<compile_context>
chip_gen: v7x
topology: tpu7x:2x2x1
jax: 0.10.0
libtpu: 0.0.40
codegen_flags: <defaults>
</compile_context>

<pallas_src>
import math

import jax
import jax.numpy as jnp
import numpy as np
from jax.experimental import pallas as pl
from jax.experimental.pallas import tpu as pltpu

HIGH = jax.lax.Precision.HIGHEST


def _round_up(x, m):
    return (x + m - 1) // m * m


def _fc1_tiling(F, tk_max=3200):
    """K-tiling of the fc1 reduction axis (tk multiple of 128)."""
    nk = max(1, -(-F // tk_max))
    tk = _round_up(-(-F // nk), 128)
    return nk, tk, nk * tk


def _h1_split(H1):
    """Split fc1 output columns into nj blocks (parallel axis; v7x megacore)."""
    if H1 >= 256:
        nj = 2
        H1p = _round_up(H1, 256)   # so that H1p // 2 is a multiple of 128
    else:
        nj = 1
        H1p = H1
    return nj, H1p // nj, H1p


# ----------------------------------------------------------------------------
# Kernel 1: conv1 -> relu -> maxpool(2) -> conv2 -> relu -> maxpool(2)
#
# Input is pre-split on the host into 4 spatial phases x[b, 4r+j] so that both
# pooling stages reduce to unit-stride slices:
#   p1e[r] = pool1-output at even index 2r,  p1o[r] = at odd index 2r+1
#   p2[q]  = max(relu(conv2@2q), relu(conv2@2q+1)) built from p1e/p1o slices.
# conv1 runs as lane-dense VPU MACs; conv2 channel mixing runs as 6 batched
# bf16 MXU dots.  Output is bf16, channel-major (BB, C2, P2).
# ----------------------------------------------------------------------------
def feature_kernel(x_ref, w1_ref, b1_ref, w2_ref, b2_ref, o_ref):
    # x_ref : (BB, 4, Rp) f32    w1_ref: (3, C1, 1) f32   b1_ref: (1, C1, 1) f32
    # w2_ref: (3, C2, C1) bf16   b2_ref: (1, C2, 1) f32   o_ref : (BB, C2, P2) bf16
    BB = x_ref.shape[0]
    C1 = w1_ref.shape[1]
    C2 = w2_ref.shape[1]
    P2 = o_ref.shape[2]
    Q = P2 + 1

    xp = x_ref[...]                                   # (BB, 4, Rp)
    w1 = w1_ref[...]                                  # (3, C1, 1)
    b1 = b1_ref[...]                                  # (1, C1, 1)

    x0 = xp[:, 0:1, :]
    x1 = xp[:, 1:2, :]
    x2 = xp[:, 2:3, :]
    x3 = xp[:, 3:4, :]

    a0 = x0[:, :, :Q]
    a1 = x1[:, :, :Q]
    a2 = x2[:, :, :Q]
    a3 = x3[:, :, :Q]
    a4 = x0[:, :, 1:Q + 1]
    a5 = x1[:, :, 1:Q + 1]

    W0, W1, W2 = w1[0:1], w1[1:2], w1[2:3]            # each (1, C1, 1)

    # conv1 evaluated at spatial positions 4r, 4r+1, 4r+2, 4r+3 (VPU MACs).
    c1a = a0 * W0 + a1 * W1 + a2 * W2 + b1
    c1b = a1 * W0 + a2 * W1 + a3 * W2 + b1
    c1c = a2 * W0 + a3 * W1 + a4 * W2 + b1
    c1d = a3 * W0 + a4 * W1 + a5 * W2 + b1

    # relu1 + maxpool1 -> even / odd pooled streams, each (BB, C1, Q).
    p1e = jnp.maximum(jnp.maximum(c1a, c1b), 0.0)
    p1o = jnp.maximum(jnp.maximum(c1c, c1d), 0.0)

    w2 = w2_ref[...]                                  # (3, C2, C1) bf16
    b2 = b2_ref[...]                                  # (1, C2, 1)
    wb0 = jnp.broadcast_to(w2[0:1], (BB, C2, C1))
    wb1 = jnp.broadcast_to(w2[1:2], (BB, C2, C1))
    wb2 = jnp.broadcast_to(w2[2:3], (BB, C2, C1))

    def mix(w, tap):                                  # (BB,C2,C1)x(BB,C1,P2)->(BB,C2,P2)
        return jax.lax.dot_general(
            w, tap.astype(jnp.bfloat16),
            (((2,), (1,)), ((0,), (0,))),
            preferred_element_type=jnp.float32)

    pe0, po0 = p1e[:, :, :P2], p1o[:, :, :P2]
    pe1, po1 = p1e[:, :, 1:], p1o[:, :, 1:]

    s_even = mix(wb0, pe0) + mix(wb1, po0) + mix(wb2, pe1) + b2   # conv2 @ 2q
    s_odd = mix(wb0, po0) + mix(wb1, pe1) + mix(wb2, po1) + b2    # conv2 @ 2q+1

    # relu2 + maxpool2, cast to bf16, channel-major (matches torch flatten).
    o_ref[...] = jnp.maximum(jnp.maximum(s_even, s_odd), 0.0).astype(o_ref.dtype)


# ----------------------------------------------------------------------------
# Kernel 2: fc1 (grid (nj, nk): nj parallel column blocks, nk streamed K blocks,
# bf16 MXU, f32 accumulator) -> + bias -> relu -> (dropout: identity) -> bf16.
# ----------------------------------------------------------------------------
def fc1_kernel(x_ref, w_ref, b_ref, o_ref, acc_ref):
    k = pl.program_id(1)

    @pl.when(k == 0)
    def _init():
        acc_ref[...] = jnp.zeros_like(acc_ref)

    acc_ref[...] += jnp.dot(x_ref[...], w_ref[...],
                            preferred_element_type=jnp.float32)

    @pl.when(k == pl.num_programs(1) - 1)
    def _finish():
        # TODO(synk): nn.Dropout(p=0.5) treated as identity (eval-mode
        #             semantics); training dropout would need pltpu.prng_*.
        o_ref[...] = jnp.maximum(acc_ref[...] + b_ref[...], 0.0).astype(o_ref.dtype)


# ----------------------------------------------------------------------------
# Kernel 3: fc2 -> relu -> fc3 (tiny, everything resident).
# ----------------------------------------------------------------------------
def head_kernel(h_ref, w2_ref, b2_ref, w3_ref, b3_ref, o_ref):
    h = jnp.dot(h_ref[...], w2_ref[...],
                preferred_element_type=jnp.float32) + b2_ref[...]
    h = jnp.maximum(h, 0.0)
    o_ref[...] = jnp.dot(h.astype(jnp.bfloat16), w3_ref[...],
                         preferred_element_type=jnp.float32) + b3_ref[...]


# ----------------------------------------------------------------------------
# One-time parameter repack (hoisted out of the per-call forward).
# ----------------------------------------------------------------------------
def prepare_params(params):
    C1 = params["conv1_w"].shape[0]
    C2 = params["conv2_w"].shape[0]
    H1, F = params["fc1_w"].shape
    nk, tk, F_pad = _fc1_tiling(F)
    nj, tn1, H1p = _h1_split(H1)
    del nk, tk, nj, tn1

    # fc1: torch flatten is channel-major (c*P2 + p); the feature kernel emits
    # exactly that order, so a plain transpose (plus one-time zero pad) suffices.
    w1t = jnp.pad(params["fc1_w"].T,
                  ((0, F_pad - F), (0, H1p - H1))).astype(jnp.bfloat16)
    b1 = jnp.pad(params["fc1_b"], (0, H1p - H1))[None, :].astype(jnp.float32)
    w2t = jnp.pad(params["fc2_w"].T,
                  ((0, H1p - H1), (0, 0))).astype(jnp.bfloat16)
    b2 = params["fc2_b"][None, :].astype(jnp.float32)
    w3t = params["fc3_w"].T.astype(jnp.bfloat16)
    b3 = params["fc3_b"][None, :].astype(jnp.float32)

    return {
        "conv1_w": jnp.transpose(params["conv1_w"], (2, 0, 1)).astype(jnp.float32),  # (3,C1,1)
        "conv1_b": params["conv1_b"].reshape(1, C1, 1).astype(jnp.float32),
        "conv2_w": jnp.transpose(params["conv2_w"], (2, 0, 1)).astype(jnp.bfloat16),  # (3,C2,C1)
        "conv2_b": params["conv2_b"].reshape(1, C2, 1).astype(jnp.float32),
        "fc1_w": w1t, "fc1_b": b1,
        "fc2_w": w2t, "fc2_b": b2,
        "fc3_w": w3t, "fc3_b": b3,
    }


# ----------------------------------------------------------------------------
# Forward (jit-able; all meta derived from static shapes).
# ----------------------------------------------------------------------------
def ram_conv1d_mx_forward(x, kp):
    """x: (B, 1, L) float32 (PyTorch NCW); kp: output of prepare_params."""
    B, Cin, L = x.shape
    assert Cin == 1
    C1 = kp["conv1_w"].shape[1]
    C2 = kp["conv2_w"].shape[1]
    F_pad = kp["fc1_w"].shape[0]
    H1p = kp["fc1_w"].shape[1]
    H2 = kp["fc2_w"].shape[1]
    O = kp["fc3_w"].shape[1]

    L1 = L - 2
    P1 = L1 // 2
    L2 = P1 - 2
    P2 = L2 // 2
    F = C2 * P2
    nk, tk, F_pad_chk = _fc1_tiling(F)
    if F_pad_chk != F_pad:
        raise ValueError("input length inconsistent with fc1 weight shape")
    nj = 2 if H1p >= 256 else 1
    tn1 = H1p // nj

    BB = 32 if B >= 32 else 8
    B_pad = _round_up(B, BB)

    # --- host-side layout prep (activations only; cheap) ---------------------
    Q = P2 + 1
    Rp = P2 + 2
    Lp = 4 * Rp
    xf = x[:, 0, :].astype(jnp.float32)                 # (B, L)
    if L >= Lp:
        xf = xf[:, :Lp]
    else:
        xf = jnp.pad(xf, ((0, 0), (0, Lp - L)))
    if B_pad > B:
        xf = jnp.pad(xf, ((0, B_pad - B), (0, 0)))
    # xph[b, j, r] = x[b, 4r + j]
    xph = xf.reshape(B_pad, Rp, 4).transpose(0, 2, 1)   # (B_pad, 4, Rp)
    del Q

    # --- feature stage --------------------------------------------------------
    feats = pl.pallas_call(
        feature_kernel,
        out_shape=jax.ShapeDtypeStruct((B_pad, C2, P2), jnp.bfloat16),
        grid_spec=pltpu.PrefetchScalarGridSpec(
            num_scalar_prefetch=0,
            grid=(B_pad // BB,),
            in_specs=[
                pl.BlockSpec((BB, 4, Rp), lambda g: (g, 0, 0)),
                pl.BlockSpec((3, C1, 1), lambda g: (0, 0, 0)),
                pl.BlockSpec((1, C1, 1), lambda g: (0, 0, 0)),
                pl.BlockSpec((3, C2, C1), lambda g: (0, 0, 0)),
                pl.BlockSpec((1, C2, 1), lambda g: (0, 0, 0)),
            ],
            out_specs=pl.BlockSpec((BB, C2, P2), lambda g: (g, 0, 0)),
        ),
        compiler_params=pltpu.CompilerParams(dimension_semantics=("parallel",)),
    )(xph, kp["conv1_w"], kp["conv1_b"], kp["conv2_w"], kp["conv2_b"])

    # Channel-major flatten == torch x.reshape(B, -1); free reshape, already bf16.
    flat = feats.reshape(B_pad, F)
    if F_pad > F:
        flat = jnp.pad(flat, ((0, 0), (0, F_pad - F)))  # zero K-pad (weight rows are zero)

    # --- fc1 (dominant, weight-streaming) -------------------------------------
    h1 = pl.pallas_call(
        fc1_kernel,
        out_shape=jax.ShapeDtypeStruct((B_pad, H1p), jnp.bfloat16),
        grid_spec=pltpu.PrefetchScalarGridSpec(
            num_scalar_prefetch=0,
            grid=(nj, nk),
            in_specs=[
                pl.BlockSpec((B_pad, tk), lambda j, k: (0, k)),
                pl.BlockSpec((tk, tn1), lambda j, k: (k, j)),
                pl.BlockSpec((1, tn1), lambda j, k: (0, j)),
            ],
            out_specs=pl.BlockSpec((B_pad, tn1), lambda j, k: (0, j)),
            scratch_shapes=[pltpu.VMEM((B_pad, tn1), jnp.float32)],
        ),
        compiler_params=pltpu.CompilerParams(
            dimension_semantics=("parallel", "arbitrary")),
    )(flat, kp["fc1_w"], kp["fc1_b"])

    # --- fc2 -> relu -> fc3 ----------------------------------------------------
    out = pl.pallas_call(
        head_kernel,
        out_shape=jax.ShapeDtypeStruct((B_pad, O), jnp.float32),
        grid_spec=pltpu.PrefetchScalarGridSpec(
            num_scalar_prefetch=0,
            grid=(1,),
            in_specs=[
                pl.BlockSpec((B_pad, H1p), lambda i: (0, 0)),
                pl.BlockSpec((H1p, H2), lambda i: (0, 0)),
                pl.BlockSpec((1, H2), lambda i: (0, 0)),
                pl.BlockSpec((H2, O), lambda i: (0, 0)),
                pl.BlockSpec((1, O), lambda i: (0, 0)),
            ],
            out_specs=pl.BlockSpec((B_pad, O), lambda i: (0, 0)),
        ),
    )(h1, kp["fc2_w"], kp["fc2_b"], kp["fc3_w"], kp["fc3_b"])

    return out[:B]


# ----------------------------------------------------------------------------
# Deterministic parameter init (PyTorch-style uniform bounds) + pure-JAX reference
# ----------------------------------------------------------------------------
def init_params(key, L, hidden_size=10, hidden_size2=50, fc1_out=1000,
                linear_hidden=14, out_size=2):
    flat = hidden_size2 * ((((L - 2) // 2) - 2) // 2)  # structural stand-in for 12400

    def unif(k, shape, fan_in):
        b = 1.0 / math.sqrt(fan_in)
        return jax.random.uniform(k, shape, jnp.float32, -b, b)

    ks = jax.random.split(key, 10)
    return {
        "conv1_w": unif(ks[0], (hidden_size, 1, 3), 1 * 3),
        "conv1_b": unif(ks[1], (hidden_size,), 1 * 3),
        "conv2_w": unif(ks[2], (hidden_size2, hidden_size, 3), hidden_size * 3),
        "conv2_b": unif(ks[3], (hidden_size2,), hidden_size * 3),
        "fc1_w": unif(ks[4], (fc1_out, flat), flat),
        "fc1_b": unif(ks[5], (fc1_out,), flat),
        "fc2_w": unif(ks[6], (linear_hidden, fc1_out), fc1_out),
        "fc2_b": unif(ks[7], (linear_hidden,), fc1_out),
        "fc3_w": unif(ks[8], (out_size, linear_hidden), linear_hidden),
        "fc3_b": unif(ks[9], (out_size,), linear_hidden),
    }


def reference_forward(x, params):
    dn = ("NCH", "OIH", "NCH")
    y = jax.lax.conv_general_dilated(x, params["conv1_w"], (1,), "VALID",
                                     dimension_numbers=dn, precision=HIGH)
    y = jnp.maximum(y + params["conv1_b"][None, :, None], 0.0)
    B, C, Ly = y.shape
    y = y[:, :, :(Ly // 2) * 2].reshape(B, C, Ly // 2, 2).max(-1)
    y = jax.lax.conv_general_dilated(y, params["conv2_w"], (1,), "VALID",
                                     dimension_numbers=dn, precision=HIGH)
    y = jnp.maximum(y + params["conv2_b"][None, :, None], 0.0)
    B, C, Ly = y.shape
    y = y[:, :, :(Ly // 2) * 2].reshape(B, C, Ly // 2, 2).max(-1)
    y = y.reshape(B, -1)
    h = jnp.maximum(jnp.dot(y, params["fc1_w"].T, precision=HIGH) + params["fc1_b"], 0.0)
    h = jnp.maximum(jnp.dot(h, params["fc2_w"].T, precision=HIGH) + params["fc2_b"], 0.0)
    return jnp.dot(h, params["fc3_w"].T, precision=HIGH) + params["fc3_b"]


if __name__ == "__main__":
    key = jax.random.PRNGKey(0)
    kx, kw = jax.random.split(key)

    B, L = 2, 38  # small shapes: L=38 -> conv/pool stack -> 50*8 = 400 flat features
    params = init_params(kw, L)
    x = jax.random.normal(kx, (B, 1, L), dtype=jnp.float32)

    kernel_params = prepare_params(params)       # one-time repack (hoisted out of forward)
    fwd = jax.jit(ram_conv1d_mx_forward)
    out = jax.block_until_ready(fwd(x, kernel_params))
    assert out.shape == (B, 2), out.shape

    ref = jax.block_until_ready(reference_forward(x, params))
    # conv2 + the whole MLP run with bf16 operands on the MXU (f32 accumulate),
    # so compare against the pure-f32 reference with a relaxed tolerance.
    np.testing.assert_allclose(np.asarray(out), np.asarray(ref), rtol=2e-2, atol=2e-2)

    print("KERNEL_OK")
</pallas_src>

<mosaic_0001>
module attributes {stable_mosaic.version = 11 : i64} {
  func.func @feature_kernel(%arg0: i32, %arg1: memref<8x4x10xf32, #tpu.memory_space<vmem>>, %arg2: memref<3x10x1xf32, #tpu.memory_space<vmem>>, %arg3: memref<1x10x1xf32, #tpu.memory_space<vmem>>, %arg4: memref<3x50x10xbf16, #tpu.memory_space<vmem>>, %arg5: memref<1x50x1xf32, #tpu.memory_space<vmem>>, %arg6: memref<8x50x8xbf16, #tpu.memory_space<vmem>>) attributes {dimension_semantics = [#tpu.dimension_semantics<parallel>], iteration_bounds = array<i64: 1>, scalar_prefetch = 0 : i64, scratch_operands = 0 : i64, tpu.core_type = #tpu.core_type<tc>, window_params = [{transform_indices = @transform_0, window_bounds = array<i64: 8, 4, 10>}, {pipeline_mode = #tpu.pipeline_mode<synchronous>, transform_indices = @transform_1, window_bounds = array<i64: 3, 10, 1>}, {pipeline_mode = #tpu.pipeline_mode<synchronous>, transform_indices = @transform_2, window_bounds = array<i64: 1, 10, 1>}, {pipeline_mode = #tpu.pipeline_mode<synchronous>, transform_indices = @transform_3, window_bounds = array<i64: 3, 50, 10>}, {pipeline_mode = #tpu.pipeline_mode<synchronous>, transform_indices = @transform_4, window_bounds = array<i64: 1, 50, 1>}, {transform_indices = @transform_5, window_bounds = array<i64: 8, 50, 8>}]} {
    %c0 = arith.constant 0 : index
    %c0_0 = arith.constant 0 : index
    %c0_1 = arith.constant 0 : index
    %0 = vector.load %arg1[%c0, %c0_0, %c0_1] : memref<8x4x10xf32, #tpu.memory_space<vmem>>, vector<8x4x10xf32>
    %c0_2 = arith.constant 0 : index
    %c0_3 = arith.constant 0 : index
    %c0_4 = arith.constant 0 : index
    %1 = vector.load %arg2[%c0_2, %c0_3, %c0_4] : memref<3x10x1xf32, #tpu.memory_space<vmem>>, vector<3x10x1xf32>
    %c0_5 = arith.constant 0 : index
    %c0_6 = arith.constant 0 : index
    %c0_7 = arith.constant 0 : index
    %2 = vector.load %arg3[%c0_5, %c0_6, %c0_7] : memref<1x10x1xf32, #tpu.memory_space<vmem>>, vector<1x10x1xf32>
    %3 = vector.extract_strided_slice %0 {offsets = [0, 0, 0], sizes = [8, 1, 10], strides = [1, 1, 1]} : vector<8x4x10xf32> to vector<8x1x10xf32>
    %4 = vector.extract_strided_slice %0 {offsets = [0, 1, 0], sizes = [8, 1, 10], strides = [1, 1, 1]} : vector<8x4x10xf32> to vector<8x1x10xf32>
    %5 = vector.extract_strided_slice %0 {offsets = [0, 2, 0], sizes = [8, 1, 10], strides = [1, 1, 1]} : vector<8x4x10xf32> to vector<8x1x10xf32>
    %6 = vector.extract_strided_slice %0 {offsets = [0, 3, 0], sizes = [8, 1, 10], strides = [1, 1, 1]} : vector<8x4x10xf32> to vector<8x1x10xf32>
    %7 = vector.extract_strided_slice %3 {offsets = [0, 0, 0], sizes = [8, 1, 9], strides = [1, 1, 1]} : vector<8x1x10xf32> to vector<8x1x9xf32>
    %8 = vector.extract_strided_slice %4 {offsets = [0, 0, 0], sizes = [8, 1, 9], strides = [1, 1, 1]} : vector<8x1x10xf32> to vector<8x1x9xf32>
    %9 = vector.extract_strided_slice %5 {offsets = [0, 0, 0], sizes = [8, 1, 9], strides = [1, 1, 1]} : vector<8x1x10xf32> to vector<8x1x9xf32>
    %10 = vector.extract_strided_slice %6 {offsets = [0, 0, 0], sizes = [8, 1, 9], strides = [1, 1, 1]} : vector<8x1x10xf32> to vector<8x1x9xf32>
    %11 = vector.extract_strided_slice %3 {offsets = [0, 0, 1], sizes = [8, 1, 9], strides = [1, 1, 1]} : vector<8x1x10xf32> to vector<8x1x9xf32>
    %12 = vector.extract_strided_slice %4 {offsets = [0, 0, 1], sizes = [8, 1, 9], strides = [1, 1, 1]} : vector<8x1x10xf32> to vector<8x1x9xf32>
    %13 = vector.extract_strided_slice %1 {offsets = [0, 0, 0], sizes = [1, 10, 1], strides = [1, 1, 1]} : vector<3x10x1xf32> to vector<1x10x1xf32>
    %14 = vector.extract_strided_slice %1 {offsets = [1, 0, 0], sizes = [1, 10, 1], strides = [1, 1, 1]} : vector<3x10x1xf32> to vector<1x10x1xf32>
    %15 = vector.extract_strided_slice %1 {offsets = [2, 0, 0], sizes = [1, 10, 1], strides = [1, 1, 1]} : vector<3x10x1xf32> to vector<1x10x1xf32>
    %16 = vector.broadcast %7 : vector<8x1x9xf32> to vector<8x10x9xf32>
    %17 = vector.broadcast %13 : vector<1x10x1xf32> to vector<8x10x9xf32>
    %18 = arith.mulf %16, %17 : vector<8x10x9xf32>
    %19 = vector.broadcast %8 : vector<8x1x9xf32> to vector<8x10x9xf32>
    %20 = vector.broadcast %14 : vector<1x10x1xf32> to vector<8x10x9xf32>
    %21 = arith.mulf %19, %20 : vector<8x10x9xf32>
    %22 = arith.addf %18, %21 : vector<8x10x9xf32>
    %23 = vector.broadcast %9 : vector<8x1x9xf32> to vector<8x10x9xf32>
    %24 = vector.broadcast %15 : vector<1x10x1xf32> to vector<8x10x9xf32>
    %25 = arith.mulf %23, %24 : vector<8x10x9xf32>
    %26 = arith.addf %22, %25 : vector<8x10x9xf32>
    %27 = vector.broadcast %2 : vector<1x10x1xf32> to vector<8x10x9xf32>
    %28 = arith.addf %26, %27 : vector<8x10x9xf32>
    %29 = vector.broadcast %8 : vector<8x1x9xf32> to vector<8x10x9xf32>
    %30 = vector.broadcast %13 : vector<1x10x1xf32> to vector<8x10x9xf32>
    %31 = arith.mulf %29, %30 : vector<8x10x9xf32>
    %32 = vector.broadcast %9 : vector<8x1x9xf32> to vector<8x10x9xf32>
    %33 = vector.broadcast %14 : vector<1x10x1xf32> to vector<8x10x9xf32>
    %34 = arith.mulf %32, %33 : vector<8x10x9xf32>
    %35 = arith.addf %31, %34 : vector<8x10x9xf32>
    %36 = vector.broadcast %10 : vector<8x1x9xf32> to vector<8x10x9xf32>
    %37 = vector.broadcast %15 : vector<1x10x1xf32> to vector<8x10x9xf32>
    %38 = arith.mulf %36, %37 : vector<8x10x9xf32>
    %39 = arith.addf %35, %38 : vector<8x10x9xf32>
    %40 = vector.broadcast %2 : vector<1x10x1xf32> to vector<8x10x9xf32>
    %41 = arith.addf %39, %40 : vector<8x10x9xf32>
    %42 = vector.broadcast %9 : vector<8x1x9xf32> to vector<8x10x9xf32>
    %43 = vector.broadcast %13 : vector<1x10x1xf32> to vector<8x10x9xf32>
    %44 = arith.mulf %42, %43 : vector<8x10x9xf32>
    %45 = vector.broadcast %10 : vector<8x1x9xf32> to vector<8x10x9xf32>
    %46 = vector.broadcast %14 : vector<1x10x1xf32> to vector<8x10x9xf32>
    %47 = arith.mulf %45, %46 : vector<8x10x9xf32>
    %48 = arith.addf %44, %47 : vector<8x10x9xf32>
    %49 = vector.broadcast %11 : vector<8x1x9xf32> to vector<8x10x9xf32>
    %50 = vector.broadcast %15 : vector<1x10x1xf32> to vector<8x10x9xf32>
    %51 = arith.mulf %49, %50 : vector<8x10x9xf32>
    %52 = arith.addf %48, %51 : vector<8x10x9xf32>
    %53 = vector.broadcast %2 : vector<1x10x1xf32> to vector<8x10x9xf32>
    %54 = arith.addf %52, %53 : vector<8x10x9xf32>
    %55 = vector.broadcast %10 : vector<8x1x9xf32> to vector<8x10x9xf32>
    %56 = vector.broadcast %13 : vector<1x10x1xf32> to vector<8x10x9xf32>
    %57 = arith.mulf %55, %56 : vector<8x10x9xf32>
    %58 = vector.broadcast %11 : vector<8x1x9xf32> to vector<8x10x9xf32>
    %59 = vector.broadcast %14 : vector<1x10x1xf32> to vector<8x10x9xf32>
    %60 = arith.mulf %58, %59 : vector<8x10x9xf32>
    %61 = arith.addf %57, %60 : vector<8x10x9xf32>
    %62 = vector.broadcast %12 : vector<8x1x9xf32> to vector<8x10x9xf32>
    %63 = vector.broadcast %15 : vector<1x10x1xf32> to vector<8x10x9xf32>
    %64 = arith.mulf %62, %63 : vector<8x10x9xf32>
    %65 = arith.addf %61, %64 : vector<8x10x9xf32>
    %66 = vector.broadcast %2 : vector<1x10x1xf32> to vector<8x10x9xf32>
    %67 = arith.addf %65, %66 : vector<8x10x9xf32>
    %68 = arith.maximumf %28, %41 : vector<8x10x9xf32>
    %cst = arith.constant 0.000000e+00 : f32
    %69 = vector.broadcast %cst : f32 to vector<8x10x9xf32>
    %70 = arith.maximumf %68, %69 : vector<8x10x9xf32>
    %71 = arith.maximumf %54, %67 : vector<8x10x9xf32>
    %cst_8 = arith.constant 0.000000e+00 : f32
    %72 = vector.broadcast %cst_8 : f32 to vector<8x10x9xf32>
    %73 = arith.maximumf %71, %72 : vector<8x10x9xf32>
    %c0_9 = arith.constant 0 : index
    %c0_10 = arith.constant 0 : index
    %c0_11 = arith.constant 0 : index
    %74 = vector.load %arg4[%c0_9, %c0_10, %c0_11] : memref<3x50x10xbf16, #tpu.memory_space<vmem>>, vector<3x50x10xbf16>
    %c0_12 = arith.constant 0 : index
    %c0_13 = arith.constant 0 : index
    %c0_14 = arith.constant 0 : index
    %75 = vector.load %arg5[%c0_12, %c0_13, %c0_14] : memref<1x50x1xf32, #tpu.memory_space<vmem>>, vector<1x50x1xf32>
    %76 = vector.extract_strided_slice %74 {offsets = [0, 0, 0], sizes = [1, 50, 10], strides = [1, 1, 1]} : vector<3x50x10xbf16> to vector<1x50x10xbf16>
    %77 = vector.shape_cast %76 : vector<1x50x10xbf16> to vector<1x50x10xbf16>
    %78 = vector.broadcast %77 : vector<1x50x10xbf16> to vector<8x50x10xbf16>
    %79 = vector.extract_strided_slice %74 {offsets = [1, 0, 0], sizes = [1, 50, 10], strides = [1, 1, 1]} : vector<3x50x10xbf16> to vector<1x50x10xbf16>
    %80 = vector.shape_cast %79 : vector<1x50x10xbf16> to vector<1x50x10xbf16>
    %81 = vector.broadcast %80 : vector<1x50x10xbf16> to vector<8x50x10xbf16>
    %82 = vector.extract_strided_slice %74 {offsets = [2, 0, 0], sizes = [1, 50, 10], strides = [1, 1, 1]} : vector<3x50x10xbf16> to vector<1x50x10xbf16>
    %83 = vector.shape_cast %82 : vector<1x50x10xbf16> to vector<1x50x10xbf16>
    %84 = vector.broadcast %83 : vector<1x50x10xbf16> to vector<8x50x10xbf16>
    %85 = vector.extract_strided_slice %70 {offsets = [0, 0, 0], sizes = [8, 10, 8], strides = [1, 1, 1]} : vector<8x10x9xf32> to vector<8x10x8xf32>
    %86 = vector.extract_strided_slice %73 {offsets = [0, 0, 0], sizes = [8, 10, 8], strides = [1, 1, 1]} : vector<8x10x9xf32> to vector<8x10x8xf32>
    %87 = vector.extract_strided_slice %70 {offsets = [0, 0, 1], sizes = [8, 10, 8], strides = [1, 1, 1]} : vector<8x10x9xf32> to vector<8x10x8xf32>
    %88 = vector.extract_strided_slice %73 {offsets = [0, 0, 1], sizes = [8, 10, 8], strides = [1, 1, 1]} : vector<8x10x9xf32> to vector<8x10x8xf32>
    %89 = arith.truncf %85 : vector<8x10x8xf32> to vector<8x10x8xbf16>
    %cst_15 = arith.constant dense<0.000000e+00> : vector<8x50x8xf32>
    %90 = tpu.matmul %78, %89, %cst_15 {dimension_numbers = #tpu.dot_dimension_numbers<[2], [1], [1], [2], [0, 0, 0, 1, 1, 2], [0], [0]>} : vector<8x50x10xbf16>, vector<8x10x8xbf16>, vector<8x50x8xf32> -> vector<8x50x8xf32>
    %91 = arith.truncf %86 : vector<8x10x8xf32> to vector<8x10x8xbf16>
    %cst_16 = arith.constant dense<0.000000e+00> : vector<8x50x8xf32>
    %92 = tpu.matmul %81, %91, %cst_16 {dimension_numbers = #tpu.dot_dimension_numbers<[2], [1], [1], [2], [0, 0, 0, 1, 1, 2], [0], [0]>} : vector<8x50x10xbf16>, vector<8x10x8xbf16>, vector<8x50x8xf32> -> vector<8x50x8xf32>
    %93 = arith.addf %90, %92 : vector<8x50x8xf32>
    %94 = arith.truncf %87 : vector<8x10x8xf32> to vector<8x10x8xbf16>
    %cst_17 = arith.constant dense<0.000000e+00> : vector<8x50x8xf32>
    %95 = tpu.matmul %84, %94, %cst_17 {dimension_numbers = #tpu.dot_dimension_numbers<[2], [1], [1], [2], [0, 0, 0, 1, 1, 2], [0], [0]>} : vector<8x50x10xbf16>, vector<8x10x8xbf16>, vector<8x50x8xf32> -> vector<8x50x8xf32>
    %96 = arith.addf %93, %95 : vector<8x50x8xf32>
    %97 = vector.broadcast %75 : vector<1x50x1xf32> to vector<8x50x8xf32>
    %98 = arith.addf %96, %97 : vector<8x50x8xf32>
    %99 = arith.truncf %86 : vector<8x10x8xf32> to vector<8x10x8xbf16>
    %cst_18 = arith.constant dense<0.000000e+00> : vector<8x50x8xf32>
    %100 = tpu.matmul %78, %99, %cst_18 {dimension_numbers = #tpu.dot_dimension_numbers<[2], [1], [1], [2], [0, 0, 0, 1, 1, 2], [0], [0]>} : vector<8x50x10xbf16>, vector<8x10x8xbf16>, vector<8x50x8xf32> -> vector<8x50x8xf32>
    %101 = arith.truncf %87 : vector<8x10x8xf32> to vector<8x10x8xbf16>
    %cst_19 = arith.constant dense<0.000000e+00> : vector<8x50x8xf32>
    %102 = tpu.matmul %81, %101, %cst_19 {dimension_numbers = #tpu.dot_dimension_numbers<[2], [1], [1], [2], [0, 0, 0, 1, 1, 2], [0], [0]>} : vector<8x50x10xbf16>, vector<8x10x8xbf16>, vector<8x50x8xf32> -> vector<8x50x8xf32>
    %103 = arith.addf %100, %102 : vector<8x50x8xf32>
    %104 = arith.truncf %88 : vector<8x10x8xf32> to vector<8x10x8xbf16>
    %cst_20 = arith.constant dense<0.000000e+00> : vector<8x50x8xf32>
    %105 = tpu.matmul %84, %104, %cst_20 {dimension_numbers = #tpu.dot_dimension_numbers<[2], [1], [1], [2], [0, 0, 0, 1, 1, 2], [0], [0]>} : vector<8x50x10xbf16>, vector<8x10x8xbf16>, vector<8x50x8xf32> -> vector<8x50x8xf32>
    %106 = arith.addf %103, %105 : vector<8x50x8xf32>
    %107 = vector.broadcast %75 : vector<1x50x1xf32> to vector<8x50x8xf32>
    %108 = arith.addf %106, %107 : vector<8x50x8xf32>
    %109 = arith.maximumf %98, %108 : vector<8x50x8xf32>
    %cst_21 = arith.constant 0.000000e+00 : f32
    %110 = vector.broadcast %cst_21 : f32 to vector<8x50x8xf32>
    %111 = arith.maximumf %109, %110 : vector<8x50x8xf32>
    %112 = arith.truncf %111 : vector<8x50x8xf32> to vector<8x50x8xbf16>
    %c0_22 = arith.constant 0 : index
    %c0_23 = arith.constant 0 : index
    %c0_24 = arith.constant 0 : index
    %113 = vector.load %arg6[%c0_22, %c0_23, %c0_24] : memref<8x50x8xbf16, #tpu.memory_space<vmem>>, vector<8x50x8xbf16>
    tpu.vector_store %arg6[%c0_22, %c0_23, %c0_24], %112 {strides = array<i32>} : memref<8x50x8xbf16, #tpu.memory_space<vmem>>, vector<8x50x8xbf16>,
    return
  }
  func.func @transform_0(%arg0: i32) -> (i32, i32, i32) {
    %c0_i32 = arith.constant 0 : i32
    %c0_i32_0 = arith.constant 0 : i32
    %c0_i32_1 = arith.constant 0 : i32
    return %arg0, %c0_i32, %c0_i32_0 : i32, i32, i32
  }
  func.func @transform_1(%arg0: i32) -> (i32, i32, i32) {
    %c0_i32 = arith.constant 0 : i32
    %c0_i32_0 = arith.constant 0 : i32
    %c0_i32_1 = arith.constant 0 : i32
    %c0_i32_2 = arith.constant 0 : i32
    return %c0_i32, %c0_i32_0, %c0_i32_1 : i32, i32, i32
  }
  func.func @transform_2(%arg0: i32) -> (i32, i32, i32) {
    %c0_i32 = arith.constant 0 : i32
    %c0_i32_0 = arith.constant 0 : i32
    %c0_i32_1 = arith.constant 0 : i32
    %c0_i32_2 = arith.constant 0 : i32
    return %c0_i32, %c0_i32_0, %c0_i32_1 : i32, i32, i32
  }
  func.func @transform_3(%arg0: i32) -> (i32, i32, i32) {
    %c0_i32 = arith.constant 0 : i32
    %c0_i32_0 = arith.constant 0 : i32
    %c0_i32_1 = arith.constant 0 : i32
    %c0_i32_2 = arith.constant 0 : i32
    return %c0_i32, %c0_i32_0, %c0_i32_1 : i32, i32, i32
  }
  func.func @transform_4(%arg0: i32) -> (i32, i32, i32) {
    %c0_i32 = arith.constant 0 : i32
    %c0_i32_0 = arith.constant 0 : i32
    %c0_i32_1 = arith.constant 0 : i32
    %c0_i32_2 = arith.constant 0 : i32
    return %c0_i32, %c0_i32_0, %c0_i32_1 : i32, i32, i32
  }
  func.func @transform_5(%arg0: i32) -> (i32, i32, i32) {
    %c0_i32 = arith.constant 0 : i32
    %c0_i32_0 = arith.constant 0 : i32
    %c0_i32_1 = arith.constant 0 : i32
    return %arg0, %c0_i32, %c0_i32_0 : i32, i32, i32
  }
}

module attributes {stable_mosaic.version = 11 : i64} {
  func.func @fc1_kernel(%arg0: i32, %arg1: i32, %arg2: memref<8x512xbf16, #tpu.memory_space<vmem>>, %arg3: memref<512x512xbf16, #tpu.memory_space<vmem>>, %arg4: memref<1x512xf32, #tpu.memory_space<vmem>>, %arg5: memref<8x512xbf16, #tpu.memory_space<vmem>>, %arg6: memref<8x512xf32, #tpu.memory_space<vmem>>) attributes {dimension_semantics = [#tpu.dimension_semantics<parallel>, #tpu.dimension_semantics<arbitrary>], iteration_bounds = array<i64: 2, 1>, scalar_prefetch = 0 : i64, scratch_operands = 1 : i64, tpu.core_type = #tpu.core_type<tc>, window_params = [{transform_indices = @transform_0, window_bounds = array<i64: 8, 512>}, {transform_indices = @transform_1, window_bounds = array<i64: 512, 512>}, {transform_indices = @transform_2, window_bounds = array<i64: 1, 512>}, {transform_indices = @transform_3, window_bounds = array<i64: 8, 512>}]} {
    %c0_i32 = arith.constant 0 : i32
    %0 = arith.cmpi eq, %arg1, %c0_i32 : i32
    %1 = arith.extui %0 : i1 to i32
    %c0_i32_0 = arith.constant 0 : i32
    %2 = arith.cmpi ne, %1, %c0_i32_0 : i32
    scf.if %2 {
      %cst_10 = arith.constant 0.000000e+00 : f32
      %12 = vector.broadcast %cst_10 : f32 to vector<8x512xf32>
      %c0_11 = arith.constant 0 : index
      %c0_12 = arith.constant 0 : index
      %13 = vector.load %arg6[%c0_11, %c0_12] : memref<8x512xf32, #tpu.memory_space<vmem>>, vector<8x512xf32>
      tpu.vector_store %arg6[%c0_11, %c0_12], %12 {strides = array<i32>} : memref<8x512xf32, #tpu.memory_space<vmem>>, vector<8x512xf32>,
    } else {
    }
    %c0 = arith.constant 0 : index
    %c0_1 = arith.constant 0 : index
    %3 = vector.load %arg6[%c0, %c0_1] : memref<8x512xf32, #tpu.memory_space<vmem>>, vector<8x512xf32>
    %c0_2 = arith.constant 0 : index
    %c0_3 = arith.constant 0 : index
    %4 = vector.load %arg2[%c0_2, %c0_3] : memref<8x512xbf16, #tpu.memory_space<vmem>>, vector<8x512xbf16>
    %c0_4 = arith.constant 0 : index
    %c0_5 = arith.constant 0 : index
    %5 = vector.load %arg3[%c0_4, %c0_5] : memref<512x512xbf16, #tpu.memory_space<vmem>>, vector<512x512xbf16>
    %cst = arith.constant dense<0.000000e+00> : vector<8x512xf32>
    %6 = tpu.matmul %4, %5, %cst {dimension_numbers = #tpu.dot_dimension_numbers<[1], [0], [0], [1], [0, 0, 1, 1], [], []>} : vector<8x512xbf16>, vector<512x512xbf16>, vector<8x512xf32> -> vector<8x512xf32>
    %7 = arith.addf %3, %6 : vector<8x512xf32>
    %c0_6 = arith.constant 0 : index
    %c0_7 = arith.constant 0 : index
    %8 = vector.load %arg6[%c0_6, %c0_7] : memref<8x512xf32, #tpu.memory_space<vmem>>, vector<8x512xf32>
    tpu.vector_store %arg6[%c0_6, %c0_7], %7 {strides = array<i32>} : memref<8x512xf32, #tpu.memory_space<vmem>>, vector<8x512xf32>,
    %c0_i32_8 = arith.constant 0 : i32
    %9 = arith.cmpi eq, %arg1, %c0_i32_8 : i32
    %10 = arith.extui %9 : i1 to i32
    %c0_i32_9 = arith.constant 0 : i32
    %11 = arith.cmpi ne, %10, %c0_i32_9 : i32
    scf.if %11 {
      %c0_10 = arith.constant 0 : index
      %c0_11 = arith.constant 0 : index
      %12 = vector.load %arg6[%c0_10, %c0_11] : memref<8x512xf32, #tpu.memory_space<vmem>>, vector<8x512xf32>
      %c0_12 = arith.constant 0 : index
      %c0_13 = arith.constant 0 : index
      %13 = vector.load %arg4[%c0_12, %c0_13] : memref<1x512xf32, #tpu.memory_space<vmem>>, vector<1x512xf32>
      %14 = vector.broadcast %13 : vector<1x512xf32> to vector<8x512xf32>
      %15 = arith.addf %12, %14 : vector<8x512xf32>
      %cst_14 = arith.constant 0.000000e+00 : f32
      %16 = vector.broadcast %cst_14 : f32 to vector<8x512xf32>
      %17 = arith.maximumf %15, %16 : vector<8x512xf32>
      %18 = arith.truncf %17 : vector<8x512xf32> to vector<8x512xbf16>
      %c0_15 = arith.constant 0 : index
      %c0_16 = arith.constant 0 : index
      %19 = vector.load %arg5[%c0_15, %c0_16] : memref<8x512xbf16, #tpu.memory_space<vmem>>, vector<8x512xbf16>
      tpu.vector_store %arg5[%c0_15, %c0_16], %18 {strides = array<i32>} : memref<8x512xbf16, #tpu.memory_space<vmem>>, vector<8x512xbf16>,
    } else {
    }
    return
  }
  func.func @transform_0(%arg0: i32, %arg1: i32) -> (i32, i32) {
    %c0_i32 = arith.constant 0 : i32
    %c0_i32_0 = arith.constant 0 : i32
    return %c0_i32, %arg1 : i32, i32
  }
  func.func @transform_1(%arg0: i32, %arg1: i32) -> (i32, i32) {
    %c0_i32 = arith.constant 0 : i32
    return %arg1, %arg0 : i32, i32
  }
  func.func @transform_2(%arg0: i32, %arg1: i32) -> (i32, i32) {
    %c0_i32 = arith.constant 0 : i32
    %c0_i32_0 = arith.constant 0 : i32
    return %c0_i32, %arg0 : i32, i32
  }
  func.func @transform_3(%arg0: i32, %arg1: i32) -> (i32, i32) {
    %c0_i32 = arith.constant 0 : i32
    %c0_i32_0 = arith.constant 0 : i32
    return %c0_i32, %arg0 : i32, i32
  }
}

module attributes {stable_mosaic.version = 11 : i64} {
  func.func @head_kernel(%arg0: i32, %arg1: memref<8x1024xbf16, #tpu.memory_space<vmem>>, %arg2: memref<1024x14xbf16, #tpu.memory_space<vmem>>, %arg3: memref<1x14xf32, #tpu.memory_space<vmem>>, %arg4: memref<14x2xbf16, #tpu.memory_space<vmem>>, %arg5: memref<1x2xf32, #tpu.memory_space<vmem>>, %arg6: memref<8x2xf32, #tpu.memory_space<vmem>>) attributes {dimension_semantics = [#tpu.dimension_semantics<arbitrary>], iteration_bounds = array<i64: 1>, scalar_prefetch = 0 : i64, scratch_operands = 0 : i64, tpu.core_type = #tpu.core_type<tc>, window_params = [{pipeline_mode = #tpu.pipeline_mode<synchronous>, transform_indices = @transform_0, window_bounds = array<i64: 8, 1024>}, {pipeline_mode = #tpu.pipeline_mode<synchronous>, transform_indices = @transform_1, window_bounds = array<i64: 1024, 14>}, {pipeline_mode = #tpu.pipeline_mode<synchronous>, transform_indices = @transform_2, window_bounds = array<i64: 1, 14>}, {pipeline_mode = #tpu.pipeline_mode<synchronous>, transform_indices = @transform_3, window_bounds = array<i64: 14, 2>}, {pipeline_mode = #tpu.pipeline_mode<synchronous>, transform_indices = @transform_4, window_bounds = array<i64: 1, 2>}, {pipeline_mode = #tpu.pipeline_mode<synchronous>, transform_indices = @transform_5, window_bounds = array<i64: 8, 2>}]} {
    %c0 = arith.constant 0 : index
    %c0_0 = arith.constant 0 : index
    %0 = vector.load %arg1[%c0, %c0_0] : memref<8x1024xbf16, #tpu.memory_space<vmem>>, vector<8x1024xbf16>
    %c0_1 = arith.constant 0 : index
    %c0_2 = arith.constant 0 : index
    %1 = vector.load %arg2[%c0_1, %c0_2] : memref<1024x14xbf16, #tpu.memory_space<vmem>>, vector<1024x14xbf16>
    %cst = arith.constant dense<0.000000e+00> : vector<8x14xf32>
    %2 = tpu.matmul %0, %1, %cst {dimension_numbers = #tpu.dot_dimension_numbers<[1], [0], [0], [1], [0, 0, 1, 1], [], []>} : vector<8x1024xbf16>, vector<1024x14xbf16>, vector<8x14xf32> -> vector<8x14xf32>
    %c0_3 = arith.constant 0 : index
    %c0_4 = arith.constant 0 : index
    %3 = vector.load %arg3[%c0_3, %c0_4] : memref<1x14xf32, #tpu.memory_space<vmem>>, vector<1x14xf32>
    %4 = vector.broadcast %3 : vector<1x14xf32> to vector<8x14xf32>
    %5 = arith.addf %2, %4 : vector<8x14xf32>
    %cst_5 = arith.constant 0.000000e+00 : f32
    %6 = vector.broadcast %cst_5 : f32 to vector<8x14xf32>
    %7 = arith.maximumf %5, %6 : vector<8x14xf32>
    %8 = arith.truncf %7 : vector<8x14xf32> to vector<8x14xbf16>
    %c0_6 = arith.constant 0 : index
    %c0_7 = arith.constant 0 : index
    %9 = vector.load %arg4[%c0_6, %c0_7] : memref<14x2xbf16, #tpu.memory_space<vmem>>, vector<14x2xbf16>
    %cst_8 = arith.constant dense<0.000000e+00> : vector<8x2xf32>
    %10 = tpu.matmul %8, %9, %cst_8 {dimension_numbers = #tpu.dot_dimension_numbers<[1], [0], [0], [1], [0, 0, 1, 1], [], []>} : vector<8x14xbf16>, vector<14x2xbf16>, vector<8x2xf32> -> vector<8x2xf32>
    %c0_9 = arith.constant 0 : index
    %c0_10 = arith.constant 0 : index
    %11 = vector.load %arg5[%c0_9, %c0_10] : memref<1x2xf32, #tpu.memory_space<vmem>>, vector<1x2xf32>
    %12 = vector.broadcast %11 : vector<1x2xf32> to vector<8x2xf32>
    %13 = arith.addf %10, %12 : vector<8x2xf32>
    %c0_11 = arith.constant 0 : index
    %c0_12 = arith.constant 0 : index
    %14 = vector.load %arg6[%c0_11, %c0_12] : memref<8x2xf32, #tpu.memory_space<vmem>>, vector<8x2xf32>
    tpu.vector_store %arg6[%c0_11, %c0_12], %13 {strides = array<i32>} : memref<8x2xf32, #tpu.memory_space<vmem>>, vector<8x2xf32>,
    return
  }
  func.func @transform_0(%arg0: i32) -> (i32, i32) {
    %c0_i32 = arith.constant 0 : i32
    %c0_i32_0 = arith.constant 0 : i32
    %c0_i32_1 = arith.constant 0 : i32
    return %c0_i32, %c0_i32_0 : i32, i32
  }
  func.func @transform_1(%arg0: i32) -> (i32, i32) {
    %c0_i32 = arith.constant 0 : i32
    %c0_i32_0 = arith.constant 0 : i32
    %c0_i32_1 = arith.constant 0 : i32
    return %c0_i32, %c0_i32_0 : i32, i32
  }
  func.func @transform_2(%arg0: i32) -> (i32, i32) {
    %c0_i32 = arith.constant 0 : i32
    %c0_i32_0 = arith.constant 0 : i32
    %c0_i32_1 = arith.constant 0 : i32
    return %c0_i32, %c0_i32_0 : i32, i32
  }
  func.func @transform_3(%arg0: i32) -> (i32, i32) {
    %c0_i32 = arith.constant 0 : i32
    %c0_i32_0 = arith.constant 0 : i32
    %c0_i32_1 = arith.constant 0 : i32
    return %c0_i32, %c0_i32_0 : i32, i32
  }
  func.func @transform_4(%arg0: i32) -> (i32, i32) {
    %c0_i32 = arith.constant 0 : i32
    %c0_i32_0 = arith.constant 0 : i32
    %c0_i32_1 = arith.constant 0 : i32
    return %c0_i32, %c0_i32_0 : i32, i32
  }
  func.func @transform_5(%arg0: i32) -> (i32, i32) {
    %c0_i32 = arith.constant 0 : i32
    %c0_i32_0 = arith.constant 0 : i32
    %c0_i32_1 = arith.constant 0 : i32
    return %c0_i32, %c0_i32_0 : i32, i32
  }
}

</mosaic_0001>

<llo_original>
// kernel: ram_conv1d_mx_forward.5
$region0: #{ram_conv1d_mx_forward.5}
  #allocation0 [shape = 'u32[]', space=smem, size = 0x4, offset = 0x4, fixed_abs, tag = 'smem constant byte address 0x4 - core index']
  #allocation1 [shape = 'u32[144,128]{1,0:T(1,128)}', space=vmem, size = 0x12000, scoped, tag = 'internal scratch']
  %s0 = inlined_call_operand.vmem [shape: bf16[8,1024], index: 0, kind: input, shape index: {}]
  %s1 = inlined_call_operand.vmem [shape: bf16[1024,14], index: 1, kind: input, shape index: {}]
  %s2 = inlined_call_operand.vmem [shape: f32[1,14], index: 2, kind: input, shape index: {}]
  %s3 = inlined_call_operand.vmem [shape: bf16[14,2], index: 3, kind: input, shape index: {}]
  %s4 = inlined_call_operand.vmem [shape: f32[1,2], index: 4, kind: input, shape index: {}]
  %s5 = inlined_call_operand.vmem [shape: f32[8,2], index: 5, kind: output, shape index: {}]
  %s6 = sld [smem:[#allocation0]]
  $region30: #{ram_conv1d_mx_forward.5} parent=0
    _
  %s8 = ssub.s32 1, %s6
  %s9 = scalar_select 0, %s8, %s6
  // Predicated region
  $region2: #{ram_conv1d_mx_forward.5} parent=0 // pred_check
    _
  $region3: #{ram_conv1d_mx_forward.5} parent=0 // pred_check_branch
    %11 = sbr.rel (0) target = $region5
  $region4: #{ram_conv1d_mx_forward.5} parent=0 // pred_region
    _
  $region5: #{ram_conv1d_mx_forward.5} parent=0 // pred_fallthru
    _
  // Predicated region
  $region6: #{ram_conv1d_mx_forward.5} parent=0 // pred_check
    _
  $region7: #{ram_conv1d_mx_forward.5} parent=0 // pred_check_branch
    %13 = sbr.rel (0) target = $region9
  $region8: #{ram_conv1d_mx_forward.5} parent=0 // pred_region
    _
  $region9: #{ram_conv1d_mx_forward.5} parent=0 // pred_fallthru
    _
  // Predicated region
  $region10: #{ram_conv1d_mx_forward.5} parent=0 // pred_check
    _
  $region11: #{ram_conv1d_mx_forward.5} parent=0 // pred_check_branch
    %15 = sbr.rel (0) target = $region13
  $region12: #{ram_conv1d_mx_forward.5} parent=0 // pred_region
    _
  $region13: #{ram_conv1d_mx_forward.5} parent=0 // pred_fallthru
    _
  // Predicated region
  $region14: #{ram_conv1d_mx_forward.5} parent=0 // pred_check
    _
  $region15: #{ram_conv1d_mx_forward.5} parent=0 // pred_check_branch
    %17 = sbr.rel (0) target = $region17
  $region16: #{ram_conv1d_mx_forward.5} parent=0 // pred_region
    _
  $region17: #{ram_conv1d_mx_forward.5} parent=0 // pred_fallthru
    _
  // Predicated region
  $region18: #{ram_conv1d_mx_forward.5} parent=0 // pred_check
    _
  $region19: #{ram_conv1d_mx_forward.5} parent=0 // pred_check_branch
    %19 = sbr.rel (0) target = $region21
  $region20: #{ram_conv1d_mx_forward.5} parent=0 // pred_region
    _
  $region21: #{ram_conv1d_mx_forward.5} parent=0 // pred_fallthru
    _
  %v21 = vld [vmem:[%s0] sm:$0xff]
  %v22 = vld [vmem:[%s0 + $0x8] sm:$0xff]
  %v23 = vld [vmem:[%s0 + $0x10] sm:$0xff]
  %v24 = vld [vmem:[%s0 + $0x18] sm:$0xff]
  %v25 = vld [vmem:[%s1] sm:$0xf]
  %v26 = vld [vmem:[%s1 + $0x4] sm:$0xf]
  %v27 = vld [vmem:[%s1 + $0x8] sm:$0xf]
  %v28 = vld [vmem:[%s1 + $0xc] sm:$0xf]
  %v29 = vld [vmem:[%s1 + $0x10] sm:$0xf]
  %v30 = vld [vmem:[%s1 + $0x14] sm:$0xf]
  %v31 = vld [vmem:[%s1 + $0x18] sm:$0xf]
  %v32 = vld [vmem:[%s1 + $0x1c] sm:$0xf]
  %v33 = vld [vmem:[%s1 + $0x20] sm:$0xf]
  %v34 = vld [vmem:[%s1 + $0x24] sm:$0xf]
  %v35 = vld [vmem:[%s1 + $0x28] sm:$0xf]
  %v36 = vld [vmem:[%s1 + $0x2c] sm:$0xf]
  %v37 = vld [vmem:[%s1 + $0x30] sm:$0xf]
  %v38 = vld [vmem:[%s1 + $0x34] sm:$0xf]
  %v39 = vld [vmem:[%s1 + $0x38] sm:$0xf]
  %v40 = vld [vmem:[%s1 + $0x3c] sm:$0xf]
  %v41 = vld [vmem:[%s1 + $0x40] sm:$0xf]
  %v42 = vld [vmem:[%s1 + $0x44] sm:$0xf]
  %v43 = vld [vmem:[%s1 + $0x48] sm:$0xf]
  %v44 = vld [vmem:[%s1 + $0x4c] sm:$0xf]
  %v45 = vld [vmem:[%s1 + $0x50] sm:$0xf]
  %v46 = vld [vmem:[%s1 + $0x54] sm:$0xf]
  %v47 = vld [vmem:[%s1 + $0x58] sm:$0xf]
  %v48 = vld [vmem:[%s1 + $0x5c] sm:$0xf]
  %v49 = vld [vmem:[%s1 + $0x60] sm:$0xf]
  %v50 = vld [vmem:[%s1 + $0x64] sm:$0xf]
  %v51 = vld [vmem:[%s1 + $0x68] sm:$0xf]
  %v52 = vld [vmem:[%s1 + $0x6c] sm:$0xf]
  %v53 = vld [vmem:[%s1 + $0x70] sm:$0xf]
  %v54 = vld [vmem:[%s1 + $0x74] sm:$0xf]
  %v55 = vld [vmem:[%s1 + $0x78] sm:$0xf]
  %v56 = vld [vmem:[%s1 + $0x7c] sm:$0xf]
  %v57 = vld [vmem:[%s1 + $0x80] sm:$0xf]
  %v58 = vld [vmem:[%s1 + $0x84] sm:$0xf]
  %v59 = vld [vmem:[%s1 + $0x88] sm:$0xf]
  %v60 = vld [vmem:[%s1 + $0x8c] sm:$0xf]
  %v61 = vld [vmem:[%s1 + $0x90] sm:$0xf]
  %v62 = vld [vmem:[%s1 + $0x94] sm:$0xf]
  %v63 = vld [vmem:[%s1 + $0x98] sm:$0xf]
  %v64 = vld [vmem:[%s1 + $0x9c] sm:$0xf]
  %v65 = vld [vmem:[%s1 + $0xa0] sm:$0xf]
  %v66 = vld [vmem:[%s1 + $0xa4] sm:$0xf]
  %v67 = vld [vmem:[%s1 + $0xa8] sm:$0xf]
  %v68 = vld [vmem:[%s1 + $0xac] sm:$0xf]
  %v69 = vld [vmem:[%s1 + $0xb0] sm:$0xf]
  %v70 = vld [vmem:[%s1 + $0xb4] sm:$0xf]
  %v71 = vld [vmem:[%s1 + $0xb8] sm:$0xf]
  %v72 = vld [vmem:[%s1 + $0xbc] sm:$0xf]
  %v73 = vld [vmem:[%s1 + $0xc0] sm:$0xf]
  %v74 = vld [vmem:[%s1 + $0xc4] sm:$0xf]
  %v75 = vld [vmem:[%s1 + $0xc8] sm:$0xf]
  %v76 = vld [vmem:[%s1 + $0xcc] sm:$0xf]
  %v77 = vld [vmem:[%s1 + $0xd0] sm:$0xf]
  %v78 = vld [vmem:[%s1 + $0xd4] sm:$0xf]
  %v79 = vld [vmem:[%s1 + $0xd8] sm:$0xf]
  %v80 = vld [vmem:[%s1 + $0xdc] sm:$0xf]
  %v81 = vld [vmem:[%s1 + $0xe0] sm:$0xf]
  %v82 = vld [vmem:[%s1 + $0xe4] sm:$0xf]
  %v83 = vld [vmem:[%s1 + $0xe8] sm:$0xf]
  %v84 = vld [vmem:[%s1 + $0xec] sm:$0xf]
  %v85 = vld [vmem:[%s1 + $0xf0] sm:$0xf]
  %v86 = vld [vmem:[%s1 + $0xf4] sm:$0xf]
  %v87 = vld [vmem:[%s1 + $0xf8] sm:$0xf]
  %v88 = vld [vmem:[%s1 + $0xfc] sm:$0xf]
  %v89 = vld [vmem:[%s1 + $0x100] sm:$0xf]
  %v90 = vld [vmem:[%s1 + $0x104] sm:$0xf]
  %v91 = vld [vmem:[%s1 + $0x108] sm:$0xf]
  %v92 = vld [vmem:[%s1 + $0x10c] sm:$0xf]
  %v93 = vld [vmem:[%s1 + $0x110] sm:$0xf]
  %v94 = vld [vmem:[%s1 + $0x114] sm:$0xf]
  %v95 = vld [vmem:[%s1 + $0x118] sm:$0xf]
  %v96 = vld [vmem:[%s1 + $0x11c] sm:$0xf]
  %v97 = vld [vmem:[%s1 + $0x120] sm:$0xf]
  %v98 = vld [vmem:[%s1 + $0x124] sm:$0xf]
  %v99 = vld [vmem:[%s1 + $0x128] sm:$0xf]
  %v100 = vld [vmem:[%s1 + $0x12c] sm:$0xf]
  %v101 = vld [vmem:[%s1 + $0x130] sm:$0xf]
  %v102 = vld [vmem:[%s1 + $0x134] sm:$0xf]
  %v103 = vld [vmem:[%s1 + $0x138] sm:$0xf]
  %v104 = vld [vmem:[%s1 + $0x13c] sm:$0xf]
  %v105 = vld [vmem:[%s1 + $0x140] sm:$0xf]
  %v106 = vld [vmem:[%s1 + $0x144] sm:$0xf]
  %v107 = vld [vmem:[%s1 + $0x148] sm:$0xf]
  %v108 = vld [vmem:[%s1 + $0x14c] sm:$0xf]
  %v109 = vld [vmem:[%s1 + $0x150] sm:$0xf]
  %v110 = vld [vmem:[%s1 + $0x154] sm:$0xf]
  %v111 = vld [vmem:[%s1 + $0x158] sm:$0xf]
  %v112 = vld [vmem:[%s1 + $0x15c] sm:$0xf]
  %v113 = vld [vmem:[%s1 + $0x160] sm:$0xf]
  %v114 = vld [vmem:[%s1 + $0x164] sm:$0xf]
  %v115 = vld [vmem:[%s1 + $0x168] sm:$0xf]
  %v116 = vld [vmem:[%s1 + $0x16c] sm:$0xf]
  %v117 = vld [vmem:[%s1 + $0x170] sm:$0xf]
  %v118 = vld [vmem:[%s1 + $0x174] sm:$0xf]
  %v119 = vld [vmem:[%s1 + $0x178] sm:$0xf]
  %v120 = vld [vmem:[%s1 + $0x17c] sm:$0xf]
  %v121 = vld [vmem:[%s1 + $0x180] sm:$0xf]
  %v122 = vld [vmem:[%s1 + $0x184] sm:$0xf]
  %v123 = vld [vmem:[%s1 + $0x188] sm:$0xf]
  %v124 = vld [vmem:[%s1 + $0x18c] sm:$0xf]
  %v125 = vld [vmem:[%s1 + $0x190] sm:$0xf]
  %v126 = vld [vmem:[%s1 + $0x194] sm:$0xf]
  %v127 = vld [vmem:[%s1 + $0x198] sm:$0xf]
  %v128 = vld [vmem:[%s1 + $0x19c] sm:$0xf]
  %v129 = vld [vmem:[%s1 + $0x1a0] sm:$0xf]
  %v130 = vld [vmem:[%s1 + $0x1a4] sm:$0xf]
  %v131 = vld [vmem:[%s1 + $0x1a8] sm:$0xf]
  %v132 = vld [vmem:[%s1 + $0x1ac] sm:$0xf]
  %v133 = vld [vmem:[%s1 + $0x1b0] sm:$0xf]
  %v134 = vld [vmem:[%s1 + $0x1b4] sm:$0xf]
  %v135 = vld [vmem:[%s1 + $0x1b8] sm:$0xf]
  %v136 = vld [vmem:[%s1 + $0x1bc] sm:$0xf]
  %v137 = vld [vmem:[%s1 + $0x1c0] sm:$0xf]
  %v138 = vld [vmem:[%s1 + $0x1c4] sm:$0xf]
  %v139 = vld [vmem:[%s1 + $0x1c8] sm:$0xf]
  %v140 = vld [vmem:[%s1 + $0x1cc] sm:$0xf]
  %v141 = vld [vmem:[%s1 + $0x1d0] sm:$0xf]
  %v142 = vld [vmem:[%s1 + $0x1d4] sm:$0xf]
  %v143 = vld [vmem:[%s1 + $0x1d8] sm:$0xf]
  %v144 = vld [vmem:[%s1 + $0x1dc] sm:$0xf]
  %v145 = vld [vmem:[%s1 + $0x1e0] sm:$0xf]
  %v146 = vld [vmem:[%s1 + $0x1e4] sm:$0xf]
  %v147 = vld [vmem:[%s1 + $0x1e8] sm:$0xf]
  %v148 = vld [vmem:[%s1 + $0x1ec] sm:$0xf]
  %v149 = vld [vmem:[%s1 + $0x1f0] sm:$0xf]
  %v150 = vld [vmem:[%s1 + $0x1f4] sm:$0xf]
  %v151 = vld [vmem:[%s1 + $0x1f8] sm:$0xf]
  %v152 = vld [vmem:[%s1 + $0x1fc] sm:$0xf]
  %v153 = vld [vmem:[%s2] sm:$0x1]
  %v155 = vlaneseq
  %v156 = vshrl.u32 %v155, 7
  %v157 = vsub.s32 0, %v156
  %v158 = vrot.slane %v153, %v157
  %v164 = vunpack.c.l.b16 %v21
  %v165 = vunpack.c.h.b16 %v21
  %v166 = vunpack.c.l.b16 %v22
  %v167 = vunpack.c.h.b16 %v22
  %v168 = vunpack.c.l.b16 %v23
  %v169 = vunpack.c.h.b16 %v23
  %v170 = vunpack.c.l.b16 %v24
  %v171 = vunpack.c.h.b16 %v24
  %v172 = vpack.c.b16 %v164, %v164
  %v173 = vpack.c.b16 %v165, %v165
  %v174 = vpack.c.b16 %v166, %v166
  %v175 = vpack.c.b16 %v167, %v167
  %v176 = vpack.c.b16 %v168, %v168
  %v177 = vpack.c.b16 %v169, %v169
  %v178 = vpack.c.b16 %v170, %v170
  %v179 = vpack.c.b16 %v171, %v171
  %v316 = vunpack.c.l.b16 %v25
  %v317 = vunpack.c.l.b16 %v26
  %v318 = vunpack.c.l.b16 %v27
  %v319 = vunpack.c.l.b16 %v28
  %v320 = vunpack.c.l.b16 %v29
  %v321 = vunpack.c.l.b16 %v30
  %v322 = vunpack.c.l.b16 %v31
  %v323 = vunpack.c.l.b16 %v32
  %v324 = vunpack.c.l.b16 %v33
  %v325 = vunpack.c.l.b16 %v34
  %v326 = vunpack.c.l.b16 %v35
  %v327 = vunpack.c.l.b16 %v36
  %v328 = vunpack.c.l.b16 %v37
  %v329 = vunpack.c.l.b16 %v38
  %v330 = vunpack.c.l.b16 %v39
  %v331 = vunpack.c.l.b16 %v40
  %v332 = vunpack.c.l.b16 %v41
  %v333 = vunpack.c.l.b16 %v42
  %v334 = vunpack.c.l.b16 %v43
  %v335 = vunpack.c.l.b16 %v44
  %v336 = vunpack.c.l.b16 %v45
  %v337 = vunpack.c.l.b16 %v46
  %v338 = vunpack.c.l.b16 %v47
  %v339 = vunpack.c.l.b16 %v48
  %v340 = vunpack.c.l.b16 %v49
  %v341 = vunpack.c.l.b16 %v50
  %v342 = vunpack.c.l.b16 %v51
  %v343 = vunpack.c.l.b16 %v52
  %v344 = vunpack.c.l.b16 %v53
  %v345 = vunpack.c.l.b16 %v54
  %v346 = vunpack.c.l.b16 %v55
  %v347 = vunpack.c.l.b16 %v56
  %v348 = vunpack.c.l.b16 %v57
  %v349 = vunpack.c.l.b16 %v58
  %v350 = vunpack.c.l.b16 %v59
  %v351 = vunpack.c.l.b16 %v60
  %v352 = vunpack.c.l.b16 %v61
  %v353 = vunpack.c.l.b16 %v62
  %v354 = vunpack.c.l.b16 %v63
  %v355 = vunpack.c.l.b16 %v64
  %v356 = vunpack.c.l.b16 %v65
  %v357 = vunpack.c.l.b16 %v66
  %v358 = vunpack.c.l.b16 %v67
  %v359 = vunpack.c.l.b16 %v68
  %v360 = vunpack.c.l.b16 %v69
  %v361 = vunpack.c.l.b16 %v70
  %v362 = vunpack.c.l.b16 %v71
  %v363 = vunpack.c.l.b16 %v72
  %v364 = vunpack.c.l.b16 %v73
  %v365 = vunpack.c.l.b16 %v74
  %v366 = vunpack.c.l.b16 %v75
  %v367 = vunpack.c.l.b16 %v76
  %v368 = vunpack.c.l.b16 %v77
  %v369 = vunpack.c.l.b16 %v78
  %v370 = vunpack.c.l.b16 %v79
  %v371 = vunpack.c.l.b16 %v80
  %v372 = vunpack.c.l.b16 %v81
  %v373 = vunpack.c.l.b16 %v82
  %v374 = vunpack.c.l.b16 %v83
  %v375 = vunpack.c.l.b16 %v84
  %v376 = vunpack.c.l.b16 %v85
  %v377 = vunpack.c.l.b16 %v86
  %v378 = vunpack.c.l.b16 %v87
  %v379 = vunpack.c.l.b16 %v88
  %v380 = vunpack.c.l.b16 %v89
  %v381 = vunpack.c.l.b16 %v90
  %v382 = vunpack.c.l.b16 %v91
  %v383 = vunpack.c.l.b16 %v92
  %v384 = vunpack.c.l.b16 %v93
  %v385 = vunpack.c.l.b16 %v94
  %v386 = vunpack.c.l.b16 %v95
  %v387 = vunpack.c.l.b16 %v96
  %v388 = vunpack.c.l.b16 %v97
  %v389 = vunpack.c.l.b16 %v98
  %v390 = vunpack.c.l.b16 %v99
  %v391 = vunpack.c.l.b16 %v100
  %v392 = vunpack.c.l.b16 %v101
  %v393 = vunpack.c.l.b16 %v102
  %v394 = vunpack.c.l.b16 %v103
  %v395 = vunpack.c.l.b16 %v104
  %v396 = vunpack.c.l.b16 %v105
  %v397 = vunpack.c.l.b16 %v106
  %v398 = vunpack.c.l.b16 %v107
  %v399 = vunpack.c.l.b16 %v108
  %v400 = vunpack.c.l.b16 %v109
  %v401 = vunpack.c.l.b16 %v110
  %v402 = vunpack.c.l.b16 %v111
  %v403 = vunpack.c.l.b16 %v112
  %v404 = vunpack.c.l.b16 %v113
  %v405 = vunpack.c.l.b16 %v114
  %v406 = vunpack.c.l.b16 %v115
  %v407 = vunpack.c.l.b16 %v116
  %v408 = vunpack.c.l.b16 %v117
  %v409 = vunpack.c.l.b16 %v118
  %v410 = vunpack.c.l.b16 %v119
  %v411 = vunpack.c.l.b16 %v120
  %v412 = vunpack.c.l.b16 %v121
  %v413 = vunpack.c.l.b16 %v122
  %v414 = vunpack.c.l.b16 %v123
  %v415 = vunpack.c.l.b16 %v124
  %v416 = vunpack.c.l.b16 %v125
  %v417 = vunpack.c.l.b16 %v126
  %v418 = vunpack.c.l.b16 %v127
  %v419 = vunpack.c.l.b16 %v128
  %v420 = vunpack.c.l.b16 %v129
  %v421 = vunpack.c.l.b16 %v130
  %v422 = vunpack.c.l.b16 %v131
  %v423 = vunpack.c.l.b16 %v132
  %v424 = vunpack.c.l.b16 %v133
  %v425 = vunpack.c.l.b16 %v134
  %v426 = vunpack.c.l.b16 %v135
  %v427 = vunpack.c.l.b16 %v136
  %v428 = vunpack.c.l.b16 %v137
  %v429 = vunpack.c.l.b16 %v138
  %v430 = vunpack.c.l.b16 %v139
  %v431 = vunpack.c.l.b16 %v140
  %v432 = vunpack.c.l.b16 %v141
  %v433 = vunpack.c.l.b16 %v142
  %v434 = vunpack.c.l.b16 %v143
  %v435 = vunpack.c.l.b16 %v144
  %v436 = vunpack.c.l.b16 %v145
  %v437 = vunpack.c.l.b16 %v146
  %v438 = vunpack.c.l.b16 %v147
  %v439 = vunpack.c.l.b16 %v148
  %v440 = vunpack.c.l.b16 %v149
  %v441 = vunpack.c.l.b16 %v150
  %v442 = vunpack.c.l.b16 %v151
  %v443 = vunpack.c.l.b16 %v152
  %v444 = vpack.c.b16 %v317, %v316
  %v445 = vpack.c.b16 %v319, %v318
  %v446 = vpack.c.b16 %v321, %v320
  %v447 = vpack.c.b16 %v323, %v322
  %v448 = vpack.c.b16 %v325, %v324
  %v449 = vpack.c.b16 %v327, %v326
  %v450 = vpack.c.b16 %v329, %v328
  %v451 = vpack.c.b16 %v331, %v330
  %v452 = vpack.c.b16 %v333, %v332
  %v453 = vpack.c.b16 %v335, %v334
  %v454 = vpack.c.b16 %v337, %v336
  %v455 = vpack.c.b16 %v339, %v338
  %v456 = vpack.c.b16 %v341, %v340
  %v457 = vpack.c.b16 %v343, %v342
  %v458 = vpack.c.b16 %v345, %v344
  %v459 = vpack.c.b16 %v347, %v346
  %v460 = vpack.c.b16 %v349, %v348
  %v461 = vpack.c.b16 %v351, %v350
  %v462 = vpack.c.b16 %v353, %v352
  %v463 = vpack.c.b16 %v355, %v354
  %v464 = vpack.c.b16 %v357, %v356
  %v465 = vpack.c.b16 %v359, %v358
  %v466 = vpack.c.b16 %v361, %v360
  %v467 = vpack.c.b16 %v363, %v362
  %v468 = vpack.c.b16 %v365, %v364
  %v469 = vpack.c.b16 %v367, %v366
  %v470 = vpack.c.b16 %v369, %v368
  %v471 = vpack.c.b16 %v371, %v370
  %v472 = vpack.c.b16 %v373, %v372
  %v473 = vpack.c.b16 %v375, %v374
  %v474 = vpack.c.b16 %v377, %v376
  %v475 = vpack.c.b16 %v379, %v378
  %v476 = vpack.c.b16 %v381, %v380
  %v477 = vpack.c.b16 %v383, %v382
  %v478 = vpack.c.b16 %v385, %v384
  %v479 = vpack.c.b16 %v387, %v386
  %v480 = vpack.c.b16 %v389, %v388
  %v481 = vpack.c.b16 %v391, %v390
  %v482 = vpack.c.b16 %v393, %v392
  %v483 = vpack.c.b16 %v395, %v394
  %v484 = vpack.c.b16 %v397, %v396
  %v485 = vpack.c.b16 %v399, %v398
  %v486 = vpack.c.b16 %v401, %v400
  %v487 = vpack.c.b16 %v403, %v402
  %v488 = vpack.c.b16 %v405, %v404
  %v489 = vpack.c.b16 %v407, %v406
  %v490 = vpack.c.b16 %v409, %v408
  %v491 = vpack.c.b16 %v411, %v410
  %v492 = vpack.c.b16 %v413, %v412
  %v493 = vpack.c.b16 %v415, %v414
  %v494 = vpack.c.b16 %v417, %v416
  %v495 = vpack.c.b16 %v419, %v418
  %v496 = vpack.c.b16 %v421, %v420
  %v497 = vpack.c.b16 %v423, %v422
  %v498 = vpack.c.b16 %v425, %v424
  %v499 = vpack.c.b16 %v427, %v426
  %v500 = vpack.c.b16 %v429, %v428
  %v501 = vpack.c.b16 %v431, %v430
  %v502 = vpack.c.b16 %v433, %v432
  %v503 = vpack.c.b16 %v435, %v434
  %v504 = vpack.c.b16 %v437, %v436
  %v505 = vpack.c.b16 %v439, %v438
  %v506 = vpack.c.b16 %v441, %v440
  %v507 = vpack.c.b16 %v443, %v442
  %572 = vmatprep.subr.bf16.mxu0 0
  %573 = vmatpush1.bf16.msra.mxu0 %v444
  %574 = vmatprep.subr.bf16.mxu0 0
  %575 = vmatpush1.bf16.msra.mxu0 %v445
  %576 = vmatprep.subr.bf16.mxu0 0
  %577 = vmatpush1.bf16.msra.mxu0 %v446
  %578 = vmatprep.subr.bf16.mxu0 0
  %579 = vmatpush1.bf16.msra.mxu0 %v447
  %580 = vmatprep.subr.bf16.mxu0 0
  %581 = vmatpush1.bf16.msra.mxu0 %v448
  %582 = vmatprep.subr.bf16.mxu0 0
  %583 = vmatpush1.bf16.msra.mxu0 %v449
  %584 = vmatprep.subr.bf16.mxu0 0
  %585 = vmatpush1.bf16.msra.mxu0 %v450
  %586 = vmatprep.subr.bf16.mxu0 0
  %587 = vmatpush1.bf16.msra.mxu0 %v451
  %588 = vmatprep.subr.bf16.mxu0 0
  %589 = vmatpush1.bf16.msra.mxu0 %v452
  %590 = vmatprep.subr.bf16.mxu0 0
  %591 = vmatpush1.bf16.msra.mxu0 %v453
  %592 = vmatprep.subr.bf16.mxu0 0
  %593 = vmatpush1.bf16.msra.mxu0 %v454
  %594 = vmatprep.subr.bf16.mxu0 0
  %595 = vmatpush1.bf16.msra.mxu0 %v455
  %596 = vmatprep.subr.bf16.mxu0 0
  %597 = vmatpush1.bf16.msra.mxu0 %v456
  %598 = vmatprep.subr.bf16.mxu0 0
  %599 = vmatpush1.bf16.msra.mxu0 %v457
  %600 = vmatprep.subr.bf16.mxu0 0
  %601 = vmatpush1.bf16.msra.mxu0 %v458
  %602 = vmatprep.subr.bf16.mxu0 0
  %603 = vmatpush1.bf16.msra.mxu0 %v459
  %604 = vmatprep.mubr.bf16.mxu0 %v173
  %605 = vmatmul.mubr.bf16.gmra.mrb[0].mxu0 %v172
  %v606 = vpop.f32.mrb[0].mxu0
  %v607 = vadd.f32 %v158, %v606
  %v608 = vpop.f32.mrb[0].mxu0
  %v609 = vpop.f32.mrb[0].mxu0
  %v610 = vpop.f32.mrb[0].mxu0
  %611 = vdwg.mxu0
  %612 = vmatprep.subr.bf16.mxu0 0
  %613 = vmatpush1.bf16.msra.mxu0 %v460
  %614 = vmatprep.subr.bf16.mxu0 0
  %615 = vmatpush1.bf16.msra.mxu0 %v461
  %616 = vmatprep.subr.bf16.mxu0 0
  %617 = vmatpush1.bf16.msra.mxu0 %v462
  %618 = vmatprep.subr.bf16.mxu0 0
  %619 = vmatpush1.bf16.msra.mxu0 %v463
  %620 = vmatprep.subr.bf16.mxu0 0
  %621 = vmatpush1.bf16.msra.mxu0 %v464
  %622 = vmatprep.subr.bf16.mxu0 0
  %623 = vmatpush1.bf16.msra.mxu0 %v465
  %624 = vmatprep.subr.bf16.mxu0 0
  %625 = vmatpush1.bf16.msra.mxu0 %v466
  %626 = vmatprep.subr.bf16.mxu0 0
  %627 = vmatpush1.bf16.msra.mxu0 %v467
  %628 = vmatprep.subr.bf16.mxu0 0
  %629 = vmatpush1.bf16.msra.mxu0 %v468
  %630 = vmatprep.subr.bf16.mxu0 0
  %631 = vmatpush1.bf16.msra.mxu0 %v469
  %632 = vmatprep.subr.bf16.mxu0 0
  %633 = vmatpush1.bf16.msra.mxu0 %v470
  %634 = vmatprep.subr.bf16.mxu0 0
  %635 = vmatpush1.bf16.msra.mxu0 %v471
  %636 = vmatprep.subr.bf16.mxu0 0
  %637 = vmatpush1.bf16.msra.mxu0 %v472
  %638 = vmatprep.subr.bf16.mxu0 0
  %639 = vmatpush1.bf16.msra.mxu0 %v473
  %640 = vmatprep.subr.bf16.mxu0 0
  %641 = vmatpush1.bf16.msra.mxu0 %v474
  %642 = vmatprep.subr.bf16.mxu0 0
  %643 = vmatpush1.bf16.msra.mxu0 %v475
  %644 = vmatprep.mubr.bf16.mxu0 %v175
  %645 = vmatmul.mubr.bf16.gmra.mrb[0].mxu0 %v174
  %v646 = vpop.f32.mrb[0].mxu0
  %v647 = vadd.f32 %v607, %v646
  %v648 = vpop.f32.mrb[0].mxu0
  %v649 = vpop.f32.mrb[0].mxu0
  %v650 = vpop.f32.mrb[0].mxu0
  %651 = vdwg.mxu0
  %652 = vmatprep.subr.bf16.mxu0 0
  %653 = vmatpush1.bf16.msra.mxu0 %v476
  %654 = vmatprep.subr.bf16.mxu0 0
  %655 = vmatpush1.bf16.msra.mxu0 %v477
  %656 = vmatprep.subr.bf16.mxu0 0
  %657 = vmatpush1.bf16.msra.mxu0 %v478
  %658 = vmatprep.subr.bf16.mxu0 0
  %659 = vmatpush1.bf16.msra.mxu0 %v479
  %660 = vmatprep.subr.bf16.mxu0 0
  %661 = vmatpush1.bf16.msra.mxu0 %v480
  %662 = vmatprep.subr.bf16.mxu0 0
  %663 = vmatpush1.bf16.msra.mxu0 %v481
  %664 = vmatprep.subr.bf16.mxu0 0
  %665 = vmatpush1.bf16.msra.mxu0 %v482
  %666 = vmatprep.subr.bf16.mxu0 0
  %667 = vmatpush1.bf16.msra.mxu0 %v483
  %668 = vmatprep.subr.bf16.mxu0 0
  %669 = vmatpush1.bf16.msra.mxu0 %v484
  %670 = vmatprep.subr.bf16.mxu0 0
  %671 = vmatpush1.bf16.msra.mxu0 %v485
  %672 = vmatprep.subr.bf16.mxu0 0
  %673 = vmatpush1.bf16.msra.mxu0 %v486
  %674 = vmatprep.subr.bf16.mxu0 0
  %675 = vmatpush1.bf16.msra.mxu0 %v487
  %676 = vmatprep.subr.bf16.mxu0 0
  %677 = vmatpush1.bf16.msra.mxu0 %v488
  %678 = vmatprep.subr.bf16.mxu0 0
  %679 = vmatpush1.bf16.msra.mxu0 %v489
  %680 = vmatprep.subr.bf16.mxu0 0
  %681 = vmatpush1.bf16.msra.mxu0 %v490
  %682 = vmatprep.subr.bf16.mxu0 0
  %683 = vmatpush1.bf16.msra.mxu0 %v491
  %684 = vmatprep.mubr.bf16.mxu0 %v177
  %685 = vmatmul.mubr.bf16.gmra.mrb[0].mxu0 %v176
  %v686 = vpop.f32.mrb[0].mxu0
  %v687 = vadd.f32 %v647, %v686
  %v688 = vpop.f32.mrb[0].mxu0
  %v689 = vpop.f32.mrb[0].mxu0
  %v690 = vpop.f32.mrb[0].mxu0
  %691 = vdwg.mxu0
  %692 = vmatprep.subr.bf16.mxu0 0
  %693 = vmatpush1.bf16.msra.mxu0 %v492
  %694 = vmatprep.subr.bf16.mxu0 0
  %695 = vmatpush1.bf16.msra.mxu0 %v493
  %696 = vmatprep.subr.bf16.mxu0 0
  %697 = vmatpush1.bf16.msra.mxu0 %v494
  %698 = vmatprep.subr.bf16.mxu0 0
  %699 = vmatpush1.bf16.msra.mxu0 %v495
  %700 = vmatprep.subr.bf16.mxu0 0
  %701 = vmatpush1.bf16.msra.mxu0 %v496
  %702 = vmatprep.subr.bf16.mxu0 0
  %703 = vmatpush1.bf16.msra.mxu0 %v497
  %704 = vmatprep.subr.bf16.mxu0 0
  %705 = vmatpush1.bf16.msra.mxu0 %v498
  %706 = vmatprep.subr.bf16.mxu0 0
  %707 = vmatpush1.bf16.msra.mxu0 %v499
  %708 = vmatprep.subr.bf16.mxu0 0
  %709 = vmatpush1.bf16.msra.mxu0 %v500
  %710 = vmatprep.subr.bf16.mxu0 0
  %711 = vmatpush1.bf16.msra.mxu0 %v501
  %712 = vmatprep.subr.bf16.mxu0 0
  %713 = vmatpush1.bf16.msra.mxu0 %v502
  %714 = vmatprep.subr.bf16.mxu0 0
  %715 = vmatpush1.bf16.msra.mxu0 %v503
  %716 = vmatprep.subr.bf16.mxu0 0
  %717 = vmatpush1.bf16.msra.mxu0 %v504
  %718 = vmatprep.subr.bf16.mxu0 0
  %719 = vmatpush1.bf16.msra.mxu0 %v505
  %720 = vmatprep.subr.bf16.mxu0 0
  %721 = vmatpush1.bf16.msra.mxu0 %v506
  %722 = vmatprep.subr.bf16.mxu0 0
  %723 = vmatpush1.bf16.msra.mxu0 %v507
  %724 = vmatprep.mubr.bf16.mxu0 %v179
  %725 = vmatmul.mubr.bf16.gmra.mrb[0].mxu0 %v178
  %v726 = vpop.f32.mrb[0].mxu0
  %v727 = vadd.f32 %v687, %v726
  %v728 = vpop.f32.mrb[0].mxu0
  %v729 = vpop.f32.mrb[0].mxu0
  %v730 = vpop.f32.mrb[0].mxu0
  %731 = vdwg.mxu0
  %v732 = vmax.f32 %v727, 0.0
  %v733 = vpack.c.bf16 %v732, %v732
  %v734 = vld [vmem:[%s3] sm:$0xf]
  %v735 = vld [vmem:[%s3 + $0x4] sm:$0x7]
  %v736 = vld [vmem:[%s4] sm:$0x1]
  %v738 = vlaneseq
  %v739 = vshrl.u32 %v738, 7
  %v740 = vsub.s32 0, %v739
  %v741 = vrot.slane %v736, %v740
  %v745 = vunpack.c.l.b16 %v734
  %v746 = vunpack.c.l.b16 %v735
  %v747 = vpack.c.b16 %v746, %v745
  %vm748 = vcmask 113664
  %v750 = vsel %vm748, %v733, 0
  %vm752 = vcmask 1046528
  %v754 = vsel %vm752, %v747, 0
  %756 = vmatprep.subr.bf16.mxu0 0
  %757 = vmatpush1.bf16.msra.mxu0 %v754
  %758 = vmatprep.subr.bf16.mxu0 0
  %759 = vmatpush1.bf16.msra.mxu0 0
  %760 = vmatprep.subr.bf16.mxu0 0
  %761 = vmatpush1.bf16.msra.mxu0 0
  %762 = vmatprep.subr.bf16.mxu0 0
  %763 = vmatpush1.bf16.msra.mxu0 0
  %764 = vmatprep.subr.bf16.mxu0 0
  %765 = vmatpush1.bf16.msra.mxu0 0
  %766 = vmatprep.subr.bf16.mxu0 0
  %767 = vmatpush1.bf16.msra.mxu0 0
  %768 = vmatprep.subr.bf16.mxu0 0
  %769 = vmatpush1.bf16.msra.mxu0 0
  %770 = vmatprep.subr.bf16.mxu0 0
  %771 = vmatpush1.bf16.msra.mxu0 0
  %772 = vmatprep.subr.bf16.mxu0 0
  %773 = vmatpush1.bf16.msra.mxu0 0
  %774 = vmatprep.subr.bf16.mxu0 0
  %775 = vmatpush1.bf16.msra.mxu0 0
  %776 = vmatprep.subr.bf16.mxu0 0
  %777 = vmatpush1.bf16.msra.mxu0 0
  %778 = vmatprep.subr.bf16.mxu0 0
  %779 = vmatpush1.bf16.msra.mxu0 0
  %780 = vmatprep.subr.bf16.mxu0 0
  %781 = vmatpush1.bf16.msra.mxu0 0
  %782 = vmatprep.subr.bf16.mxu0 0
  %783 = vmatpush1.bf16.msra.mxu0 0
  %784 = vmatprep.subr.bf16.mxu0 0
  %785 = vmatpush1.bf16.msra.mxu0 0
  %786 = vmatprep.subr.bf16.mxu0 0
  %787 = vmatpush1.bf16.msra.mxu0 0
  %788 = vmatprep.mubr.bf16.mxu0 0
  %789 = vmatmul.mubr.bf16.gmra.mrb[0].mxu0 %v750
  %v790 = vpop.f32.mrb[0].mxu0
  %v791 = vadd.f32 %v741, %v790
  %v792 = vpop.f32.mrb[0].mxu0
  %v793 = vpop.f32.mrb[0].mxu0
  %v794 = vpop.f32.mrb[0].mxu0
  %795 = vdwg.mxu0
  %vm796 = vcmask 15360
  %797 = vst.msk [vmem:[%s5] sm:$0xff] %vm796, %v791
  // Predicated region
  $region22: #{ram_conv1d_mx_forward.5} parent=0 // pred_check
    _
  $region23: #{ram_conv1d_mx_forward.5} parent=0 // pred_check_branch
    %799 = sbr.rel (0) target = $region25
  $region24: #{ram_conv1d_mx_forward.5} parent=0 // pred_region
    _
  $region25: #{ram_conv1d_mx_forward.5} parent=0 // pred_fallthru
    _
  // Predicated region
  $region26: #{ram_conv1d_mx_forward.5} parent=0 // pred_check
    _
  $region27: #{ram_conv1d_mx_forward.5} parent=0 // pred_check_branch
    %801 = sbr.rel (0) target = $region29
  $region28: #{ram_conv1d_mx_forward.5} parent=0 // pred_region
    _
  $region29: #{ram_conv1d_mx_forward.5} parent=0 // pred_fallthru
    _

// kernel: ram_conv1d_mx_forward.4
$region0: #{ram_conv1d_mx_forward.4}
  #allocation0 [shape = 'u32[]', space=smem, size = 0x4, offset = 0x4, fixed_abs, tag = 'smem constant byte address 0x4 - core index']
  #allocation1 [shape = 'u32[144,128]{1,0:T(1,128)}', space=vmem, size = 0x12000, scoped, tag = 'internal scratch']
  #allocation2 [shape = 'f32[8,512]{1,0:T(8,128)}', space=vmem, size = 0x4000, scoped, tag = 'scratch operand']
  %s0 = inlined_call_operand.vmem [shape: bf16[8,512], index: 0, kind: input, shape index: {}]
  %s1 = inlined_call_operand.hbm [shape: bf16[512,1024], index: 1, kind: input, shape index: {}]
  %s2 = inlined_call_operand.vmem [shape: f32[1,1024], index: 2, kind: input, shape index: {}]
  %s3 = inlined_call_operand.vmem [shape: bf16[8,1024], index: 3, kind: output, shape index: {}]
  %s4 = sld [smem:[#allocation0]]
  $region57: #{ram_conv1d_mx_forward.4} parent=0
    _
  %s6 = ssub.s32 1, %s4
  %s7 = scalar_select 0, %s6, %s4
  $region1: #{ram_conv1d_mx_forward.4} parent=0
    #allocation3 [shape = 'u8[1048576]{0}', space=vmem, size = 0x100000, scoped, tag = 'input window, operand 1']
    #allocation4 [shape = 's32[2]{0}', space=sflag, size = 0x8, scoped, tag = 'scoped memory for ram_conv1d_mx_forward.4']
    %8 = vsyncpa [#allocation4], 0
    %s9 = scalar_lea.sflag [#allocation4], 1
    %10 = vsyncpa %s9, 0
    loop: start=0, step=1, limit=4
    $region2: #{ram_conv1d_mx_forward.4} parent=1 // loop_pre_header
      _
    $region3: #{ram_conv1d_mx_forward.4} parent=1 // loop_header
      %s12 = sphi 0, %s16
      %p13 = scmp.ge.s32.totalorder %s12, 4
      %s19 = sphi 0, %s31
      %s20 = sphi 0, %s27
      %s21 = sphi 0, %s19
      %s22 = sphi 0, %s20
      %s23 = sphi 0, %s21
      %s24 = sphi 0, %s22
      %s34 = sphi 0, %s36
      %s37 = sphi 0, %s34
      %s38 = sphi 0, %s37
      %s54 = sphi 0, %s38
      %s62 = sphi 0, %s64
      %s65 = sphi 0, %s62
      %s66 = sphi 0, %s65
      %s82 = sphi 0, %s66
      %s88 = sphi 0, %s90
      %s91 = sphi 0, %s88
      %s92 = sphi 0, %s91
      %s108 = sphi 0, %s92
      %s114 = sphi 0, %s116
      %s117 = sphi 0, %s114
      %s118 = sphi 0, %s117
      %s134 = sphi 0, %s118
    $region4: #{ram_conv1d_mx_forward.4} parent=1 // loop_header_branch
      %15 = sbr.rel (%p13) target = $region8
    $region5: #{ram_conv1d_mx_forward.4} parent=1 // loop_body
      %s17 = ssub.s32 %s12, 1
      %s18 = ssub.s32 %s12, 2
      %s25 = sadd.s32 1, %s20
      %p26 = scmp.ge.s32.totalorder %s25, 1
      %s27 = scalar_select %p26, 0, %s25
      %s28 = sadd.s32 1, %s19
      %s29 = scalar_select %p26, %s28, %s19
      %p30 = scmp.ge.s32.totalorder %s29, 2
      %s31 = scalar_select %p30, 0, %s29
      %s32 = ssub.s32 %s20, %s27
      %p33 = scmp.eq.s32.totalorder %s32, 0
      %s35 = sadd.s32 %s34, 1
      %s36 = scalar_select %p33, %s34, %s35
      %p39 = pneg %p33
      %p40 = scmp.eq.s32.totalorder %s12, 1
      %p41 = por %p39, %p40
      %p42 = scmp.ne.s32.totalorder %s34, %s37
      %p43 = scmp.eq.s32.totalorder %s12, 0
      %p44 = por %p42, %p43
      %p45 = scmp.ne.s32.totalorder %s34, %s37
      %p46 = scmp.eq.s32.totalorder %s17, 1
      %p47 = por %p45, %p46
      %p48 = scmp.ne.s32.totalorder %s37, %s38
      %p49 = scmp.eq.s32.totalorder %s17, 0
      %p50 = por %p48, %p49
      %p51 = scmp.ne.s32.totalorder %s37, %s38
      %p52 = scmp.eq.s32.totalorder %s18, 1
      %p53 = por %p51, %p52
      %p55 = scmp.ne.s32.totalorder %s38, %s54
      %p56 = scmp.eq.s32.totalorder %s18, 0
      %p57 = por %p55, %p56
      %s58 = ssub.s32 %s20, %s27
      %s59 = ssub.s32 %s19, %s31
      %s60 = sor.u32 %s58, %s59
      %p61 = scmp.eq.s32.totalorder %s60, 0
      %s63 = sadd.s32 %s62, 1
      %s64 = scalar_select %p61, %s62, %s63
      %p67 = pneg %p61
      %p68 = scmp.eq.s32.totalorder %s12, 1
      %p69 = por %p67, %p68
      %p70 = scmp.ne.s32.totalorder %s62, %s65
      %p71 = scmp.eq.s32.totalorder %s12, 0
      %p72 = por %p70, %p71
      %p73 = scmp.ne.s32.totalorder %s62, %s65
      %p74 = scmp.eq.s32.totalorder %s17, 1
      %p75 = por %p73, %p74
      %p76 = scmp.ne.s32.totalorder %s65, %s66
      %p77 = scmp.eq.s32.totalorder %s17, 0
      %p78 = por %p76, %p77
      %p79 = scmp.ne.s32.totalorder %s65, %s66
      %p80 = scmp.eq.s32.totalorder %s18, 1
      %p81 = por %p79, %p80
      %p83 = scmp.ne.s32.totalorder %s66, %s82
      %p84 = scmp.eq.s32.totalorder %s18, 0
      %p85 = por %p83, %p84
      %s86 = ssub.s32 %s19, %s31
      %p87 = scmp.eq.s32.totalorder %s86, 0
      %s89 = sadd.s32 %s88, 1
      %s90 = scalar_select %p87, %s88, %s89
      %p93 = pneg %p87
      %p94 = scmp.eq.s32.totalorder %s12, 1
      %p95 = por %p93, %p94
      %p96 = scmp.ne.s32.totalorder %s88, %s91
      %p97 = scmp.eq.s32.totalorder %s12, 0
      %p98 = por %p96, %p97
      %p99 = scmp.ne.s32.totalorder %s88, %s91
      %p100 = scmp.eq.s32.totalorder %s17, 1
      %p101 = por %p99, %p100
      %p102 = scmp.ne.s32.totalorder %s91, %s92
      %p103 = scmp.eq.s32.totalorder %s17, 0
      %p104 = por %p102, %p103
      %p105 = scmp.ne.s32.totalorder %s91, %s92
      %p106 = scmp.eq.s32.totalorder %s18, 1
      %p107 = por %p105, %p106
      %p109 = scmp.ne.s32.totalorder %s92, %s108
      %p110 = scmp.eq.s32.totalorder %s18, 0
      %p111 = por %p109, %p110
      %s112 = ssub.s32 %s19, %s31
      %p113 = scmp.eq.s32.totalorder %s112, 0
      %s115 = sadd.s32 %s114, 1
      %s116 = scalar_select %p113, %s114, %s115
      %p119 = pneg %p113
      %p120 = scmp.eq.s32.totalorder %s12, 1
      %p121 = por %p119, %p120
      %p122 = scmp.ne.s32.totalorder %s114, %s117
      %p123 = scmp.eq.s32.totalorder %s12, 0
      %p124 = por %p122, %p123
      %p125 = scmp.ne.s32.totalorder %s114, %s117
      %p126 = scmp.eq.s32.totalorder %s17, 1
      %p127 = por %p125, %p126
      %p128 = scmp.ne.s32.totalorder %s117, %s118
      %p129 = scmp.eq.s32.totalorder %s17, 0
      %p130 = por %p128, %p129
      %p131 = scmp.ne.s32.totalorder %s117, %s118
      %p132 = scmp.eq.s32.totalorder %s18, 1
      %p133 = por %p131, %p132
      %p135 = scmp.ne.s32.totalorder %s118, %s134
      %p136 = scmp.eq.s32.totalorder %s18, 0
      %p137 = por %p135, %p136
      %p138 = scmp.le.s32.totalorder 1, %s12
      %p139 = scmp.lt.s32.totalorder %s12, 3
      %p140 = pnand %p138, %p139
      %p141 = pneg %p140
      // Predicated region
      $region9: #{ram_conv1d_mx_forward.4} parent=5 // pred_check
        _
      $region10: #{ram_conv1d_mx_forward.4} parent=5 // pred_check_branch
        %143 = sbr.rel (%p140) target = $region12
      $region11: #{ram_conv1d_mx_forward.4} parent=5 // pred_region
        %s144 = ssub.s32 %s12, 1
        // Predicated region
        $region13: #{ram_conv1d_mx_forward.4} parent=11 // pred_check
          %p145 = pneg %p50
        $region14: #{ram_conv1d_mx_forward.4} parent=11 // pred_check_branch
          %147 = sbr.rel (%p145) target = $region16
        $region15: #{ram_conv1d_mx_forward.4} parent=11 // pred_region
          %s148 = smul.u32 4, %s22
          %p149 = scmp.lt.s32.totalorder %s148, 3
          %s150 = scalar_select %p149, %s148, 3
          %s151 = smul.addr %s150, 4
          %s152 = scalar_lea.vmem %s0, %s151
          %s153 = smul.u32 4, %s22
        $region16: #{ram_conv1d_mx_forward.4} parent=11 // pred_fallthru
          _
      $region12: #{ram_conv1d_mx_forward.4} parent=5 // pred_fallthru
        _
      %p154 = scmp.lt.s32.totalorder %s12, 2
      // Predicated region
      $region17: #{ram_conv1d_mx_forward.4} parent=5 // pred_check
        %p155 = pneg %p154
      $region18: #{ram_conv1d_mx_forward.4} parent=5 // pred_check_branch
        %157 = sbr.rel (%p155) target = $region20
      $region19: #{ram_conv1d_mx_forward.4} parent=5 // pred_region
        // Predicated region
        $region21: #{ram_conv1d_mx_forward.4} parent=19 // pred_check
          %p158 = pneg %p72
        $region22: #{ram_conv1d_mx_forward.4} parent=19 // pred_check_branch
          %160 = sbr.rel (%p158) target = $region24
        $region23: #{ram_conv1d_mx_forward.4} parent=19 // pred_region
          %s161 = sand.u32 %s62, 1
          %s162 = scalar_lea.sflag [#allocation4], %s161
          %s163 = sand.u32 %s62, 1
          %s164 = smul.addr %s163, 1024
          %s165 = scalar_lea.vmem [#allocation3], %s164
          %s166 = smul.u32 64, %s20
          %s167 = smul.u32 4, %s19
          %s169 = ssub.s32 16384, 16384
          %170 = vsyncadd %s162, %s169
          %s171 = smul.addr %s166, 8
          %s172 = sadd.s32 %s167, %s171
          %s173 = smul.addr %s172, 64
          %s174 = scalar_lea.hbm %s1, %s173
          %s175 = sshll.u32 %s165, 4
          %s176 = int_to_ptr.vmem [resolvable:$true] %s175
          %181 = dma.hbm_to_vmem [thread:$0]  %s174, 16384, %s176, %s162, 512, 256, 16
        $region24: #{ram_conv1d_mx_forward.4} parent=19 // pred_fallthru
          _
        // Predicated region
        $region25: #{ram_conv1d_mx_forward.4} parent=19 // pred_check
          %p182 = pneg %p98
        $region26: #{ram_conv1d_mx_forward.4} parent=19 // pred_check_branch
          %184 = sbr.rel (%p182) target = $region28
        $region27: #{ram_conv1d_mx_forward.4} parent=19 // pred_region
          %s185 = smul.u32 4, %s19
          %p186 = scmp.lt.s32.totalorder %s185, 7
          %s187 = scalar_select %p186, %s185, 7
          %s188 = scalar_lea.vmem %s2, %s187
          %s189 = smul.u32 4, %s19
        $region28: #{ram_conv1d_mx_forward.4} parent=19 // pred_fallthru
          _
      $region20: #{ram_conv1d_mx_forward.4} parent=5 // pred_fallthru
        _
      %p190 = scmp.le.s32.totalorder 1, %s12
      %p191 = scmp.lt.s32.totalorder %s12, 3
      %p192 = pnand %p190, %p191
      %p193 = pneg %p192
      // Predicated region
      $region29: #{ram_conv1d_mx_forward.4} parent=5 // pred_check
        _
      $region30: #{ram_conv1d_mx_forward.4} parent=5 // pred_check_branch
        %195 = sbr.rel (%p192) target = $region32
      $region31: #{ram_conv1d_mx_forward.4} parent=5 // pred_region
        %s196 = ssub.s32 %s12, 1
        %s197 = sand.u32 %s65, 1
        %s198 = scalar_lea.sflag [#allocation4], %s197
        %s199 = sand.u32 %s65, 1
        %s200 = smul.addr %s199, 1024
        %s201 = scalar_lea.vmem [#allocation3], %s200
        // Predicated region
        $region33: #{ram_conv1d_mx_forward.4} parent=31 // pred_check
          %p202 = pneg %p78
        $region34: #{ram_conv1d_mx_forward.4} parent=31 // pred_check_branch
          %204 = sbr.rel (%p202) target = $region36
        $region35: #{ram_conv1d_mx_forward.4} parent=31 // pred_region
          %205 = dma.done %s198, 16384
        $region36: #{ram_conv1d_mx_forward.4} parent=31 // pred_fallthru
          _
        %s206 = smul.u32 4, %s22
        %p207 = scmp.lt.s32.totalorder %s206, 3
        %s208 = scalar_select %p207, %s206, 3
        %s209 = smul.addr %s208, 4
        %s210 = scalar_lea.vmem %s0, %s209
        %p211 = pneg %p50
        %p212 = pneg %p47
        %s213 = sand.u32 %s65, 1
        %s214 = scalar_lea.sflag [#allocation4], %s213
        %s215 = sand.u32 %s65, 1
        %s216 = smul.addr %s215, 1024
        %s217 = scalar_lea.vmem [#allocation3], %s216
        %p218 = pneg %p78
        %p219 = pneg %p75
        %s220 = smul.u32 4, %s21
        %p221 = scmp.lt.s32.totalorder %s220, 7
        %s222 = scalar_select %p221, %s220, 7
        %s223 = scalar_lea.vmem %s2, %s222
        %p224 = pneg %p104
        %p225 = pneg %p101
        %p226 = pneg %p130
        %p227 = pneg %p127
        %s228 = smul.u32 4, %s21
        %p229 = scmp.lt.s32.totalorder %s228, 7
        %s230 = scalar_select %p229, %s228, 7
        %s231 = smul.addr %s230, 4
        %s232 = scalar_lea.vmem %s3, %s231
        %s233 = smul.u32 4, %s22
        %p234 = scmp.lt.s32.totalorder %s233, 3
        %s235 = scalar_select %p234, %s233, 3
        %s236 = smul.addr %s235, 4
        %s237 = scalar_lea.vmem %s0, %s236
        %s238 = smul.u32 4, %s22
        %s239 = smul.u32 64, %s22
        %s240 = smul.u32 4, %s21
        %s241 = smul.u32 4, %s21
        %p242 = scmp.lt.s32.totalorder %s241, 7
        %s243 = scalar_select %p242, %s241, 7
        %s244 = scalar_lea.vmem %s2, %s243
        %s245 = smul.u32 4, %s21
        %s246 = smul.u32 4, %s21
        %p247 = scmp.lt.s32.totalorder %s246, 7
        %s248 = scalar_select %p247, %s246, 7
        %s249 = smul.addr %s248, 4
        %s250 = scalar_lea.vmem %s3, %s249
        %s251 = smul.u32 4, %s21
        %p252 = scmp.eq.s32.totalorder %s22, 0
        // Predicated region
        $region37: #{ram_conv1d_mx_forward.4} parent=31 // pred_check
          %p253 = pneg %p252
        $region38: #{ram_conv1d_mx_forward.4} parent=31 // pred_check_branch
          %255 = sbr.rel (%p253) target = $region40
        $region39: #{ram_conv1d_mx_forward.4} parent=31 // pred_region
          %256 = vst [vmem:[#allocation2] sm:$0xff] 0.0
          %257 = vst [vmem:[#allocation2 + $0x8] sm:$0xff] 0.0
          %258 = vst [vmem:[#allocation2 + $0x10] sm:$0xff] 0.0
          %259 = vst [vmem:[#allocation2 + $0x18] sm:$0xff] 0.0
        $region40: #{ram_conv1d_mx_forward.4} parent=31 // pred_fallthru
          _
        %v260 = vld [vmem:[#allocation2] sm:$0xff]
        %v261 = vld [vmem:[#allocation2 + $0x8] sm:$0xff]
        %v262 = vld [vmem:[#allocation2 + $0x10] sm:$0xff]
        %v263 = vld [vmem:[#allocation2 + $0x18] sm:$0xff]
        %v264 = vld [vmem:[%s237] sm:$0xff]
        %v265 = vld [vmem:[%s237 + $0x8] sm:$0xff]
        %v266 = vld [vmem:[%s201] sm:$0xff]
        %v267 = vld [vmem:[%s201 + $0x8] sm:$0xff]
        %v268 = vld [vmem:[%s201 + $0x10] sm:$0xff]
        %v269 = vld [vmem:[%s201 + $0x18] sm:$0xff]
        %v270 = vld [vmem:[%s201 + $0x20] sm:$0xff]
        %v271 = vld [vmem:[%s201 + $0x28] sm:$0xff]
        %v272 = vld [vmem:[%s201 + $0x30] sm:$0xff]
        %v273 = vld [vmem:[%s201 + $0x38] sm:$0xff]
        %v274 = vld [vmem:[%s201 + $0x40] sm:$0xff]
        %v275 = vld [vmem:[%s201 + $0x48] sm:$0xff]
        %v276 = vld [vmem:[%s201 + $0x50] sm:$0xff]
        %v277 = vld [vmem:[%s201 + $0x58] sm:$0xff]
        %v278 = vld [vmem:[%s201 + $0x60] sm:$0xff]
        %v279 = vld [vmem:[%s201 + $0x68] sm:$0xff]
        %v280 = vld [vmem:[%s201 + $0x70] sm:$0xff]
        %v281 = vld [vmem:[%s201 + $0x78] sm:$0xff]
        %v282 = vld [vmem:[%s201 + $0x80] sm:$0xff]
        %v283 = vld [vmem:[%s201 + $0x88] sm:$0xff]
        %v284 = vld [vmem:[%s201 + $0x90] sm:$0xff]
        %v285 = vld [vmem:[%s201 + $0x98] sm:$0xff]
        %v286 = vld [vmem:[%s201 + $0xa0] sm:$0xff]
        %v287 = vld [vmem:[%s201 + $0xa8] sm:$0xff]
        %v288 = vld [vmem:[%s201 + $0xb0] sm:$0xff]
        %v289 = vld [vmem:[%s201 + $0xb8] sm:$0xff]
        %v290 = vld [vmem:[%s201 + $0xc0] sm:$0xff]
        %v291 = vld [vmem:[%s201 + $0xc8] sm:$0xff]
        %v292 = vld [vmem:[%s201 + $0xd0] sm:$0xff]
        %v293 = vld [vmem:[%s201 + $0xd8] sm:$0xff]
        %v294 = vld [vmem:[%s201 + $0xe0] sm:$0xff]
        %v295 = vld [vmem:[%s201 + $0xe8] sm:$0xff]
        %v296 = vld [vmem:[%s201 + $0xf0] sm:$0xff]
        %v297 = vld [vmem:[%s201 + $0xf8] sm:$0xff]
        %v298 = vld [vmem:[%s201 + $0x100] sm:$0xff]
        %v299 = vld [vmem:[%s201 + $0x108] sm:$0xff]
        %v300 = vld [vmem:[%s201 + $0x110] sm:$0xff]
        %v301 = vld [vmem:[%s201 + $0x118] sm:$0xff]
        %v302 = vld [vmem:[%s201 + $0x120] sm:$0xff]
        %v303 = vld [vmem:[%s201 + $0x128] sm:$0xff]
        %v304 = vld [vmem:[%s201 + $0x130] sm:$0xff]
        %v305 = vld [vmem:[%s201 + $0x138] sm:$0xff]
        %v306 = vld [vmem:[%s201 + $0x140] sm:$0xff]
        %v307 = vld [vmem:[%s201 + $0x148] sm:$0xff]
        %v308 = vld [vmem:[%s201 + $0x150] sm:$0xff]
        %v309 = vld [vmem:[%s201 + $0x158] sm:$0xff]
        %v310 = vld [vmem:[%s201 + $0x160] sm:$0xff]
        %v311 = vld [vmem:[%s201 + $0x168] sm:$0xff]
        %v312 = vld [vmem:[%s201 + $0x170] sm:$0xff]
        %v313 = vld [vmem:[%s201 + $0x178] sm:$0xff]
        %v314 = vld [vmem:[%s201 + $0x180] sm:$0xff]
        %v315 = vld [vmem:[%s201 + $0x188] sm:$0xff]
        %v316 = vld [vmem:[%s201 + $0x190] sm:$0xff]
        %v317 = vld [vmem:[%s201 + $0x198] sm:$0xff]
        %v318 = vld [vmem:[%s201 + $0x1a0] sm:$0xff]
        %v319 = vld [vmem:[%s201 + $0x1a8] sm:$0xff]
        %v320 = vld [vmem:[%s201 + $0x1b0] sm:$0xff]
        %v321 = vld [vmem:[%s201 + $0x1b8] sm:$0xff]
        %v322 = vld [vmem:[%s201 + $0x1c0] sm:$0xff]
        %v323 = vld [vmem:[%s201 + $0x1c8] sm:$0xff]
        %v324 = vld [vmem:[%s201 + $0x1d0] sm:$0xff]
        %v325 = vld [vmem:[%s201 + $0x1d8] sm:$0xff]
        %v326 = vld [vmem:[%s201 + $0x1e0] sm:$0xff]
        %v327 = vld [vmem:[%s201 + $0x1e8] sm:$0xff]
        %v328 = vld [vmem:[%s201 + $0x1f0] sm:$0xff]
        %v329 = vld [vmem:[%s201 + $0x1f8] sm:$0xff]
        %v330 = vld [vmem:[%s201 + $0x200] sm:$0xff]
        %v331 = vld [vmem:[%s201 + $0x208] sm:$0xff]
        %v332 = vld [vmem:[%s201 + $0x210] sm:$0xff]
        %v333 = vld [vmem:[%s201 + $0x218] sm:$0xff]
        %v334 = vld [vmem:[%s201 + $0x220] sm:$0xff]
        %v335 = vld [vmem:[%s201 + $0x228] sm:$0xff]
        %v336 = vld [vmem:[%s201 + $0x230] sm:$0xff]
        %v337 = vld [vmem:[%s201 + $0x238] sm:$0xff]
        %v338 = vld [vmem:[%s201 + $0x240] sm:$0xff]
        %v339 = vld [vmem:[%s201 + $0x248] sm:$0xff]
        %v340 = vld [vmem:[%s201 + $0x250] sm:$0xff]
        %v341 = vld [vmem:[%s201 + $0x258] sm:$0xff]
        %v342 = vld [vmem:[%s201 + $0x260] sm:$0xff]
        %v343 = vld [vmem:[%s201 + $0x268] sm:$0xff]
        %v344 = vld [vmem:[%s201 + $0x270] sm:$0xff]
        %v345 = vld [vmem:[%s201 + $0x278] sm:$0xff]
        %v346 = vld [vmem:[%s201 + $0x280] sm:$0xff]
        %v347 = vld [vmem:[%s201 + $0x288] sm:$0xff]
        %v348 = vld [vmem:[%s201 + $0x290] sm:$0xff]
        %v349 = vld [vmem:[%s201 + $0x298] sm:$0xff]
        %v350 = vld [vmem:[%s201 + $0x2a0] sm:$0xff]
        %v351 = vld [vmem:[%s201 + $0x2a8] sm:$0xff]
        %v352 = vld [vmem:[%s201 + $0x2b0] sm:$0xff]
        %v353 = vld [vmem:[%s201 + $0x2b8] sm:$0xff]
        %v354 = vld [vmem:[%s201 + $0x2c0] sm:$0xff]
        %v355 = vld [vmem:[%s201 + $0x2c8] sm:$0xff]
        %v356 = vld [vmem:[%s201 + $0x2d0] sm:$0xff]
        %v357 = vld [vmem:[%s201 + $0x2d8] sm:$0xff]
        %v358 = vld [vmem:[%s201 + $0x2e0] sm:$0xff]
        %v359 = vld [vmem:[%s201 + $0x2e8] sm:$0xff]
        %v360 = vld [vmem:[%s201 + $0x2f0] sm:$0xff]
        %v361 = vld [vmem:[%s201 + $0x2f8] sm:$0xff]
        %v362 = vld [vmem:[%s201 + $0x300] sm:$0xff]
        %v363 = vld [vmem:[%s201 + $0x308] sm:$0xff]
        %v364 = vld [vmem:[%s201 + $0x310] sm:$0xff]
        %v365 = vld [vmem:[%s201 + $0x318] sm:$0xff]
        %v366 = vld [vmem:[%s201 + $0x320] sm:$0xff]
        %v367 = vld [vmem:[%s201 + $0x328] sm:$0xff]
        %v368 = vld [vmem:[%s201 + $0x330] sm:$0xff]
        %v369 = vld [vmem:[%s201 + $0x338] sm:$0xff]
        %v370 = vld [vmem:[%s201 + $0x340] sm:$0xff]
        %v371 = vld [vmem:[%s201 + $0x348] sm:$0xff]
        %v372 = vld [vmem:[%s201 + $0x350] sm:$0xff]
        %v373 = vld [vmem:[%s201 + $0x358] sm:$0xff]
        %v374 = vld [vmem:[%s201 + $0x360] sm:$0xff]
        %v375 = vld [vmem:[%s201 + $0x368] sm:$0xff]
        %v376 = vld [vmem:[%s201 + $0x370] sm:$0xff]
        %v377 = vld [vmem:[%s201 + $0x378] sm:$0xff]
        %v378 = vld [vmem:[%s201 + $0x380] sm:$0xff]
        %v379 = vld [vmem:[%s201 + $0x388] sm:$0xff]
        %v380 = vld [vmem:[%s201 + $0x390] sm:$0xff]
        %v381 = vld [vmem:[%s201 + $0x398] sm:$0xff]
        %v382 = vld [vmem:[%s201 + $0x3a0] sm:$0xff]
        %v383 = vld [vmem:[%s201 + $0x3a8] sm:$0xff]
        %v384 = vld [vmem:[%s201 + $0x3b0] sm:$0xff]
        %v385 = vld [vmem:[%s201 + $0x3b8] sm:$0xff]
        %v386 = vld [vmem:[%s201 + $0x3c0] sm:$0xff]
        %v387 = vld [vmem:[%s201 + $0x3c8] sm:$0xff]
        %v388 = vld [vmem:[%s201 + $0x3d0] sm:$0xff]
        %v389 = vld [vmem:[%s201 + $0x3d8] sm:$0xff]
        %v390 = vld [vmem:[%s201 + $0x3e0] sm:$0xff]
        %v391 = vld [vmem:[%s201 + $0x3e8] sm:$0xff]
        %v392 = vld [vmem:[%s201 + $0x3f0] sm:$0xff]
        %v393 = vld [vmem:[%s201 + $0x3f8] sm:$0xff]
        %v396 = vunpack.c.l.b16 %v264
        %v397 = vunpack.c.h.b16 %v264
        %v398 = vunpack.c.l.b16 %v265
        %v399 = vunpack.c.h.b16 %v265
        %v400 = vpack.c.b16 %v396, %v396
        %v401 = vpack.c.b16 %v397, %v397
        %v402 = vpack.c.b16 %v398, %v398
        %v403 = vpack.c.b16 %v399, %v399
        %v536 = vunpack.c.l.b16 %v266
        %v537 = vunpack.c.h.b16 %v266
        %v538 = vunpack.c.l.b16 %v267
        %v539 = vunpack.c.h.b16 %v267
        %v540 = vunpack.c.l.b16 %v268
        %v541 = vunpack.c.h.b16 %v268
        %v542 = vunpack.c.l.b16 %v269
        %v543 = vunpack.c.h.b16 %v269
        %v544 = vunpack.c.l.b16 %v270
        %v545 = vunpack.c.h.b16 %v270
        %v546 = vunpack.c.l.b16 %v271
        %v547 = vunpack.c.h.b16 %v271
        %v548 = vunpack.c.l.b16 %v272
        %v549 = vunpack.c.h.b16 %v272
        %v550 = vunpack.c.l.b16 %v273
        %v551 = vunpack.c.h.b16 %v273
        %v552 = vunpack.c.l.b16 %v274
        %v553 = vunpack.c.h.b16 %v274
        %v554 = vunpack.c.l.b16 %v275
        %v555 = vunpack.c.h.b16 %v275
        %v556 = vunpack.c.l.b16 %v276
        %v557 = vunpack.c.h.b16 %v276
        %v558 = vunpack.c.l.b16 %v277
        %v559 = vunpack.c.h.b16 %v277
        %v560 = vunpack.c.l.b16 %v278
        %v561 = vunpack.c.h.b16 %v278
        %v562 = vunpack.c.l.b16 %v279
        %v563 = vunpack.c.h.b16 %v279
        %v564 = vunpack.c.l.b16 %v280
        %v565 = vunpack.c.h.b16 %v280
        %v566 = vunpack.c.l.b16 %v281
        %v567 = vunpack.c.h.b16 %v281
        %v568 = vunpack.c.l.b16 %v282
        %v569 = vunpack.c.h.b16 %v282
        %v570 = vunpack.c.l.b16 %v283
        %v571 = vunpack.c.h.b16 %v283
        %v572 = vunpack.c.l.b16 %v284
        %v573 = vunpack.c.h.b16 %v284
        %v574 = vunpack.c.l.b16 %v285
        %v575 = vunpack.c.h.b16 %v285
        %v576 = vunpack.c.l.b16 %v286
        %v577 = vunpack.c.h.b16 %v286
        %v578 = vunpack.c.l.b16 %v287
        %v579 = vunpack.c.h.b16 %v287
        %v580 = vunpack.c.l.b16 %v288
        %v581 = vunpack.c.h.b16 %v288
        %v582 = vunpack.c.l.b16 %v289
        %v583 = vunpack.c.h.b16 %v289
        %v584 = vunpack.c.l.b16 %v290
        %v585 = vunpack.c.h.b16 %v290
        %v586 = vunpack.c.l.b16 %v291
        %v587 = vunpack.c.h.b16 %v291
        %v588 = vunpack.c.l.b16 %v292
        %v589 = vunpack.c.h.b16 %v292
        %v590 = vunpack.c.l.b16 %v293
        %v591 = vunpack.c.h.b16 %v293
        %v592 = vunpack.c.l.b16 %v294
        %v593 = vunpack.c.h.b16 %v294
        %v594 = vunpack.c.l.b16 %v295
        %v595 = vunpack.c.h.b16 %v295
        %v596 = vunpack.c.l.b16 %v296
        %v597 = vunpack.c.h.b16 %v296
        %v598 = vunpack.c.l.b16 %v297
        %v599 = vunpack.c.h.b16 %v297
        %v600 = vunpack.c.l.b16 %v298
        %v601 = vunpack.c.h.b16 %v298
        %v602 = vunpack.c.l.b16 %v299
        %v603 = vunpack.c.h.b16 %v299
        %v604 = vunpack.c.l.b16 %v300
        %v605 = vunpack.c.h.b16 %v300
        %v606 = vunpack.c.l.b16 %v301
        %v607 = vunpack.c.h.b16 %v301
        %v608 = vunpack.c.l.b16 %v302
        %v609 = vunpack.c.h.b16 %v302
        %v610 = vunpack.c.l.b16 %v303
        %v611 = vunpack.c.h.b16 %v303
        %v612 = vunpack.c.l.b16 %v304
        %v613 = vunpack.c.h.b16 %v304
        %v614 = vunpack.c.l.b16 %v305
        %v615 = vunpack.c.h.b16 %v305
        %v616 = vunpack.c.l.b16 %v306
        %v617 = vunpack.c.h.b16 %v306
        %v618 = vunpack.c.l.b16 %v307
        %v619 = vunpack.c.h.b16 %v307
        %v620 = vunpack.c.l.b16 %v308
        %v621 = vunpack.c.h.b16 %v308
        %v622 = vunpack.c.l.b16 %v309
        %v623 = vunpack.c.h.b16 %v309
        %v624 = vunpack.c.l.b16 %v310
        %v625 = vunpack.c.h.b16 %v310
        %v626 = vunpack.c.l.b16 %v311
        %v627 = vunpack.c.h.b16 %v311
        %v628 = vunpack.c.l.b16 %v312
        %v629 = vunpack.c.h.b16 %v312
        %v630 = vunpack.c.l.b16 %v313
        %v631 = vunpack.c.h.b16 %v313
        %v632 = vunpack.c.l.b16 %v314
        %v633 = vunpack.c.h.b16 %v314
        %v634 = vunpack.c.l.b16 %v315
        %v635 = vunpack.c.h.b16 %v315
        %v636 = vunpack.c.l.b16 %v316
        %v637 = vunpack.c.h.b16 %v316
        %v638 = vunpack.c.l.b16 %v317
        %v639 = vunpack.c.h.b16 %v317
        %v640 = vunpack.c.l.b16 %v318
        %v641 = vunpack.c.h.b16 %v318
        %v642 = vunpack.c.l.b16 %v319
        %v643 = vunpack.c.h.b16 %v319
        %v644 = vunpack.c.l.b16 %v320
        %v645 = vunpack.c.h.b16 %v320
        %v646 = vunpack.c.l.b16 %v321
        %v647 = vunpack.c.h.b16 %v321
        %v648 = vunpack.c.l.b16 %v322
        %v649 = vunpack.c.h.b16 %v322
        %v650 = vunpack.c.l.b16 %v323
        %v651 = vunpack.c.h.b16 %v323
        %v652 = vunpack.c.l.b16 %v324
        %v653 = vunpack.c.h.b16 %v324
        %v654 = vunpack.c.l.b16 %v325
        %v655 = vunpack.c.h.b16 %v325
        %v656 = vunpack.c.l.b16 %v326
        %v657 = vunpack.c.h.b16 %v326
        %v658 = vunpack.c.l.b16 %v327
        %v659 = vunpack.c.h.b16 %v327
        %v660 = vunpack.c.l.b16 %v328
        %v661 = vunpack.c.h.b16 %v328
        %v662 = vunpack.c.l.b16 %v329
        %v663 = vunpack.c.h.b16 %v329
        %v664 = vunpack.c.l.b16 %v330
        %v665 = vunpack.c.h.b16 %v330
        %v666 = vunpack.c.l.b16 %v331
        %v667 = vunpack.c.h.b16 %v331
        %v668 = vunpack.c.l.b16 %v332
        %v669 = vunpack.c.h.b16 %v332
        %v670 = vunpack.c.l.b16 %v333
        %v671 = vunpack.c.h.b16 %v333
        %v672 = vunpack.c.l.b16 %v334
        %v673 = vunpack.c.h.b16 %v334
        %v674 = vunpack.c.l.b16 %v335
        %v675 = vunpack.c.h.b16 %v335
        %v676 = vunpack.c.l.b16 %v336
        %v677 = vunpack.c.h.b16 %v336
        %v678 = vunpack.c.l.b16 %v337
        %v679 = vunpack.c.h.b16 %v337
        %v680 = vunpack.c.l.b16 %v338
        %v681 = vunpack.c.h.b16 %v338
        %v682 = vunpack.c.l.b16 %v339
        %v683 = vunpack.c.h.b16 %v339
        %v684 = vunpack.c.l.b16 %v340
        %v685 = vunpack.c.h.b16 %v340
        %v686 = vunpack.c.l.b16 %v341
        %v687 = vunpack.c.h.b16 %v341
        %v688 = vunpack.c.l.b16 %v342
        %v689 = vunpack.c.h.b16 %v342
        %v690 = vunpack.c.l.b16 %v343
        %v691 = vunpack.c.h.b16 %v343
        %v692 = vunpack.c.l.b16 %v344
        %v693 = vunpack.c.h.b16 %v344
        %v694 = vunpack.c.l.b16 %v345
        %v695 = vunpack.c.h.b16 %v345
        %v696 = vunpack.c.l.b16 %v346
        %v697 = vunpack.c.h.b16 %v346
        %v698 = vunpack.c.l.b16 %v347
        %v699 = vunpack.c.h.b16 %v347
        %v700 = vunpack.c.l.b16 %v348
        %v701 = vunpack.c.h.b16 %v348
        %v702 = vunpack.c.l.b16 %v349
        %v703 = vunpack.c.h.b16 %v349
        %v704 = vunpack.c.l.b16 %v350
        %v705 = vunpack.c.h.b16 %v350
        %v706 = vunpack.c.l.b16 %v351
        %v707 = vunpack.c.h.b16 %v351
        %v708 = vunpack.c.l.b16 %v352
        %v709 = vunpack.c.h.b16 %v352
        %v710 = vunpack.c.l.b16 %v353
        %v711 = vunpack.c.h.b16 %v353
        %v712 = vunpack.c.l.b16 %v354
        %v713 = vunpack.c.h.b16 %v354
        %v714 = vunpack.c.l.b16 %v355
        %v715 = vunpack.c.h.b16 %v355
        %v716 = vunpack.c.l.b16 %v356
        %v717 = vunpack.c.h.b16 %v356
        %v718 = vunpack.c.l.b16 %v357
        %v719 = vunpack.c.h.b16 %v357
        %v720 = vunpack.c.l.b16 %v358
        %v721 = vunpack.c.h.b16 %v358
        %v722 = vunpack.c.l.b16 %v359
        %v723 = vunpack.c.h.b16 %v359
        %v724 = vunpack.c.l.b16 %v360
        %v725 = vunpack.c.h.b16 %v360
        %v726 = vunpack.c.l.b16 %v361
        %v727 = vunpack.c.h.b16 %v361
        %v728 = vunpack.c.l.b16 %v362
        %v729 = vunpack.c.h.b16 %v362
        %v730 = vunpack.c.l.b16 %v363
        %v731 = vunpack.c.h.b16 %v363
        %v732 = vunpack.c.l.b16 %v364
        %v733 = vunpack.c.h.b16 %v364
        %v734 = vunpack.c.l.b16 %v365
        %v735 = vunpack.c.h.b16 %v365
        %v736 = vunpack.c.l.b16 %v366
        %v737 = vunpack.c.h.b16 %v366
        %v738 = vunpack.c.l.b16 %v367
        %v739 = vunpack.c.h.b16 %v367
        %v740 = vunpack.c.l.b16 %v368
        %v741 = vunpack.c.h.b16 %v368
        %v742 = vunpack.c.l.b16 %v369
        %v743 = vunpack.c.h.b16 %v369
        %v744 = vunpack.c.l.b16 %v370
        %v745 = vunpack.c.h.b16 %v370
        %v746 = vunpack.c.l.b16 %v371
        %v747 = vunpack.c.h.b16 %v371
        %v748 = vunpack.c.l.b16 %v372
        %v749 = vunpack.c.h.b16 %v372
        %v750 = vunpack.c.l.b16 %v373
        %v751 = vunpack.c.h.b16 %v373
        %v752 = vunpack.c.l.b16 %v374
        %v753 = vunpack.c.h.b16 %v374
        %v754 = vunpack.c.l.b16 %v375
        %v755 = vunpack.c.h.b16 %v375
        %v756 = vunpack.c.l.b16 %v376
        %v757 = vunpack.c.h.b16 %v376
        %v758 = vunpack.c.l.b16 %v377
        %v759 = vunpack.c.h.b16 %v377
        %v760 = vunpack.c.l.b16 %v378
        %v761 = vunpack.c.h.b16 %v378
        %v762 = vunpack.c.l.b16 %v379
        %v763 = vunpack.c.h.b16 %v379
        %v764 = vunpack.c.l.b16 %v380
        %v765 = vunpack.c.h.b16 %v380
        %v766 = vunpack.c.l.b16 %v381
        %v767 = vunpack.c.h.b16 %v381
        %v768 = vunpack.c.l.b16 %v382
        %v769 = vunpack.c.h.b16 %v382
        %v770 = vunpack.c.l.b16 %v383
        %v771 = vunpack.c.h.b16 %v383
        %v772 = vunpack.c.l.b16 %v384
        %v773 = vunpack.c.h.b16 %v384
        %v774 = vunpack.c.l.b16 %v385
        %v775 = vunpack.c.h.b16 %v385
        %v776 = vunpack.c.l.b16 %v386
        %v777 = vunpack.c.h.b16 %v386
        %v778 = vunpack.c.l.b16 %v387
        %v779 = vunpack.c.h.b16 %v387
        %v780 = vunpack.c.l.b16 %v388
        %v781 = vunpack.c.h.b16 %v388
        %v782 = vunpack.c.l.b16 %v389
        %v783 = vunpack.c.h.b16 %v389
        %v784 = vunpack.c.l.b16 %v390
        %v785 = vunpack.c.h.b16 %v390
        %v786 = vunpack.c.l.b16 %v391
        %v787 = vunpack.c.h.b16 %v391
        %v788 = vunpack.c.l.b16 %v392
        %v789 = vunpack.c.h.b16 %v392
        %v790 = vunpack.c.l.b16 %v393
        %v791 = vunpack.c.h.b16 %v393
        %v792 = vpack.c.b16 %v540, %v536
        %v793 = vpack.c.b16 %v541, %v537
        %v794 = vpack.c.b16 %v542, %v538
        %v795 = vpack.c.b16 %v543, %v539
        %v796 = vpack.c.b16 %v548, %v544
        %v797 = vpack.c.b16 %v549, %v545
        %v798 = vpack.c.b16 %v550, %v546
        %v799 = vpack.c.b16 %v551, %v547
        %v800 = vpack.c.b16 %v556, %v552
        %v801 = vpack.c.b16 %v557, %v553
        %v802 = vpack.c.b16 %v558, %v554
        %v803 = vpack.c.b16 %v559, %v555
        %v804 = vpack.c.b16 %v564, %v560
        %v805 = vpack.c.b16 %v565, %v561
        %v806 = vpack.c.b16 %v566, %v562
        %v807 = vpack.c.b16 %v567, %v563
        %v808 = vpack.c.b16 %v572, %v568
        %v809 = vpack.c.b16 %v573, %v569
        %v810 = vpack.c.b16 %v574, %v570
        %v811 = vpack.c.b16 %v575, %v571
        %v812 = vpack.c.b16 %v580, %v576
        %v813 = vpack.c.b16 %v581, %v577
        %v814 = vpack.c.b16 %v582, %v578
        %v815 = vpack.c.b16 %v583, %v579
        %v816 = vpack.c.b16 %v588, %v584
        %v817 = vpack.c.b16 %v589, %v585
        %v818 = vpack.c.b16 %v590, %v586
        %v819 = vpack.c.b16 %v591, %v587
        %v820 = vpack.c.b16 %v596, %v592
        %v821 = vpack.c.b16 %v597, %v593
        %v822 = vpack.c.b16 %v598, %v594
        %v823 = vpack.c.b16 %v599, %v595
        %v824 = vpack.c.b16 %v604, %v600
        %v825 = vpack.c.b16 %v605, %v601
        %v826 = vpack.c.b16 %v606, %v602
        %v827 = vpack.c.b16 %v607, %v603
        %v828 = vpack.c.b16 %v612, %v608
        %v829 = vpack.c.b16 %v613, %v609
        %v830 = vpack.c.b16 %v614, %v610
        %v831 = vpack.c.b16 %v615, %v611
        %v832 = vpack.c.b16 %v620, %v616
        %v833 = vpack.c.b16 %v621, %v617
        %v834 = vpack.c.b16 %v622, %v618
        %v835 = vpack.c.b16 %v623, %v619
        %v836 = vpack.c.b16 %v628, %v624
        %v837 = vpack.c.b16 %v629, %v625
        %v838 = vpack.c.b16 %v630, %v626
        %v839 = vpack.c.b16 %v631, %v627
        %v840 = vpack.c.b16 %v636, %v632
        %v841 = vpack.c.b16 %v637, %v633
        %v842 = vpack.c.b16 %v638, %v634
        %v843 = vpack.c.b16 %v639, %v635
        %v844 = vpack.c.b16 %v644, %v640
        %v845 = vpack.c.b16 %v645, %v641
        %v846 = vpack.c.b16 %v646, %v642
        %v847 = vpack.c.b16 %v647, %v643
        %v848 = vpack.c.b16 %v652, %v648
        %v849 = vpack.c.b16 %v653, %v649
        %v850 = vpack.c.b16 %v654, %v650
        %v851 = vpack.c.b16 %v655, %v651
        %v852 = vpack.c.b16 %v660, %v656
        %v853 = vpack.c.b16 %v661, %v657
        %v854 = vpack.c.b16 %v662, %v658
        %v855 = vpack.c.b16 %v663, %v659
        %v856 = vpack.c.b16 %v668, %v664
        %v857 = vpack.c.b16 %v669, %v665
        %v858 = vpack.c.b16 %v670, %v666
        %v859 = vpack.c.b16 %v671, %v667
        %v860 = vpack.c.b16 %v676, %v672
        %v861 = vpack.c.b16 %v677, %v673
        %v862 = vpack.c.b16 %v678, %v674
        %v863 = vpack.c.b16 %v679, %v675
        %v864 = vpack.c.b16 %v684, %v680
        %v865 = vpack.c.b16 %v685, %v681
        %v866 = vpack.c.b16 %v686, %v682
        %v867 = vpack.c.b16 %v687, %v683
        %v868 = vpack.c.b16 %v692, %v688
        %v869 = vpack.c.b16 %v693, %v689
        %v870 = vpack.c.b16 %v694, %v690
        %v871 = vpack.c.b16 %v695, %v691
        %v872 = vpack.c.b16 %v700, %v696
        %v873 = vpack.c.b16 %v701, %v697
        %v874 = vpack.c.b16 %v702, %v698
        %v875 = vpack.c.b16 %v703, %v699
        %v876 = vpack.c.b16 %v708, %v704
        %v877 = vpack.c.b16 %v709, %v705
        %v878 = vpack.c.b16 %v710, %v706
        %v879 = vpack.c.b16 %v711, %v707
        %v880 = vpack.c.b16 %v716, %v712
        %v881 = vpack.c.b16 %v717, %v713
        %v882 = vpack.c.b16 %v718, %v714
        %v883 = vpack.c.b16 %v719, %v715
        %v884 = vpack.c.b16 %v724, %v720
        %v885 = vpack.c.b16 %v725, %v721
        %v886 = vpack.c.b16 %v726, %v722
        %v887 = vpack.c.b16 %v727, %v723
        %v888 = vpack.c.b16 %v732, %v728
        %v889 = vpack.c.b16 %v733, %v729
        %v890 = vpack.c.b16 %v734, %v730
        %v891 = vpack.c.b16 %v735, %v731
        %v892 = vpack.c.b16 %v740, %v736
        %v893 = vpack.c.b16 %v741, %v737
        %v894 = vpack.c.b16 %v742, %v738
        %v895 = vpack.c.b16 %v743, %v739
        %v896 = vpack.c.b16 %v748, %v744
        %v897 = vpack.c.b16 %v749, %v745
        %v898 = vpack.c.b16 %v750, %v746
        %v899 = vpack.c.b16 %v751, %v747
        %v900 = vpack.c.b16 %v756, %v752
        %v901 = vpack.c.b16 %v757, %v753
        %v902 = vpack.c.b16 %v758, %v754
        %v903 = vpack.c.b16 %v759, %v755
        %v904 = vpack.c.b16 %v764, %v760
        %v905 = vpack.c.b16 %v765, %v761
        %v906 = vpack.c.b16 %v766, %v762
        %v907 = vpack.c.b16 %v767, %v763
        %v908 = vpack.c.b16 %v772, %v768
        %v909 = vpack.c.b16 %v773, %v769
        %v910 = vpack.c.b16 %v774, %v770
        %v911 = vpack.c.b16 %v775, %v771
        %v912 = vpack.c.b16 %v780, %v776
        %v913 = vpack.c.b16 %v781, %v777
        %v914 = vpack.c.b16 %v782, %v778
        %v915 = vpack.c.b16 %v783, %v779
        %v916 = vpack.c.b16 %v788, %v784
        %v917 = vpack.c.b16 %v789, %v785
        %v918 = vpack.c.b16 %v790, %v786
        %v919 = vpack.c.b16 %v791, %v787
        %1048 = vmatprep.subr.bf16.mxu0 %v793
        %1049 = vmatpush1.bf16.msra.mxu0 %v792
        %1050 = vmatprep.subr.bf16.mxu0 %v797
        %1051 = vmatpush1.bf16.msra.mxu0 %v796
        %1052 = vmatprep.subr.bf16.mxu0 %v801
        %1053 = vmatpush1.bf16.msra.mxu0 %v800
        %1054 = vmatprep.subr.bf16.mxu0 %v805
        %1055 = vmatpush1.bf16.msra.mxu0 %v804
        %1056 = vmatprep.subr.bf16.mxu0 %v809
        %1057 = vmatpush1.bf16.msra.mxu0 %v808
        %1058 = vmatprep.subr.bf16.mxu0 %v813
        %1059 = vmatpush1.bf16.msra.mxu0 %v812
        %1060 = vmatprep.subr.bf16.mxu0 %v817
        %1061 = vmatpush1.bf16.msra.mxu0 %v816
        %1062 = vmatprep.subr.bf16.mxu0 %v821
        %1063 = vmatpush1.bf16.msra.mxu0 %v820
        %1064 = vmatprep.subr.bf16.mxu0 %v825
        %1065 = vmatpush1.bf16.msra.mxu0 %v824
        %1066 = vmatprep.subr.bf16.mxu0 %v829
        %1067 = vmatpush1.bf16.msra.mxu0 %v828
        %1068 = vmatprep.subr.bf16.mxu0 %v833
        %1069 = vmatpush1.bf16.msra.mxu0 %v832
        %1070 = vmatprep.subr.bf16.mxu0 %v837
        %1071 = vmatpush1.bf16.msra.mxu0 %v836
        %1072 = vmatprep.subr.bf16.mxu0 %v841
        %1073 = vmatpush1.bf16.msra.mxu0 %v840
        %1074 = vmatprep.subr.bf16.mxu0 %v845
        %1075 = vmatpush1.bf16.msra.mxu0 %v844
        %1076 = vmatprep.subr.bf16.mxu0 %v849
        %1077 = vmatpush1.bf16.msra.mxu0 %v848
        %1078 = vmatprep.subr.bf16.mxu0 %v853
        %1079 = vmatpush1.bf16.msra.mxu0 %v852
        %1080 = vmatprep.mubr.bf16.mxu0 %v401
        %1081 = vmatmul.mubr.bf16.gmra.mrb[0].mxu0 %v400
        %v1082 = vpop.f32.mrb[0].mxu0
        %v1083 = vadd.f32 0.0, %v1082
        %v1084 = vpop.f32.mrb[0].mxu0
        %v1085 = vadd.f32 0.0, %v1084
        %v1086 = vpop.f32.mrb[0].mxu0
        %v1087 = vpop.f32.mrb[0].mxu0
        %1088 = vdwg.mxu0
        %1089 = vmatprep.subr.bf16.mxu0 %v857
        %1090 = vmatpush1.bf16.msra.mxu0 %v856
        %1091 = vmatprep.subr.bf16.mxu0 %v861
        %1092 = vmatpush1.bf16.msra.mxu0 %v860
        %1093 = vmatprep.subr.bf16.mxu0 %v865
        %1094 = vmatpush1.bf16.msra.mxu0 %v864
        %1095 = vmatprep.subr.bf16.mxu0 %v869
        %1096 = vmatpush1.bf16.msra.mxu0 %v868
        %1097 = vmatprep.subr.bf16.mxu0 %v873
        %1098 = vmatpush1.bf16.msra.mxu0 %v872
        %1099 = vmatprep.subr.bf16.mxu0 %v877
        %1100 = vmatpush1.bf16.msra.mxu0 %v876
        %1101 = vmatprep.subr.bf16.mxu0 %v881
        %1102 = vmatpush1.bf16.msra.mxu0 %v880
        %1103 = vmatprep.subr.bf16.mxu0 %v885
        %1104 = vmatpush1.bf16.msra.mxu0 %v884
        %1105 = vmatprep.subr.bf16.mxu0 %v889
        %1106 = vmatpush1.bf16.msra.mxu0 %v888
        %1107 = vmatprep.subr.bf16.mxu0 %v893
        %1108 = vmatpush1.bf16.msra.mxu0 %v892
        %1109 = vmatprep.subr.bf16.mxu0 %v897
        %1110 = vmatpush1.bf16.msra.mxu0 %v896
        %1111 = vmatprep.subr.bf16.mxu0 %v901
        %1112 = vmatpush1.bf16.msra.mxu0 %v900
        %1113 = vmatprep.subr.bf16.mxu0 %v905
        %1114 = vmatpush1.bf16.msra.mxu0 %v904
        %1115 = vmatprep.subr.bf16.mxu0 %v909
        %1116 = vmatpush1.bf16.msra.mxu0 %v908
        %1117 = vmatprep.subr.bf16.mxu0 %v913
        %1118 = vmatpush1.bf16.msra.mxu0 %v912
        %1119 = vmatprep.subr.bf16.mxu0 %v917
        %1120 = vmatpush1.bf16.msra.mxu0 %v916
        %1121 = vmatprep.mubr.bf16.mxu0 %v403
        %1122 = vmatmul.mubr.bf16.gmra.mrb[0].mxu0 %v402
        %v1123 = vpop.f32.mrb[0].mxu0
        %v1124 = vadd.f32 %v1083, %v1123
        %v1125 = vpop.f32.mrb[0].mxu0
        %v1126 = vadd.f32 %v1085, %v1125
        %v1127 = vpop.f32.mrb[0].mxu0
        %v1128 = vpop.f32.mrb[0].mxu0
        %1129 = vdwg.mxu0
        %1130 = vmatprep.subr.bf16.mxu0 %v795
        %1131 = vmatpush1.bf16.msra.mxu0 %v794
        %1132 = vmatprep.subr.bf16.mxu0 %v799
        %1133 = vmatpush1.bf16.msra.mxu0 %v798
        %1134 = vmatprep.subr.bf16.mxu0 %v803
        %1135 = vmatpush1.bf16.msra.mxu0 %v802
        %1136 = vmatprep.subr.bf16.mxu0 %v807
        %1137 = vmatpush1.bf16.msra.mxu0 %v806
        %1138 = vmatprep.subr.bf16.mxu0 %v811
        %1139 = vmatpush1.bf16.msra.mxu0 %v810
        %1140 = vmatprep.subr.bf16.mxu0 %v815
        %1141 = vmatpush1.bf16.msra.mxu0 %v814
        %1142 = vmatprep.subr.bf16.mxu0 %v819
        %1143 = vmatpush1.bf16.msra.mxu0 %v818
        %1144 = vmatprep.subr.bf16.mxu0 %v823
        %1145 = vmatpush1.bf16.msra.mxu0 %v822
        %1146 = vmatprep.subr.bf16.mxu0 %v827
        %1147 = vmatpush1.bf16.msra.mxu0 %v826
        %1148 = vmatprep.subr.bf16.mxu0 %v831
        %1149 = vmatpush1.bf16.msra.mxu0 %v830
        %1150 = vmatprep.subr.bf16.mxu0 %v835
        %1151 = vmatpush1.bf16.msra.mxu0 %v834
        %1152 = vmatprep.subr.bf16.mxu0 %v839
        %1153 = vmatpush1.bf16.msra.mxu0 %v838
        %1154 = vmatprep.subr.bf16.mxu0 %v843
        %1155 = vmatpush1.bf16.msra.mxu0 %v842
        %1156 = vmatprep.subr.bf16.mxu0 %v847
        %1157 = vmatpush1.bf16.msra.mxu0 %v846
        %1158 = vmatprep.subr.bf16.mxu0 %v851
        %1159 = vmatpush1.bf16.msra.mxu0 %v850
        %1160 = vmatprep.subr.bf16.mxu0 %v855
        %1161 = vmatpush1.bf16.msra.mxu0 %v854
        %1162 = vmatprep.mubr.bf16.mxu0 %v401
        %1163 = vmatmul.mubr.bf16.gmra.mrb[0].mxu0 %v400
        %v1164 = vpop.f32.mrb[0].mxu0
        %v1165 = vadd.f32 0.0, %v1164
        %v1166 = vpop.f32.mrb[0].mxu0
        %v1167 = vadd.f32 0.0, %v1166
        %v1168 = vpop.f32.mrb[0].mxu0
        %v1169 = vpop.f32.mrb[0].mxu0
        %1170 = vdwg.mxu0
        %1171 = vmatprep.subr.bf16.mxu0 %v859
        %1172 = vmatpush1.bf16.msra.mxu0 %v858
        %1173 = vmatprep.subr.bf16.mxu0 %v863
        %1174 = vmatpush1.bf16.msra.mxu0 %v862
        %1175 = vmatprep.subr.bf16.mxu0 %v867
        %1176 = vmatpush1.bf16.msra.mxu0 %v866
        %1177 = vmatprep.subr.bf16.mxu0 %v871
        %1178 = vmatpush1.bf16.msra.mxu0 %v870
        %1179 = vmatprep.subr.bf16.mxu0 %v875
        %1180 = vmatpush1.bf16.msra.mxu0 %v874
        %1181 = vmatprep.subr.bf16.mxu0 %v879
        %1182 = vmatpush1.bf16.msra.mxu0 %v878
        %1183 = vmatprep.subr.bf16.mxu0 %v883
        %1184 = vmatpush1.bf16.msra.mxu0 %v882
        %1185 = vmatprep.subr.bf16.mxu0 %v887
        %1186 = vmatpush1.bf16.msra.mxu0 %v886
        %1187 = vmatprep.subr.bf16.mxu0 %v891
        %1188 = vmatpush1.bf16.msra.mxu0 %v890
        %1189 = vmatprep.subr.bf16.mxu0 %v895
        %1190 = vmatpush1.bf16.msra.mxu0 %v894
        %1191 = vmatprep.subr.bf16.mxu0 %v899
        %1192 = vmatpush1.bf16.msra.mxu0 %v898
        %1193 = vmatprep.subr.bf16.mxu0 %v903
        %1194 = vmatpush1.bf16.msra.mxu0 %v902
        %1195 = vmatprep.subr.bf16.mxu0 %v907
        %1196 = vmatpush1.bf16.msra.mxu0 %v906
        %1197 = vmatprep.subr.bf16.mxu0 %v911
        %1198 = vmatpush1.bf16.msra.mxu0 %v910
        %1199 = vmatprep.subr.bf16.mxu0 %v915
        %1200 = vmatpush1.bf16.msra.mxu0 %v914
        %1201 = vmatprep.subr.bf16.mxu0 %v919
        %1202 = vmatpush1.bf16.msra.mxu0 %v918
        %1203 = vmatprep.mubr.bf16.mxu0 %v403
        %1204 = vmatmul.mubr.bf16.gmra.mrb[0].mxu0 %v402
        %v1205 = vpop.f32.mrb[0].mxu0
        %v1206 = vadd.f32 %v1165, %v1205
        %v1207 = vpop.f32.mrb[0].mxu0
        %v1208 = vadd.f32 %v1167, %v1207
        %v1209 = vpop.f32.mrb[0].mxu0
        %v1210 = vpop.f32.mrb[0].mxu0
        %1211 = vdwg.mxu0
        %v1212 = vadd.f32 %v260, %v1124
        %v1213 = vadd.f32 %v261, %v1126
        %v1214 = vadd.f32 %v262, %v1206
        %v1215 = vadd.f32 %v263, %v1208
        %1216 = vst [vmem:[#allocation2] sm:$0xff] %v1212
        %1217 = vst [vmem:[#allocation2 + $0x8] sm:$0xff] %v1213
        %1218 = vst [vmem:[#allocation2 + $0x10] sm:$0xff] %v1214
        %1219 = vst [vmem:[#allocation2 + $0x18] sm:$0xff] %v1215
        // Predicated region
        $region41: #{ram_conv1d_mx_forward.4} parent=31 // pred_check
          %p1220 = pneg %p252
        $region42: #{ram_conv1d_mx_forward.4} parent=31 // pred_check_branch
          %1222 = sbr.rel (%p1220) target = $region44
        $region43: #{ram_conv1d_mx_forward.4} parent=31 // pred_region
          %v1223 = vld [vmem:[#allocation2] sm:$0xff]
          %v1224 = vld [vmem:[#allocation2 + $0x8] sm:$0xff]
          %v1225 = vld [vmem:[#allocation2 + $0x10] sm:$0xff]
          %v1226 = vld [vmem:[#allocation2 + $0x18] sm:$0xff]
          %v1227 = vld [vmem:[%s244] sm:$0xf]
          %v1229 = vlaneseq
          %v1230 = vshrl.u32 %v1229, 7
          %v1231 = vsub.s32 0, %v1230
          %v1232 = vrot.slane %v1227, %v1231
          %v1233 = vlaneseq
          %v1234 = vshrl.u32 %v1233, 7
          %v1235 = vsub.s32 1, %v1234
          %v1236 = vrot.slane %v1227, %v1235
          %v1237 = vlaneseq
          %v1238 = vshrl.u32 %v1237, 7
          %v1239 = vsub.s32 2, %v1238
          %v1240 = vrot.slane %v1227, %v1239
          %v1241 = vlaneseq
          %v1242 = vshrl.u32 %v1241, 7
          %v1243 = vsub.s32 3, %v1242
          %v1244 = vrot.slane %v1227, %v1243
          %v1249 = vadd.f32 %v1223, %v1232
          %v1250 = vadd.f32 %v1224, %v1236
          %v1251 = vadd.f32 %v1225, %v1240
          %v1252 = vadd.f32 %v1226, %v1244
          %v1253 = vmax.f32 %v1249, 0.0
          %v1254 = vmax.f32 %v1250, 0.0
          %v1255 = vmax.f32 %v1251, 0.0
          %v1256 = vmax.f32 %v1252, 0.0
          %v1257 = vpack.c.bf16 %v1253, %v1253
          %v1258 = vpack.c.bf16 %v1254, %v1254
          %v1259 = vpack.c.bf16 %v1255, %v1255
          %v1260 = vpack.c.bf16 %v1256, %v1256
          %v1265 = vunpack.c.l.b16 %v1257
          %v1266 = vunpack.c.l.b16 %v1258
          %v1267 = vunpack.c.l.b16 %v1259
          %v1268 = vunpack.c.l.b16 %v1260
          %v1269 = vpack.c.b16 %v1266, %v1265
          %v1270 = vpack.c.b16 %v1268, %v1267
          %1273 = vst [vmem:[%s250] sm:$0xff] %v1269
          %1274 = vst [vmem:[%s250 + $0x8] sm:$0xff] %v1270
        $region44: #{ram_conv1d_mx_forward.4} parent=31 // pred_fallthru
          _
        %s1275 = smul.u32 4, %s21
        %p1276 = scmp.lt.s32.totalorder %s1275, 7
        %s1277 = scalar_select %p1276, %s1275, 7
        %s1278 = smul.addr %s1277, 4
        %s1279 = scalar_lea.vmem %s3, %s1278
        // Predicated region
        $region45: #{ram_conv1d_mx_forward.4} parent=31 // pred_check
          %p1280 = pneg %p127
        $region46: #{ram_conv1d_mx_forward.4} parent=31 // pred_check_branch
          %1282 = sbr.rel (%p1280) target = $region48
        $region47: #{ram_conv1d_mx_forward.4} parent=31 // pred_region
          %s1283 = smul.u32 4, %s21
        $region48: #{ram_conv1d_mx_forward.4} parent=31 // pred_fallthru
          _
      $region32: #{ram_conv1d_mx_forward.4} parent=5 // pred_fallthru
        _
      %p1284 = scmp.le.s32.totalorder 2, %s12
      // Predicated region
      $region49: #{ram_conv1d_mx_forward.4} parent=5 // pred_check
        %p1285 = pneg %p1284
      $region50: #{ram_conv1d_mx_forward.4} parent=5 // pred_check_branch
        %1287 = sbr.rel (%p1285) target = $region52
      $region51: #{ram_conv1d_mx_forward.4} parent=5 // pred_region
        %s1288 = ssub.s32 %s12, 2
        // Predicated region
        $region53: #{ram_conv1d_mx_forward.4} parent=51 // pred_check
          %p1289 = pneg %p133
        $region54: #{ram_conv1d_mx_forward.4} parent=51 // pred_check_branch
          %1291 = sbr.rel (%p1289) target = $region56
        $region55: #{ram_conv1d_mx_forward.4} parent=51 // pred_region
          %s1292 = smul.u32 4, %s23
          %p1293 = scmp.lt.s32.totalorder %s1292, 7
          %s1294 = scalar_select %p1293, %s1292, 7
          %s1295 = smul.addr %s1294, 4
          %s1296 = scalar_lea.vmem %s3, %s1295
        $region56: #{ram_conv1d_mx_forward.4} parent=51 // pred_fallthru
          _
      $region52: #{ram_conv1d_mx_forward.4} parent=5 // pred_fallthru
        _
    $region6: #{ram_conv1d_mx_forward.4} parent=1 // loop_footer
      %s16 = sadd.s32 1, %s12
    $region7: #{ram_conv1d_mx_forward.4} parent=1 // loop_footer_branch
      %11 = sbr.rel target = $region3
    $region8: #{ram_conv1d_mx_forward.4} parent=1 // loop_exit
      _
    %1297 = vsyncpa [#allocation4], 1
    %s1298 = scalar_lea.sflag [#allocation4], 1
    %1299 = vsyncpa %s1298, 1

// kernel: ram_conv1d_mx_forward.3
$region0: #{ram_conv1d_mx_forward.3}
  #allocation0 [shape = 'u32[]', space=smem, size = 0x4, offset = 0x4, fixed_abs, tag = 'smem constant byte address 0x4 - core index']
  #allocation1 [shape = 'u32[144,128]{1,0:T(1,128)}', space=vmem, size = 0x12000, scoped, tag = 'internal scratch']
  %s0 = inlined_call_operand.vmem [shape: f32[8,4,10], index: 0, kind: input, shape index: {}]
  %s1 = inlined_call_operand.vmem [shape: f32[3,10,1], index: 1, kind: input, shape index: {}]
  %s2 = inlined_call_operand.vmem [shape: f32[1,10,1], index: 2, kind: input, shape index: {}]
  %s3 = inlined_call_operand.vmem [shape: bf16[3,50,10], index: 3, kind: input, shape index: {}]
  %s4 = inlined_call_operand.vmem [shape: f32[1,50,1], index: 4, kind: input, shape index: {}]
  %s5 = inlined_call_operand.vmem [shape: bf16[8,50,8], index: 5, kind: output, shape index: {}]
  %s6 = sld [smem:[#allocation0]]
  $region30: #{ram_conv1d_mx_forward.3} parent=0
    _
  %s8 = ssub.s32 1, %s6
  %s9 = scalar_select 0, %s8, %s6
  // Predicated region
  $region2: #{ram_conv1d_mx_forward.3} parent=0 // pred_check
    _
  $region3: #{ram_conv1d_mx_forward.3} parent=0 // pred_check_branch
    %11 = sbr.rel (0) target = $region5
  $region4: #{ram_conv1d_mx_forward.3} parent=0 // pred_region
    _
  $region5: #{ram_conv1d_mx_forward.3} parent=0 // pred_fallthru
    _
  // Predicated region
  $region6: #{ram_conv1d_mx_forward.3} parent=0 // pred_check
    _
  $region7: #{ram_conv1d_mx_forward.3} parent=0 // pred_check_branch
    %13 = sbr.rel (0) target = $region9
  $region8: #{ram_conv1d_mx_forward.3} parent=0 // pred_region
    _
  $region9: #{ram_conv1d_mx_forward.3} parent=0 // pred_fallthru
    _
  // Predicated region
  $region10: #{ram_conv1d_mx_forward.3} parent=0 // pred_check
    _
  $region11: #{ram_conv1d_mx_forward.3} parent=0 // pred_check_branch
    %15 = sbr.rel (0) target = $region13
  $region12: #{ram_conv1d_mx_forward.3} parent=0 // pred_region
    _
  $region13: #{ram_conv1d_mx_forward.3} parent=0 // pred_fallthru
    _
  // Predicated region
  $region14: #{ram_conv1d_mx_forward.3} parent=0 // pred_check
    _
  $region15: #{ram_conv1d_mx_forward.3} parent=0 // pred_check_branch
    %17 = sbr.rel (0) target = $region17
  $region16: #{ram_conv1d_mx_forward.3} parent=0 // pred_region
    _
  $region17: #{ram_conv1d_mx_forward.3} parent=0 // pred_fallthru
    _
  // Predicated region
  $region18: #{ram_conv1d_mx_forward.3} parent=0 // pred_check
    _
  $region19: #{ram_conv1d_mx_forward.3} parent=0 // pred_check_branch
    %19 = sbr.rel (0) target = $region21
  $region20: #{ram_conv1d_mx_forward.3} parent=0 // pred_region
    _
  $region21: #{ram_conv1d_mx_forward.3} parent=0 // pred_fallthru
    _
  %v21 = vld [vmem:[%s0] sm:$0xf]
  %v22 = vld [vmem:[%s0 + $0x4] sm:$0xf]
  %v23 = vld [vmem:[%s0 + $0x8] sm:$0xf]
  %v24 = vld [vmem:[%s0 + $0xc] sm:$0xf]
  %v25 = vld [vmem:[%s0 + $0x10] sm:$0xf]
  %v26 = vld [vmem:[%s0 + $0x14] sm:$0xf]
  %v27 = vld [vmem:[%s0 + $0x18] sm:$0xf]
  %v28 = vld [vmem:[%s0 + $0x1c] sm:$0xf]
  %v29 = vld [vmem:[%s1] sm:$0xff]
  %v30 = vld [vmem:[%s1 + $0x8] sm:$0x3]
  %v31 = vld [vmem:[%s1 + $0x10] sm:$0xff]
  %v32 = vld [vmem:[%s1 + $0x18] sm:$0x3]
  %v33 = vld [vmem:[%s1 + $0x20] sm:$0xff]
  %v34 = vld [vmem:[%s1 + $0x28] sm:$0x3]
  %v35 = vld [vmem:[%s2] sm:$0xff]
  %v36 = vld [vmem:[%s2 + $0x8] sm:$0x3]
  %v37 = vlaneseq
  %v38 = vshrl.u32 %v37, 7
  %v39 = vsub.s32 0, %v38
  %v40 = vrot.slane %v21, %v39
  %v41 = vlaneseq
  %v42 = vshrl.u32 %v41, 7
  %v43 = vsub.s32 0, %v42
  %v44 = vrot.slane %v22, %v43
  %v45 = vlaneseq
  %v46 = vshrl.u32 %v45, 7
  %v47 = vsub.s32 0, %v46
  %v48 = vrot.slane %v23, %v47
  %v49 = vlaneseq
  %v50 = vshrl.u32 %v49, 7
  %v51 = vsub.s32 0, %v50
  %v52 = vrot.slane %v24, %v51
  %v53 = vlaneseq
  %v54 = vshrl.u32 %v53, 7
  %v55 = vsub.s32 0, %v54
  %v56 = vrot.slane %v25, %v55
  %v57 = vlaneseq
  %v58 = vshrl.u32 %v57, 7
  %v59 = vsub.s32 0, %v58
  %v60 = vrot.slane %v26, %v59
  %v61 = vlaneseq
  %v62 = vshrl.u32 %v61, 7
  %v63 = vsub.s32 0, %v62
  %v64 = vrot.slane %v27, %v63
  %v65 = vlaneseq
  %v66 = vshrl.u32 %v65, 7
  %v67 = vsub.s32 0, %v66
  %v68 = vrot.slane %v28, %v67
  %70 = vset.pattern.permute.xlu0 0
  %71 = vperm.xlu0 %70, %v29
  %v72 = vpop.permute.xlu0 %71
  %75 = vset.pattern.permute.xlu0 0
  %76 = vperm.xlu0 %75, %v30
  %v77 = vpop.permute.xlu0 %76
  %v79 = vmul.f32 %v40, %v72
  %v80 = vmul.f32 %v40, %v77
  %v81 = vmul.f32 %v44, %v72
  %v82 = vmul.f32 %v44, %v77
  %v83 = vmul.f32 %v48, %v72
  %v84 = vmul.f32 %v48, %v77
  %v85 = vmul.f32 %v52, %v72
  %v86 = vmul.f32 %v52, %v77
  %v87 = vmul.f32 %v56, %v72
  %v88 = vmul.f32 %v56, %v77
  %v89 = vmul.f32 %v60, %v72
  %v90 = vmul.f32 %v60, %v77
  %v91 = vmul.f32 %v64, %v72
  %v92 = vmul.f32 %v64, %v77
  %v93 = vmul.f32 %v68, %v72
  %v94 = vmul.f32 %v68, %v77
  %v95 = vlaneseq
  %v96 = vshrl.u32 %v95, 7
  %v97 = vsub.s32 1, %v96
  %v98 = vrot.slane %v21, %v97
  %v99 = vlaneseq
  %v100 = vshrl.u32 %v99, 7
  %v101 = vsub.s32 1, %v100
  %v102 = vrot.slane %v22, %v101
  %v103 = vlaneseq
  %v104 = vshrl.u32 %v103, 7
  %v105 = vsub.s32 1, %v104
  %v106 = vrot.slane %v23, %v105
  %v107 = vlaneseq
  %v108 = vshrl.u32 %v107, 7
  %v109 = vsub.s32 1, %v108
  %v110 = vrot.slane %v24, %v109
  %v111 = vlaneseq
  %v112 = vshrl.u32 %v111, 7
  %v113 = vsub.s32 1, %v112
  %v114 = vrot.slane %v25, %v113
  %v115 = vlaneseq
  %v116 = vshrl.u32 %v115, 7
  %v117 = vsub.s32 1, %v116
  %v118 = vrot.slane %v26, %v117
  %v119 = vlaneseq
  %v120 = vshrl.u32 %v119, 7
  %v121 = vsub.s32 1, %v120
  %v122 = vrot.slane %v27, %v121
  %v123 = vlaneseq
  %v124 = vshrl.u32 %v123, 7
  %v125 = vsub.s32 1, %v124
  %v126 = vrot.slane %v28, %v125
  %128 = vset.pattern.permute.xlu0 0
  %129 = vperm.xlu0 %128, %v31
  %v130 = vpop.permute.xlu0 %129
  %133 = vset.pattern.permute.xlu0 0
  %134 = vperm.xlu0 %133, %v32
  %v135 = vpop.permute.xlu0 %134
  %v137 = vmul.f32 %v98, %v130
  %v138 = vmul.f32 %v98, %v135
  %v139 = vmul.f32 %v102, %v130
  %v140 = vmul.f32 %v102, %v135
  %v141 = vmul.f32 %v106, %v130
  %v142 = vmul.f32 %v106, %v135
  %v143 = vmul.f32 %v110, %v130
  %v144 = vmul.f32 %v110, %v135
  %v145 = vmul.f32 %v114, %v130
  %v146 = vmul.f32 %v114, %v135
  %v147 = vmul.f32 %v118, %v130
  %v148 = vmul.f32 %v118, %v135
  %v149 = vmul.f32 %v122, %v130
  %v150 = vmul.f32 %v122, %v135
  %v151 = vmul.f32 %v126, %v130
  %v152 = vmul.f32 %v126, %v135
  %v153 = vadd.f32 %v79, %v137
  %v154 = vadd.f32 %v80, %v138
  %v155 = vadd.f32 %v81, %v139
  %v156 = vadd.f32 %v82, %v140
  %v157 = vadd.f32 %v83, %v141
  %v158 = vadd.f32 %v84, %v142
  %v159 = vadd.f32 %v85, %v143
  %v160 = vadd.f32 %v86, %v144
  %v161 = vadd.f32 %v87, %v145
  %v162 = vadd.f32 %v88, %v146
  %v163 = vadd.f32 %v89, %v147
  %v164 = vadd.f32 %v90, %v148
  %v165 = vadd.f32 %v91, %v149
  %v166 = vadd.f32 %v92, %v150
  %v167 = vadd.f32 %v93, %v151
  %v168 = vadd.f32 %v94, %v152
  %v169 = vlaneseq
  %v170 = vshrl.u32 %v169, 7
  %v171 = vsub.s32 2, %v170
  %v172 = vrot.slane %v21, %v171
  %v173 = vlaneseq
  %v174 = vshrl.u32 %v173, 7
  %v175 = vsub.s32 2, %v174
  %v176 = vrot.slane %v22, %v175
  %v177 = vlaneseq
  %v178 = vshrl.u32 %v177, 7
  %v179 = vsub.s32 2, %v178
  %v180 = vrot.slane %v23, %v179
  %v181 = vlaneseq
  %v182 = vshrl.u32 %v181, 7
  %v183 = vsub.s32 2, %v182
  %v184 = vrot.slane %v24, %v183
  %v185 = vlaneseq
  %v186 = vshrl.u32 %v185, 7
  %v187 = vsub.s32 2, %v186
  %v188 = vrot.slane %v25, %v187
  %v189 = vlaneseq
  %v190 = vshrl.u32 %v189, 7
  %v191 = vsub.s32 2, %v190
  %v192 = vrot.slane %v26, %v191
  %v193 = vlaneseq
  %v194 = vshrl.u32 %v193, 7
  %v195 = vsub.s32 2, %v194
  %v196 = vrot.slane %v27, %v195
  %v197 = vlaneseq
  %v198 = vshrl.u32 %v197, 7
  %v199 = vsub.s32 2, %v198
  %v200 = vrot.slane %v28, %v199
  %202 = vset.pattern.permute.xlu0 0
  %203 = vperm.xlu0 %202, %v33
  %v204 = vpop.permute.xlu0 %203
  %207 = vset.pattern.permute.xlu0 0
  %208 = vperm.xlu0 %207, %v34
  %v209 = vpop.permute.xlu0 %208
  %v211 = vmul.f32 %v172, %v204
  %v212 = vmul.f32 %v172, %v209
  %v213 = vmul.f32 %v176, %v204
  %v214 = vmul.f32 %v176, %v209
  %v215 = vmul.f32 %v180, %v204
  %v216 = vmul.f32 %v180, %v209
  %v217 = vmul.f32 %v184, %v204
  %v218 = vmul.f32 %v184, %v209
  %v219 = vmul.f32 %v188, %v204
  %v220 = vmul.f32 %v188, %v209
  %v221 = vmul.f32 %v192, %v204
  %v222 = vmul.f32 %v192, %v209
  %v223 = vmul.f32 %v196, %v204
  %v224 = vmul.f32 %v196, %v209
  %v225 = vmul.f32 %v200, %v204
  %v226 = vmul.f32 %v200, %v209
  %v227 = vadd.f32 %v153, %v211
  %v228 = vadd.f32 %v154, %v212
  %v229 = vadd.f32 %v155, %v213
  %v230 = vadd.f32 %v156, %v214
  %v231 = vadd.f32 %v157, %v215
  %v232 = vadd.f32 %v158, %v216
  %v233 = vadd.f32 %v159, %v217
  %v234 = vadd.f32 %v160, %v218
  %v235 = vadd.f32 %v161, %v219
  %v236 = vadd.f32 %v162, %v220
  %v237 = vadd.f32 %v163, %v221
  %v238 = vadd.f32 %v164, %v222
  %v239 = vadd.f32 %v165, %v223
  %v240 = vadd.f32 %v166, %v224
  %v241 = vadd.f32 %v167, %v225
  %v242 = vadd.f32 %v168, %v226
  %244 = vset.pattern.permute.xlu0 0
  %245 = vperm.xlu0 %244, %v35
  %v246 = vpop.permute.xlu0 %245
  %249 = vset.pattern.permute.xlu0 0
  %250 = vperm.xlu0 %249, %v36
  %v251 = vpop.permute.xlu0 %250
  %v253 = vadd.f32 %v227, %v246
  %v254 = vadd.f32 %v228, %v251
  %v255 = vadd.f32 %v229, %v246
  %v256 = vadd.f32 %v230, %v251
  %v257 = vadd.f32 %v231, %v246
  %v258 = vadd.f32 %v232, %v251
  %v259 = vadd.f32 %v233, %v246
  %v260 = vadd.f32 %v234, %v251
  %v261 = vadd.f32 %v235, %v246
  %v262 = vadd.f32 %v236, %v251
  %v263 = vadd.f32 %v237, %v246
  %v264 = vadd.f32 %v238, %v251
  %v265 = vadd.f32 %v239, %v246
  %v266 = vadd.f32 %v240, %v251
  %v267 = vadd.f32 %v241, %v246
  %v268 = vadd.f32 %v242, %v251
  %v269 = vmul.f32 %v98, %v72
  %v270 = vmul.f32 %v98, %v77
  %v271 = vmul.f32 %v102, %v72
  %v272 = vmul.f32 %v102, %v77
  %v273 = vmul.f32 %v106, %v72
  %v274 = vmul.f32 %v106, %v77
  %v275 = vmul.f32 %v110, %v72
  %v276 = vmul.f32 %v110, %v77
  %v277 = vmul.f32 %v114, %v72
  %v278 = vmul.f32 %v114, %v77
  %v279 = vmul.f32 %v118, %v72
  %v280 = vmul.f32 %v118, %v77
  %v281 = vmul.f32 %v122, %v72
  %v282 = vmul.f32 %v122, %v77
  %v283 = vmul.f32 %v126, %v72
  %v284 = vmul.f32 %v126, %v77
  %v285 = vmul.f32 %v172, %v130
  %v286 = vmul.f32 %v172, %v135
  %v287 = vmul.f32 %v176, %v130
  %v288 = vmul.f32 %v176, %v135
  %v289 = vmul.f32 %v180, %v130
  %v290 = vmul.f32 %v180, %v135
  %v291 = vmul.f32 %v184, %v130
  %v292 = vmul.f32 %v184, %v135
  %v293 = vmul.f32 %v188, %v130
  %v294 = vmul.f32 %v188, %v135
  %v295 = vmul.f32 %v192, %v130
  %v296 = vmul.f32 %v192, %v135
  %v297 = vmul.f32 %v196, %v130
  %v298 = vmul.f32 %v196, %v135
  %v299 = vmul.f32 %v200, %v130
  %v300 = vmul.f32 %v200, %v135
  %v301 = vadd.f32 %v269, %v285
  %v302 = vadd.f32 %v270, %v286
  %v303 = vadd.f32 %v271, %v287
  %v304 = vadd.f32 %v272, %v288
  %v305 = vadd.f32 %v273, %v289
  %v306 = vadd.f32 %v274, %v290
  %v307 = vadd.f32 %v275, %v291
  %v308 = vadd.f32 %v276, %v292
  %v309 = vadd.f32 %v277, %v293
  %v310 = vadd.f32 %v278, %v294
  %v311 = vadd.f32 %v279, %v295
  %v312 = vadd.f32 %v280, %v296
  %v313 = vadd.f32 %v281, %v297
  %v314 = vadd.f32 %v282, %v298
  %v315 = vadd.f32 %v283, %v299
  %v316 = vadd.f32 %v284, %v300
  %v317 = vlaneseq
  %v318 = vshrl.u32 %v317, 7
  %v319 = vsub.s32 3, %v318
  %v320 = vrot.slane %v21, %v319
  %v321 = vlaneseq
  %v322 = vshrl.u32 %v321, 7
  %v323 = vsub.s32 3, %v322
  %v324 = vrot.slane %v22, %v323
  %v325 = vlaneseq
  %v326 = vshrl.u32 %v325, 7
  %v327 = vsub.s32 3, %v326
  %v328 = vrot.slane %v23, %v327
  %v329 = vlaneseq
  %v330 = vshrl.u32 %v329, 7
  %v331 = vsub.s32 3, %v330
  %v332 = vrot.slane %v24, %v331
  %v333 = vlaneseq
  %v334 = vshrl.u32 %v333, 7
  %v335 = vsub.s32 3, %v334
  %v336 = vrot.slane %v25, %v335
  %v337 = vlaneseq
  %v338 = vshrl.u32 %v337, 7
  %v339 = vsub.s32 3, %v338
  %v340 = vrot.slane %v26, %v339
  %v341 = vlaneseq
  %v342 = vshrl.u32 %v341, 7
  %v343 = vsub.s32 3, %v342
  %v344 = vrot.slane %v27, %v343
  %v345 = vlaneseq
  %v346 = vshrl.u32 %v345, 7
  %v347 = vsub.s32 3, %v346
  %v348 = vrot.slane %v28, %v347
  %v349 = vmul.f32 %v320, %v204
  %v350 = vmul.f32 %v320, %v209
  %v351 = vmul.f32 %v324, %v204
  %v352 = vmul.f32 %v324, %v209
  %v353 = vmul.f32 %v328, %v204
  %v354 = vmul.f32 %v328, %v209
  %v355 = vmul.f32 %v332, %v204
  %v356 = vmul.f32 %v332, %v209
  %v357 = vmul.f32 %v336, %v204
  %v358 = vmul.f32 %v336, %v209
  %v359 = vmul.f32 %v340, %v204
  %v360 = vmul.f32 %v340, %v209
  %v361 = vmul.f32 %v344, %v204
  %v362 = vmul.f32 %v344, %v209
  %v363 = vmul.f32 %v348, %v204
  %v364 = vmul.f32 %v348, %v209
  %v365 = vadd.f32 %v301, %v349
  %v366 = vadd.f32 %v302, %v350
  %v367 = vadd.f32 %v303, %v351
  %v368 = vadd.f32 %v304, %v352
  %v369 = vadd.f32 %v305, %v353
  %v370 = vadd.f32 %v306, %v354
  %v371 = vadd.f32 %v307, %v355
  %v372 = vadd.f32 %v308, %v356
  %v373 = vadd.f32 %v309, %v357
  %v374 = vadd.f32 %v310, %v358
  %v375 = vadd.f32 %v311, %v359
  %v376 = vadd.f32 %v312, %v360
  %v377 = vadd.f32 %v313, %v361
  %v378 = vadd.f32 %v314, %v362
  %v379 = vadd.f32 %v315, %v363
  %v380 = vadd.f32 %v316, %v364
  %v381 = vadd.f32 %v365, %v246
  %v382 = vadd.f32 %v366, %v251
  %v383 = vadd.f32 %v367, %v246
  %v384 = vadd.f32 %v368, %v251
  %v385 = vadd.f32 %v369, %v246
  %v386 = vadd.f32 %v370, %v251
  %v387 = vadd.f32 %v371, %v246
  %v388 = vadd.f32 %v372, %v251
  %v389 = vadd.f32 %v373, %v246
  %v390 = vadd.f32 %v374, %v251
  %v391 = vadd.f32 %v375, %v246
  %v392 = vadd.f32 %v376, %v251
  %v393 = vadd.f32 %v377, %v246
  %v394 = vadd.f32 %v378, %v251
  %v395 = vadd.f32 %v379, %v246
  %v396 = vadd.f32 %v380, %v251
  %v397 = vmul.f32 %v172, %v72
  %v398 = vmul.f32 %v172, %v77
  %v399 = vmul.f32 %v176, %v72
  %v400 = vmul.f32 %v176, %v77
  %v401 = vmul.f32 %v180, %v72
  %v402 = vmul.f32 %v180, %v77
  %v403 = vmul.f32 %v184, %v72
  %v404 = vmul.f32 %v184, %v77
  %v405 = vmul.f32 %v188, %v72
  %v406 = vmul.f32 %v188, %v77
  %v407 = vmul.f32 %v192, %v72
  %v408 = vmul.f32 %v192, %v77
  %v409 = vmul.f32 %v196, %v72
  %v410 = vmul.f32 %v196, %v77
  %v411 = vmul.f32 %v200, %v72
  %v412 = vmul.f32 %v200, %v77
  %v413 = vmul.f32 %v320, %v130
  %v414 = vmul.f32 %v320, %v135
  %v415 = vmul.f32 %v324, %v130
  %v416 = vmul.f32 %v324, %v135
  %v417 = vmul.f32 %v328, %v130
  %v418 = vmul.f32 %v328, %v135
  %v419 = vmul.f32 %v332, %v130
  %v420 = vmul.f32 %v332, %v135
  %v421 = vmul.f32 %v336, %v130
  %v422 = vmul.f32 %v336, %v135
  %v423 = vmul.f32 %v340, %v130
  %v424 = vmul.f32 %v340, %v135
  %v425 = vmul.f32 %v344, %v130
  %v426 = vmul.f32 %v344, %v135
  %v427 = vmul.f32 %v348, %v130
  %v428 = vmul.f32 %v348, %v135
  %v429 = vadd.f32 %v397, %v413
  %v430 = vadd.f32 %v398, %v414
  %v431 = vadd.f32 %v399, %v415
  %v432 = vadd.f32 %v400, %v416
  %v433 = vadd.f32 %v401, %v417
  %v434 = vadd.f32 %v402, %v418
  %v435 = vadd.f32 %v403, %v419
  %v436 = vadd.f32 %v404, %v420
  %v437 = vadd.f32 %v405, %v421
  %v438 = vadd.f32 %v406, %v422
  %v439 = vadd.f32 %v407, %v423
  %v440 = vadd.f32 %v408, %v424
  %v441 = vadd.f32 %v409, %v425
  %v442 = vadd.f32 %v410, %v426
  %v443 = vadd.f32 %v411, %v427
  %v444 = vadd.f32 %v412, %v428
  %v445 = vmul.f32 %v40, %v204
  %v446 = vmul.f32 %v40, %v209
  %v447 = vmul.f32 %v44, %v204
  %v448 = vmul.f32 %v44, %v209
  %v449 = vmul.f32 %v48, %v204
  %v450 = vmul.f32 %v48, %v209
  %v451 = vmul.f32 %v52, %v204
  %v452 = vmul.f32 %v52, %v209
  %v453 = vmul.f32 %v56, %v204
  %v454 = vmul.f32 %v56, %v209
  %v455 = vmul.f32 %v60, %v204
  %v456 = vmul.f32 %v60, %v209
  %v457 = vmul.f32 %v64, %v204
  %v458 = vmul.f32 %v64, %v209
  %v459 = vmul.f32 %v68, %v204
  %v460 = vmul.f32 %v68, %v209
  %477 = vrot.lane.b32.xlu0 %v445, 127
  %v478 = vpop.permute.xlu0 %477
  %479 = vrot.lane.b32.xlu0 %v446, 127
  %v480 = vpop.permute.xlu0 %479
  %481 = vrot.lane.b32.xlu0 %v447, 127
  %v482 = vpop.permute.xlu0 %481
  %483 = vrot.lane.b32.xlu0 %v448, 127
  %v484 = vpop.permute.xlu0 %483
  %485 = vrot.lane.b32.xlu0 %v449, 127
  %v486 = vpop.permute.xlu0 %485
  %487 = vrot.lane.b32.xlu0 %v450, 127
  %v488 = vpop.permute.xlu0 %487
  %489 = vrot.lane.b32.xlu0 %v451, 127
  %v490 = vpop.permute.xlu0 %489
  %491 = vrot.lane.b32.xlu0 %v452, 127
  %v492 = vpop.permute.xlu0 %491
  %493 = vrot.lane.b32.xlu0 %v453, 127
  %v494 = vpop.permute.xlu0 %493
  %495 = vrot.lane.b32.xlu0 %v454, 127
  %v496 = vpop.permute.xlu0 %495
  %497 = vrot.lane.b32.xlu0 %v455, 127
  %v498 = vpop.permute.xlu0 %497
  %499 = vrot.lane.b32.xlu0 %v456, 127
  %v500 = vpop.permute.xlu0 %499
  %501 = vrot.lane.b32.xlu0 %v457, 127
  %v502 = vpop.permute.xlu0 %501
  %503 = vrot.lane.b32.xlu0 %v458, 127
  %v504 = vpop.permute.xlu0 %503
  %505 = vrot.lane.b32.xlu0 %v459, 127
  %v506 = vpop.permute.xlu0 %505
  %507 = vrot.lane.b32.xlu0 %v460, 127
  %v508 = vpop.permute.xlu0 %507
  %v525 = vadd.f32 %v429, %v478
  %v526 = vadd.f32 %v430, %v480
  %v527 = vadd.f32 %v431, %v482
  %v528 = vadd.f32 %v432, %v484
  %v529 = vadd.f32 %v433, %v486
  %v530 = vadd.f32 %v434, %v488
  %v531 = vadd.f32 %v435, %v490
  %v532 = vadd.f32 %v436, %v492
  %v533 = vadd.f32 %v437, %v494
  %v534 = vadd.f32 %v438, %v496
  %v535 = vadd.f32 %v439, %v498
  %v536 = vadd.f32 %v440, %v500
  %v537 = vadd.f32 %v441, %v502
  %v538 = vadd.f32 %v442, %v504
  %v539 = vadd.f32 %v443, %v506
  %v540 = vadd.f32 %v444, %v508
  %v541 = vadd.f32 %v525, %v246
  %v542 = vadd.f32 %v526, %v251
  %v543 = vadd.f32 %v527, %v246
  %v544 = vadd.f32 %v528, %v251
  %v545 = vadd.f32 %v529, %v246
  %v546 = vadd.f32 %v530, %v251
  %v547 = vadd.f32 %v531, %v246
  %v548 = vadd.f32 %v532, %v251
  %v549 = vadd.f32 %v533, %v246
  %v550 = vadd.f32 %v534, %v251
  %v551 = vadd.f32 %v535, %v246
  %v552 = vadd.f32 %v536, %v251
  %v553 = vadd.f32 %v537, %v246
  %v554 = vadd.f32 %v538, %v251
  %v555 = vadd.f32 %v539, %v246
  %v556 = vadd.f32 %v540, %v251
  %v557 = vmul.f32 %v320, %v72
  %v558 = vmul.f32 %v320, %v77
  %v559 = vmul.f32 %v324, %v72
  %v560 = vmul.f32 %v324, %v77
  %v561 = vmul.f32 %v328, %v72
  %v562 = vmul.f32 %v328, %v77
  %v563 = vmul.f32 %v332, %v72
  %v564 = vmul.f32 %v332, %v77
  %v565 = vmul.f32 %v336, %v72
  %v566 = vmul.f32 %v336, %v77
  %v567 = vmul.f32 %v340, %v72
  %v568 = vmul.f32 %v340, %v77
  %v569 = vmul.f32 %v344, %v72
  %v570 = vmul.f32 %v344, %v77
  %v571 = vmul.f32 %v348, %v72
  %v572 = vmul.f32 %v348, %v77
  %v573 = vmul.f32 %v40, %v130
  %v574 = vmul.f32 %v40, %v135
  %v575 = vmul.f32 %v44, %v130
  %v576 = vmul.f32 %v44, %v135
  %v577 = vmul.f32 %v48, %v130
  %v578 = vmul.f32 %v48, %v135
  %v579 = vmul.f32 %v52, %v130
  %v580 = vmul.f32 %v52, %v135
  %v581 = vmul.f32 %v56, %v130
  %v582 = vmul.f32 %v56, %v135
  %v583 = vmul.f32 %v60, %v130
  %v584 = vmul.f32 %v60, %v135
  %v585 = vmul.f32 %v64, %v130
  %v586 = vmul.f32 %v64, %v135
  %v587 = vmul.f32 %v68, %v130
  %v588 = vmul.f32 %v68, %v135
  %605 = vrot.lane.b32.xlu0 %v573, 127
  %v606 = vpop.permute.xlu0 %605
  %607 = vrot.lane.b32.xlu0 %v574, 127
  %v608 = vpop.permute.xlu0 %607
  %609 = vrot.lane.b32.xlu0 %v575, 127
  %v610 = vpop.permute.xlu0 %609
  %611 = vrot.lane.b32.xlu0 %v576, 127
  %v612 = vpop.permute.xlu0 %611
  %613 = vrot.lane.b32.xlu0 %v577, 127
  %v614 = vpop.permute.xlu0 %613
  %615 = vrot.lane.b32.xlu0 %v578, 127
  %v616 = vpop.permute.xlu0 %615
  %617 = vrot.lane.b32.xlu0 %v579, 127
  %v618 = vpop.permute.xlu0 %617
  %619 = vrot.lane.b32.xlu0 %v580, 127
  %v620 = vpop.permute.xlu0 %619
  %621 = vrot.lane.b32.xlu0 %v581, 127
  %v622 = vpop.permute.xlu0 %621
  %623 = vrot.lane.b32.xlu0 %v582, 127
  %v624 = vpop.permute.xlu0 %623
  %625 = vrot.lane.b32.xlu0 %v583, 127
  %v626 = vpop.permute.xlu0 %625
  %627 = vrot.lane.b32.xlu0 %v584, 127
  %v628 = vpop.permute.xlu0 %627
  %629 = vrot.lane.b32.xlu0 %v585, 127
  %v630 = vpop.permute.xlu0 %629
  %631 = vrot.lane.b32.xlu0 %v586, 127
  %v632 = vpop.permute.xlu0 %631
  %633 = vrot.lane.b32.xlu0 %v587, 127
  %v634 = vpop.permute.xlu0 %633
  %635 = vrot.lane.b32.xlu0 %v588, 127
  %v636 = vpop.permute.xlu0 %635
  %v653 = vadd.f32 %v557, %v606
  %v654 = vadd.f32 %v558, %v608
  %v655 = vadd.f32 %v559, %v610
  %v656 = vadd.f32 %v560, %v612
  %v657 = vadd.f32 %v561, %v614
  %v658 = vadd.f32 %v562, %v616
  %v659 = vadd.f32 %v563, %v618
  %v660 = vadd.f32 %v564, %v620
  %v661 = vadd.f32 %v565, %v622
  %v662 = vadd.f32 %v566, %v624
  %v663 = vadd.f32 %v567, %v626
  %v664 = vadd.f32 %v568, %v628
  %v665 = vadd.f32 %v569, %v630
  %v666 = vadd.f32 %v570, %v632
  %v667 = vadd.f32 %v571, %v634
  %v668 = vadd.f32 %v572, %v636
  %v669 = vmul.f32 %v98, %v204
  %v670 = vmul.f32 %v98, %v209
  %v671 = vmul.f32 %v102, %v204
  %v672 = vmul.f32 %v102, %v209
  %v673 = vmul.f32 %v106, %v204
  %v674 = vmul.f32 %v106, %v209
  %v675 = vmul.f32 %v110, %v204
  %v676 = vmul.f32 %v110, %v209
  %v677 = vmul.f32 %v114, %v204
  %v678 = vmul.f32 %v114, %v209
  %v679 = vmul.f32 %v118, %v204
  %v680 = vmul.f32 %v118, %v209
  %v681 = vmul.f32 %v122, %v204
  %v682 = vmul.f32 %v122, %v209
  %v683 = vmul.f32 %v126, %v204
  %v684 = vmul.f32 %v126, %v209
  %701 = vrot.lane.b32.xlu0 %v669, 127
  %v702 = vpop.permute.xlu0 %701
  %703 = vrot.lane.b32.xlu0 %v670, 127
  %v704 = vpop.permute.xlu0 %703
  %705 = vrot.lane.b32.xlu0 %v671, 127
  %v706 = vpop.permute.xlu0 %705
  %707 = vrot.lane.b32.xlu0 %v672, 127
  %v708 = vpop.permute.xlu0 %707
  %709 = vrot.lane.b32.xlu0 %v673, 127
  %v710 = vpop.permute.xlu0 %709
  %711 = vrot.lane.b32.xlu0 %v674, 127
  %v712 = vpop.permute.xlu0 %711
  %713 = vrot.lane.b32.xlu0 %v675, 127
  %v714 = vpop.permute.xlu0 %713
  %715 = vrot.lane.b32.xlu0 %v676, 127
  %v716 = vpop.permute.xlu0 %715
  %717 = vrot.lane.b32.xlu0 %v677, 127
  %v718 = vpop.permute.xlu0 %717
  %719 = vrot.lane.b32.xlu0 %v678, 127
  %v720 = vpop.permute.xlu0 %719
  %721 = vrot.lane.b32.xlu0 %v679, 127
  %v722 = vpop.permute.xlu0 %721
  %723 = vrot.lane.b32.xlu0 %v680, 127
  %v724 = vpop.permute.xlu0 %723
  %725 = vrot.lane.b32.xlu0 %v681, 127
  %v726 = vpop.permute.xlu0 %725
  %727 = vrot.lane.b32.xlu0 %v682, 127
  %v728 = vpop.permute.xlu0 %727
  %729 = vrot.lane.b32.xlu0 %v683, 127
  %v730 = vpop.permute.xlu0 %729
  %731 = vrot.lane.b32.xlu0 %v684, 127
  %v732 = vpop.permute.xlu0 %731
  %v749 = vadd.f32 %v653, %v702
  %v750 = vadd.f32 %v654, %v704
  %v751 = vadd.f32 %v655, %v706
  %v752 = vadd.f32 %v656, %v708
  %v753 = vadd.f32 %v657, %v710
  %v754 = vadd.f32 %v658, %v712
  %v755 = vadd.f32 %v659, %v714
  %v756 = vadd.f32 %v660, %v716
  %v757 = vadd.f32 %v661, %v718
  %v758 = vadd.f32 %v662, %v720
  %v759 = vadd.f32 %v663, %v722
  %v760 = vadd.f32 %v664, %v724
  %v761 = vadd.f32 %v665, %v726
  %v762 = vadd.f32 %v666, %v728
  %v763 = vadd.f32 %v667, %v730
  %v764 = vadd.f32 %v668, %v732
  %v765 = vadd.f32 %v749, %v246
  %v766 = vadd.f32 %v750, %v251
  %v767 = vadd.f32 %v751, %v246
  %v768 = vadd.f32 %v752, %v251
  %v769 = vadd.f32 %v753, %v246
  %v770 = vadd.f32 %v754, %v251
  %v771 = vadd.f32 %v755, %v246
  %v772 = vadd.f32 %v756, %v251
  %v773 = vadd.f32 %v757, %v246
  %v774 = vadd.f32 %v758, %v251
  %v775 = vadd.f32 %v759, %v246
  %v776 = vadd.f32 %v760, %v251
  %v777 = vadd.f32 %v761, %v246
  %v778 = vadd.f32 %v762, %v251
  %v779 = vadd.f32 %v763, %v246
  %v780 = vadd.f32 %v764, %v251
  %v781 = vmax.f32 %v253, %v381
  %v782 = vmax.f32 %v254, %v382
  %v783 = vmax.f32 %v255, %v383
  %v784 = vmax.f32 %v256, %v384
  %v785 = vmax.f32 %v257, %v385
  %v786 = vmax.f32 %v258, %v386
  %v787 = vmax.f32 %v259, %v387
  %v788 = vmax.f32 %v260, %v388
  %v789 = vmax.f32 %v261, %v389
  %v790 = vmax.f32 %v262, %v390
  %v791 = vmax.f32 %v263, %v391
  %v792 = vmax.f32 %v264, %v392
  %v793 = vmax.f32 %v265, %v393
  %v794 = vmax.f32 %v266, %v394
  %v795 = vmax.f32 %v267, %v395
  %v796 = vmax.f32 %v268, %v396
  %v797 = vmax.f32 %v781, 0.0
  %v798 = vmax.f32 %v782, 0.0
  %v799 = vmax.f32 %v783, 0.0
  %v800 = vmax.f32 %v784, 0.0
  %v801 = vmax.f32 %v785, 0.0
  %v802 = vmax.f32 %v786, 0.0
  %v803 = vmax.f32 %v787, 0.0
  %v804 = vmax.f32 %v788, 0.0
  %v805 = vmax.f32 %v789, 0.0
  %v806 = vmax.f32 %v790, 0.0
  %v807 = vmax.f32 %v791, 0.0
  %v808 = vmax.f32 %v792, 0.0
  %v809 = vmax.f32 %v793, 0.0
  %v810 = vmax.f32 %v794, 0.0
  %v811 = vmax.f32 %v795, 0.0
  %v812 = vmax.f32 %v796, 0.0
  %v813 = vmax.f32 %v541, %v765
  %v814 = vmax.f32 %v542, %v766
  %v815 = vmax.f32 %v543, %v767
  %v816 = vmax.f32 %v544, %v768
  %v817 = vmax.f32 %v545, %v769
  %v818 = vmax.f32 %v546, %v770
  %v819 = vmax.f32 %v547, %v771
  %v820 = vmax.f32 %v548, %v772
  %v821 = vmax.f32 %v549, %v773
  %v822 = vmax.f32 %v550, %v774
  %v823 = vmax.f32 %v551, %v775
  %v824 = vmax.f32 %v552, %v776
  %v825 = vmax.f32 %v553, %v777
  %v826 = vmax.f32 %v554, %v778
  %v827 = vmax.f32 %v555, %v779
  %v828 = vmax.f32 %v556, %v780
  %v829 = vmax.f32 %v813, 0.0
  %v830 = vmax.f32 %v814, 0.0
  %v831 = vmax.f32 %v815, 0.0
  %v832 = vmax.f32 %v816, 0.0
  %v833 = vmax.f32 %v817, 0.0
  %v834 = vmax.f32 %v818, 0.0
  %v835 = vmax.f32 %v819, 0.0
  %v836 = vmax.f32 %v820, 0.0
  %v837 = vmax.f32 %v821, 0.0
  %v838 = vmax.f32 %v822, 0.0
  %v839 = vmax.f32 %v823, 0.0
  %v840 = vmax.f32 %v824, 0.0
  %v841 = vmax.f32 %v825, 0.0
  %v842 = vmax.f32 %v826, 0.0
  %v843 = vmax.f32 %v827, 0.0
  %v844 = vmax.f32 %v828, 0.0
  %v845 = vld [vmem:[%s3] sm:$0xf]
  %v846 = vld [vmem:[%s3 + $0x4] sm:$0xf]
  %v847 = vld [vmem:[%s3 + $0x8] sm:$0xf]
  %v848 = vld [vmem:[%s3 + $0xc] sm:$0xf]
  %v849 = vld [vmem:[%s3 + $0x10] sm:$0xf]
  %v850 = vld [vmem:[%s3 + $0x14] sm:$0xf]
  %v851 = vld [vmem:[%s3 + $0x18] sm:$0x1]
  %v852 = vld [vmem:[%s3 + $0x1c] sm:$0xf]
  %v853 = vld [vmem:[%s3 + $0x20] sm:$0xf]
  %v854 = vld [vmem:[%s3 + $0x24] sm:$0xf]
  %v855 = vld [vmem:[%s3 + $0x28] sm:$0xf]
  %v856 = vld [vmem:[%s3 + $0x2c] sm:$0xf]
  %v857 = vld [vmem:[%s3 + $0x30] sm:$0xf]
  %v858 = vld [vmem:[%s3 + $0x34] sm:$0x1]
  %v859 = vld [vmem:[%s3 + $0x38] sm:$0xf]
  %v860 = vld [vmem:[%s3 + $0x3c] sm:$0xf]
  %v861 = vld [vmem:[%s3 + $0x40] sm:$0xf]
  %v862 = vld [vmem:[%s3 + $0x44] sm:$0xf]
  %v863 = vld [vmem:[%s3 + $0x48] sm:$0xf]
  %v864 = vld [vmem:[%s3 + $0x4c] sm:$0xf]
  %v865 = vld [vmem:[%s3 + $0x50] sm:$0x1]
  %v866 = vld [vmem:[%s4] sm:$0xff]
  %v867 = vld [vmem:[%s4 + $0x8] sm:$0xff]
  %v868 = vld [vmem:[%s4 + $0x10] sm:$0xff]
  %v869 = vld [vmem:[%s4 + $0x18] sm:$0xff]
  %v870 = vld [vmem:[%s4 + $0x20] sm:$0xff]
  %v871 = vld [vmem:[%s4 + $0x28] sm:$0xff]
  %v872 = vld [vmem:[%s4 + $0x30] sm:$0x3]
  %v873 = vpack.c.bf16 %v798, %v797
  %v874 = vpack.c.bf16 %v800, %v799
  %v875 = vpack.c.bf16 %v802, %v801
  %v876 = vpack.c.bf16 %v804, %v803
  %v877 = vpack.c.bf16 %v806, %v805
  %v878 = vpack.c.bf16 %v808, %v807
  %v879 = vpack.c.bf16 %v810, %v809
  %v880 = vpack.c.bf16 %v812, %v811
  %v881 = vpack.c.bf16 %v830, %v829
  %v882 = vpack.c.bf16 %v832, %v831
  %v883 = vpack.c.bf16 %v834, %v833
  %v884 = vpack.c.bf16 %v836, %v835
  %v885 = vpack.c.bf16 %v838, %v837
  %v886 = vpack.c.bf16 %v840, %v839
  %v887 = vpack.c.bf16 %v842, %v841
  %v888 = vpack.c.bf16 %v844, %v843
  %v896 = vunpack.c.l.b16 %v852
  %v897 = vunpack.c.l.b16 %v853
  %v898 = vunpack.c.l.b16 %v854
  %v899 = vunpack.c.l.b16 %v855
  %v900 = vunpack.c.l.b16 %v856
  %v901 = vunpack.c.l.b16 %v857
  %v902 = vunpack.c.l.b16 %v858
  %v903 = vpack.c.b16 %v897, %v896
  %v904 = vpack.c.b16 %v899, %v898
  %v905 = vpack.c.b16 %v901, %v900
  %v906 = vpack.c.b16 %v902, %v902
  %vm907 = vcmask 80896
  %v909 = vsel %vm907, %v903, 0
  %v912 = vsel %vm907, %v904, 0
  %v915 = vsel %vm907, %v905, 0
  %v918 = vsel %vm907, %v906, 0
  %vm920 = vcmask 1044480
  %v922 = vsel %vm920, %v881, 0
  %924 = vmatprep.subr.bf16.mxu0 0
  %925 = vmatpush1.bf16.msra.mxu0 %v922
  %926 = vmatprep.subr.bf16.mxu0 0
  %927 = vmatpush1.bf16.msra.mxu0 0
  %928 = vmatprep.subr.bf16.mxu0 0
  %929 = vmatpush1.bf16.msra.mxu0 0
  %930 = vmatprep.subr.bf16.mxu0 0
  %931 = vmatpush1.bf16.msra.mxu0 0
  %932 = vmatprep.subr.bf16.mxu0 0
  %933 = vmatpush1.bf16.msra.mxu0 0
  %934 = vmatprep.subr.bf16.mxu0 0
  %935 = vmatpush1.bf16.msra.mxu0 0
  %936 = vmatprep.subr.bf16.mxu0 0
  %937 = vmatpush1.bf16.msra.mxu0 0
  %938 = vmatprep.subr.bf16.mxu0 0
  %939 = vmatpush1.bf16.msra.mxu0 0
  %940 = vmatprep.subr.bf16.mxu0 0
  %941 = vmatpush1.bf16.msra.mxu0 0
  %942 = vmatprep.subr.bf16.mxu0 0
  %943 = vmatpush1.bf16.msra.mxu0 0
  %944 = vmatprep.subr.bf16.mxu0 0
  %945 = vmatpush1.bf16.msra.mxu0 0
  %946 = vmatprep.subr.bf16.mxu0 0
  %947 = vmatpush1.bf16.msra.mxu0 0
  %948 = vmatprep.subr.bf16.mxu0 0
  %949 = vmatpush1.bf16.msra.mxu0 0
  %950 = vmatprep.subr.bf16.mxu0 0
  %951 = vmatpush1.bf16.msra.mxu0 0
  %952 = vmatprep.subr.bf16.mxu0 0
  %953 = vmatpush1.bf16.msra.mxu0 0
  %954 = vmatprep.subr.bf16.mxu0 0
  %955 = vmatpush1.bf16.msra.mxu0 0
  %956 = vmatprep.mubr.bf16.mxu0 0
  %957 = vmatmul.mubr.bf16.gmra.mrb[0].mxu0 %v909
  %v958 = vpop.f32.mrb[0].mxu0
  %v959 = vadd.f32 0.0, %v958
  %v960 = vpop.f32.mrb[0].mxu0
  %v961 = vpop.f32.mrb[0].mxu0
  %v962 = vadd.f32 0.0, %v961
  %v963 = vpop.f32.mrb[0].mxu0
  %964 = vmatprep.mubr.bf16.mxu0 0
  %965 = vmatmul.mubr.bf16.gmra.mrb[0].mxu0 %v912
  %v966 = vpop.f32.mrb[0].mxu0
  %v967 = vadd.f32 0.0, %v966
  %v968 = vpop.f32.mrb[0].mxu0
  %v969 = vpop.f32.mrb[0].mxu0
  %v970 = vadd.f32 0.0, %v969
  %v971 = vpop.f32.mrb[0].mxu0
  %972 = vmatprep.mubr.bf16.mxu0 0
  %973 = vmatmul.mubr.bf16.gmra.mrb[0].mxu0 %v915
  %v974 = vpop.f32.mrb[0].mxu0
  %v975 = vadd.f32 0.0, %v974
  %v976 = vpop.f32.mrb[0].mxu0
  %v977 = vpop.f32.mrb[0].mxu0
  %v978 = vadd.f32 0.0, %v977
  %v979 = vpop.f32.mrb[0].mxu0
  %980 = vmatprep.mubr.bf16.mxu0 0
  %981 = vmatmul.mubr.bf16.gmra.mrb[0].mxu0 %v918
  %v982 = vpop.f32.mrb[0].mxu0
  %v983 = vadd.f32 0.0, %v982
  %v984 = vpop.f32.mrb[0].mxu0
  %v985 = vpop.f32.mrb[0].mxu0
  %v986 = vpop.f32.mrb[0].mxu0
  %987 = vdwg.mxu0
  %v989 = vsel %vm920, %v882, 0
  %991 = vmatprep.subr.bf16.mxu0 0
  %992 = vmatpush1.bf16.msra.mxu0 %v989
  %993 = vmatprep.subr.bf16.mxu0 0
  %994 = vmatpush1.bf16.msra.mxu0 0
  %995 = vmatprep.subr.bf16.mxu0 0
  %996 = vmatpush1.bf16.msra.mxu0 0
  %997 = vmatprep.subr.bf16.mxu0 0
  %998 = vmatpush1.bf16.msra.mxu0 0
  %999 = vmatprep.subr.bf16.mxu0 0
  %1000 = vmatpush1.bf16.msra.mxu0 0
  %1001 = vmatprep.subr.bf16.mxu0 0
  %1002 = vmatpush1.bf16.msra.mxu0 0
  %1003 = vmatprep.subr.bf16.mxu0 0
  %1004 = vmatpush1.bf16.msra.mxu0 0
  %1005 = vmatprep.subr.bf16.mxu0 0
  %1006 = vmatpush1.bf16.msra.mxu0 0
  %1007 = vmatprep.subr.bf16.mxu0 0
  %1008 = vmatpush1.bf16.msra.mxu0 0
  %1009 = vmatprep.subr.bf16.mxu0 0
  %1010 = vmatpush1.bf16.msra.mxu0 0
  %1011 = vmatprep.subr.bf16.mxu0 0
  %1012 = vmatpush1.bf16.msra.mxu0 0
  %1013 = vmatprep.subr.bf16.mxu0 0
  %1014 = vmatpush1.bf16.msra.mxu0 0
  %1015 = vmatprep.subr.bf16.mxu0 0
  %1016 = vmatpush1.bf16.msra.mxu0 0
  %1017 = vmatprep.subr.bf16.mxu0 0
  %1018 = vmatpush1.bf16.msra.mxu0 0
  %1019 = vmatprep.subr.bf16.mxu0 0
  %1020 = vmatpush1.bf16.msra.mxu0 0
  %1021 = vmatprep.subr.bf16.mxu0 0
  %1022 = vmatpush1.bf16.msra.mxu0 0
  %1023 = vmatprep.mubr.bf16.mxu0 0
  %1024 = vmatmul.mubr.bf16.gmra.mrb[0].mxu0 %v909
  %v1025 = vpop.f32.mrb[0].mxu0
  %v1026 = vadd.f32 0.0, %v1025
  %v1027 = vpop.f32.mrb[0].mxu0
  %v1028 = vpop.f32.mrb[0].mxu0
  %v1029 = vadd.f32 0.0, %v1028
  %v1030 = vpop.f32.mrb[0].mxu0
  %1031 = vmatprep.mubr.bf16.mxu0 0
  %1032 = vmatmul.mubr.bf16.gmra.mrb[0].mxu0 %v912
  %v1033 = vpop.f32.mrb[0].mxu0
  %v1034 = vadd.f32 0.0, %v1033
  %v1035 = vpop.f32.mrb[0].mxu0
  %v1036 = vpop.f32.mrb[0].mxu0
  %v1037 = vadd.f32 0.0, %v1036
  %v1038 = vpop.f32.mrb[0].mxu0
  %1039 = vmatprep.mubr.bf16.mxu0 0
  %1040 = vmatmul.mubr.bf16.gmra.mrb[0].mxu0 %v915
  %v1041 = vpop.f32.mrb[0].mxu0
  %v1042 = vadd.f32 0.0, %v1041
  %v1043 = vpop.f32.mrb[0].mxu0
  %v1044 = vpop.f32.mrb[0].mxu0
  %v1045 = vadd.f32 0.0, %v1044
  %v1046 = vpop.f32.mrb[0].mxu0
  %1047 = vmatprep.mubr.bf16.mxu0 0
  %1048 = vmatmul.mubr.bf16.gmra.mrb[0].mxu0 %v918
  %v1049 = vpop.f32.mrb[0].mxu0
  %v1050 = vadd.f32 0.0, %v1049
  %v1051 = vpop.f32.mrb[0].mxu0
  %v1052 = vpop.f32.mrb[0].mxu0
  %v1053 = vpop.f32.mrb[0].mxu0
  %1054 = vdwg.mxu0
  %v1056 = vsel %vm920, %v883, 0
  %1058 = vmatprep.subr.bf16.mxu0 0
  %1059 = vmatpush1.bf16.msra.mxu0 %v1056
  %1060 = vmatprep.subr.bf16.mxu0 0
  %1061 = vmatpush1.bf16.msra.mxu0 0
  %1062 = vmatprep.subr.bf16.mxu0 0
  %1063 = vmatpush1.bf16.msra.mxu0 0
  %1064 = vmatprep.subr.bf16.mxu0 0
  %1065 = vmatpush1.bf16.msra.mxu0 0
  %1066 = vmatprep.subr.bf16.mxu0 0
  %1067 = vmatpush1.bf16.msra.mxu0 0
  %1068 = vmatprep.subr.bf16.mxu0 0
  %1069 = vmatpush1.bf16.msra.mxu0 0
  %1070 = vmatprep.subr.bf16.mxu0 0
  %1071 = vmatpush1.bf16.msra.mxu0 0
  %1072 = vmatprep.subr.bf16.mxu0 0
  %1073 = vmatpush1.bf16.msra.mxu0 0
  %1074 = vmatprep.subr.bf16.mxu0 0
  %1075 = vmatpush1.bf16.msra.mxu0 0
  %1076 = vmatprep.subr.bf16.mxu0 0
  %1077 = vmatpush1.bf16.msra.mxu0 0
  %1078 = vmatprep.subr.bf16.mxu0 0
  %1079 = vmatpush1.bf16.msra.mxu0 0
  %1080 = vmatprep.subr.bf16.mxu0 0
  %1081 = vmatpush1.bf16.msra.mxu0 0
  %1082 = vmatprep.subr.bf16.mxu0 0
  %1083 = vmatpush1.bf16.msra.mxu0 0
  %1084 = vmatprep.subr.bf16.mxu0 0
  %1085 = vmatpush1.bf16.msra.mxu0 0
  %1086 = vmatprep.subr.bf16.mxu0 0
  %1087 = vmatpush1.bf16.msra.mxu0 0
  %1088 = vmatprep.subr.bf16.mxu0 0
  %1089 = vmatpush1.bf16.msra.mxu0 0
  %1090 = vmatprep.mubr.bf16.mxu0 0
  %1091 = vmatmul.mubr.bf16.gmra.mrb[0].mxu0 %v909
  %v1092 = vpop.f32.mrb[0].mxu0
  %v1093 = vadd.f32 0.0, %v1092
  %v1094 = vpop.f32.mrb[0].mxu0
  %v1095 = vpop.f32.mrb[0].mxu0
  %v1096 = vadd.f32 0.0, %v1095
  %v1097 = vpop.f32.mrb[0].mxu0
  %1098 = vmatprep.mubr.bf16.mxu0 0
  %1099 = vmatmul.mubr.bf16.gmra.mrb[0].mxu0 %v912
  %v1100 = vpop.f32.mrb[0].mxu0
  %v1101 = vadd.f32 0.0, %v1100
  %v1102 = vpop.f32.mrb[0].mxu0
  %v1103 = vpop.f32.mrb[0].mxu0
  %v1104 = vadd.f32 0.0, %v1103
  %v1105 = vpop.f32.mrb[0].mxu0
  %1106 = vmatprep.mubr.bf16.mxu0 0
  %1107 = vmatmul.mubr.bf16.gmra.mrb[0].mxu0 %v915
  %v1108 = vpop.f32.mrb[0].mxu0
  %v1109 = vadd.f32 0.0, %v1108
  %v1110 = vpop.f32.mrb[0].mxu0
  %v1111 = vpop.f32.mrb[0].mxu0
  %v1112 = vadd.f32 0.0, %v1111
  %v1113 = vpop.f32.mrb[0].mxu0
  %1114 = vmatprep.mubr.bf16.mxu0 0
  %1115 = vmatmul.mubr.bf16.gmra.mrb[0].mxu0 %v918
  %v1116 = vpop.f32.mrb[0].mxu0
  %v1117 = vadd.f32 0.0, %v1116
  %v1118 = vpop.f32.mrb[0].mxu0
  %v1119 = vpop.f32.mrb[0].mxu0
  %v1120 = vpop.f32.mrb[0].mxu0
  %1121 = vdwg.mxu0
  %v1123 = vsel %vm920, %v884, 0
  %1125 = vmatprep.subr.bf16.mxu0 0
  %1126 = vmatpush1.bf16.msra.mxu0 %v1123
  %1127 = vmatprep.subr.bf16.mxu0 0
  %1128 = vmatpush1.bf16.msra.mxu0 0
  %1129 = vmatprep.subr.bf16.mxu0 0
  %1130 = vmatpush1.bf16.msra.mxu0 0
  %1131 = vmatprep.subr.bf16.mxu0 0
  %1132 = vmatpush1.bf16.msra.mxu0 0
  %1133 = vmatprep.subr.bf16.mxu0 0
  %1134 = vmatpush1.bf16.msra.mxu0 0
  %1135 = vmatprep.subr.bf16.mxu0 0
  %1136 = vmatpush1.bf16.msra.mxu0 0
  %1137 = vmatprep.subr.bf16.mxu0 0
  %1138 = vmatpush1.bf16.msra.mxu0 0
  %1139 = vmatprep.subr.bf16.mxu0 0
  %1140 = vmatpush1.bf16.msra.mxu0 0
  %1141 = vmatprep.subr.bf16.mxu0 0
  %1142 = vmatpush1.bf16.msra.mxu0 0
  %1143 = vmatprep.subr.bf16.mxu0 0
  %1144 = vmatpush1.bf16.msra.mxu0 0
  %1145 = vmatprep.subr.bf16.mxu0 0
  %1146 = vmatpush1.bf16.msra.mxu0 0
  %1147 = vmatprep.subr.bf16.mxu0 0
  %1148 = vmatpush1.bf16.msra.mxu0 0
  %1149 = vmatprep.subr.bf16.mxu0 0
  %1150 = vmatpush1.bf16.msra.mxu0 0
  %1151 = vmatprep.subr.bf16.mxu0 0
  %1152 = vmatpush1.bf16.msra.mxu0 0
  %1153 = vmatprep.subr.bf16.mxu0 0
  %1154 = vmatpush1.bf16.msra.mxu0 0
  %1155 = vmatprep.subr.bf16.mxu0 0
  %1156 = vmatpush1.bf16.msra.mxu0 0
  %1157 = vmatprep.mubr.bf16.mxu0 0
  %1158 = vmatmul.mubr.bf16.gmra.mrb[0].mxu0 %v909
  %v1159 = vpop.f32.mrb[0].mxu0
  %v1160 = vadd.f32 0.0, %v1159
  %v1161 = vpop.f32.mrb[0].mxu0
  %v1162 = vpop.f32.mrb[0].mxu0
  %v1163 = vadd.f32 0.0, %v1162
  %v1164 = vpop.f32.mrb[0].mxu0
  %1165 = vmatprep.mubr.bf16.mxu0 0
  %1166 = vmatmul.mubr.bf16.gmra.mrb[0].mxu0 %v912
  %v1167 = vpop.f32.mrb[0].mxu0
  %v1168 = vadd.f32 0.0, %v1167
  %v1169 = vpop.f32.mrb[0].mxu0
  %v1170 = vpop.f32.mrb[0].mxu0
  %v1171 = vadd.f32 0.0, %v1170
  %v1172 = vpop.f32.mrb[0].mxu0
  %1173 = vmatprep.mubr.bf16.mxu0 0
  %1174 = vmatmul.mubr.bf16.gmra.mrb[0].mxu0 %v915
  %v1175 = vpop.f32.mrb[0].mxu0
  %v1176 = vadd.f32 0.0, %v1175
  %v1177 = vpop.f32.mrb[0].mxu0
  %v1178 = vpop.f32.mrb[0].mxu0
  %v1179 = vadd.f32 0.0, %v1178
  %v1180 = vpop.f32.mrb[0].mxu0
  %1181 = vmatprep.mubr.bf16.mxu0 0
  %1182 = vmatmul.mubr.bf16.gmra.mrb[0].mxu0 %v918
  %v1183 = vpop.f32.mrb[0].mxu0
  %v1184 = vadd.f32 0.0, %v1183
  %v1185 = vpop.f32.mrb[0].mxu0
  %v1186 = vpop.f32.mrb[0].mxu0
  %v1187 = vpop.f32.mrb[0].mxu0
  %1188 = vdwg.mxu0
  %v1190 = vsel %vm920, %v885, 0
  %1192 = vmatprep.subr.bf16.mxu0 0
  %1193 = vmatpush1.bf16.msra.mxu0 %v1190
  %1194 = vmatprep.subr.bf16.mxu0 0
  %1195 = vmatpush1.bf16.msra.mxu0 0
  %1196 = vmatprep.subr.bf16.mxu0 0
  %1197 = vmatpush1.bf16.msra.mxu0 0
  %1198 = vmatprep.subr.bf16.mxu0 0
  %1199 = vmatpush1.bf16.msra.mxu0 0
  %1200 = vmatprep.subr.bf16.mxu0 0
  %1201 = vmatpush1.bf16.msra.mxu0 0
  %1202 = vmatprep.subr.bf16.mxu0 0
  %1203 = vmatpush1.bf16.msra.mxu0 0
  %1204 = vmatprep.subr.bf16.mxu0 0
  %1205 = vmatpush1.bf16.msra.mxu0 0
  %1206 = vmatprep.subr.bf16.mxu0 0
  %1207 = vmatpush1.bf16.msra.mxu0 0
  %1208 = vmatprep.subr.bf16.mxu0 0
  %1209 = vmatpush1.bf16.msra.mxu0 0
  %1210 = vmatprep.subr.bf16.mxu0 0
  %1211 = vmatpush1.bf16.msra.mxu0 0
  %1212 = vmatprep.subr.bf16.mxu0 0
  %1213 = vmatpush1.bf16.msra.mxu0 0
  %1214 = vmatprep.subr.bf16.mxu0 0
  %1215 = vmatpush1.bf16.msra.mxu0 0
  %1216 = vmatprep.subr.bf16.mxu0 0
  %1217 = vmatpush1.bf16.msra.mxu0 0
  %1218 = vmatprep.subr.bf16.mxu0 0
  %1219 = vmatpush1.bf16.msra.mxu0 0
  %1220 = vmatprep.subr.bf16.mxu0 0
  %1221 = vmatpush1.bf16.msra.mxu0 0
  %1222 = vmatprep.subr.bf16.mxu0 0
  %1223 = vmatpush1.bf16.msra.mxu0 0
  %1224 = vmatprep.mubr.bf16.mxu0 0
  %1225 = vmatmul.mubr.bf16.gmra.mrb[0].mxu0 %v909
  %v1226 = vpop.f32.mrb[0].mxu0
  %v1227 = vadd.f32 0.0, %v1226
  %v1228 = vpop.f32.mrb[0].mxu0
  %v1229 = vpop.f32.mrb[0].mxu0
  %v1230 = vadd.f32 0.0, %v1229
  %v1231 = vpop.f32.mrb[0].mxu0
  %1232 = vmatprep.mubr.bf16.mxu0 0
  %1233 = vmatmul.mubr.bf16.gmra.mrb[0].mxu0 %v912
  %v1234 = vpop.f32.mrb[0].mxu0
  %v1235 = vadd.f32 0.0, %v1234
  %v1236 = vpop.f32.mrb[0].mxu0
  %v1237 = vpop.f32.mrb[0].mxu0
  %v1238 = vadd.f32 0.0, %v1237
  %v1239 = vpop.f32.mrb[0].mxu0
  %1240 = vmatprep.mubr.bf16.mxu0 0
  %1241 = vmatmul.mubr.bf16.gmra.mrb[0].mxu0 %v915
  %v1242 = vpop.f32.mrb[0].mxu0
  %v1243 = vadd.f32 0.0, %v1242
  %v1244 = vpop.f32.mrb[0].mxu0
  %v1245 = vpop.f32.mrb[0].mxu0
  %v1246 = vadd.f32 0.0, %v1245
  %v1247 = vpop.f32.mrb[0].mxu0
  %1248 = vmatprep.mubr.bf16.mxu0 0
  %1249 = vmatmul.mubr.bf16.gmra.mrb[0].mxu0 %v918
  %v1250 = vpop.f32.mrb[0].mxu0
  %v1251 = vadd.f32 0.0, %v1250
  %v1252 = vpop.f32.mrb[0].mxu0
  %v1253 = vpop.f32.mrb[0].mxu0
  %v1254 = vpop.f32.mrb[0].mxu0
  %1255 = vdwg.mxu0
  %v1257 = vsel %vm920, %v886, 0
  %1259 = vmatprep.subr.bf16.mxu0 0
  %1260 = vmatpush1.bf16.msra.mxu0 %v1257
  %1261 = vmatprep.subr.bf16.mxu0 0
  %1262 = vmatpush1.bf16.msra.mxu0 0
  %1263 = vmatprep.subr.bf16.mxu0 0
  %1264 = vmatpush1.bf16.msra.mxu0 0
  %1265 = vmatprep.subr.bf16.mxu0 0
  %1266 = vmatpush1.bf16.msra.mxu0 0
  %1267 = vmatprep.subr.bf16.mxu0 0
  %1268 = vmatpush1.bf16.msra.mxu0 0
  %1269 = vmatprep.subr.bf16.mxu0 0
  %1270 = vmatpush1.bf16.msra.mxu0 0
  %1271 = vmatprep.subr.bf16.mxu0 0
  %1272 = vmatpush1.bf16.msra.mxu0 0
  %1273 = vmatprep.subr.bf16.mxu0 0
  %1274 = vmatpush1.bf16.msra.mxu0 0
  %1275 = vmatprep.subr.bf16.mxu0 0
  %1276 = vmatpush1.bf16.msra.mxu0 0
  %1277 = vmatprep.subr.bf16.mxu0 0
  %1278 = vmatpush1.bf16.msra.mxu0 0
  %1279 = vmatprep.subr.bf16.mxu0 0
  %1280 = vmatpush1.bf16.msra.mxu0 0
  %1281 = vmatprep.subr.bf16.mxu0 0
  %1282 = vmatpush1.bf16.msra.mxu0 0
  %1283 = vmatprep.subr.bf16.mxu0 0
  %1284 = vmatpush1.bf16.msra.mxu0 0
  %1285 = vmatprep.subr.bf16.mxu0 0
  %1286 = vmatpush1.bf16.msra.mxu0 0
  %1287 = vmatprep.subr.bf16.mxu0 0
  %1288 = vmatpush1.bf16.msra.mxu0 0
  %1289 = vmatprep.subr.bf16.mxu0 0
  %1290 = vmatpush1.bf16.msra.mxu0 0
  %1291 = vmatprep.mubr.bf16.mxu0 0
  %1292 = vmatmul.mubr.bf16.gmra.mrb[0].mxu0 %v909
  %v1293 = vpop.f32.mrb[0].mxu0
  %v1294 = vadd.f32 0.0, %v1293
  %v1295 = vpop.f32.mrb[0].mxu0
  %v1296 = vpop.f32.mrb[0].mxu0
  %v1297 = vadd.f32 0.0, %v1296
  %v1298 = vpop.f32.mrb[0].mxu0
  %1299 = vmatprep.mubr.bf16.mxu0 0
  %1300 = vmatmul.mubr.bf16.gmra.mrb[0].mxu0 %v912
  %v1301 = vpop.f32.mrb[0].mxu0
  %v1302 = vadd.f32 0.0, %v1301
  %v1303 = vpop.f32.mrb[0].mxu0
  %v1304 = vpop.f32.mrb[0].mxu0
  %v1305 = vadd.f32 0.0, %v1304
  %v1306 = vpop.f32.mrb[0].mxu0
  %1307 = vmatprep.mubr.bf16.mxu0 0
  %1308 = vmatmul.mubr.bf16.gmra.mrb[0].mxu0 %v915
  %v1309 = vpop.f32.mrb[0].mxu0
  %v1310 = vadd.f32 0.0, %v1309
  %v1311 = vpop.f32.mrb[0].mxu0
  %v1312 = vpop.f32.mrb[0].mxu0
  %v1313 = vadd.f32 0.0, %v1312
  %v1314 = vpop.f32.mrb[0].mxu0
  %1315 = vmatprep.mubr.bf16.mxu0 0
  %1316 = vmatmul.mubr.bf16.gmra.mrb[0].mxu0 %v918
  %v1317 = vpop.f32.mrb[0].mxu0
  %v1318 = vadd.f32 0.0, %v1317
  %v1319 = vpop.f32.mrb[0].mxu0
  %v1320 = vpop.f32.mrb[0].mxu0
  %v1321 = vpop.f32.mrb[0].mxu0
  %1322 = vdwg.mxu0
  %v1324 = vsel %vm920, %v887, 0
  %1326 = vmatprep.subr.bf16.mxu0 0
  %1327 = vmatpush1.bf16.msra.mxu0 %v1324
  %1328 = vmatprep.subr.bf16.mxu0 0
  %1329 = vmatpush1.bf16.msra.mxu0 0
  %1330 = vmatprep.subr.bf16.mxu0 0
  %1331 = vmatpush1.bf16.msra.mxu0 0
  %1332 = vmatprep.subr.bf16.mxu0 0
  %1333 = vmatpush1.bf16.msra.mxu0 0
  %1334 = vmatprep.subr.bf16.mxu0 0
  %1335 = vmatpush1.bf16.msra.mxu0 0
  %1336 = vmatprep.subr.bf16.mxu0 0
  %1337 = vmatpush1.bf16.msra.mxu0 0
  %1338 = vmatprep.subr.bf16.mxu0 0
  %1339 = vmatpush1.bf16.msra.mxu0 0
  %1340 = vmatprep.subr.bf16.mxu0 0
  %1341 = vmatpush1.bf16.msra.mxu0 0
  %1342 = vmatprep.subr.bf16.mxu0 0
  %1343 = vmatpush1.bf16.msra.mxu0 0
  %1344 = vmatprep.subr.bf16.mxu0 0
  %1345 = vmatpush1.bf16.msra.mxu0 0
  %1346 = vmatprep.subr.bf16.mxu0 0
  %1347 = vmatpush1.bf16.msra.mxu0 0
  %1348 = vmatprep.subr.bf16.mxu0 0
  %1349 = vmatpush1.bf16.msra.mxu0 0
  %1350 = vmatprep.subr.bf16.mxu0 0
  %1351 = vmatpush1.bf16.msra.mxu0 0
  %1352 = vmatprep.subr.bf16.mxu0 0
  %1353 = vmatpush1.bf16.msra.mxu0 0
  %1354 = vmatprep.subr.bf16.mxu0 0
  %1355 = vmatpush1.bf16.msra.mxu0 0
  %1356 = vmatprep.subr.bf16.mxu0 0
  %1357 = vmatpush1.bf16.msra.mxu0 0
  %1358 = vmatprep.mubr.bf16.mxu0 0
  %1359 = vmatmul.mubr.bf16.gmra.mrb[0].mxu0 %v909
  %v1360 = vpop.f32.mrb[0].mxu0
  %v1361 = vadd.f32 0.0, %v1360
  %v1362 = vpop.f32.mrb[0].mxu0
  %v1363 = vpop.f32.mrb[0].mxu0
  %v1364 = vadd.f32 0.0, %v1363
  %v1365 = vpop.f32.mrb[0].mxu0
  %1366 = vmatprep.mubr.bf16.mxu0 0
  %1367 = vmatmul.mubr.bf16.gmra.mrb[0].mxu0 %v912
  %v1368 = vpop.f32.mrb[0].mxu0
  %v1369 = vadd.f32 0.0, %v1368
  %v1370 = vpop.f32.mrb[0].mxu0
  %v1371 = vpop.f32.mrb[0].mxu0
  %v1372 = vadd.f32 0.0, %v1371
  %v1373 = vpop.f32.mrb[0].mxu0
  %1374 = vmatprep.mubr.bf16.mxu0 0
  %1375 = vmatmul.mubr.bf16.gmra.mrb[0].mxu0 %v915
  %v1376 = vpop.f32.mrb[0].mxu0
  %v1377 = vadd.f32 0.0, %v1376
  %v1378 = vpop.f32.mrb[0].mxu0
  %v1379 = vpop.f32.mrb[0].mxu0
  %v1380 = vadd.f32 0.0, %v1379
  %v1381 = vpop.f32.mrb[0].mxu0
  %1382 = vmatprep.mubr.bf16.mxu0 0
  %1383 = vmatmul.mubr.bf16.gmra.mrb[0].mxu0 %v918
  %v1384 = vpop.f32.mrb[0].mxu0
  %v1385 = vadd.f32 0.0, %v1384
  %v1386 = vpop.f32.mrb[0].mxu0
  %v1387 = vpop.f32.mrb[0].mxu0
  %v1388 = vpop.f32.mrb[0].mxu0
  %1389 = vdwg.mxu0
  %v1391 = vsel %vm920, %v888, 0
  %1393 = vmatprep.subr.bf16.mxu0 0
  %1394 = vmatpush1.bf16.msra.mxu0 %v1391
  %1395 = vmatprep.subr.bf16.mxu0 0
  %1396 = vmatpush1.bf16.msra.mxu0 0
  %1397 = vmatprep.subr.bf16.mxu0 0
  %1398 = vmatpush1.bf16.msra.mxu0 0
  %1399 = vmatprep.subr.bf16.mxu0 0
  %1400 = vmatpush1.bf16.msra.mxu0 0
  %1401 = vmatprep.subr.bf16.mxu0 0
  %1402 = vmatpush1.bf16.msra.mxu0 0
  %1403 = vmatprep.subr.bf16.mxu0 0
  %1404 = vmatpush1.bf16.msra.mxu0 0
  %1405 = vmatprep.subr.bf16.mxu0 0
  %1406 = vmatpush1.bf16.msra.mxu0 0
  %1407 = vmatprep.subr.bf16.mxu0 0
  %1408 = vmatpush1.bf16.msra.mxu0 0
  %1409 = vmatprep.subr.bf16.mxu0 0
  %1410 = vmatpush1.bf16.msra.mxu0 0
  %1411 = vmatprep.subr.bf16.mxu0 0
  %1412 = vmatpush1.bf16.msra.mxu0 0
  %1413 = vmatprep.subr.bf16.mxu0 0
  %1414 = vmatpush1.bf16.msra.mxu0 0
  %1415 = vmatprep.subr.bf16.mxu0 0
  %1416 = vmatpush1.bf16.msra.mxu0 0
  %1417 = vmatprep.subr.bf16.mxu0 0
  %1418 = vmatpush1.bf16.msra.mxu0 0
  %1419 = vmatprep.subr.bf16.mxu0 0
  %1420 = vmatpush1.bf16.msra.mxu0 0
  %1421 = vmatprep.subr.bf16.mxu0 0
  %1422 = vmatpush1.bf16.msra.mxu0 0
  %1423 = vmatprep.subr.bf16.mxu0 0
  %1424 = vmatpush1.bf16.msra.mxu0 0
  %1425 = vmatprep.mubr.bf16.mxu0 0
  %1426 = vmatmul.mubr.bf16.gmra.mrb[0].mxu0 %v909
  %v1427 = vpop.f32.mrb[0].mxu0
  %v1428 = vadd.f32 0.0, %v1427
  %v1429 = vpop.f32.mrb[0].mxu0
  %v1430 = vpop.f32.mrb[0].mxu0
  %v1431 = vadd.f32 0.0, %v1430
  %v1432 = vpop.f32.mrb[0].mxu0
  %1433 = vmatprep.mubr.bf16.mxu0 0
  %1434 = vmatmul.mubr.bf16.gmra.mrb[0].mxu0 %v912
  %v1435 = vpop.f32.mrb[0].mxu0
  %v1436 = vadd.f32 0.0, %v1435
  %v1437 = vpop.f32.mrb[0].mxu0
  %v1438 = vpop.f32.mrb[0].mxu0
  %v1439 = vadd.f32 0.0, %v1438
  %v1440 = vpop.f32.mrb[0].mxu0
  %1441 = vmatprep.mubr.bf16.mxu0 0
  %1442 = vmatmul.mubr.bf16.gmra.mrb[0].mxu0 %v915
  %v1443 = vpop.f32.mrb[0].mxu0
  %v1444 = vadd.f32 0.0, %v1443
  %v1445 = vpop.f32.mrb[0].mxu0
  %v1446 = vpop.f32.mrb[0].mxu0
  %v1447 = vadd.f32 0.0, %v1446
  %v1448 = vpop.f32.mrb[0].mxu0
  %1449 = vmatprep.mubr.bf16.mxu0 0
  %1450 = vmatmul.mubr.bf16.gmra.mrb[0].mxu0 %v918
  %v1451 = vpop.f32.mrb[0].mxu0
  %v1452 = vadd.f32 0.0, %v1451
  %v1453 = vpop.f32.mrb[0].mxu0
  %v1454 = vpop.f32.mrb[0].mxu0
  %v1455 = vpop.f32.mrb[0].mxu0
  %1456 = vdwg.mxu0
  %v1464 = vunpack.c.l.b16 %v845
  %v1465 = vunpack.c.l.b16 %v846
  %v1466 = vunpack.c.l.b16 %v847
  %v1467 = vunpack.c.l.b16 %v848
  %v1468 = vunpack.c.l.b16 %v849
  %v1469 = vunpack.c.l.b16 %v850
  %v1470 = vunpack.c.l.b16 %v851
  %v1471 = vpack.c.b16 %v1465, %v1464
  %v1472 = vpack.c.b16 %v1467, %v1466
  %v1473 = vpack.c.b16 %v1469, %v1468
  %v1474 = vpack.c.b16 %v1470, %v1470
  %v1476 = vsel %vm907, %v1471, 0
  %v1479 = vsel %vm907, %v1472, 0
  %v1482 = vsel %vm907, %v1473, 0
  %v1485 = vsel %vm907, %v1474, 0
  %v1488 = vsel %vm920, %v873, 0
  %1490 = vmatprep.subr.bf16.mxu0 0
  %1491 = vmatpush1.bf16.msra.mxu0 %v1488
  %1492 = vmatprep.subr.bf16.mxu0 0
  %1493 = vmatpush1.bf16.msra.mxu0 0
  %1494 = vmatprep.subr.bf16.mxu0 0
  %1495 = vmatpush1.bf16.msra.mxu0 0
  %1496 = vmatprep.subr.bf16.mxu0 0
  %1497 = vmatpush1.bf16.msra.mxu0 0
  %1498 = vmatprep.subr.bf16.mxu0 0
  %1499 = vmatpush1.bf16.msra.mxu0 0
  %1500 = vmatprep.subr.bf16.mxu0 0
  %1501 = vmatpush1.bf16.msra.mxu0 0
  %1502 = vmatprep.subr.bf16.mxu0 0
  %1503 = vmatpush1.bf16.msra.mxu0 0
  %1504 = vmatprep.subr.bf16.mxu0 0
  %1505 = vmatpush1.bf16.msra.mxu0 0
  %1506 = vmatprep.subr.bf16.mxu0 0
  %1507 = vmatpush1.bf16.msra.mxu0 0
  %1508 = vmatprep.subr.bf16.mxu0 0
  %1509 = vmatpush1.bf16.msra.mxu0 0
  %1510 = vmatprep.subr.bf16.mxu0 0
  %1511 = vmatpush1.bf16.msra.mxu0 0
  %1512 = vmatprep.subr.bf16.mxu0 0
  %1513 = vmatpush1.bf16.msra.mxu0 0
  %1514 = vmatprep.subr.bf16.mxu0 0
  %1515 = vmatpush1.bf16.msra.mxu0 0
  %1516 = vmatprep.subr.bf16.mxu0 0
  %1517 = vmatpush1.bf16.msra.mxu0 0
  %1518 = vmatprep.subr.bf16.mxu0 0
  %1519 = vmatpush1.bf16.msra.mxu0 0
  %1520 = vmatprep.subr.bf16.mxu0 0
  %1521 = vmatpush1.bf16.msra.mxu0 0
  %1522 = vmatprep.mubr.bf16.mxu0 0
  %1523 = vmatmul.mubr.bf16.gmra.mrb[0].mxu0 %v1476
  %v1524 = vpop.f32.mrb[0].mxu0
  %v1525 = vadd.f32 %v959, %v1524
  %v1526 = vpop.f32.mrb[0].mxu0
  %v1527 = vpop.f32.mrb[0].mxu0
  %v1528 = vadd.f32 %v962, %v1527
  %v1529 = vpop.f32.mrb[0].mxu0
  %1530 = vmatprep.mubr.bf16.mxu0 0
  %1531 = vmatmul.mubr.bf16.gmra.mrb[0].mxu0 %v1479
  %v1532 = vpop.f32.mrb[0].mxu0
  %v1533 = vadd.f32 %v967, %v1532
  %v1534 = vpop.f32.mrb[0].mxu0
  %v1535 = vpop.f32.mrb[0].mxu0
  %v1536 = vadd.f32 %v970, %v1535
  %v1537 = vpop.f32.mrb[0].mxu0
  %1538 = vmatprep.mubr.bf16.mxu0 0
  %1539 = vmatmul.mubr.bf16.gmra.mrb[0].mxu0 %v1482
  %v1540 = vpop.f32.mrb[0].mxu0
  %v1541 = vadd.f32 %v975, %v1540
  %v1542 = vpop.f32.mrb[0].mxu0
  %v1543 = vpop.f32.mrb[0].mxu0
  %v1544 = vadd.f32 %v978, %v1543
  %v1545 = vpop.f32.mrb[0].mxu0
  %1546 = vmatprep.mubr.bf16.mxu0 0
  %1547 = vmatmul.mubr.bf16.gmra.mrb[0].mxu0 %v1485
  %v1548 = vpop.f32.mrb[0].mxu0
  %v1549 = vadd.f32 %v983, %v1548
  %v1550 = vpop.f32.mrb[0].mxu0
  %v1551 = vpop.f32.mrb[0].mxu0
  %v1552 = vpop.f32.mrb[0].mxu0
  %1553 = vdwg.mxu0
  %v1555 = vsel %vm920, %v874, 0
  %1557 = vmatprep.subr.bf16.mxu0 0
  %1558 = vmatpush1.bf16.msra.mxu0 %v1555
  %1559 = vmatprep.subr.bf16.mxu0 0
  %1560 = vmatpush1.bf16.msra.mxu0 0
  %1561 = vmatprep.subr.bf16.mxu0 0
  %1562 = vmatpush1.bf16.msra.mxu0 0
  %1563 = vmatprep.subr.bf16.mxu0 0
  %1564 = vmatpush1.bf16.msra.mxu0 0
  %1565 = vmatprep.subr.bf16.mxu0 0
  %1566 = vmatpush1.bf16.msra.mxu0 0
  %1567 = vmatprep.subr.bf16.mxu0 0
  %1568 = vmatpush1.bf16.msra.mxu0 0
  %1569 = vmatprep.subr.bf16.mxu0 0
  %1570 = vmatpush1.bf16.msra.mxu0 0
  %1571 = vmatprep.subr.bf16.mxu0 0
  %1572 = vmatpush1.bf16.msra.mxu0 0
  %1573 = vmatprep.subr.bf16.mxu0 0
  %1574 = vmatpush1.bf16.msra.mxu0 0
  %1575 = vmatprep.subr.bf16.mxu0 0
  %1576 = vmatpush1.bf16.msra.mxu0 0
  %1577 = vmatprep.subr.bf16.mxu0 0
  %1578 = vmatpush1.bf16.msra.mxu0 0
  %1579 = vmatprep.subr.bf16.mxu0 0
  %1580 = vmatpush1.bf16.msra.mxu0 0
  %1581 = vmatprep.subr.bf16.mxu0 0
  %1582 = vmatpush1.bf16.msra.mxu0 0
  %1583 = vmatprep.subr.bf16.mxu0 0
  %1584 = vmatpush1.bf16.msra.mxu0 0
  %1585 = vmatprep.subr.bf16.mxu0 0
  %1586 = vmatpush1.bf16.msra.mxu0 0
  %1587 = vmatprep.subr.bf16.mxu0 0
  %1588 = vmatpush1.bf16.msra.mxu0 0
  %1589 = vmatprep.mubr.bf16.mxu0 0
  %1590 = vmatmul.mubr.bf16.gmra.mrb[0].mxu0 %v1476
  %v1591 = vpop.f32.mrb[0].mxu0
  %v1592 = vadd.f32 %v1026, %v1591
  %v1593 = vpop.f32.mrb[0].mxu0
  %v1594 = vpop.f32.mrb[0].mxu0
  %v1595 = vadd.f32 %v1029, %v1594
  %v1596 = vpop.f32.mrb[0].mxu0
  %1597 = vmatprep.mubr.bf16.mxu0 0
  %1598 = vmatmul.mubr.bf16.gmra.mrb[0].mxu0 %v1479
  %v1599 = vpop.f32.mrb[0].mxu0
  %v1600 = vadd.f32 %v1034, %v1599
  %v1601 = vpop.f32.mrb[0].mxu0
  %v1602 = vpop.f32.mrb[0].mxu0
  %v1603 = vadd.f32 %v1037, %v1602
  %v1604 = vpop.f32.mrb[0].mxu0
  %1605 = vmatprep.mubr.bf16.mxu0 0
  %1606 = vmatmul.mubr.bf16.gmra.mrb[0].mxu0 %v1482
  %v1607 = vpop.f32.mrb[0].mxu0
  %v1608 = vadd.f32 %v1042, %v1607
  %v1609 = vpop.f32.mrb[0].mxu0
  %v1610 = vpop.f32.mrb[0].mxu0
  %v1611 = vadd.f32 %v1045, %v1610
  %v1612 = vpop.f32.mrb[0].mxu0
  %1613 = vmatprep.mubr.bf16.mxu0 0
  %1614 = vmatmul.mubr.bf16.gmra.mrb[0].mxu0 %v1485
  %v1615 = vpop.f32.mrb[0].mxu0
  %v1616 = vadd.f32 %v1050, %v1615
  %v1617 = vpop.f32.mrb[0].mxu0
  %v1618 = vpop.f32.mrb[0].mxu0
  %v1619 = vpop.f32.mrb[0].mxu0
  %1620 = vdwg.mxu0
  %v1622 = vsel %vm920, %v875, 0
  %1624 = vmatprep.subr.bf16.mxu0 0
  %1625 = vmatpush1.bf16.msra.mxu0 %v1622
  %1626 = vmatprep.subr.bf16.mxu0 0
  %1627 = vmatpush1.bf16.msra.mxu0 0
  %1628 = vmatprep.subr.bf16.mxu0 0
  %1629 = vmatpush1.bf16.msra.mxu0 0
  %1630 = vmatprep.subr.bf16.mxu0 0
  %1631 = vmatpush1.bf16.msra.mxu0 0
  %1632 = vmatprep.subr.bf16.mxu0 0
  %1633 = vmatpush1.bf16.msra.mxu0 0
  %1634 = vmatprep.subr.bf16.mxu0 0
  %1635 = vmatpush1.bf16.msra.mxu0 0
  %1636 = vmatprep.subr.bf16.mxu0 0
  %1637 = vmatpush1.bf16.msra.mxu0 0
  %1638 = vmatprep.subr.bf16.mxu0 0
  %1639 = vmatpush1.bf16.msra.mxu0 0
  %1640 = vmatprep.subr.bf16.mxu0 0
  %1641 = vmatpush1.bf16.msra.mxu0 0
  %1642 = vmatprep.subr.bf16.mxu0 0
  %1643 = vmatpush1.bf16.msra.mxu0 0
  %1644 = vmatprep.subr.bf16.mxu0 0
  %1645 = vmatpush1.bf16.msra.mxu0 0
  %1646 = vmatprep.subr.bf16.mxu0 0
  %1647 = vmatpush1.bf16.msra.mxu0 0
  %1648 = vmatprep.subr.bf16.mxu0 0
  %1649 = vmatpush1.bf16.msra.mxu0 0
  %1650 = vmatprep.subr.bf16.mxu0 0
  %1651 = vmatpush1.bf16.msra.mxu0 0
  %1652 = vmatprep.subr.bf16.mxu0 0
  %1653 = vmatpush1.bf16.msra.mxu0 0
  %1654 = vmatprep.subr.bf16.mxu0 0
  %1655 = vmatpush1.bf16.msra.mxu0 0
  %1656 = vmatprep.mubr.bf16.mxu0 0
  %1657 = vmatmul.mubr.bf16.gmra.mrb[0].mxu0 %v1476
  %v1658 = vpop.f32.mrb[0].mxu0
  %v1659 = vadd.f32 %v1093, %v1658
  %v1660 = vpop.f32.mrb[0].mxu0
  %v1661 = vpop.f32.mrb[0].mxu0
  %v1662 = vadd.f32 %v1096, %v1661
  %v1663 = vpop.f32.mrb[0].mxu0
  %1664 = vmatprep.mubr.bf16.mxu0 0
  %1665 = vmatmul.mubr.bf16.gmra.mrb[0].mxu0 %v1479
  %v1666 = vpop.f32.mrb[0].mxu0
  %v1667 = vadd.f32 %v1101, %v1666
  %v1668 = vpop.f32.mrb[0].mxu0
  %v1669 = vpop.f32.mrb[0].mxu0
  %v1670 = vadd.f32 %v1104, %v1669
  %v1671 = vpop.f32.mrb[0].mxu0
  %1672 = vmatprep.mubr.bf16.mxu0 0
  %1673 = vmatmul.mubr.bf16.gmra.mrb[0].mxu0 %v1482
  %v1674 = vpop.f32.mrb[0].mxu0
  %v1675 = vadd.f32 %v1109, %v1674
  %v1676 = vpop.f32.mrb[0].mxu0
  %v1677 = vpop.f32.mrb[0].mxu0
  %v1678 = vadd.f32 %v1112, %v1677
  %v1679 = vpop.f32.mrb[0].mxu0
  %1680 = vmatprep.mubr.bf16.mxu0 0
  %1681 = vmatmul.mubr.bf16.gmra.mrb[0].mxu0 %v1485
  %v1682 = vpop.f32.mrb[0].mxu0
  %v1683 = vadd.f32 %v1117, %v1682
  %v1684 = vpop.f32.mrb[0].mxu0
  %v1685 = vpop.f32.mrb[0].mxu0
  %v1686 = vpop.f32.mrb[0].mxu0
  %1687 = vdwg.mxu0
  %v1689 = vsel %vm920, %v876, 0
  %1691 = vmatprep.subr.bf16.mxu0 0
  %1692 = vmatpush1.bf16.msra.mxu0 %v1689
  %1693 = vmatprep.subr.bf16.mxu0 0
  %1694 = vmatpush1.bf16.msra.mxu0 0
  %1695 = vmatprep.subr.bf16.mxu0 0
  %1696 = vmatpush1.bf16.msra.mxu0 0
  %1697 = vmatprep.subr.bf16.mxu0 0
  %1698 = vmatpush1.bf16.msra.mxu0 0
  %1699 = vmatprep.subr.bf16.mxu0 0
  %1700 = vmatpush1.bf16.msra.mxu0 0
  %1701 = vmatprep.subr.bf16.mxu0 0
  %1702 = vmatpush1.bf16.msra.mxu0 0
  %1703 = vmatprep.subr.bf16.mxu0 0
  %1704 = vmatpush1.bf16.msra.mxu0 0
  %1705 = vmatprep.subr.bf16.mxu0 0
  %1706 = vmatpush1.bf16.msra.mxu0 0
  %1707 = vmatprep.subr.bf16.mxu0 0
  %1708 = vmatpush1.bf16.msra.mxu0 0
  %1709 = vmatprep.subr.bf16.mxu0 0
  %1710 = vmatpush1.bf16.msra.mxu0 0
  %1711 = vmatprep.subr.bf16.mxu0 0
  %1712 = vmatpush1.bf16.msra.mxu0 0
  %1713 = vmatprep.subr.bf16.mxu0 0
  %1714 = vmatpush1.bf16.msra.mxu0 0
  %1715 = vmatprep.subr.bf16.mxu0 0
  %1716 = vmatpush1.bf16.msra.mxu0 0
  %1717 = vmatprep.subr.bf16.mxu0 0
  %1718 = vmatpush1.bf16.msra.mxu0 0
  %1719 = vmatprep.subr.bf16.mxu0 0
  %1720 = vmatpush1.bf16.msra.mxu0 0
  %1721 = vmatprep.subr.bf16.mxu0 0
  %1722 = vmatpush1.bf16.msra.mxu0 0
  %1723 = vmatprep.mubr.bf16.mxu0 0
  %1724 = vmatmul.mubr.bf16.gmra.mrb[0].mxu0 %v1476
  %v1725 = vpop.f32.mrb[0].mxu0
  %v1726 = vadd.f32 %v1160, %v1725
  %v1727 = vpop.f32.mrb[0].mxu0
  %v1728 = vpop.f32.mrb[0].mxu0
  %v1729 = vadd.f32 %v1163, %v1728
  %v1730 = vpop.f32.mrb[0].mxu0
  %1731 = vmatprep.mubr.bf16.mxu0 0
  %1732 = vmatmul.mubr.bf16.gmra.mrb[0].mxu0 %v1479
  %v1733 = vpop.f32.mrb[0].mxu0
  %v1734 = vadd.f32 %v1168, %v1733
  %v1735 = vpop.f32.mrb[0].mxu0
  %v1736 = vpop.f32.mrb[0].mxu0
  %v1737 = vadd.f32 %v1171, %v1736
  %v1738 = vpop.f32.mrb[0].mxu0
  %1739 = vmatprep.mubr.bf16.mxu0 0
  %1740 = vmatmul.mubr.bf16.gmra.mrb[0].mxu0 %v1482
  %v1741 = vpop.f32.mrb[0].mxu0
  %v1742 = vadd.f32 %v1176, %v1741
  %v1743 = vpop.f32.mrb[0].mxu0
  %v1744 = vpop.f32.mrb[0].mxu0
  %v1745 = vadd.f32 %v1179, %v1744
  %v1746 = vpop.f32.mrb[0].mxu0
  %1747 = vmatprep.mubr.bf16.mxu0 0
  %1748 = vmatmul.mubr.bf16.gmra.mrb[0].mxu0 %v1485
  %v1749 = vpop.f32.mrb[0].mxu0
  %v1750 = vadd.f32 %v1184, %v1749
  %v1751 = vpop.f32.mrb[0].mxu0
  %v1752 = vpop.f32.mrb[0].mxu0
  %v1753 = vpop.f32.mrb[0].mxu0
  %1754 = vdwg.mxu0
  %v1756 = vsel %vm920, %v877, 0
  %1758 = vmatprep.subr.bf16.mxu0 0
  %1759 = vmatpush1.bf16.msra.mxu0 %v1756
  %1760 = vmatprep.subr.bf16.mxu0 0
  %1761 = vmatpush1.bf16.msra.mxu0 0
  %1762 = vmatprep.subr.bf16.mxu0 0
  %1763 = vmatpush1.bf16.msra.mxu0 0
  %1764 = vmatprep.subr.bf16.mxu0 0
  %1765 = vmatpush1.bf16.msra.mxu0 0
  %1766 = vmatprep.subr.bf16.mxu0 0
  %1767 = vmatpush1.bf16.msra.mxu0 0
  %1768 = vmatprep.subr.bf16.mxu0 0
  %1769 = vmatpush1.bf16.msra.mxu0 0
  %1770 = vmatprep.subr.bf16.mxu0 0
  %1771 = vmatpush1.bf16.msra.mxu0 0
  %1772 = vmatprep.subr.bf16.mxu0 0
  %1773 = vmatpush1.bf16.msra.mxu0 0
  %1774 = vmatprep.subr.bf16.mxu0 0
  %1775 = vmatpush1.bf16.msra.mxu0 0
  %1776 = vmatprep.subr.bf16.mxu0 0
  %1777 = vmatpush1.bf16.msra.mxu0 0
  %1778 = vmatprep.subr.bf16.mxu0 0
  %1779 = vmatpush1.bf16.msra.mxu0 0
  %1780 = vmatprep.subr.bf16.mxu0 0
  %1781 = vmatpush1.bf16.msra.mxu0 0
  %1782 = vmatprep.subr.bf16.mxu0 0
  %1783 = vmatpush1.bf16.msra.mxu0 0
  %1784 = vmatprep.subr.bf16.mxu0 0
  %1785 = vmatpush1.bf16.msra.mxu0 0
  %1786 = vmatprep.subr.bf16.mxu0 0
  %1787 = vmatpush1.bf16.msra.mxu0 0
  %1788 = vmatprep.subr.bf16.mxu0 0
  %1789 = vmatpush1.bf16.msra.mxu0 0
  %1790 = vmatprep.mubr.bf16.mxu0 0
  %1791 = vmatmul.mubr.bf16.gmra.mrb[0].mxu0 %v1476
  %v1792 = vpop.f32.mrb[0].mxu0
  %v1793 = vadd.f32 %v1227, %v1792
  %v1794 = vpop.f32.mrb[0].mxu0
  %v1795 = vpop.f32.mrb[0].mxu0
  %v1796 = vadd.f32 %v1230, %v1795
  %v1797 = vpop.f32.mrb[0].mxu0
  %1798 = vmatprep.mubr.bf16.mxu0 0
  %1799 = vmatmul.mubr.bf16.gmra.mrb[0].mxu0 %v1479
  %v1800 = vpop.f32.mrb[0].mxu0
  %v1801 = vadd.f32 %v1235, %v1800
  %v1802 = vpop.f32.mrb[0].mxu0
  %v1803 = vpop.f32.mrb[0].mxu0
  %v1804 = vadd.f32 %v1238, %v1803
  %v1805 = vpop.f32.mrb[0].mxu0
  %1806 = vmatprep.mubr.bf16.mxu0 0
  %1807 = vmatmul.mubr.bf16.gmra.mrb[0].mxu0 %v1482
  %v1808 = vpop.f32.mrb[0].mxu0
  %v1809 = vadd.f32 %v1243, %v1808
  %v1810 = vpop.f32.mrb[0].mxu0
  %v1811 = vpop.f32.mrb[0].mxu0
  %v1812 = vadd.f32 %v1246, %v1811
  %v1813 = vpop.f32.mrb[0].mxu0
  %1814 = vmatprep.mubr.bf16.mxu0 0
  %1815 = vmatmul.mubr.bf16.gmra.mrb[0].mxu0 %v1485
  %v1816 = vpop.f32.mrb[0].mxu0
  %v1817 = vadd.f32 %v1251, %v1816
  %v1818 = vpop.f32.mrb[0].mxu0
  %v1819 = vpop.f32.mrb[0].mxu0
  %v1820 = vpop.f32.mrb[0].mxu0
  %1821 = vdwg.mxu0
  %v1823 = vsel %vm920, %v878, 0
  %1825 = vmatprep.subr.bf16.mxu0 0
  %1826 = vmatpush1.bf16.msra.mxu0 %v1823
  %1827 = vmatprep.subr.bf16.mxu0 0
  %1828 = vmatpush1.bf16.msra.mxu0 0
  %1829 = vmatprep.subr.bf16.mxu0 0
  %1830 = vmatpush1.bf16.msra.mxu0 0
  %1831 = vmatprep.subr.bf16.mxu0 0
  %1832 = vmatpush1.bf16.msra.mxu0 0
  %1833 = vmatprep.subr.bf16.mxu0 0
  %1834 = vmatpush1.bf16.msra.mxu0 0
  %1835 = vmatprep.subr.bf16.mxu0 0
  %1836 = vmatpush1.bf16.msra.mxu0 0
  %1837 = vmatprep.subr.bf16.mxu0 0
  %1838 = vmatpush1.bf16.msra.mxu0 0
  %1839 = vmatprep.subr.bf16.mxu0 0
  %1840 = vmatpush1.bf16.msra.mxu0 0
  %1841 = vmatprep.subr.bf16.mxu0 0
  %1842 = vmatpush1.bf16.msra.mxu0 0
  %1843 = vmatprep.subr.bf16.mxu0 0
  %1844 = vmatpush1.bf16.msra.mxu0 0
  %1845 = vmatprep.subr.bf16.mxu0 0
  %1846 = vmatpush1.bf16.msra.mxu0 0
  %1847 = vmatprep.subr.bf16.mxu0 0
  %1848 = vmatpush1.bf16.msra.mxu0 0
  %1849 = vmatprep.subr.bf16.mxu0 0
  %1850 = vmatpush1.bf16.msra.mxu0 0
  %1851 = vmatprep.subr.bf16.mxu0 0
  %1852 = vmatpush1.bf16.msra.mxu0 0
  %1853 = vmatprep.subr.bf16.mxu0 0
  %1854 = vmatpush1.bf16.msra.mxu0 0
  %1855 = vmatprep.subr.bf16.mxu0 0
  %1856 = vmatpush1.bf16.msra.mxu0 0
  %1857 = vmatprep.mubr.bf16.mxu0 0
  %1858 = vmatmul.mubr.bf16.gmra.mrb[0].mxu0 %v1476
  %v1859 = vpop.f32.mrb[0].mxu0
  %v1860 = vadd.f32 %v1294, %v1859
  %v1861 = vpop.f32.mrb[0].mxu0
  %v1862 = vpop.f32.mrb[0].mxu0
  %v1863 = vadd.f32 %v1297, %v1862
  %v1864 = vpop.f32.mrb[0].mxu0
  %1865 = vmatprep.mubr.bf16.mxu0 0
  %1866 = vmatmul.mubr.bf16.gmra.mrb[0].mxu0 %v1479
  %v1867 = vpop.f32.mrb[0].mxu0
  %v1868 = vadd.f32 %v1302, %v1867
  %v1869 = vpop.f32.mrb[0].mxu0
  %v1870 = vpop.f32.mrb[0].mxu0
  %v1871 = vadd.f32 %v1305, %v1870
  %v1872 = vpop.f32.mrb[0].mxu0
  %1873 = vmatprep.mubr.bf16.mxu0 0
  %1874 = vmatmul.mubr.bf16.gmra.mrb[0].mxu0 %v1482
  %v1875 = vpop.f32.mrb[0].mxu0
  %v1876 = vadd.f32 %v1310, %v1875
  %v1877 = vpop.f32.mrb[0].mxu0
  %v1878 = vpop.f32.mrb[0].mxu0
  %v1879 = vadd.f32 %v1313, %v1878
  %v1880 = vpop.f32.mrb[0].mxu0
  %1881 = vmatprep.mubr.bf16.mxu0 0
  %1882 = vmatmul.mubr.bf16.gmra.mrb[0].mxu0 %v1485
  %v1883 = vpop.f32.mrb[0].mxu0
  %v1884 = vadd.f32 %v1318, %v1883
  %v1885 = vpop.f32.mrb[0].mxu0
  %v1886 = vpop.f32.mrb[0].mxu0
  %v1887 = vpop.f32.mrb[0].mxu0
  %1888 = vdwg.mxu0
  %v1890 = vsel %vm920, %v879, 0
  %1892 = vmatprep.subr.bf16.mxu0 0
  %1893 = vmatpush1.bf16.msra.mxu0 %v1890
  %1894 = vmatprep.subr.bf16.mxu0 0
  %1895 = vmatpush1.bf16.msra.mxu0 0
  %1896 = vmatprep.subr.bf16.mxu0 0
  %1897 = vmatpush1.bf16.msra.mxu0 0
  %1898 = vmatprep.subr.bf16.mxu0 0
  %1899 = vmatpush1.bf16.msra.mxu0 0
  %1900 = vmatprep.subr.bf16.mxu0 0
  %1901 = vmatpush1.bf16.msra.mxu0 0
  %1902 = vmatprep.subr.bf16.mxu0 0
  %1903 = vmatpush1.bf16.msra.mxu0 0
  %1904 = vmatprep.subr.bf16.mxu0 0
  %1905 = vmatpush1.bf16.msra.mxu0 0
  %1906 = vmatprep.subr.bf16.mxu0 0
  %1907 = vmatpush1.bf16.msra.mxu0 0
  %1908 = vmatprep.subr.bf16.mxu0 0
  %1909 = vmatpush1.bf16.msra.mxu0 0
  %1910 = vmatprep.subr.bf16.mxu0 0
  %1911 = vmatpush1.bf16.msra.mxu0 0
  %1912 = vmatprep.subr.bf16.mxu0 0
  %1913 = vmatpush1.bf16.msra.mxu0 0
  %1914 = vmatprep.subr.bf16.mxu0 0
  %1915 = vmatpush1.bf16.msra.mxu0 0
  %1916 = vmatprep.subr.bf16.mxu0 0
  %1917 = vmatpush1.bf16.msra.mxu0 0
  %1918 = vmatprep.subr.bf16.mxu0 0
  %1919 = vmatpush1.bf16.msra.mxu0 0
  %1920 = vmatprep.subr.bf16.mxu0 0
  %1921 = vmatpush1.bf16.msra.mxu0 0
  %1922 = vmatprep.subr.bf16.mxu0 0
  %1923 = vmatpush1.bf16.msra.mxu0 0
  %1924 = vmatprep.mubr.bf16.mxu0 0
  %1925 = vmatmul.mubr.bf16.gmra.mrb[0].mxu0 %v1476
  %v1926 = vpop.f32.mrb[0].mxu0
  %v1927 = vadd.f32 %v1361, %v1926
  %v1928 = vpop.f32.mrb[0].mxu0
  %v1929 = vpop.f32.mrb[0].mxu0
  %v1930 = vadd.f32 %v1364, %v1929
  %v1931 = vpop.f32.mrb[0].mxu0
  %1932 = vmatprep.mubr.bf16.mxu0 0
  %1933 = vmatmul.mubr.bf16.gmra.mrb[0].mxu0 %v1479
  %v1934 = vpop.f32.mrb[0].mxu0
  %v1935 = vadd.f32 %v1369, %v1934
  %v1936 = vpop.f32.mrb[0].mxu0
  %v1937 = vpop.f32.mrb[0].mxu0
  %v1938 = vadd.f32 %v1372, %v1937
  %v1939 = vpop.f32.mrb[0].mxu0
  %1940 = vmatprep.mubr.bf16.mxu0 0
  %1941 = vmatmul.mubr.bf16.gmra.mrb[0].mxu0 %v1482
  %v1942 = vpop.f32.mrb[0].mxu0
  %v1943 = vadd.f32 %v1377, %v1942
  %v1944 = vpop.f32.mrb[0].mxu0
  %v1945 = vpop.f32.mrb[0].mxu0
  %v1946 = vadd.f32 %v1380, %v1945
  %v1947 = vpop.f32.mrb[0].mxu0
  %1948 = vmatprep.mubr.bf16.mxu0 0
  %1949 = vmatmul.mubr.bf16.gmra.mrb[0].mxu0 %v1485
  %v1950 = vpop.f32.mrb[0].mxu0
  %v1951 = vadd.f32 %v1385, %v1950
  %v1952 = vpop.f32.mrb[0].mxu0
  %v1953 = vpop.f32.mrb[0].mxu0
  %v1954 = vpop.f32.mrb[0].mxu0
  %1955 = vdwg.mxu0
  %v1957 = vsel %vm920, %v880, 0
  %1959 = vmatprep.subr.bf16.mxu0 0
  %1960 = vmatpush1.bf16.msra.mxu0 %v1957
  %1961 = vmatprep.subr.bf16.mxu0 0
  %1962 = vmatpush1.bf16.msra.mxu0 0
  %1963 = vmatprep.subr.bf16.mxu0 0
  %1964 = vmatpush1.bf16.msra.mxu0 0
  %1965 = vmatprep.subr.bf16.mxu0 0
  %1966 = vmatpush1.bf16.msra.mxu0 0
  %1967 = vmatprep.subr.bf16.mxu0 0
  %1968 = vmatpush1.bf16.msra.mxu0 0
  %1969 = vmatprep.subr.bf16.mxu0 0
  %1970 = vmatpush1.bf16.msra.mxu0 0
  %1971 = vmatprep.subr.bf16.mxu0 0
  %1972 = vmatpush1.bf16.msra.mxu0 0
  %1973 = vmatprep.subr.bf16.mxu0 0
  %1974 = vmatpush1.bf16.msra.mxu0 0
  %1975 = vmatprep.subr.bf16.mxu0 0
  %1976 = vmatpush1.bf16.msra.mxu0 0
  %1977 = vmatprep.subr.bf16.mxu0 0
  %1978 = vmatpush1.bf16.msra.mxu0 0
  %1979 = vmatprep.subr.bf16.mxu0 0
  %1980 = vmatpush1.bf16.msra.mxu0 0
  %1981 = vmatprep.subr.bf16.mxu0 0
  %1982 = vmatpush1.bf16.msra.mxu0 0
  %1983 = vmatprep.subr.bf16.mxu0 0
  %1984 = vmatpush1.bf16.msra.mxu0 0
  %1985 = vmatprep.subr.bf16.mxu0 0
  %1986 = vmatpush1.bf16.msra.mxu0 0
  %1987 = vmatprep.subr.bf16.mxu0 0
  %1988 = vmatpush1.bf16.msra.mxu0 0
  %1989 = vmatprep.subr.bf16.mxu0 0
  %1990 = vmatpush1.bf16.msra.mxu0 0
  %1991 = vmatprep.mubr.bf16.mxu0 0
  %1992 = vmatmul.mubr.bf16.gmra.mrb[0].mxu0 %v1476
  %v1993 = vpop.f32.mrb[0].mxu0
  %v1994 = vadd.f32 %v1428, %v1993
  %v1995 = vpop.f32.mrb[0].mxu0
  %v1996 = vpop.f32.mrb[0].mxu0
  %v1997 = vadd.f32 %v1431, %v1996
  %v1998 = vpop.f32.mrb[0].mxu0
  %1999 = vmatprep.mubr.bf16.mxu0 0
  %2000 = vmatmul.mubr.bf16.gmra.mrb[0].mxu0 %v1479
  %v2001 = vpop.f32.mrb[0].mxu0
  %v2002 = vadd.f32 %v1436, %v2001
  %v2003 = vpop.f32.mrb[0].mxu0
  %v2004 = vpop.f32.mrb[0].mxu0
  %v2005 = vadd.f32 %v1439, %v2004
  %v2006 = vpop.f32.mrb[0].mxu0
  %2007 = vmatprep.mubr.bf16.mxu0 0
  %2008 = vmatmul.mubr.bf16.gmra.mrb[0].mxu0 %v1482
  %v2009 = vpop.f32.mrb[0].mxu0
  %v2010 = vadd.f32 %v1444, %v2009
  %v2011 = vpop.f32.mrb[0].mxu0
  %v2012 = vpop.f32.mrb[0].mxu0
  %v2013 = vadd.f32 %v1447, %v2012
  %v2014 = vpop.f32.mrb[0].mxu0
  %2015 = vmatprep.mubr.bf16.mxu0 0
  %2016 = vmatmul.mubr.bf16.gmra.mrb[0].mxu0 %v1485
  %v2017 = vpop.f32.mrb[0].mxu0
  %v2018 = vadd.f32 %v1452, %v2017
  %v2019 = vpop.f32.mrb[0].mxu0
  %v2020 = vpop.f32.mrb[0].mxu0
  %v2021 = vpop.f32.mrb[0].mxu0
  %2022 = vdwg.mxu0
  %v2030 = vunpack.c.l.b16 %v859
  %v2031 = vunpack.c.l.b16 %v860
  %v2032 = vunpack.c.l.b16 %v861
  %v2033 = vunpack.c.l.b16 %v862
  %v2034 = vunpack.c.l.b16 %v863
  %v2035 = vunpack.c.l.b16 %v864
  %v2036 = vunpack.c.l.b16 %v865
  %v2037 = vpack.c.b16 %v2031, %v2030
  %v2038 = vpack.c.b16 %v2033, %v2032
  %v2039 = vpack.c.b16 %v2035, %v2034
  %v2040 = vpack.c.b16 %v2036, %v2036
  %2042 = vrot.lane.b32.xlu0 %v873, 127
  %v2043 = vpop.permute.xlu0 %2042
  %v2045 = vsel %vm907, %v2037, 0
  %v2048 = vsel %vm907, %v2038, 0
  %v2051 = vsel %vm907, %v2039, 0
  %v2054 = vsel %vm907, %v2040, 0
  %v2057 = vsel %vm920, %v2043, 0
  %2059 = vmatprep.subr.bf16.mxu0 0
  %2060 = vmatpush1.bf16.msra.mxu0 %v2057
  %2061 = vmatprep.subr.bf16.mxu0 0
  %2062 = vmatpush1.bf16.msra.mxu0 0
  %2063 = vmatprep.subr.bf16.mxu0 0
  %2064 = vmatpush1.bf16.msra.mxu0 0
  %2065 = vmatprep.subr.bf16.mxu0 0
  %2066 = vmatpush1.bf16.msra.mxu0 0
  %2067 = vmatprep.subr.bf16.mxu0 0
  %2068 = vmatpush1.bf16.msra.mxu0 0
  %2069 = vmatprep.subr.bf16.mxu0 0
  %2070 = vmatpush1.bf16.msra.mxu0 0
  %2071 = vmatprep.subr.bf16.mxu0 0
  %2072 = vmatpush1.bf16.msra.mxu0 0
  %2073 = vmatprep.subr.bf16.mxu0 0
  %2074 = vmatpush1.bf16.msra.mxu0 0
  %2075 = vmatprep.subr.bf16.mxu0 0
  %2076 = vmatpush1.bf16.msra.mxu0 0
  %2077 = vmatprep.subr.bf16.mxu0 0
  %2078 = vmatpush1.bf16.msra.mxu0 0
  %2079 = vmatprep.subr.bf16.mxu0 0
  %2080 = vmatpush1.bf16.msra.mxu0 0
  %2081 = vmatprep.subr.bf16.mxu0 0
  %2082 = vmatpush1.bf16.msra.mxu0 0
  %2083 = vmatprep.subr.bf16.mxu0 0
  %2084 = vmatpush1.bf16.msra.mxu0 0
  %2085 = vmatprep.subr.bf16.mxu0 0
  %2086 = vmatpush1.bf16.msra.mxu0 0
  %2087 = vmatprep.subr.bf16.mxu0 0
  %2088 = vmatpush1.bf16.msra.mxu0 0
  %2089 = vmatprep.subr.bf16.mxu0 0
  %2090 = vmatpush1.bf16.msra.mxu0 0
  %2091 = vmatprep.mubr.bf16.mxu0 0
  %2092 = vmatmul.mubr.bf16.gmra.mrb[0].mxu0 %v2045
  %v2093 = vpop.f32.mrb[0].mxu0
  %v2094 = vadd.f32 0.0, %v2093
  %v2095 = vpop.f32.mrb[0].mxu0
  %v2096 = vpop.f32.mrb[0].mxu0
  %v2097 = vadd.f32 0.0, %v2096
  %v2098 = vpop.f32.mrb[0].mxu0
  %2099 = vmatprep.mubr.bf16.mxu0 0
  %2100 = vmatmul.mubr.bf16.gmra.mrb[0].mxu0 %v2048
  %v2101 = vpop.f32.mrb[0].mxu0
  %v2102 = vadd.f32 0.0, %v2101
  %v2103 = vpop.f32.mrb[0].mxu0
  %v2104 = vpop.f32.mrb[0].mxu0
  %v2105 = vadd.f32 0.0, %v2104
  %v2106 = vpop.f32.mrb[0].mxu0
  %2107 = vmatprep.mubr.bf16.mxu0 0
  %2108 = vmatmul.mubr.bf16.gmra.mrb[0].mxu0 %v2051
  %v2109 = vpop.f32.mrb[0].mxu0
  %v2110 = vadd.f32 0.0, %v2109
  %v2111 = vpop.f32.mrb[0].mxu0
  %v2112 = vpop.f32.mrb[0].mxu0
  %v2113 = vadd.f32 0.0, %v2112
  %v2114 = vpop.f32.mrb[0].mxu0
  %2115 = vmatprep.mubr.bf16.mxu0 0
  %2116 = vmatmul.mubr.bf16.gmra.mrb[0].mxu0 %v2054
  %v2117 = vpop.f32.mrb[0].mxu0
  %v2118 = vadd.f32 0.0, %v2117
  %v2119 = vpop.f32.mrb[0].mxu0
  %v2120 = vpop.f32.mrb[0].mxu0
  %v2121 = vpop.f32.mrb[0].mxu0
  %2122 = vdwg.mxu0
  %2124 = vrot.lane.b32.xlu0 %v874, 127
  %v2125 = vpop.permute.xlu0 %2124
  %v2127 = vsel %vm920, %v2125, 0
  %2129 = vmatprep.subr.bf16.mxu0 0
  %2130 = vmatpush1.bf16.msra.mxu0 %v2127
  %2131 = vmatprep.subr.bf16.mxu0 0
  %2132 = vmatpush1.bf16.msra.mxu0 0
  %2133 = vmatprep.subr.bf16.mxu0 0
  %2134 = vmatpush1.bf16.msra.mxu0 0
  %2135 = vmatprep.subr.bf16.mxu0 0
  %2136 = vmatpush1.bf16.msra.mxu0 0
  %2137 = vmatprep.subr.bf16.mxu0 0
  %2138 = vmatpush1.bf16.msra.mxu0 0
  %2139 = vmatprep.subr.bf16.mxu0 0
  %2140 = vmatpush1.bf16.msra.mxu0 0
  %2141 = vmatprep.subr.bf16.mxu0 0
  %2142 = vmatpush1.bf16.msra.mxu0 0
  %2143 = vmatprep.subr.bf16.mxu0 0
  %2144 = vmatpush1.bf16.msra.mxu0 0
  %2145 = vmatprep.subr.bf16.mxu0 0
  %2146 = vmatpush1.bf16.msra.mxu0 0
  %2147 = vmatprep.subr.bf16.mxu0 0
  %2148 = vmatpush1.bf16.msra.mxu0 0
  %2149 = vmatprep.subr.bf16.mxu0 0
  %2150 = vmatpush1.bf16.msra.mxu0 0
  %2151 = vmatprep.subr.bf16.mxu0 0
  %2152 = vmatpush1.bf16.msra.mxu0 0
  %2153 = vmatprep.subr.bf16.mxu0 0
  %2154 = vmatpush1.bf16.msra.mxu0 0
  %2155 = vmatprep.subr.bf16.mxu0 0
  %2156 = vmatpush1.bf16.msra.mxu0 0
  %2157 = vmatprep.subr.bf16.mxu0 0
  %2158 = vmatpush1.bf16.msra.mxu0 0
  %2159 = vmatprep.subr.bf16.mxu0 0
  %2160 = vmatpush1.bf16.msra.mxu0 0
  %2161 = vmatprep.mubr.bf16.mxu0 0
  %2162 = vmatmul.mubr.bf16.gmra.mrb[0].mxu0 %v2045
  %v2163 = vpop.f32.mrb[0].mxu0
  %v2164 = vadd.f32 0.0, %v2163
  %v2165 = vpop.f32.mrb[0].mxu0
  %v2166 = vpop.f32.mrb[0].mxu0
  %v2167 = vadd.f32 0.0, %v2166
  %v2168 = vpop.f32.mrb[0].mxu0
  %2169 = vmatprep.mubr.bf16.mxu0 0
  %2170 = vmatmul.mubr.bf16.gmra.mrb[0].mxu0 %v2048
  %v2171 = vpop.f32.mrb[0].mxu0
  %v2172 = vadd.f32 0.0, %v2171
  %v2173 = vpop.f32.mrb[0].mxu0
  %v2174 = vpop.f32.mrb[0].mxu0
  %v2175 = vadd.f32 0.0, %v2174
  %v2176 = vpop.f32.mrb[0].mxu0
  %2177 = vmatprep.mubr.bf16.mxu0 0
  %2178 = vmatmul.mubr.bf16.gmra.mrb[0].mxu0 %v2051
  %v2179 = vpop.f32.mrb[0].mxu0
  %v2180 = vadd.f32 0.0, %v2179
  %v2181 = vpop.f32.mrb[0].mxu0
  %v2182 = vpop.f32.mrb[0].mxu0
  %v2183 = vadd.f32 0.0, %v2182
  %v2184 = vpop.f32.mrb[0].mxu0
  %2185 = vmatprep.mubr.bf16.mxu0 0
  %2186 = vmatmul.mubr.bf16.gmra.mrb[0].mxu0 %v2054
  %v2187 = vpop.f32.mrb[0].mxu0
  %v2188 = vadd.f32 0.0, %v2187
  %v2189 = vpop.f32.mrb[0].mxu0
  %v2190 = vpop.f32.mrb[0].mxu0
  %v2191 = vpop.f32.mrb[0].mxu0
  %2192 = vdwg.mxu0
  %2194 = vrot.lane.b32.xlu0 %v875, 127
  %v2195 = vpop.permute.xlu0 %2194
  %v2197 = vsel %vm920, %v2195, 0
  %2199 = vmatprep.subr.bf16.mxu0 0
  %2200 = vmatpush1.bf16.msra.mxu0 %v2197
  %2201 = vmatprep.subr.bf16.mxu0 0
  %2202 = vmatpush1.bf16.msra.mxu0 0
  %2203 = vmatprep.subr.bf16.mxu0 0
  %2204 = vmatpush1.bf16.msra.mxu0 0
  %2205 = vmatprep.subr.bf16.mxu0 0
  %2206 = vmatpush1.bf16.msra.mxu0 0
  %2207 = vmatprep.subr.bf16.mxu0 0
  %2208 = vmatpush1.bf16.msra.mxu0 0
  %2209 = vmatprep.subr.bf16.mxu0 0
  %2210 = vmatpush1.bf16.msra.mxu0 0
  %2211 = vmatprep.subr.bf16.mxu0 0
  %2212 = vmatpush1.bf16.msra.mxu0 0
  %2213 = vmatprep.subr.bf16.mxu0 0
  %2214 = vmatpush1.bf16.msra.mxu0 0
  %2215 = vmatprep.subr.bf16.mxu0 0
  %2216 = vmatpush1.bf16.msra.mxu0 0
  %2217 = vmatprep.subr.bf16.mxu0 0
  %2218 = vmatpush1.bf16.msra.mxu0 0
  %2219 = vmatprep.subr.bf16.mxu0 0
  %2220 = vmatpush1.bf16.msra.mxu0 0
  %2221 = vmatprep.subr.bf16.mxu0 0
  %2222 = vmatpush1.bf16.msra.mxu0 0
  %2223 = vmatprep.subr.bf16.mxu0 0
  %2224 = vmatpush1.bf16.msra.mxu0 0
  %2225 = vmatprep.subr.bf16.mxu0 0
  %2226 = vmatpush1.bf16.msra.mxu0 0
  %2227 = vmatprep.subr.bf16.mxu0 0
  %2228 = vmatpush1.bf16.msra.mxu0 0
  %2229 = vmatprep.subr.bf16.mxu0 0
  %2230 = vmatpush1.bf16.msra.mxu0 0
  %2231 = vmatprep.mubr.bf16.mxu0 0
  %2232 = vmatmul.mubr.bf16.gmra.mrb[0].mxu0 %v2045
  %v2233 = vpop.f32.mrb[0].mxu0
  %v2234 = vadd.f32 0.0, %v2233
  %v2235 = vpop.f32.mrb[0].mxu0
  %v2236 = vpop.f32.mrb[0].mxu0
  %v2237 = vadd.f32 0.0, %v2236
  %v2238 = vpop.f32.mrb[0].mxu0
  %2239 = vmatprep.mubr.bf16.mxu0 0
  %2240 = vmatmul.mubr.bf16.gmra.mrb[0].mxu0 %v2048
  %v2241 = vpop.f32.mrb[0].mxu0
  %v2242 = vadd.f32 0.0, %v2241
  %v2243 = vpop.f32.mrb[0].mxu0
  %v2244 = vpop.f32.mrb[0].mxu0
  %v2245 = vadd.f32 0.0, %v2244
  %v2246 = vpop.f32.mrb[0].mxu0
  %2247 = vmatprep.mubr.bf16.mxu0 0
  %2248 = vmatmul.mubr.bf16.gmra.mrb[0].mxu0 %v2051
  %v2249 = vpop.f32.mrb[0].mxu0
  %v2250 = vadd.f32 0.0, %v2249
  %v2251 = vpop.f32.mrb[0].mxu0
  %v2252 = vpop.f32.mrb[0].mxu0
  %v2253 = vadd.f32 0.0, %v2252
  %v2254 = vpop.f32.mrb[0].mxu0
  %2255 = vmatprep.mubr.bf16.mxu0 0
  %2256 = vmatmul.mubr.bf16.gmra.mrb[0].mxu0 %v2054
  %v2257 = vpop.f32.mrb[0].mxu0
  %v2258 = vadd.f32 0.0, %v2257
  %v2259 = vpop.f32.mrb[0].mxu0
  %v2260 = vpop.f32.mrb[0].mxu0
  %v2261 = vpop.f32.mrb[0].mxu0
  %2262 = vdwg.mxu0
  %2264 = vrot.lane.b32.xlu0 %v876, 127
  %v2265 = vpop.permute.xlu0 %2264
  %v2267 = vsel %vm920, %v2265, 0
  %2269 = vmatprep.subr.bf16.mxu0 0
  %2270 = vmatpush1.bf16.msra.mxu0 %v2267
  %2271 = vmatprep.subr.bf16.mxu0 0
  %2272 = vmatpush1.bf16.msra.mxu0 0
  %2273 = vmatprep.subr.bf16.mxu0 0
  %2274 = vmatpush1.bf16.msra.mxu0 0
  %2275 = vmatprep.subr.bf16.mxu0 0
  %2276 = vmatpush1.bf16.msra.mxu0 0
  %2277 = vmatprep.subr.bf16.mxu0 0
  %2278 = vmatpush1.bf16.msra.mxu0 0
  %2279 = vmatprep.subr.bf16.mxu0 0
  %2280 = vmatpush1.bf16.msra.mxu0 0
  %2281 = vmatprep.subr.bf16.mxu0 0
  %2282 = vmatpush1.bf16.msra.mxu0 0
  %2283 = vmatprep.subr.bf16.mxu0 0
  %2284 = vmatpush1.bf16.msra.mxu0 0
  %2285 = vmatprep.subr.bf16.mxu0 0
  %2286 = vmatpush1.bf16.msra.mxu0 0
  %2287 = vmatprep.subr.bf16.mxu0 0
  %2288 = vmatpush1.bf16.msra.mxu0 0
  %2289 = vmatprep.subr.bf16.mxu0 0
  %2290 = vmatpush1.bf16.msra.mxu0 0
  %2291 = vmatprep.subr.bf16.mxu0 0
  %2292 = vmatpush1.bf16.msra.mxu0 0
  %2293 = vmatprep.subr.bf16.mxu0 0
  %2294 = vmatpush1.bf16.msra.mxu0 0
  %2295 = vmatprep.subr.bf16.mxu0 0
  %2296 = vmatpush1.bf16.msra.mxu0 0
  %2297 = vmatprep.subr.bf16.mxu0 0
  %2298 = vmatpush1.bf16.msra.mxu0 0
  %2299 = vmatprep.subr.bf16.mxu0 0
  %2300 = vmatpush1.bf16.msra.mxu0 0
  %2301 = vmatprep.mubr.bf16.mxu0 0
  %2302 = vmatmul.mubr.bf16.gmra.mrb[0].mxu0 %v2045
  %v2303 = vpop.f32.mrb[0].mxu0
  %v2304 = vadd.f32 0.0, %v2303
  %v2305 = vpop.f32.mrb[0].mxu0
  %v2306 = vpop.f32.mrb[0].mxu0
  %v2307 = vadd.f32 0.0, %v2306
  %v2308 = vpop.f32.mrb[0].mxu0
  %2309 = vmatprep.mubr.bf16.mxu0 0
  %2310 = vmatmul.mubr.bf16.gmra.mrb[0].mxu0 %v2048
  %v2311 = vpop.f32.mrb[0].mxu0
  %v2312 = vadd.f32 0.0, %v2311
  %v2313 = vpop.f32.mrb[0].mxu0
  %v2314 = vpop.f32.mrb[0].mxu0
  %v2315 = vadd.f32 0.0, %v2314
  %v2316 = vpop.f32.mrb[0].mxu0
  %2317 = vmatprep.mubr.bf16.mxu0 0
  %2318 = vmatmul.mubr.bf16.gmra.mrb[0].mxu0 %v2051
  %v2319 = vpop.f32.mrb[0].mxu0
  %v2320 = vadd.f32 0.0, %v2319
  %v2321 = vpop.f32.mrb[0].mxu0
  %v2322 = vpop.f32.mrb[0].mxu0
  %v2323 = vadd.f32 0.0, %v2322
  %v2324 = vpop.f32.mrb[0].mxu0
  %2325 = vmatprep.mubr.bf16.mxu0 0
  %2326 = vmatmul.mubr.bf16.gmra.mrb[0].mxu0 %v2054
  %v2327 = vpop.f32.mrb[0].mxu0
  %v2328 = vadd.f32 0.0, %v2327
  %v2329 = vpop.f32.mrb[0].mxu0
  %v2330 = vpop.f32.mrb[0].mxu0
  %v2331 = vpop.f32.mrb[0].mxu0
  %2332 = vdwg.mxu0
  %2334 = vrot.lane.b32.xlu0 %v877, 127
  %v2335 = vpop.permute.xlu0 %2334
  %v2337 = vsel %vm920, %v2335, 0
  %2339 = vmatprep.subr.bf16.mxu0 0
  %2340 = vmatpush1.bf16.msra.mxu0 %v2337
  %2341 = vmatprep.subr.bf16.mxu0 0
  %2342 = vmatpush1.bf16.msra.mxu0 0
  %2343 = vmatprep.subr.bf16.mxu0 0
  %2344 = vmatpush1.bf16.msra.mxu0 0
  %2345 = vmatprep.subr.bf16.mxu0 0
  %2346 = vmatpush1.bf16.msra.mxu0 0
  %2347 = vmatprep.subr.bf16.mxu0 0
  %2348 = vmatpush1.bf16.msra.mxu0 0
  %2349 = vmatprep.subr.bf16.mxu0 0
  %2350 = vmatpush1.bf16.msra.mxu0 0
  %2351 = vmatprep.subr.bf16.mxu0 0
  %2352 = vmatpush1.bf16.msra.mxu0 0
  %2353 = vmatprep.subr.bf16.mxu0 0
  %2354 = vmatpush1.bf16.msra.mxu0 0
  %2355 = vmatprep.subr.bf16.mxu0 0
  %2356 = vmatpush1.bf16.msra.mxu0 0
  %2357 = vmatprep.subr.bf16.mxu0 0
  %2358 = vmatpush1.bf16.msra.mxu0 0
  %2359 = vmatprep.subr.bf16.mxu0 0
  %2360 = vmatpush1.bf16.msra.mxu0 0
  %2361 = vmatprep.subr.bf16.mxu0 0
  %2362 = vmatpush1.bf16.msra.mxu0 0
  %2363 = vmatprep.subr.bf16.mxu0 0
  %2364 = vmatpush1.bf16.msra.mxu0 0
  %2365 = vmatprep.subr.bf16.mxu0 0
  %2366 = vmatpush1.bf16.msra.mxu0 0
  %2367 = vmatprep.subr.bf16.mxu0 0
  %2368 = vmatpush1.bf16.msra.mxu0 0
  %2369 = vmatprep.subr.bf16.mxu0 0
  %2370 = vmatpush1.bf16.msra.mxu0 0
  %2371 = vmatprep.mubr.bf16.mxu0 0
  %2372 = vmatmul.mubr.bf16.gmra.mrb[0].mxu0 %v2045
  %v2373 = vpop.f32.mrb[0].mxu0
  %v2374 = vadd.f32 0.0, %v2373
  %v2375 = vpop.f32.mrb[0].mxu0
  %v2376 = vpop.f32.mrb[0].mxu0
  %v2377 = vadd.f32 0.0, %v2376
  %v2378 = vpop.f32.mrb[0].mxu0
  %2379 = vmatprep.mubr.bf16.mxu0 0
  %2380 = vmatmul.mubr.bf16.gmra.mrb[0].mxu0 %v2048
  %v2381 = vpop.f32.mrb[0].mxu0
  %v2382 = vadd.f32 0.0, %v2381
  %v2383 = vpop.f32.mrb[0].mxu0
  %v2384 = vpop.f32.mrb[0].mxu0
  %v2385 = vadd.f32 0.0, %v2384
  %v2386 = vpop.f32.mrb[0].mxu0
  %2387 = vmatprep.mubr.bf16.mxu0 0
  %2388 = vmatmul.mubr.bf16.gmra.mrb[0].mxu0 %v2051
  %v2389 = vpop.f32.mrb[0].mxu0
  %v2390 = vadd.f32 0.0, %v2389
  %v2391 = vpop.f32.mrb[0].mxu0
  %v2392 = vpop.f32.mrb[0].mxu0
  %v2393 = vadd.f32 0.0, %v2392
  %v2394 = vpop.f32.mrb[0].mxu0
  %2395 = vmatprep.mubr.bf16.mxu0 0
  %2396 = vmatmul.mubr.bf16.gmra.mrb[0].mxu0 %v2054
  %v2397 = vpop.f32.mrb[0].mxu0
  %v2398 = vadd.f32 0.0, %v2397
  %v2399 = vpop.f32.mrb[0].mxu0
  %v2400 = vpop.f32.mrb[0].mxu0
  %v2401 = vpop.f32.mrb[0].mxu0
  %2402 = vdwg.mxu0
  %2404 = vrot.lane.b32.xlu0 %v878, 127
  %v2405 = vpop.permute.xlu0 %2404
  %v2407 = vsel %vm920, %v2405, 0
  %2409 = vmatprep.subr.bf16.mxu0 0
  %2410 = vmatpush1.bf16.msra.mxu0 %v2407
  %2411 = vmatprep.subr.bf16.mxu0 0
  %2412 = vmatpush1.bf16.msra.mxu0 0
  %2413 = vmatprep.subr.bf16.mxu0 0
  %2414 = vmatpush1.bf16.msra.mxu0 0
  %2415 = vmatprep.subr.bf16.mxu0 0
  %2416 = vmatpush1.bf16.msra.mxu0 0
  %2417 = vmatprep.subr.bf16.mxu0 0
  %2418 = vmatpush1.bf16.msra.mxu0 0
  %2419 = vmatprep.subr.bf16.mxu0 0
  %2420 = vmatpush1.bf16.msra.mxu0 0
  %2421 = vmatprep.subr.bf16.mxu0 0
  %2422 = vmatpush1.bf16.msra.mxu0 0
  %2423 = vmatprep.subr.bf16.mxu0 0
  %2424 = vmatpush1.bf16.msra.mxu0 0
  %2425 = vmatprep.subr.bf16.mxu0 0
  %2426 = vmatpush1.bf16.msra.mxu0 0
  %2427 = vmatprep.subr.bf16.mxu0 0
  %2428 = vmatpush1.bf16.msra.mxu0 0
  %2429 = vmatprep.subr.bf16.mxu0 0
  %2430 = vmatpush1.bf16.msra.mxu0 0
  %2431 = vmatprep.subr.bf16.mxu0 0
  %2432 = vmatpush1.bf16.msra.mxu0 0
  %2433 = vmatprep.subr.bf16.mxu0 0
  %2434 = vmatpush1.bf16.msra.mxu0 0
  %2435 = vmatprep.subr.bf16.mxu0 0
  %2436 = vmatpush1.bf16.msra.mxu0 0
  %2437 = vmatprep.subr.bf16.mxu0 0
  %2438 = vmatpush1.bf16.msra.mxu0 0
  %2439 = vmatprep.subr.bf16.mxu0 0
  %2440 = vmatpush1.bf16.msra.mxu0 0
  %2441 = vmatprep.mubr.bf16.mxu0 0
  %2442 = vmatmul.mubr.bf16.gmra.mrb[0].mxu0 %v2045
  %v2443 = vpop.f32.mrb[0].mxu0
  %v2444 = vadd.f32 0.0, %v2443
  %v2445 = vpop.f32.mrb[0].mxu0
  %v2446 = vpop.f32.mrb[0].mxu0
  %v2447 = vadd.f32 0.0, %v2446
  %v2448 = vpop.f32.mrb[0].mxu0
  %2449 = vmatprep.mubr.bf16.mxu0 0
  %2450 = vmatmul.mubr.bf16.gmra.mrb[0].mxu0 %v2048
  %v2451 = vpop.f32.mrb[0].mxu0
  %v2452 = vadd.f32 0.0, %v2451
  %v2453 = vpop.f32.mrb[0].mxu0
  %v2454 = vpop.f32.mrb[0].mxu0
  %v2455 = vadd.f32 0.0, %v2454
  %v2456 = vpop.f32.mrb[0].mxu0
  %2457 = vmatprep.mubr.bf16.mxu0 0
  %2458 = vmatmul.mubr.bf16.gmra.mrb[0].mxu0 %v2051
  %v2459 = vpop.f32.mrb[0].mxu0
  %v2460 = vadd.f32 0.0, %v2459
  %v2461 = vpop.f32.mrb[0].mxu0
  %v2462 = vpop.f32.mrb[0].mxu0
  %v2463 = vadd.f32 0.0, %v2462
  %v2464 = vpop.f32.mrb[0].mxu0
  %2465 = vmatprep.mubr.bf16.mxu0 0
  %2466 = vmatmul.mubr.bf16.gmra.mrb[0].mxu0 %v2054
  %v2467 = vpop.f32.mrb[0].mxu0
  %v2468 = vadd.f32 0.0, %v2467
  %v2469 = vpop.f32.mrb[0].mxu0
  %v2470 = vpop.f32.mrb[0].mxu0
  %v2471 = vpop.f32.mrb[0].mxu0
  %2472 = vdwg.mxu0
  %2474 = vrot.lane.b32.xlu0 %v879, 127
  %v2475 = vpop.permute.xlu0 %2474
  %v2477 = vsel %vm920, %v2475, 0
  %2479 = vmatprep.subr.bf16.mxu0 0
  %2480 = vmatpush1.bf16.msra.mxu0 %v2477
  %2481 = vmatprep.subr.bf16.mxu0 0
  %2482 = vmatpush1.bf16.msra.mxu0 0
  %2483 = vmatprep.subr.bf16.mxu0 0
  %2484 = vmatpush1.bf16.msra.mxu0 0
  %2485 = vmatprep.subr.bf16.mxu0 0
  %2486 = vmatpush1.bf16.msra.mxu0 0
  %2487 = vmatprep.subr.bf16.mxu0 0
  %2488 = vmatpush1.bf16.msra.mxu0 0
  %2489 = vmatprep.subr.bf16.mxu0 0
  %2490 = vmatpush1.bf16.msra.mxu0 0
  %2491 = vmatprep.subr.bf16.mxu0 0
  %2492 = vmatpush1.bf16.msra.mxu0 0
  %2493 = vmatprep.subr.bf16.mxu0 0
  %2494 = vmatpush1.bf16.msra.mxu0 0
  %2495 = vmatprep.subr.bf16.mxu0 0
  %2496 = vmatpush1.bf16.msra.mxu0 0
  %2497 = vmatprep.subr.bf16.mxu0 0
  %2498 = vmatpush1.bf16.msra.mxu0 0
  %2499 = vmatprep.subr.bf16.mxu0 0
  %2500 = vmatpush1.bf16.msra.mxu0 0
  %2501 = vmatprep.subr.bf16.mxu0 0
  %2502 = vmatpush1.bf16.msra.mxu0 0
  %2503 = vmatprep.subr.bf16.mxu0 0
  %2504 = vmatpush1.bf16.msra.mxu0 0
  %2505 = vmatprep.subr.bf16.mxu0 0
  %2506 = vmatpush1.bf16.msra.mxu0 0
  %2507 = vmatprep.subr.bf16.mxu0 0
  %2508 = vmatpush1.bf16.msra.mxu0 0
  %2509 = vmatprep.subr.bf16.mxu0 0
  %2510 = vmatpush1.bf16.msra.mxu0 0
  %2511 = vmatprep.mubr.bf16.mxu0 0
  %2512 = vmatmul.mubr.bf16.gmra.mrb[0].mxu0 %v2045
  %v2513 = vpop.f32.mrb[0].mxu0
  %v2514 = vadd.f32 0.0, %v2513
  %v2515 = vpop.f32.mrb[0].mxu0
  %v2516 = vpop.f32.mrb[0].mxu0
  %v2517 = vadd.f32 0.0, %v2516
  %v2518 = vpop.f32.mrb[0].mxu0
  %2519 = vmatprep.mubr.bf16.mxu0 0
  %2520 = vmatmul.mubr.bf16.gmra.mrb[0].mxu0 %v2048
  %v2521 = vpop.f32.mrb[0].mxu0
  %v2522 = vadd.f32 0.0, %v2521
  %v2523 = vpop.f32.mrb[0].mxu0
  %v2524 = vpop.f32.mrb[0].mxu0
  %v2525 = vadd.f32 0.0, %v2524
  %v2526 = vpop.f32.mrb[0].mxu0
  %2527 = vmatprep.mubr.bf16.mxu0 0
  %2528 = vmatmul.mubr.bf16.gmra.mrb[0].mxu0 %v2051
  %v2529 = vpop.f32.mrb[0].mxu0
  %v2530 = vadd.f32 0.0, %v2529
  %v2531 = vpop.f32.mrb[0].mxu0
  %v2532 = vpop.f32.mrb[0].mxu0
  %v2533 = vadd.f32 0.0, %v2532
  %v2534 = vpop.f32.mrb[0].mxu0
  %2535 = vmatprep.mubr.bf16.mxu0 0
  %2536 = vmatmul.mubr.bf16.gmra.mrb[0].mxu0 %v2054
  %v2537 = vpop.f32.mrb[0].mxu0
  %v2538 = vadd.f32 0.0, %v2537
  %v2539 = vpop.f32.mrb[0].mxu0
  %v2540 = vpop.f32.mrb[0].mxu0
  %v2541 = vpop.f32.mrb[0].mxu0
  %2542 = vdwg.mxu0
  %2544 = vrot.lane.b32.xlu0 %v880, 127
  %v2545 = vpop.permute.xlu0 %2544
  %v2547 = vsel %vm920, %v2545, 0
  %2549 = vmatprep.subr.bf16.mxu0 0
  %2550 = vmatpush1.bf16.msra.mxu0 %v2547
  %2551 = vmatprep.subr.bf16.mxu0 0
  %2552 = vmatpush1.bf16.msra.mxu0 0
  %2553 = vmatprep.subr.bf16.mxu0 0
  %2554 = vmatpush1.bf16.msra.mxu0 0
  %2555 = vmatprep.subr.bf16.mxu0 0
  %2556 = vmatpush1.bf16.msra.mxu0 0
  %2557 = vmatprep.subr.bf16.mxu0 0
  %2558 = vmatpush1.bf16.msra.mxu0 0
  %2559 = vmatprep.subr.bf16.mxu0 0
  %2560 = vmatpush1.bf16.msra.mxu0 0
  %2561 = vmatprep.subr.bf16.mxu0 0
  %2562 = vmatpush1.bf16.msra.mxu0 0
  %2563 = vmatprep.subr.bf16.mxu0 0
  %2564 = vmatpush1.bf16.msra.mxu0 0
  %2565 = vmatprep.subr.bf16.mxu0 0
  %2566 = vmatpush1.bf16.msra.mxu0 0
  %2567 = vmatprep.subr.bf16.mxu0 0
  %2568 = vmatpush1.bf16.msra.mxu0 0
  %2569 = vmatprep.subr.bf16.mxu0 0
  %2570 = vmatpush1.bf16.msra.mxu0 0
  %2571 = vmatprep.subr.bf16.mxu0 0
  %2572 = vmatpush1.bf16.msra.mxu0 0
  %2573 = vmatprep.subr.bf16.mxu0 0
  %2574 = vmatpush1.bf16.msra.mxu0 0
  %2575 = vmatprep.subr.bf16.mxu0 0
  %2576 = vmatpush1.bf16.msra.mxu0 0
  %2577 = vmatprep.subr.bf16.mxu0 0
  %2578 = vmatpush1.bf16.msra.mxu0 0
  %2579 = vmatprep.subr.bf16.mxu0 0
  %2580 = vmatpush1.bf16.msra.mxu0 0
  %2581 = vmatprep.mubr.bf16.mxu0 0
  %2582 = vmatmul.mubr.bf16.gmra.mrb[0].mxu0 %v2045
  %v2583 = vpop.f32.mrb[0].mxu0
  %v2584 = vadd.f32 0.0, %v2583
  %v2585 = vpop.f32.mrb[0].mxu0
  %v2586 = vpop.f32.mrb[0].mxu0
  %v2587 = vadd.f32 0.0, %v2586
  %v2588 = vpop.f32.mrb[0].mxu0
  %2589 = vmatprep.mubr.bf16.mxu0 0
  %2590 = vmatmul.mubr.bf16.gmra.mrb[0].mxu0 %v2048
  %v2591 = vpop.f32.mrb[0].mxu0
  %v2592 = vadd.f32 0.0, %v2591
  %v2593 = vpop.f32.mrb[0].mxu0
  %v2594 = vpop.f32.mrb[0].mxu0
  %v2595 = vadd.f32 0.0, %v2594
  %v2596 = vpop.f32.mrb[0].mxu0
  %2597 = vmatprep.mubr.bf16.mxu0 0
  %2598 = vmatmul.mubr.bf16.gmra.mrb[0].mxu0 %v2051
  %v2599 = vpop.f32.mrb[0].mxu0
  %v2600 = vadd.f32 0.0, %v2599
  %v2601 = vpop.f32.mrb[0].mxu0
  %v2602 = vpop.f32.mrb[0].mxu0
  %v2603 = vadd.f32 0.0, %v2602
  %v2604 = vpop.f32.mrb[0].mxu0
  %2605 = vmatprep.mubr.bf16.mxu0 0
  %2606 = vmatmul.mubr.bf16.gmra.mrb[0].mxu0 %v2054
  %v2607 = vpop.f32.mrb[0].mxu0
  %v2608 = vadd.f32 0.0, %v2607
  %v2609 = vpop.f32.mrb[0].mxu0
  %v2610 = vpop.f32.mrb[0].mxu0
  %v2611 = vpop.f32.mrb[0].mxu0
  %2612 = vdwg.mxu0
  %v2613 = vadd.f32 %v1525, %v2094
  %v2614 = vadd.f32 %v1528, %v2097
  %v2615 = vadd.f32 %v1533, %v2102
  %v2616 = vadd.f32 %v1536, %v2105
  %v2617 = vadd.f32 %v1541, %v2110
  %v2618 = vadd.f32 %v1544, %v2113
  %v2619 = vadd.f32 %v1549, %v2118
  %v2620 = vadd.f32 %v1592, %v2164
  %v2621 = vadd.f32 %v1595, %v2167
  %v2622 = vadd.f32 %v1600, %v2172
  %v2623 = vadd.f32 %v1603, %v2175
  %v2624 = vadd.f32 %v1608, %v2180
  %v2625 = vadd.f32 %v1611, %v2183
  %v2626 = vadd.f32 %v1616, %v2188
  %v2627 = vadd.f32 %v1659, %v2234
  %v2628 = vadd.f32 %v1662, %v2237
  %v2629 = vadd.f32 %v1667, %v2242
  %v2630 = vadd.f32 %v1670, %v2245
  %v2631 = vadd.f32 %v1675, %v2250
  %v2632 = vadd.f32 %v1678, %v2253
  %v2633 = vadd.f32 %v1683, %v2258
  %v2634 = vadd.f32 %v1726, %v2304
  %v2635 = vadd.f32 %v1729, %v2307
  %v2636 = vadd.f32 %v1734, %v2312
  %v2637 = vadd.f32 %v1737, %v2315
  %v2638 = vadd.f32 %v1742, %v2320
  %v2639 = vadd.f32 %v1745, %v2323
  %v2640 = vadd.f32 %v1750, %v2328
  %v2641 = vadd.f32 %v1793, %v2374
  %v2642 = vadd.f32 %v1796, %v2377
  %v2643 = vadd.f32 %v1801, %v2382
  %v2644 = vadd.f32 %v1804, %v2385
  %v2645 = vadd.f32 %v1809, %v2390
  %v2646 = vadd.f32 %v1812, %v2393
  %v2647 = vadd.f32 %v1817, %v2398
  %v2648 = vadd.f32 %v1860, %v2444
  %v2649 = vadd.f32 %v1863, %v2447
  %v2650 = vadd.f32 %v1868, %v2452
  %v2651 = vadd.f32 %v1871, %v2455
  %v2652 = vadd.f32 %v1876, %v2460
  %v2653 = vadd.f32 %v1879, %v2463
  %v2654 = vadd.f32 %v1884, %v2468
  %v2655 = vadd.f32 %v1927, %v2514
  %v2656 = vadd.f32 %v1930, %v2517
  %v2657 = vadd.f32 %v1935, %v2522
  %v2658 = vadd.f32 %v1938, %v2525
  %v2659 = vadd.f32 %v1943, %v2530
  %v2660 = vadd.f32 %v1946, %v2533
  %v2661 = vadd.f32 %v1951, %v2538
  %v2662 = vadd.f32 %v1994, %v2584
  %v2663 = vadd.f32 %v1997, %v2587
  %v2664 = vadd.f32 %v2002, %v2592
  %v2665 = vadd.f32 %v2005, %v2595
  %v2666 = vadd.f32 %v2010, %v2600
  %v2667 = vadd.f32 %v2013, %v2603
  %v2668 = vadd.f32 %v2018, %v2608
  %2670 = vset.pattern.permute.xlu0 0
  %2671 = vperm.xlu0 %2670, %v866
  %v2672 = vpop.permute.xlu0 %2671
  %2675 = vset.pattern.permute.xlu0 0
  %2676 = vperm.xlu0 %2675, %v867
  %v2677 = vpop.permute.xlu0 %2676
  %2680 = vset.pattern.permute.xlu0 0
  %2681 = vperm.xlu0 %2680, %v868
  %v2682 = vpop.permute.xlu0 %2681
  %2685 = vset.pattern.permute.xlu0 0
  %2686 = vperm.xlu0 %2685, %v869
  %v2687 = vpop.permute.xlu0 %2686
  %2690 = vset.pattern.permute.xlu0 0
  %2691 = vperm.xlu0 %2690, %v870
  %v2692 = vpop.permute.xlu0 %2691
  %2695 = vset.pattern.permute.xlu0 0
  %2696 = vperm.xlu0 %2695, %v871
  %v2697 = vpop.permute.xlu0 %2696
  %2700 = vset.pattern.permute.xlu0 0
  %2701 = vperm.xlu0 %2700, %v872
  %v2702 = vpop.permute.xlu0 %2701
  %v2704 = vadd.f32 %v2613, %v2672
  %v2705 = vadd.f32 %v2614, %v2677
  %v2706 = vadd.f32 %v2615, %v2682
  %v2707 = vadd.f32 %v2616, %v2687
  %v2708 = vadd.f32 %v2617, %v2692
  %v2709 = vadd.f32 %v2618, %v2697
  %v2710 = vadd.f32 %v2619, %v2702
  %v2711 = vadd.f32 %v2620, %v2672
  %v2712 = vadd.f32 %v2621, %v2677
  %v2713 = vadd.f32 %v2622, %v2682
  %v2714 = vadd.f32 %v2623, %v2687
  %v2715 = vadd.f32 %v2624, %v2692
  %v2716 = vadd.f32 %v2625, %v2697
  %v2717 = vadd.f32 %v2626, %v2702
  %v2718 = vadd.f32 %v2627, %v2672
  %v2719 = vadd.f32 %v2628, %v2677
  %v2720 = vadd.f32 %v2629, %v2682
  %v2721 = vadd.f32 %v2630, %v2687
  %v2722 = vadd.f32 %v2631, %v2692
  %v2723 = vadd.f32 %v2632, %v2697
  %v2724 = vadd.f32 %v2633, %v2702
  %v2725 = vadd.f32 %v2634, %v2672
  %v2726 = vadd.f32 %v2635, %v2677
  %v2727 = vadd.f32 %v2636, %v2682
  %v2728 = vadd.f32 %v2637, %v2687
  %v2729 = vadd.f32 %v2638, %v2692
  %v2730 = vadd.f32 %v2639, %v2697
  %v2731 = vadd.f32 %v2640, %v2702
  %v2732 = vadd.f32 %v2641, %v2672
  %v2733 = vadd.f32 %v2642, %v2677
  %v2734 = vadd.f32 %v2643, %v2682
  %v2735 = vadd.f32 %v2644, %v2687
  %v2736 = vadd.f32 %v2645, %v2692
  %v2737 = vadd.f32 %v2646, %v2697
  %v2738 = vadd.f32 %v2647, %v2702
  %v2739 = vadd.f32 %v2648, %v2672
  %v2740 = vadd.f32 %v2649, %v2677
  %v2741 = vadd.f32 %v2650, %v2682
  %v2742 = vadd.f32 %v2651, %v2687
  %v2743 = vadd.f32 %v2652, %v2692
  %v2744 = vadd.f32 %v2653, %v2697
  %v2745 = vadd.f32 %v2654, %v2702
  %v2746 = vadd.f32 %v2655, %v2672
  %v2747 = vadd.f32 %v2656, %v2677
  %v2748 = vadd.f32 %v2657, %v2682
  %v2749 = vadd.f32 %v2658, %v2687
  %v2750 = vadd.f32 %v2659, %v2692
  %v2751 = vadd.f32 %v2660, %v2697
  %v2752 = vadd.f32 %v2661, %v2702
  %v2753 = vadd.f32 %v2662, %v2672
  %v2754 = vadd.f32 %v2663, %v2677
  %v2755 = vadd.f32 %v2664, %v2682
  %v2756 = vadd.f32 %v2665, %v2687
  %v2757 = vadd.f32 %v2666, %v2692
  %v2758 = vadd.f32 %v2667, %v2697
  %v2759 = vadd.f32 %v2668, %v2702
  %2760 = vmatprep.subr.bf16.mxu0 0
  %2761 = vmatpush1.bf16.msra.mxu0 %v2057
  %2762 = vmatprep.subr.bf16.mxu0 0
  %2763 = vmatpush1.bf16.msra.mxu0 0
  %2764 = vmatprep.subr.bf16.mxu0 0
  %2765 = vmatpush1.bf16.msra.mxu0 0
  %2766 = vmatprep.subr.bf16.mxu0 0
  %2767 = vmatpush1.bf16.msra.mxu0 0
  %2768 = vmatprep.subr.bf16.mxu0 0
  %2769 = vmatpush1.bf16.msra.mxu0 0
  %2770 = vmatprep.subr.bf16.mxu0 0
  %2771 = vmatpush1.bf16.msra.mxu0 0
  %2772 = vmatprep.subr.bf16.mxu0 0
  %2773 = vmatpush1.bf16.msra.mxu0 0
  %2774 = vmatprep.subr.bf16.mxu0 0
  %2775 = vmatpush1.bf16.msra.mxu0 0
  %2776 = vmatprep.subr.bf16.mxu0 0
  %2777 = vmatpush1.bf16.msra.mxu0 0
  %2778 = vmatprep.subr.bf16.mxu0 0
  %2779 = vmatpush1.bf16.msra.mxu0 0
  %2780 = vmatprep.subr.bf16.mxu0 0
  %2781 = vmatpush1.bf16.msra.mxu0 0
  %2782 = vmatprep.subr.bf16.mxu0 0
  %2783 = vmatpush1.bf16.msra.mxu0 0
  %2784 = vmatprep.subr.bf16.mxu0 0
  %2785 = vmatpush1.bf16.msra.mxu0 0
  %2786 = vmatprep.subr.bf16.mxu0 0
  %2787 = vmatpush1.bf16.msra.mxu0 0
  %2788 = vmatprep.subr.bf16.mxu0 0
  %2789 = vmatpush1.bf16.msra.mxu0 0
  %2790 = vmatprep.subr.bf16.mxu0 0
  %2791 = vmatpush1.bf16.msra.mxu0 0
  %2792 = vmatprep.mubr.bf16.mxu0 0
  %2793 = vmatmul.mubr.bf16.gmra.mrb[0].mxu0 %v909
  %v2794 = vpop.f32.mrb[0].mxu0
  %v2795 = vadd.f32 0.0, %v2794
  %v2796 = vpop.f32.mrb[0].mxu0
  %v2797 = vpop.f32.mrb[0].mxu0
  %v2798 = vadd.f32 0.0, %v2797
  %v2799 = vpop.f32.mrb[0].mxu0
  %2800 = vmatprep.mubr.bf16.mxu0 0
  %2801 = vmatmul.mubr.bf16.gmra.mrb[0].mxu0 %v912
  %v2802 = vpop.f32.mrb[0].mxu0
  %v2803 = vadd.f32 0.0, %v2802
  %v2804 = vpop.f32.mrb[0].mxu0
  %v2805 = vpop.f32.mrb[0].mxu0
  %v2806 = vadd.f32 0.0, %v2805
  %v2807 = vpop.f32.mrb[0].mxu0
  %2808 = vmatprep.mubr.bf16.mxu0 0
  %2809 = vmatmul.mubr.bf16.gmra.mrb[0].mxu0 %v915
  %v2810 = vpop.f32.mrb[0].mxu0
  %v2811 = vadd.f32 0.0, %v2810
  %v2812 = vpop.f32.mrb[0].mxu0
  %v2813 = vpop.f32.mrb[0].mxu0
  %v2814 = vadd.f32 0.0, %v2813
  %v2815 = vpop.f32.mrb[0].mxu0
  %2816 = vmatprep.mubr.bf16.mxu0 0
  %2817 = vmatmul.mubr.bf16.gmra.mrb[0].mxu0 %v918
  %v2818 = vpop.f32.mrb[0].mxu0
  %v2819 = vadd.f32 0.0, %v2818
  %v2820 = vpop.f32.mrb[0].mxu0
  %v2821 = vpop.f32.mrb[0].mxu0
  %v2822 = vpop.f32.mrb[0].mxu0
  %2823 = vdwg.mxu0
  %2824 = vmatprep.subr.bf16.mxu0 0
  %2825 = vmatpush1.bf16.msra.mxu0 %v2127
  %2826 = vmatprep.subr.bf16.mxu0 0
  %2827 = vmatpush1.bf16.msra.mxu0 0
  %2828 = vmatprep.subr.bf16.mxu0 0
  %2829 = vmatpush1.bf16.msra.mxu0 0
  %2830 = vmatprep.subr.bf16.mxu0 0
  %2831 = vmatpush1.bf16.msra.mxu0 0
  %2832 = vmatprep.subr.bf16.mxu0 0
  %2833 = vmatpush1.bf16.msra.mxu0 0
  %2834 = vmatprep.subr.bf16.mxu0 0
  %2835 = vmatpush1.bf16.msra.mxu0 0
  %2836 = vmatprep.subr.bf16.mxu0 0
  %2837 = vmatpush1.bf16.msra.mxu0 0
  %2838 = vmatprep.subr.bf16.mxu0 0
  %2839 = vmatpush1.bf16.msra.mxu0 0
  %2840 = vmatprep.subr.bf16.mxu0 0
  %2841 = vmatpush1.bf16.msra.mxu0 0
  %2842 = vmatprep.subr.bf16.mxu0 0
  %2843 = vmatpush1.bf16.msra.mxu0 0
  %2844 = vmatprep.subr.bf16.mxu0 0
  %2845 = vmatpush1.bf16.msra.mxu0 0
  %2846 = vmatprep.subr.bf16.mxu0 0
  %2847 = vmatpush1.bf16.msra.mxu0 0
  %2848 = vmatprep.subr.bf16.mxu0 0
  %2849 = vmatpush1.bf16.msra.mxu0 0
  %2850 = vmatprep.subr.bf16.mxu0 0
  %2851 = vmatpush1.bf16.msra.mxu0 0
  %2852 = vmatprep.subr.bf16.mxu0 0
  %2853 = vmatpush1.bf16.msra.mxu0 0
  %2854 = vmatprep.subr.bf16.mxu0 0
  %2855 = vmatpush1.bf16.msra.mxu0 0
  %2856 = vmatprep.mubr.bf16.mxu0 0
  %2857 = vmatmul.mubr.bf16.gmra.mrb[0].mxu0 %v909
  %v2858 = vpop.f32.mrb[0].mxu0
  %v2859 = vadd.f32 0.0, %v2858
  %v2860 = vpop.f32.mrb[0].mxu0
  %v2861 = vpop.f32.mrb[0].mxu0
  %v2862 = vadd.f32 0.0, %v2861
  %v2863 = vpop.f32.mrb[0].mxu0
  %2864 = vmatprep.mubr.bf16.mxu0 0
  %2865 = vmatmul.mubr.bf16.gmra.mrb[0].mxu0 %v912
  %v2866 = vpop.f32.mrb[0].mxu0
  %v2867 = vadd.f32 0.0, %v2866
  %v2868 = vpop.f32.mrb[0].mxu0
  %v2869 = vpop.f32.mrb[0].mxu0
  %v2870 = vadd.f32 0.0, %v2869
  %v2871 = vpop.f32.mrb[0].mxu0
  %2872 = vmatprep.mubr.bf16.mxu0 0
  %2873 = vmatmul.mubr.bf16.gmra.mrb[0].mxu0 %v915
  %v2874 = vpop.f32.mrb[0].mxu0
  %v2875 = vadd.f32 0.0, %v2874
  %v2876 = vpop.f32.mrb[0].mxu0
  %v2877 = vpop.f32.mrb[0].mxu0
  %v2878 = vadd.f32 0.0, %v2877
  %v2879 = vpop.f32.mrb[0].mxu0
  %2880 = vmatprep.mubr.bf16.mxu0 0
  %2881 = vmatmul.mubr.bf16.gmra.mrb[0].mxu0 %v918
  %v2882 = vpop.f32.mrb[0].mxu0
  %v2883 = vadd.f32 0.0, %v2882
  %v2884 = vpop.f32.mrb[0].mxu0
  %v2885 = vpop.f32.mrb[0].mxu0
  %v2886 = vpop.f32.mrb[0].mxu0
  %2887 = vdwg.mxu0
  %2888 = vmatprep.subr.bf16.mxu0 0
  %2889 = vmatpush1.bf16.msra.mxu0 %v2197
  %2890 = vmatprep.subr.bf16.mxu0 0
  %2891 = vmatpush1.bf16.msra.mxu0 0
  %2892 = vmatprep.subr.bf16.mxu0 0
  %2893 = vmatpush1.bf16.msra.mxu0 0
  %2894 = vmatprep.subr.bf16.mxu0 0
  %2895 = vmatpush1.bf16.msra.mxu0 0
  %2896 = vmatprep.subr.bf16.mxu0 0
  %2897 = vmatpush1.bf16.msra.mxu0 0
  %2898 = vmatprep.subr.bf16.mxu0 0
  %2899 = vmatpush1.bf16.msra.mxu0 0
  %2900 = vmatprep.subr.bf16.mxu0 0
  %2901 = vmatpush1.bf16.msra.mxu0 0
  %2902 = vmatprep.subr.bf16.mxu0 0
  %2903 = vmatpush1.bf16.msra.mxu0 0
  %2904 = vmatprep.subr.bf16.mxu0 0
  %2905 = vmatpush1.bf16.msra.mxu0 0
  %2906 = vmatprep.subr.bf16.mxu0 0
  %2907 = vmatpush1.bf16.msra.mxu0 0
  %2908 = vmatprep.subr.bf16.mxu0 0
  %2909 = vmatpush1.bf16.msra.mxu0 0
  %2910 = vmatprep.subr.bf16.mxu0 0
  %2911 = vmatpush1.bf16.msra.mxu0 0
  %2912 = vmatprep.subr.bf16.mxu0 0
  %2913 = vmatpush1.bf16.msra.mxu0 0
  %2914 = vmatprep.subr.bf16.mxu0 0
  %2915 = vmatpush1.bf16.msra.mxu0 0
  %2916 = vmatprep.subr.bf16.mxu0 0
  %2917 = vmatpush1.bf16.msra.mxu0 0
  %2918 = vmatprep.subr.bf16.mxu0 0
  %2919 = vmatpush1.bf16.msra.mxu0 0
  %2920 = vmatprep.mubr.bf16.mxu0 0
  %2921 = vmatmul.mubr.bf16.gmra.mrb[0].mxu0 %v909
  %v2922 = vpop.f32.mrb[0].mxu0
  %v2923 = vadd.f32 0.0, %v2922
  %v2924 = vpop.f32.mrb[0].mxu0
  %v2925 = vpop.f32.mrb[0].mxu0
  %v2926 = vadd.f32 0.0, %v2925
  %v2927 = vpop.f32.mrb[0].mxu0
  %2928 = vmatprep.mubr.bf16.mxu0 0
  %2929 = vmatmul.mubr.bf16.gmra.mrb[0].mxu0 %v912
  %v2930 = vpop.f32.mrb[0].mxu0
  %v2931 = vadd.f32 0.0, %v2930
  %v2932 = vpop.f32.mrb[0].mxu0
  %v2933 = vpop.f32.mrb[0].mxu0
  %v2934 = vadd.f32 0.0, %v2933
  %v2935 = vpop.f32.mrb[0].mxu0
  %2936 = vmatprep.mubr.bf16.mxu0 0
  %2937 = vmatmul.mubr.bf16.gmra.mrb[0].mxu0 %v915
  %v2938 = vpop.f32.mrb[0].mxu0
  %v2939 = vadd.f32 0.0, %v2938
  %v2940 = vpop.f32.mrb[0].mxu0
  %v2941 = vpop.f32.mrb[0].mxu0
  %v2942 = vadd.f32 0.0, %v2941
  %v2943 = vpop.f32.mrb[0].mxu0
  %2944 = vmatprep.mubr.bf16.mxu0 0
  %2945 = vmatmul.mubr.bf16.gmra.mrb[0].mxu0 %v918
  %v2946 = vpop.f32.mrb[0].mxu0
  %v2947 = vadd.f32 0.0, %v2946
  %v2948 = vpop.f32.mrb[0].mxu0
  %v2949 = vpop.f32.mrb[0].mxu0
  %v2950 = vpop.f32.mrb[0].mxu0
  %2951 = vdwg.mxu0
  %2952 = vmatprep.subr.bf16.mxu0 0
  %2953 = vmatpush1.bf16.msra.mxu0 %v2267
  %2954 = vmatprep.subr.bf16.mxu0 0
  %2955 = vmatpush1.bf16.msra.mxu0 0
  %2956 = vmatprep.subr.bf16.mxu0 0
  %2957 = vmatpush1.bf16.msra.mxu0 0
  %2958 = vmatprep.subr.bf16.mxu0 0
  %2959 = vmatpush1.bf16.msra.mxu0 0
  %2960 = vmatprep.subr.bf16.mxu0 0
  %2961 = vmatpush1.bf16.msra.mxu0 0
  %2962 = vmatprep.subr.bf16.mxu0 0
  %2963 = vmatpush1.bf16.msra.mxu0 0
  %2964 = vmatprep.subr.bf16.mxu0 0
  %2965 = vmatpush1.bf16.msra.mxu0 0
  %2966 = vmatprep.subr.bf16.mxu0 0
  %2967 = vmatpush1.bf16.msra.mxu0 0
  %2968 = vmatprep.subr.bf16.mxu0 0
  %2969 = vmatpush1.bf16.msra.mxu0 0
  %2970 = vmatprep.subr.bf16.mxu0 0
  %2971 = vmatpush1.bf16.msra.mxu0 0
  %2972 = vmatprep.subr.bf16.mxu0 0
  %2973 = vmatpush1.bf16.msra.mxu0 0
  %2974 = vmatprep.subr.bf16.mxu0 0
  %2975 = vmatpush1.bf16.msra.mxu0 0
  %2976 = vmatprep.subr.bf16.mxu0 0
  %2977 = vmatpush1.bf16.msra.mxu0 0
  %2978 = vmatprep.subr.bf16.mxu0 0
  %2979 = vmatpush1.bf16.msra.mxu0 0
  %2980 = vmatprep.subr.bf16.mxu0 0
  %2981 = vmatpush1.bf16.msra.mxu0 0
  %2982 = vmatprep.subr.bf16.mxu0 0
  %2983 = vmatpush1.bf16.msra.mxu0 0
  %2984 = vmatprep.mubr.bf16.mxu0 0
  %2985 = vmatmul.mubr.bf16.gmra.mrb[0].mxu0 %v909
  %v2986 = vpop.f32.mrb[0].mxu0
  %v2987 = vadd.f32 0.0, %v2986
  %v2988 = vpop.f32.mrb[0].mxu0
  %v2989 = vpop.f32.mrb[0].mxu0
  %v2990 = vadd.f32 0.0, %v2989
  %v2991 = vpop.f32.mrb[0].mxu0
  %2992 = vmatprep.mubr.bf16.mxu0 0
  %2993 = vmatmul.mubr.bf16.gmra.mrb[0].mxu0 %v912
  %v2994 = vpop.f32.mrb[0].mxu0
  %v2995 = vadd.f32 0.0, %v2994
  %v2996 = vpop.f32.mrb[0].mxu0
  %v2997 = vpop.f32.mrb[0].mxu0
  %v2998 = vadd.f32 0.0, %v2997
  %v2999 = vpop.f32.mrb[0].mxu0
  %3000 = vmatprep.mubr.bf16.mxu0 0
  %3001 = vmatmul.mubr.bf16.gmra.mrb[0].mxu0 %v915
  %v3002 = vpop.f32.mrb[0].mxu0
  %v3003 = vadd.f32 0.0, %v3002
  %v3004 = vpop.f32.mrb[0].mxu0
  %v3005 = vpop.f32.mrb[0].mxu0
  %v3006 = vadd.f32 0.0, %v3005
  %v3007 = vpop.f32.mrb[0].mxu0
  %3008 = vmatprep.mubr.bf16.mxu0 0
  %3009 = vmatmul.mubr.bf16.gmra.mrb[0].mxu0 %v918
  %v3010 = vpop.f32.mrb[0].mxu0
  %v3011 = vadd.f32 0.0, %v3010
  %v3012 = vpop.f32.mrb[0].mxu0
  %v3013 = vpop.f32.mrb[0].mxu0
  %v3014 = vpop.f32.mrb[0].mxu0
  %3015 = vdwg.mxu0
  %3016 = vmatprep.subr.bf16.mxu0 0
  %3017 = vmatpush1.bf16.msra.mxu0 %v2337
  %3018 = vmatprep.subr.bf16.mxu0 0
  %3019 = vmatpush1.bf16.msra.mxu0 0
  %3020 = vmatprep.subr.bf16.mxu0 0
  %3021 = vmatpush1.bf16.msra.mxu0 0
  %3022 = vmatprep.subr.bf16.mxu0 0
  %3023 = vmatpush1.bf16.msra.mxu0 0
  %3024 = vmatprep.subr.bf16.mxu0 0
  %3025 = vmatpush1.bf16.msra.mxu0 0
  %3026 = vmatprep.subr.bf16.mxu0 0
  %3027 = vmatpush1.bf16.msra.mxu0 0
  %3028 = vmatprep.subr.bf16.mxu0 0
  %3029 = vmatpush1.bf16.msra.mxu0 0
  %3030 = vmatprep.subr.bf16.mxu0 0
  %3031 = vmatpush1.bf16.msra.mxu0 0
  %3032 = vmatprep.subr.bf16.mxu0 0
  %3033 = vmatpush1.bf16.msra.mxu0 0
  %3034 = vmatprep.subr.bf16.mxu0 0
  %3035 = vmatpush1.bf16.msra.mxu0 0
  %3036 = vmatprep.subr.bf16.mxu0 0
  %3037 = vmatpush1.bf16.msra.mxu0 0
  %3038 = vmatprep.subr.bf16.mxu0 0
  %3039 = vmatpush1.bf16.msra.mxu0 0
  %3040 = vmatprep.subr.bf16.mxu0 0
  %3041 = vmatpush1.bf16.msra.mxu0 0
  %3042 = vmatprep.subr.bf16.mxu0 0
  %3043 = vmatpush1.bf16.msra.mxu0 0
  %3044 = vmatprep.subr.bf16.mxu0 0
  %3045 = vmatpush1.bf16.msra.mxu0 0
  %3046 = vmatprep.subr.bf16.mxu0 0
  %3047 = vmatpush1.bf16.msra.mxu0 0
  %3048 = vmatprep.mubr.bf16.mxu0 0
  %3049 = vmatmul.mubr.bf16.gmra.mrb[0].mxu0 %v909
  %v3050 = vpop.f32.mrb[0].mxu0
  %v3051 = vadd.f32 0.0, %v3050
  %v3052 = vpop.f32.mrb[0].mxu0
  %v3053 = vpop.f32.mrb[0].mxu0
  %v3054 = vadd.f32 0.0, %v3053
  %v3055 = vpop.f32.mrb[0].mxu0
  %3056 = vmatprep.mubr.bf16.mxu0 0
  %3057 = vmatmul.mubr.bf16.gmra.mrb[0].mxu0 %v912
  %v3058 = vpop.f32.mrb[0].mxu0
  %v3059 = vadd.f32 0.0, %v3058
  %v3060 = vpop.f32.mrb[0].mxu0
  %v3061 = vpop.f32.mrb[0].mxu0
  %v3062 = vadd.f32 0.0, %v3061
  %v3063 = vpop.f32.mrb[0].mxu0
  %3064 = vmatprep.mubr.bf16.mxu0 0
  %3065 = vmatmul.mubr.bf16.gmra.mrb[0].mxu0 %v915
  %v3066 = vpop.f32.mrb[0].mxu0
  %v3067 = vadd.f32 0.0, %v3066
  %v3068 = vpop.f32.mrb[0].mxu0
  %v3069 = vpop.f32.mrb[0].mxu0
  %v3070 = vadd.f32 0.0, %v3069
  %v3071 = vpop.f32.mrb[0].mxu0
  %3072 = vmatprep.mubr.bf16.mxu0 0
  %3073 = vmatmul.mubr.bf16.gmra.mrb[0].mxu0 %v918
  %v3074 = vpop.f32.mrb[0].mxu0
  %v3075 = vadd.f32 0.0, %v3074
  %v3076 = vpop.f32.mrb[0].mxu0
  %v3077 = vpop.f32.mrb[0].mxu0
  %v3078 = vpop.f32.mrb[0].mxu0
  %3079 = vdwg.mxu0
  %3080 = vmatprep.subr.bf16.mxu0 0
  %3081 = vmatpush1.bf16.msra.mxu0 %v2407
  %3082 = vmatprep.subr.bf16.mxu0 0
  %3083 = vmatpush1.bf16.msra.mxu0 0
  %3084 = vmatprep.subr.bf16.mxu0 0
  %3085 = vmatpush1.bf16.msra.mxu0 0
  %3086 = vmatprep.subr.bf16.mxu0 0
  %3087 = vmatpush1.bf16.msra.mxu0 0
  %3088 = vmatprep.subr.bf16.mxu0 0
  %3089 = vmatpush1.bf16.msra.mxu0 0
  %3090 = vmatprep.subr.bf16.mxu0 0
  %3091 = vmatpush1.bf16.msra.mxu0 0
  %3092 = vmatprep.subr.bf16.mxu0 0
  %3093 = vmatpush1.bf16.msra.mxu0 0
  %3094 = vmatprep.subr.bf16.mxu0 0
  %3095 = vmatpush1.bf16.msra.mxu0 0
  %3096 = vmatprep.subr.bf16.mxu0 0
  %3097 = vmatpush1.bf16.msra.mxu0 0
  %3098 = vmatprep.subr.bf16.mxu0 0
  %3099 = vmatpush1.bf16.msra.mxu0 0
  %3100 = vmatprep.subr.bf16.mxu0 0
  %3101 = vmatpush1.bf16.msra.mxu0 0
  %3102 = vmatprep.subr.bf16.mxu0 0
  %3103 = vmatpush1.bf16.msra.mxu0 0
  %3104 = vmatprep.subr.bf16.mxu0 0
  %3105 = vmatpush1.bf16.msra.mxu0 0
  %3106 = vmatprep.subr.bf16.mxu0 0
  %3107 = vmatpush1.bf16.msra.mxu0 0
  %3108 = vmatprep.subr.bf16.mxu0 0
  %3109 = vmatpush1.bf16.msra.mxu0 0
  %3110 = vmatprep.subr.bf16.mxu0 0
  %3111 = vmatpush1.bf16.msra.mxu0 0
  %3112 = vmatprep.mubr.bf16.mxu0 0
  %3113 = vmatmul.mubr.bf16.gmra.mrb[0].mxu0 %v909
  %v3114 = vpop.f32.mrb[0].mxu0
  %v3115 = vadd.f32 0.0, %v3114
  %v3116 = vpop.f32.mrb[0].mxu0
  %v3117 = vpop.f32.mrb[0].mxu0
  %v3118 = vadd.f32 0.0, %v3117
  %v3119 = vpop.f32.mrb[0].mxu0
  %3120 = vmatprep.mubr.bf16.mxu0 0
  %3121 = vmatmul.mubr.bf16.gmra.mrb[0].mxu0 %v912
  %v3122 = vpop.f32.mrb[0].mxu0
  %v3123 = vadd.f32 0.0, %v3122
  %v3124 = vpop.f32.mrb[0].mxu0
  %v3125 = vpop.f32.mrb[0].mxu0
  %v3126 = vadd.f32 0.0, %v3125
  %v3127 = vpop.f32.mrb[0].mxu0
  %3128 = vmatprep.mubr.bf16.mxu0 0
  %3129 = vmatmul.mubr.bf16.gmra.mrb[0].mxu0 %v915
  %v3130 = vpop.f32.mrb[0].mxu0
  %v3131 = vadd.f32 0.0, %v3130
  %v3132 = vpop.f32.mrb[0].mxu0
  %v3133 = vpop.f32.mrb[0].mxu0
  %v3134 = vadd.f32 0.0, %v3133
  %v3135 = vpop.f32.mrb[0].mxu0
  %3136 = vmatprep.mubr.bf16.mxu0 0
  %3137 = vmatmul.mubr.bf16.gmra.mrb[0].mxu0 %v918
  %v3138 = vpop.f32.mrb[0].mxu0
  %v3139 = vadd.f32 0.0, %v3138
  %v3140 = vpop.f32.mrb[0].mxu0
  %v3141 = vpop.f32.mrb[0].mxu0
  %v3142 = vpop.f32.mrb[0].mxu0
  %3143 = vdwg.mxu0
  %3144 = vmatprep.subr.bf16.mxu0 0
  %3145 = vmatpush1.bf16.msra.mxu0 %v2477
  %3146 = vmatprep.subr.bf16.mxu0 0
  %3147 = vmatpush1.bf16.msra.mxu0 0
  %3148 = vmatprep.subr.bf16.mxu0 0
  %3149 = vmatpush1.bf16.msra.mxu0 0
  %3150 = vmatprep.subr.bf16.mxu0 0
  %3151 = vmatpush1.bf16.msra.mxu0 0
  %3152 = vmatprep.subr.bf16.mxu0 0
  %3153 = vmatpush1.bf16.msra.mxu0 0
  %3154 = vmatprep.subr.bf16.mxu0 0
  %3155 = vmatpush1.bf16.msra.mxu0 0
  %3156 = vmatprep.subr.bf16.mxu0 0
  %3157 = vmatpush1.bf16.msra.mxu0 0
  %3158 = vmatprep.subr.bf16.mxu0 0
  %3159 = vmatpush1.bf16.msra.mxu0 0
  %3160 = vmatprep.subr.bf16.mxu0 0
  %3161 = vmatpush1.bf16.msra.mxu0 0
  %3162 = vmatprep.subr.bf16.mxu0 0
  %3163 = vmatpush1.bf16.msra.mxu0 0
  %3164 = vmatprep.subr.bf16.mxu0 0
  %3165 = vmatpush1.bf16.msra.mxu0 0
  %3166 = vmatprep.subr.bf16.mxu0 0
  %3167 = vmatpush1.bf16.msra.mxu0 0
  %3168 = vmatprep.subr.bf16.mxu0 0
  %3169 = vmatpush1.bf16.msra.mxu0 0
  %3170 = vmatprep.subr.bf16.mxu0 0
  %3171 = vmatpush1.bf16.msra.mxu0 0
  %3172 = vmatprep.subr.bf16.mxu0 0
  %3173 = vmatpush1.bf16.msra.mxu0 0
  %3174 = vmatprep.subr.bf16.mxu0 0
  %3175 = vmatpush1.bf16.msra.mxu0 0
  %3176 = vmatprep.mubr.bf16.mxu0 0
  %3177 = vmatmul.mubr.bf16.gmra.mrb[0].mxu0 %v909
  %v3178 = vpop.f32.mrb[0].mxu0
  %v3179 = vadd.f32 0.0, %v3178
  %v3180 = vpop.f32.mrb[0].mxu0
  %v3181 = vpop.f32.mrb[0].mxu0
  %v3182 = vadd.f32 0.0, %v3181
  %v3183 = vpop.f32.mrb[0].mxu0
  %3184 = vmatprep.mubr.bf16.mxu0 0
  %3185 = vmatmul.mubr.bf16.gmra.mrb[0].mxu0 %v912
  %v3186 = vpop.f32.mrb[0].mxu0
  %v3187 = vadd.f32 0.0, %v3186
  %v3188 = vpop.f32.mrb[0].mxu0
  %v3189 = vpop.f32.mrb[0].mxu0
  %v3190 = vadd.f32 0.0, %v3189
  %v3191 = vpop.f32.mrb[0].mxu0
  %3192 = vmatprep.mubr.bf16.mxu0 0
  %3193 = vmatmul.mubr.bf16.gmra.mrb[0].mxu0 %v915
  %v3194 = vpop.f32.mrb[0].mxu0
  %v3195 = vadd.f32 0.0, %v3194
  %v3196 = vpop.f32.mrb[0].mxu0
  %v3197 = vpop.f32.mrb[0].mxu0
  %v3198 = vadd.f32 0.0, %v3197
  %v3199 = vpop.f32.mrb[0].mxu0
  %3200 = vmatprep.mubr.bf16.mxu0 0
  %3201 = vmatmul.mubr.bf16.gmra.mrb[0].mxu0 %v918
  %v3202 = vpop.f32.mrb[0].mxu0
  %v3203 = vadd.f32 0.0, %v3202
  %v3204 = vpop.f32.mrb[0].mxu0
  %v3205 = vpop.f32.mrb[0].mxu0
  %v3206 = vpop.f32.mrb[0].mxu0
  %3207 = vdwg.mxu0
  %3208 = vmatprep.subr.bf16.mxu0 0
  %3209 = vmatpush1.bf16.msra.mxu0 %v2547
  %3210 = vmatprep.subr.bf16.mxu0 0
  %3211 = vmatpush1.bf16.msra.mxu0 0
  %3212 = vmatprep.subr.bf16.mxu0 0
  %3213 = vmatpush1.bf16.msra.mxu0 0
  %3214 = vmatprep.subr.bf16.mxu0 0
  %3215 = vmatpush1.bf16.msra.mxu0 0
  %3216 = vmatprep.subr.bf16.mxu0 0
  %3217 = vmatpush1.bf16.msra.mxu0 0
  %3218 = vmatprep.subr.bf16.mxu0 0
  %3219 = vmatpush1.bf16.msra.mxu0 0
  %3220 = vmatprep.subr.bf16.mxu0 0
  %3221 = vmatpush1.bf16.msra.mxu0 0
  %3222 = vmatprep.subr.bf16.mxu0 0
  %3223 = vmatpush1.bf16.msra.mxu0 0
  %3224 = vmatprep.subr.bf16.mxu0 0
  %3225 = vmatpush1.bf16.msra.mxu0 0
  %3226 = vmatprep.subr.bf16.mxu0 0
  %3227 = vmatpush1.bf16.msra.mxu0 0
  %3228 = vmatprep.subr.bf16.mxu0 0
  %3229 = vmatpush1.bf16.msra.mxu0 0
  %3230 = vmatprep.subr.bf16.mxu0 0
  %3231 = vmatpush1.bf16.msra.mxu0 0
  %3232 = vmatprep.subr.bf16.mxu0 0
  %3233 = vmatpush1.bf16.msra.mxu0 0
  %3234 = vmatprep.subr.bf16.mxu0 0
  %3235 = vmatpush1.bf16.msra.mxu0 0
  %3236 = vmatprep.subr.bf16.mxu0 0
  %3237 = vmatpush1.bf16.msra.mxu0 0
  %3238 = vmatprep.subr.bf16.mxu0 0
  %3239 = vmatpush1.bf16.msra.mxu0 0
  %3240 = vmatprep.mubr.bf16.mxu0 0
  %3241 = vmatmul.mubr.bf16.gmra.mrb[0].mxu0 %v909
  %v3242 = vpop.f32.mrb[0].mxu0
  %v3243 = vadd.f32 0.0, %v3242
  %v3244 = vpop.f32.mrb[0].mxu0
  %v3245 = vpop.f32.mrb[0].mxu0
  %v3246 = vadd.f32 0.0, %v3245
  %v3247 = vpop.f32.mrb[0].mxu0
  %3248 = vmatprep.mubr.bf16.mxu0 0
  %3249 = vmatmul.mubr.bf16.gmra.mrb[0].mxu0 %v912
  %v3250 = vpop.f32.mrb[0].mxu0
  %v3251 = vadd.f32 0.0, %v3250
  %v3252 = vpop.f32.mrb[0].mxu0
  %v3253 = vpop.f32.mrb[0].mxu0
  %v3254 = vadd.f32 0.0, %v3253
  %v3255 = vpop.f32.mrb[0].mxu0
  %3256 = vmatprep.mubr.bf16.mxu0 0
  %3257 = vmatmul.mubr.bf16.gmra.mrb[0].mxu0 %v915
  %v3258 = vpop.f32.mrb[0].mxu0
  %v3259 = vadd.f32 0.0, %v3258
  %v3260 = vpop.f32.mrb[0].mxu0
  %v3261 = vpop.f32.mrb[0].mxu0
  %v3262 = vadd.f32 0.0, %v3261
  %v3263 = vpop.f32.mrb[0].mxu0
  %3264 = vmatprep.mubr.bf16.mxu0 0
  %3265 = vmatmul.mubr.bf16.gmra.mrb[0].mxu0 %v918
  %v3266 = vpop.f32.mrb[0].mxu0
  %v3267 = vadd.f32 0.0, %v3266
  %v3268 = vpop.f32.mrb[0].mxu0
  %v3269 = vpop.f32.mrb[0].mxu0
  %v3270 = vpop.f32.mrb[0].mxu0
  %3271 = vdwg.mxu0
  %3272 = vmatprep.subr.bf16.mxu0 0
  %3273 = vmatpush1.bf16.msra.mxu0 %v922
  %3274 = vmatprep.subr.bf16.mxu0 0
  %3275 = vmatpush1.bf16.msra.mxu0 0
  %3276 = vmatprep.subr.bf16.mxu0 0
  %3277 = vmatpush1.bf16.msra.mxu0 0
  %3278 = vmatprep.subr.bf16.mxu0 0
  %3279 = vmatpush1.bf16.msra.mxu0 0
  %3280 = vmatprep.subr.bf16.mxu0 0
  %3281 = vmatpush1.bf16.msra.mxu0 0
  %3282 = vmatprep.subr.bf16.mxu0 0
  %3283 = vmatpush1.bf16.msra.mxu0 0
  %3284 = vmatprep.subr.bf16.mxu0 0
  %3285 = vmatpush1.bf16.msra.mxu0 0
  %3286 = vmatprep.subr.bf16.mxu0 0
  %3287 = vmatpush1.bf16.msra.mxu0 0
  %3288 = vmatprep.subr.bf16.mxu0 0
  %3289 = vmatpush1.bf16.msra.mxu0 0
  %3290 = vmatprep.subr.bf16.mxu0 0
  %3291 = vmatpush1.bf16.msra.mxu0 0
  %3292 = vmatprep.subr.bf16.mxu0 0
  %3293 = vmatpush1.bf16.msra.mxu0 0
  %3294 = vmatprep.subr.bf16.mxu0 0
  %3295 = vmatpush1.bf16.msra.mxu0 0
  %3296 = vmatprep.subr.bf16.mxu0 0
  %3297 = vmatpush1.bf16.msra.mxu0 0
  %3298 = vmatprep.subr.bf16.mxu0 0
  %3299 = vmatpush1.bf16.msra.mxu0 0
  %3300 = vmatprep.subr.bf16.mxu0 0
  %3301 = vmatpush1.bf16.msra.mxu0 0
  %3302 = vmatprep.subr.bf16.mxu0 0
  %3303 = vmatpush1.bf16.msra.mxu0 0
  %3304 = vmatprep.mubr.bf16.mxu0 0
  %3305 = vmatmul.mubr.bf16.gmra.mrb[0].mxu0 %v1476
  %v3306 = vpop.f32.mrb[0].mxu0
  %v3307 = vadd.f32 %v2795, %v3306
  %v3308 = vpop.f32.mrb[0].mxu0
  %v3309 = vpop.f32.mrb[0].mxu0
  %v3310 = vadd.f32 %v2798, %v3309
  %v3311 = vpop.f32.mrb[0].mxu0
  %3312 = vmatprep.mubr.bf16.mxu0 0
  %3313 = vmatmul.mubr.bf16.gmra.mrb[0].mxu0 %v1479
  %v3314 = vpop.f32.mrb[0].mxu0
  %v3315 = vadd.f32 %v2803, %v3314
  %v3316 = vpop.f32.mrb[0].mxu0
  %v3317 = vpop.f32.mrb[0].mxu0
  %v3318 = vadd.f32 %v2806, %v3317
  %v3319 = vpop.f32.mrb[0].mxu0
  %3320 = vmatprep.mubr.bf16.mxu0 0
  %3321 = vmatmul.mubr.bf16.gmra.mrb[0].mxu0 %v1482
  %v3322 = vpop.f32.mrb[0].mxu0
  %v3323 = vadd.f32 %v2811, %v3322
  %v3324 = vpop.f32.mrb[0].mxu0
  %v3325 = vpop.f32.mrb[0].mxu0
  %v3326 = vadd.f32 %v2814, %v3325
  %v3327 = vpop.f32.mrb[0].mxu0
  %3328 = vmatprep.mubr.bf16.mxu0 0
  %3329 = vmatmul.mubr.bf16.gmra.mrb[0].mxu0 %v1485
  %v3330 = vpop.f32.mrb[0].mxu0
  %v3331 = vadd.f32 %v2819, %v3330
  %v3332 = vpop.f32.mrb[0].mxu0
  %v3333 = vpop.f32.mrb[0].mxu0
  %v3334 = vpop.f32.mrb[0].mxu0
  %3335 = vdwg.mxu0
  %3336 = vmatprep.subr.bf16.mxu0 0
  %3337 = vmatpush1.bf16.msra.mxu0 %v989
  %3338 = vmatprep.subr.bf16.mxu0 0
  %3339 = vmatpush1.bf16.msra.mxu0 0
  %3340 = vmatprep.subr.bf16.mxu0 0
  %3341 = vmatpush1.bf16.msra.mxu0 0
  %3342 = vmatprep.subr.bf16.mxu0 0
  %3343 = vmatpush1.bf16.msra.mxu0 0
  %3344 = vmatprep.subr.bf16.mxu0 0
  %3345 = vmatpush1.bf16.msra.mxu0 0
  %3346 = vmatprep.subr.bf16.mxu0 0
  %3347 = vmatpush1.bf16.msra.mxu0 0
  %3348 = vmatprep.subr.bf16.mxu0 0
  %3349 = vmatpush1.bf16.msra.mxu0 0
  %3350 = vmatprep.subr.bf16.mxu0 0
  %3351 = vmatpush1.bf16.msra.mxu0 0
  %3352 = vmatprep.subr.bf16.mxu0 0
  %3353 = vmatpush1.bf16.msra.mxu0 0
  %3354 = vmatprep.subr.bf16.mxu0 0
  %3355 = vmatpush1.bf16.msra.mxu0 0
  %3356 = vmatprep.subr.bf16.mxu0 0
  %3357 = vmatpush1.bf16.msra.mxu0 0
  %3358 = vmatprep.subr.bf16.mxu0 0
  %3359 = vmatpush1.bf16.msra.mxu0 0
  %3360 = vmatprep.subr.bf16.mxu0 0
  %3361 = vmatpush1.bf16.msra.mxu0 0
  %3362 = vmatprep.subr.bf16.mxu0 0
  %3363 = vmatpush1.bf16.msra.mxu0 0
  %3364 = vmatprep.subr.bf16.mxu0 0
  %3365 = vmatpush1.bf16.msra.mxu0 0
  %3366 = vmatprep.subr.bf16.mxu0 0
  %3367 = vmatpush1.bf16.msra.mxu0 0
  %3368 = vmatprep.mubr.bf16.mxu0 0
  %3369 = vmatmul.mubr.bf16.gmra.mrb[0].mxu0 %v1476
  %v3370 = vpop.f32.mrb[0].mxu0
  %v3371 = vadd.f32 %v2859, %v3370
  %v3372 = vpop.f32.mrb[0].mxu0
  %v3373 = vpop.f32.mrb[0].mxu0
  %v3374 = vadd.f32 %v2862, %v3373
  %v3375 = vpop.f32.mrb[0].mxu0
  %3376 = vmatprep.mubr.bf16.mxu0 0
  %3377 = vmatmul.mubr.bf16.gmra.mrb[0].mxu0 %v1479
  %v3378 = vpop.f32.mrb[0].mxu0
  %v3379 = vadd.f32 %v2867, %v3378
  %v3380 = vpop.f32.mrb[0].mxu0
  %v3381 = vpop.f32.mrb[0].mxu0
  %v3382 = vadd.f32 %v2870, %v3381
  %v3383 = vpop.f32.mrb[0].mxu0
  %3384 = vmatprep.mubr.bf16.mxu0 0
  %3385 = vmatmul.mubr.bf16.gmra.mrb[0].mxu0 %v1482
  %v3386 = vpop.f32.mrb[0].mxu0
  %v3387 = vadd.f32 %v2875, %v3386
  %v3388 = vpop.f32.mrb[0].mxu0
  %v3389 = vpop.f32.mrb[0].mxu0
  %v3390 = vadd.f32 %v2878, %v3389
  %v3391 = vpop.f32.mrb[0].mxu0
  %3392 = vmatprep.mubr.bf16.mxu0 0
  %3393 = vmatmul.mubr.bf16.gmra.mrb[0].mxu0 %v1485
  %v3394 = vpop.f32.mrb[0].mxu0
  %v3395 = vadd.f32 %v2883, %v3394
  %v3396 = vpop.f32.mrb[0].mxu0
  %v3397 = vpop.f32.mrb[0].mxu0
  %v3398 = vpop.f32.mrb[0].mxu0
  %3399 = vdwg.mxu0
  %3400 = vmatprep.subr.bf16.mxu0 0
  %3401 = vmatpush1.bf16.msra.mxu0 %v1056
  %3402 = vmatprep.subr.bf16.mxu0 0
  %3403 = vmatpush1.bf16.msra.mxu0 0
  %3404 = vmatprep.subr.bf16.mxu0 0
  %3405 = vmatpush1.bf16.msra.mxu0 0
  %3406 = vmatprep.subr.bf16.mxu0 0
  %3407 = vmatpush1.bf16.msra.mxu0 0
  %3408 = vmatprep.subr.bf16.mxu0 0
  %3409 = vmatpush1.bf16.msra.mxu0 0
  %3410 = vmatprep.subr.bf16.mxu0 0
  %3411 = vmatpush1.bf16.msra.mxu0 0
  %3412 = vmatprep.subr.bf16.mxu0 0
  %3413 = vmatpush1.bf16.msra.mxu0 0
  %3414 = vmatprep.subr.bf16.mxu0 0
  %3415 = vmatpush1.bf16.msra.mxu0 0
  %3416 = vmatprep.subr.bf16.mxu0 0
  %3417 = vmatpush1.bf16.msra.mxu0 0
  %3418 = vmatprep.subr.bf16.mxu0 0
  %3419 = vmatpush1.bf16.msra.mxu0 0
  %3420 = vmatprep.subr.bf16.mxu0 0
  %3421 = vmatpush1.bf16.msra.mxu0 0
  %3422 = vmatprep.subr.bf16.mxu0 0
  %3423 = vmatpush1.bf16.msra.mxu0 0
  %3424 = vmatprep.subr.bf16.mxu0 0
  %3425 = vmatpush1.bf16.msra.mxu0 0
  %3426 = vmatprep.subr.bf16.mxu0 0
  %3427 = vmatpush1.bf16.msra.mxu0 0
  %3428 = vmatprep.subr.bf16.mxu0 0
  %3429 = vmatpush1.bf16.msra.mxu0 0
  %3430 = vmatprep.subr.bf16.mxu0 0
  %3431 = vmatpush1.bf16.msra.mxu0 0
  %3432 = vmatprep.mubr.bf16.mxu0 0
  %3433 = vmatmul.mubr.bf16.gmra.mrb[0].mxu0 %v1476
  %v3434 = vpop.f32.mrb[0].mxu0
  %v3435 = vadd.f32 %v2923, %v3434
  %v3436 = vpop.f32.mrb[0].mxu0
  %v3437 = vpop.f32.mrb[0].mxu0
  %v3438 = vadd.f32 %v2926, %v3437
  %v3439 = vpop.f32.mrb[0].mxu0
  %3440 = vmatprep.mubr.bf16.mxu0 0
  %3441 = vmatmul.mubr.bf16.gmra.mrb[0].mxu0 %v1479
  %v3442 = vpop.f32.mrb[0].mxu0
  %v3443 = vadd.f32 %v2931, %v3442
  %v3444 = vpop.f32.mrb[0].mxu0
  %v3445 = vpop.f32.mrb[0].mxu0
  %v3446 = vadd.f32 %v2934, %v3445
  %v3447 = vpop.f32.mrb[0].mxu0
  %3448 = vmatprep.mubr.bf16.mxu0 0
  %3449 = vmatmul.mubr.bf16.gmra.mrb[0].mxu0 %v1482
  %v3450 = vpop.f32.mrb[0].mxu0
  %v3451 = vadd.f32 %v2939, %v3450
  %v3452 = vpop.f32.mrb[0].mxu0
  %v3453 = vpop.f32.mrb[0].mxu0
  %v3454 = vadd.f32 %v2942, %v3453
  %v3455 = vpop.f32.mrb[0].mxu0
  %3456 = vmatprep.mubr.bf16.mxu0 0
  %3457 = vmatmul.mubr.bf16.gmra.mrb[0].mxu0 %v1485
  %v3458 = vpop.f32.mrb[0].mxu0
  %v3459 = vadd.f32 %v2947, %v3458
  %v3460 = vpop.f32.mrb[0].mxu0
  %v3461 = vpop.f32.mrb[0].mxu0
  %v3462 = vpop.f32.mrb[0].mxu0
  %3463 = vdwg.mxu0
  %3464 = vmatprep.subr.bf16.mxu0 0
  %3465 = vmatpush1.bf16.msra.mxu0 %v1123
  %3466 = vmatprep.subr.bf16.mxu0 0
  %3467 = vmatpush1.bf16.msra.mxu0 0
  %3468 = vmatprep.subr.bf16.mxu0 0
  %3469 = vmatpush1.bf16.msra.mxu0 0
  %3470 = vmatprep.subr.bf16.mxu0 0
  %3471 = vmatpush1.bf16.msra.mxu0 0
  %3472 = vmatprep.subr.bf16.mxu0 0
  %3473 = vmatpush1.bf16.msra.mxu0 0
  %3474 = vmatprep.subr.bf16.mxu0 0
  %3475 = vmatpush1.bf16.msra.mxu0 0
  %3476 = vmatprep.subr.bf16.mxu0 0
  %3477 = vmatpush1.bf16.msra.mxu0 0
  %3478 = vmatprep.subr.bf16.mxu0 0
  %3479 = vmatpush1.bf16.msra.mxu0 0
  %3480 = vmatprep.subr.bf16.mxu0 0
  %3481 = vmatpush1.bf16.msra.mxu0 0
  %3482 = vmatprep.subr.bf16.mxu0 0
  %3483 = vmatpush1.bf16.msra.mxu0 0
  %3484 = vmatprep.subr.bf16.mxu0 0
  %3485 = vmatpush1.bf16.msra.mxu0 0
  %3486 = vmatprep.subr.bf16.mxu0 0
  %3487 = vmatpush1.bf16.msra.mxu0 0
  %3488 = vmatprep.subr.bf16.mxu0 0
  %3489 = vmatpush1.bf16.msra.mxu0 0
  %3490 = vmatprep.subr.bf16.mxu0 0
  %3491 = vmatpush1.bf16.msra.mxu0 0
  %3492 = vmatprep.subr.bf16.mxu0 0
  %3493 = vmatpush1.bf16.msra.mxu0 0
  %3494 = vmatprep.subr.bf16.mxu0 0
  %3495 = vmatpush1.bf16.msra.mxu0 0
  %3496 = vmatprep.mubr.bf16.mxu0 0
  %3497 = vmatmul.mubr.bf16.gmra.mrb[0].mxu0 %v1476
  %v3498 = vpop.f32.mrb[0].mxu0
  %v3499 = vadd.f32 %v2987, %v3498
  %v3500 = vpop.f32.mrb[0].mxu0
  %v3501 = vpop.f32.mrb[0].mxu0
  %v3502 = vadd.f32 %v2990, %v3501
  %v3503 = vpop.f32.mrb[0].mxu0
  %3504 = vmatprep.mubr.bf16.mxu0 0
  %3505 = vmatmul.mubr.bf16.gmra.mrb[0].mxu0 %v1479
  %v3506 = vpop.f32.mrb[0].mxu0
  %v3507 = vadd.f32 %v2995, %v3506
  %v3508 = vpop.f32.mrb[0].mxu0
  %v3509 = vpop.f32.mrb[0].mxu0
  %v3510 = vadd.f32 %v2998, %v3509
  %v3511 = vpop.f32.mrb[0].mxu0
  %3512 = vmatprep.mubr.bf16.mxu0 0
  %3513 = vmatmul.mubr.bf16.gmra.mrb[0].mxu0 %v1482
  %v3514 = vpop.f32.mrb[0].mxu0
  %v3515 = vadd.f32 %v3003, %v3514
  %v3516 = vpop.f32.mrb[0].mxu0
  %v3517 = vpop.f32.mrb[0].mxu0
  %v3518 = vadd.f32 %v3006, %v3517
  %v3519 = vpop.f32.mrb[0].mxu0
  %3520 = vmatprep.mubr.bf16.mxu0 0
  %3521 = vmatmul.mubr.bf16.gmra.mrb[0].mxu0 %v1485
  %v3522 = vpop.f32.mrb[0].mxu0
  %v3523 = vadd.f32 %v3011, %v3522
  %v3524 = vpop.f32.mrb[0].mxu0
  %v3525 = vpop.f32.mrb[0].mxu0
  %v3526 = vpop.f32.mrb[0].mxu0
  %3527 = vdwg.mxu0
  %3528 = vmatprep.subr.bf16.mxu0 0
  %3529 = vmatpush1.bf16.msra.mxu0 %v1190
  %3530 = vmatprep.subr.bf16.mxu0 0
  %3531 = vmatpush1.bf16.msra.mxu0 0
  %3532 = vmatprep.subr.bf16.mxu0 0
  %3533 = vmatpush1.bf16.msra.mxu0 0
  %3534 = vmatprep.subr.bf16.mxu0 0
  %3535 = vmatpush1.bf16.msra.mxu0 0
  %3536 = vmatprep.subr.bf16.mxu0 0
  %3537 = vmatpush1.bf16.msra.mxu0 0
  %3538 = vmatprep.subr.bf16.mxu0 0
  %3539 = vmatpush1.bf16.msra.mxu0 0
  %3540 = vmatprep.subr.bf16.mxu0 0
  %3541 = vmatpush1.bf16.msra.mxu0 0
  %3542 = vmatprep.subr.bf16.mxu0 0
  %3543 = vmatpush1.bf16.msra.mxu0 0
  %3544 = vmatprep.subr.bf16.mxu0 0
  %3545 = vmatpush1.bf16.msra.mxu0 0
  %3546 = vmatprep.subr.bf16.mxu0 0
  %3547 = vmatpush1.bf16.msra.mxu0 0
  %3548 = vmatprep.subr.bf16.mxu0 0
  %3549 = vmatpush1.bf16.msra.mxu0 0
  %3550 = vmatprep.subr.bf16.mxu0 0
  %3551 = vmatpush1.bf16.msra.mxu0 0
  %3552 = vmatprep.subr.bf16.mxu0 0
  %3553 = vmatpush1.bf16.msra.mxu0 0
  %3554 = vmatprep.subr.bf16.mxu0 0
  %3555 = vmatpush1.bf16.msra.mxu0 0
  %3556 = vmatprep.subr.bf16.mxu0 0
  %3557 = vmatpush1.bf16.msra.mxu0 0
  %3558 = vmatprep.subr.bf16.mxu0 0
  %3559 = vmatpush1.bf16.msra.mxu0 0
  %3560 = vmatprep.mubr.bf16.mxu0 0
  %3561 = vmatmul.mubr.bf16.gmra.mrb[0].mxu0 %v1476
  %v3562 = vpop.f32.mrb[0].mxu0
  %v3563 = vadd.f32 %v3051, %v3562
  %v3564 = vpop.f32.mrb[0].mxu0
  %v3565 = vpop.f32.mrb[0].mxu0
  %v3566 = vadd.f32 %v3054, %v3565
  %v3567 = vpop.f32.mrb[0].mxu0
  %3568 = vmatprep.mubr.bf16.mxu0 0
  %3569 = vmatmul.mubr.bf16.gmra.mrb[0].mxu0 %v1479
  %v3570 = vpop.f32.mrb[0].mxu0
  %v3571 = vadd.f32 %v3059, %v3570
  %v3572 = vpop.f32.mrb[0].mxu0
  %v3573 = vpop.f32.mrb[0].mxu0
  %v3574 = vadd.f32 %v3062, %v3573
  %v3575 = vpop.f32.mrb[0].mxu0
  %3576 = vmatprep.mubr.bf16.mxu0 0
  %3577 = vmatmul.mubr.bf16.gmra.mrb[0].mxu0 %v1482
  %v3578 = vpop.f32.mrb[0].mxu0
  %v3579 = vadd.f32 %v3067, %v3578
  %v3580 = vpop.f32.mrb[0].mxu0
  %v3581 = vpop.f32.mrb[0].mxu0
  %v3582 = vadd.f32 %v3070, %v3581
  %v3583 = vpop.f32.mrb[0].mxu0
  %3584 = vmatprep.mubr.bf16.mxu0 0
  %3585 = vmatmul.mubr.bf16.gmra.mrb[0].mxu0 %v1485
  %v3586 = vpop.f32.mrb[0].mxu0
  %v3587 = vadd.f32 %v3075, %v3586
  %v3588 = vpop.f32.mrb[0].mxu0
  %v3589 = vpop.f32.mrb[0].mxu0
  %v3590 = vpop.f32.mrb[0].mxu0
  %3591 = vdwg.mxu0
  %3592 = vmatprep.subr.bf16.mxu0 0
  %3593 = vmatpush1.bf16.msra.mxu0 %v1257
  %3594 = vmatprep.subr.bf16.mxu0 0
  %3595 = vmatpush1.bf16.msra.mxu0 0
  %3596 = vmatprep.subr.bf16.mxu0 0
  %3597 = vmatpush1.bf16.msra.mxu0 0
  %3598 = vmatprep.subr.bf16.mxu0 0
  %3599 = vmatpush1.bf16.msra.mxu0 0
  %3600 = vmatprep.subr.bf16.mxu0 0
  %3601 = vmatpush1.bf16.msra.mxu0 0
  %3602 = vmatprep.subr.bf16.mxu0 0
  %3603 = vmatpush1.bf16.msra.mxu0 0
  %3604 = vmatprep.subr.bf16.mxu0 0
  %3605 = vmatpush1.bf16.msra.mxu0 0
  %3606 = vmatprep.subr.bf16.mxu0 0
  %3607 = vmatpush1.bf16.msra.mxu0 0
  %3608 = vmatprep.subr.bf16.mxu0 0
  %3609 = vmatpush1.bf16.msra.mxu0 0
  %3610 = vmatprep.subr.bf16.mxu0 0
  %3611 = vmatpush1.bf16.msra.mxu0 0
  %3612 = vmatprep.subr.bf16.mxu0 0
  %3613 = vmatpush1.bf16.msra.mxu0 0
  %3614 = vmatprep.subr.bf16.mxu0 0
  %3615 = vmatpush1.bf16.msra.mxu0 0
  %3616 = vmatprep.subr.bf16.mxu0 0
  %3617 = vmatpush1.bf16.msra.mxu0 0
  %3618 = vmatprep.subr.bf16.mxu0 0
  %3619 = vmatpush1.bf16.msra.mxu0 0
  %3620 = vmatprep.subr.bf16.mxu0 0
  %3621 = vmatpush1.bf16.msra.mxu0 0
  %3622 = vmatprep.subr.bf16.mxu0 0
  %3623 = vmatpush1.bf16.msra.mxu0 0
  %3624 = vmatprep.mubr.bf16.mxu0 0
  %3625 = vmatmul.mubr.bf16.gmra.mrb[0].mxu0 %v1476
  %v3626 = vpop.f32.mrb[0].mxu0
  %v3627 = vadd.f32 %v3115, %v3626
  %v3628 = vpop.f32.mrb[0].mxu0
  %v3629 = vpop.f32.mrb[0].mxu0
  %v3630 = vadd.f32 %v3118, %v3629
  %v3631 = vpop.f32.mrb[0].mxu0
  %3632 = vmatprep.mubr.bf16.mxu0 0
  %3633 = vmatmul.mubr.bf16.gmra.mrb[0].mxu0 %v1479
  %v3634 = vpop.f32.mrb[0].mxu0
  %v3635 = vadd.f32 %v3123, %v3634
  %v3636 = vpop.f32.mrb[0].mxu0
  %v3637 = vpop.f32.mrb[0].mxu0
  %v3638 = vadd.f32 %v3126, %v3637
  %v3639 = vpop.f32.mrb[0].mxu0
  %3640 = vmatprep.mubr.bf16.mxu0 0
  %3641 = vmatmul.mubr.bf16.gmra.mrb[0].mxu0 %v1482
  %v3642 = vpop.f32.mrb[0].mxu0
  %v3643 = vadd.f32 %v3131, %v3642
  %v3644 = vpop.f32.mrb[0].mxu0
  %v3645 = vpop.f32.mrb[0].mxu0
  %v3646 = vadd.f32 %v3134, %v3645
  %v3647 = vpop.f32.mrb[0].mxu0
  %3648 = vmatprep.mubr.bf16.mxu0 0
  %3649 = vmatmul.mubr.bf16.gmra.mrb[0].mxu0 %v1485
  %v3650 = vpop.f32.mrb[0].mxu0
  %v3651 = vadd.f32 %v3139, %v3650
  %v3652 = vpop.f32.mrb[0].mxu0
  %v3653 = vpop.f32.mrb[0].mxu0
  %v3654 = vpop.f32.mrb[0].mxu0
  %3655 = vdwg.mxu0
  %3656 = vmatprep.subr.bf16.mxu0 0
  %3657 = vmatpush1.bf16.msra.mxu0 %v1324
  %3658 = vmatprep.subr.bf16.mxu0 0
  %3659 = vmatpush1.bf16.msra.mxu0 0
  %3660 = vmatprep.subr.bf16.mxu0 0
  %3661 = vmatpush1.bf16.msra.mxu0 0
  %3662 = vmatprep.subr.bf16.mxu0 0
  %3663 = vmatpush1.bf16.msra.mxu0 0
  %3664 = vmatprep.subr.bf16.mxu0 0
  %3665 = vmatpush1.bf16.msra.mxu0 0
  %3666 = vmatprep.subr.bf16.mxu0 0
  %3667 = vmatpush1.bf16.msra.mxu0 0
  %3668 = vmatprep.subr.bf16.mxu0 0
  %3669 = vmatpush1.bf16.msra.mxu0 0
  %3670 = vmatprep.subr.bf16.mxu0 0
  %3671 = vmatpush1.bf16.msra.mxu0 0
  %3672 = vmatprep.subr.bf16.mxu0 0
  %3673 = vmatpush1.bf16.msra.mxu0 0
  %3674 = vmatprep.subr.bf16.mxu0 0
  %3675 = vmatpush1.bf16.msra.mxu0 0
  %3676 = vmatprep.subr.bf16.mxu0 0
  %3677 = vmatpush1.bf16.msra.mxu0 0
  %3678 = vmatprep.subr.bf16.mxu0 0
  %3679 = vmatpush1.bf16.msra.mxu0 0
  %3680 = vmatprep.subr.bf16.mxu0 0
  %3681 = vmatpush1.bf16.msra.mxu0 0
  %3682 = vmatprep.subr.bf16.mxu0 0
  %3683 = vmatpush1.bf16.msra.mxu0 0
  %3684 = vmatprep.subr.bf16.mxu0 0
  %3685 = vmatpush1.bf16.msra.mxu0 0
  %3686 = vmatprep.subr.bf16.mxu0 0
  %3687 = vmatpush1.bf16.msra.mxu0 0
  %3688 = vmatprep.mubr.bf16.mxu0 0
  %3689 = vmatmul.mubr.bf16.gmra.mrb[0].mxu0 %v1476
  %v3690 = vpop.f32.mrb[0].mxu0
  %v3691 = vadd.f32 %v3179, %v3690
  %v3692 = vpop.f32.mrb[0].mxu0
  %v3693 = vpop.f32.mrb[0].mxu0
  %v3694 = vadd.f32 %v3182, %v3693
  %v3695 = vpop.f32.mrb[0].mxu0
  %3696 = vmatprep.mubr.bf16.mxu0 0
  %3697 = vmatmul.mubr.bf16.gmra.mrb[0].mxu0 %v1479
  %v3698 = vpop.f32.mrb[0].mxu0
  %v3699 = vadd.f32 %v3187, %v3698
  %v3700 = vpop.f32.mrb[0].mxu0
  %v3701 = vpop.f32.mrb[0].mxu0
  %v3702 = vadd.f32 %v3190, %v3701
  %v3703 = vpop.f32.mrb[0].mxu0
  %3704 = vmatprep.mubr.bf16.mxu0 0
  %3705 = vmatmul.mubr.bf16.gmra.mrb[0].mxu0 %v1482
  %v3706 = vpop.f32.mrb[0].mxu0
  %v3707 = vadd.f32 %v3195, %v3706
  %v3708 = vpop.f32.mrb[0].mxu0
  %v3709 = vpop.f32.mrb[0].mxu0
  %v3710 = vadd.f32 %v3198, %v3709
  %v3711 = vpop.f32.mrb[0].mxu0
  %3712 = vmatprep.mubr.bf16.mxu0 0
  %3713 = vmatmul.mubr.bf16.gmra.mrb[0].mxu0 %v1485
  %v3714 = vpop.f32.mrb[0].mxu0
  %v3715 = vadd.f32 %v3203, %v3714
  %v3716 = vpop.f32.mrb[0].mxu0
  %v3717 = vpop.f32.mrb[0].mxu0
  %v3718 = vpop.f32.mrb[0].mxu0
  %3719 = vdwg.mxu0
  %3720 = vmatprep.subr.bf16.mxu0 0
  %3721 = vmatpush1.bf16.msra.mxu0 %v1391
  %3722 = vmatprep.subr.bf16.mxu0 0
  %3723 = vmatpush1.bf16.msra.mxu0 0
  %3724 = vmatprep.subr.bf16.mxu0 0
  %3725 = vmatpush1.bf16.msra.mxu0 0
  %3726 = vmatprep.subr.bf16.mxu0 0
  %3727 = vmatpush1.bf16.msra.mxu0 0
  %3728 = vmatprep.subr.bf16.mxu0 0
  %3729 = vmatpush1.bf16.msra.mxu0 0
  %3730 = vmatprep.subr.bf16.mxu0 0
  %3731 = vmatpush1.bf16.msra.mxu0 0
  %3732 = vmatprep.subr.bf16.mxu0 0
  %3733 = vmatpush1.bf16.msra.mxu0 0
  %3734 = vmatprep.subr.bf16.mxu0 0
  %3735 = vmatpush1.bf16.msra.mxu0 0
  %3736 = vmatprep.subr.bf16.mxu0 0
  %3737 = vmatpush1.bf16.msra.mxu0 0
  %3738 = vmatprep.subr.bf16.mxu0 0
  %3739 = vmatpush1.bf16.msra.mxu0 0
  %3740 = vmatprep.subr.bf16.mxu0 0
  %3741 = vmatpush1.bf16.msra.mxu0 0
  %3742 = vmatprep.subr.bf16.mxu0 0
  %3743 = vmatpush1.bf16.msra.mxu0 0
  %3744 = vmatprep.subr.bf16.mxu0 0
  %3745 = vmatpush1.bf16.msra.mxu0 0
  %3746 = vmatprep.subr.bf16.mxu0 0
  %3747 = vmatpush1.bf16.msra.mxu0 0
  %3748 = vmatprep.subr.bf16.mxu0 0
  %3749 = vmatpush1.bf16.msra.mxu0 0
  %3750 = vmatprep.subr.bf16.mxu0 0
  %3751 = vmatpush1.bf16.msra.mxu0 0
  %3752 = vmatprep.mubr.bf16.mxu0 0
  %3753 = vmatmul.mubr.bf16.gmra.mrb[0].mxu0 %v1476
  %v3754 = vpop.f32.mrb[0].mxu0
  %v3755 = vadd.f32 %v3243, %v3754
  %v3756 = vpop.f32.mrb[0].mxu0
  %v3757 = vpop.f32.mrb[0].mxu0
  %v3758 = vadd.f32 %v3246, %v3757
  %v3759 = vpop.f32.mrb[0].mxu0
  %3760 = vmatprep.mubr.bf16.mxu0 0
  %3761 = vmatmul.mubr.bf16.gmra.mrb[0].mxu0 %v1479
  %v3762 = vpop.f32.mrb[0].mxu0
  %v3763 = vadd.f32 %v3251, %v3762
  %v3764 = vpop.f32.mrb[0].mxu0
  %v3765 = vpop.f32.mrb[0].mxu0
  %v3766 = vadd.f32 %v3254, %v3765
  %v3767 = vpop.f32.mrb[0].mxu0
  %3768 = vmatprep.mubr.bf16.mxu0 0
  %3769 = vmatmul.mubr.bf16.gmra.mrb[0].mxu0 %v1482
  %v3770 = vpop.f32.mrb[0].mxu0
  %v3771 = vadd.f32 %v3259, %v3770
  %v3772 = vpop.f32.mrb[0].mxu0
  %v3773 = vpop.f32.mrb[0].mxu0
  %v3774 = vadd.f32 %v3262, %v3773
  %v3775 = vpop.f32.mrb[0].mxu0
  %3776 = vmatprep.mubr.bf16.mxu0 0
  %3777 = vmatmul.mubr.bf16.gmra.mrb[0].mxu0 %v1485
  %v3778 = vpop.f32.mrb[0].mxu0
  %v3779 = vadd.f32 %v3267, %v3778
  %v3780 = vpop.f32.mrb[0].mxu0
  %v3781 = vpop.f32.mrb[0].mxu0
  %v3782 = vpop.f32.mrb[0].mxu0
  %3783 = vdwg.mxu0
  %3785 = vrot.lane.b32.xlu0 %v881, 127
  %v3786 = vpop.permute.xlu0 %3785
  %v3788 = vsel %vm920, %v3786, 0
  %3790 = vmatprep.subr.bf16.mxu0 0
  %3791 = vmatpush1.bf16.msra.mxu0 %v3788
  %3792 = vmatprep.subr.bf16.mxu0 0
  %3793 = vmatpush1.bf16.msra.mxu0 0
  %3794 = vmatprep.subr.bf16.mxu0 0
  %3795 = vmatpush1.bf16.msra.mxu0 0
  %3796 = vmatprep.subr.bf16.mxu0 0
  %3797 = vmatpush1.bf16.msra.mxu0 0
  %3798 = vmatprep.subr.bf16.mxu0 0
  %3799 = vmatpush1.bf16.msra.mxu0 0
  %3800 = vmatprep.subr.bf16.mxu0 0
  %3801 = vmatpush1.bf16.msra.mxu0 0
  %3802 = vmatprep.subr.bf16.mxu0 0
  %3803 = vmatpush1.bf16.msra.mxu0 0
  %3804 = vmatprep.subr.bf16.mxu0 0
  %3805 = vmatpush1.bf16.msra.mxu0 0
  %3806 = vmatprep.subr.bf16.mxu0 0
  %3807 = vmatpush1.bf16.msra.mxu0 0
  %3808 = vmatprep.subr.bf16.mxu0 0
  %3809 = vmatpush1.bf16.msra.mxu0 0
  %3810 = vmatprep.subr.bf16.mxu0 0
  %3811 = vmatpush1.bf16.msra.mxu0 0
  %3812 = vmatprep.subr.bf16.mxu0 0
  %3813 = vmatpush1.bf16.msra.mxu0 0
  %3814 = vmatprep.subr.bf16.mxu0 0
  %3815 = vmatpush1.bf16.msra.mxu0 0
  %3816 = vmatprep.subr.bf16.mxu0 0
  %3817 = vmatpush1.bf16.msra.mxu0 0
  %3818 = vmatprep.subr.bf16.mxu0 0
  %3819 = vmatpush1.bf16.msra.mxu0 0
  %3820 = vmatprep.subr.bf16.mxu0 0
  %3821 = vmatpush1.bf16.msra.mxu0 0
  %3822 = vmatprep.mubr.bf16.mxu0 0
  %3823 = vmatmul.mubr.bf16.gmra.mrb[0].mxu0 %v2045
  %v3824 = vpop.f32.mrb[0].mxu0
  %v3825 = vadd.f32 0.0, %v3824
  %v3826 = vpop.f32.mrb[0].mxu0
  %v3827 = vpop.f32.mrb[0].mxu0
  %v3828 = vadd.f32 0.0, %v3827
  %v3829 = vpop.f32.mrb[0].mxu0
  %3830 = vmatprep.mubr.bf16.mxu0 0
  %3831 = vmatmul.mubr.bf16.gmra.mrb[0].mxu0 %v2048
  %v3832 = vpop.f32.mrb[0].mxu0
  %v3833 = vadd.f32 0.0, %v3832
  %v3834 = vpop.f32.mrb[0].mxu0
  %v3835 = vpop.f32.mrb[0].mxu0
  %v3836 = vadd.f32 0.0, %v3835
  %v3837 = vpop.f32.mrb[0].mxu0
  %3838 = vmatprep.mubr.bf16.mxu0 0
  %3839 = vmatmul.mubr.bf16.gmra.mrb[0].mxu0 %v2051
  %v3840 = vpop.f32.mrb[0].mxu0
  %v3841 = vadd.f32 0.0, %v3840
  %v3842 = vpop.f32.mrb[0].mxu0
  %v3843 = vpop.f32.mrb[0].mxu0
  %v3844 = vadd.f32 0.0, %v3843
  %v3845 = vpop.f32.mrb[0].mxu0
  %3846 = vmatprep.mubr.bf16.mxu0 0
  %3847 = vmatmul.mubr.bf16.gmra.mrb[0].mxu0 %v2054
  %v3848 = vpop.f32.mrb[0].mxu0
  %v3849 = vadd.f32 0.0, %v3848
  %v3850 = vpop.f32.mrb[0].mxu0
  %v3851 = vpop.f32.mrb[0].mxu0
  %v3852 = vpop.f32.mrb[0].mxu0
  %3853 = vdwg.mxu0
  %3855 = vrot.lane.b32.xlu0 %v882, 127
  %v3856 = vpop.permute.xlu0 %3855
  %v3858 = vsel %vm920, %v3856, 0
  %3860 = vmatprep.subr.bf16.mxu0 0
  %3861 = vmatpush1.bf16.msra.mxu0 %v3858
  %3862 = vmatprep.subr.bf16.mxu0 0
  %3863 = vmatpush1.bf16.msra.mxu0 0
  %3864 = vmatprep.subr.bf16.mxu0 0
  %3865 = vmatpush1.bf16.msra.mxu0 0
  %3866 = vmatprep.subr.bf16.mxu0 0
  %3867 = vmatpush1.bf16.msra.mxu0 0
  %3868 = vmatprep.subr.bf16.mxu0 0
  %3869 = vmatpush1.bf16.msra.mxu0 0
  %3870 = vmatprep.subr.bf16.mxu0 0
  %3871 = vmatpush1.bf16.msra.mxu0 0
  %3872 = vmatprep.subr.bf16.mxu0 0
  %3873 = vmatpush1.bf16.msra.mxu0 0
  %3874 = vmatprep.subr.bf16.mxu0 0
  %3875 = vmatpush1.bf16.msra.mxu0 0
  %3876 = vmatprep.subr.bf16.mxu0 0
  %3877 = vmatpush1.bf16.msra.mxu0 0
  %3878 = vmatprep.subr.bf16.mxu0 0
  %3879 = vmatpush1.bf16.msra.mxu0 0
  %3880 = vmatprep.subr.bf16.mxu0 0
  %3881 = vmatpush1.bf16.msra.mxu0 0
  %3882 = vmatprep.subr.bf16.mxu0 0
  %3883 = vmatpush1.bf16.msra.mxu0 0
  %3884 = vmatprep.subr.bf16.mxu0 0
  %3885 = vmatpush1.bf16.msra.mxu0 0
  %3886 = vmatprep.subr.bf16.mxu0 0
  %3887 = vmatpush1.bf16.msra.mxu0 0
  %3888 = vmatprep.subr.bf16.mxu0 0
  %3889 = vmatpush1.bf16.msra.mxu0 0
  %3890 = vmatprep.subr.bf16.mxu0 0
  %3891 = vmatpush1.bf16.msra.mxu0 0
  %3892 = vmatprep.mubr.bf16.mxu0 0
  %3893 = vmatmul.mubr.bf16.gmra.mrb[0].mxu0 %v2045
  %v3894 = vpop.f32.mrb[0].mxu0
  %v3895 = vadd.f32 0.0, %v3894
  %v3896 = vpop.f32.mrb[0].mxu0
  %v3897 = vpop.f32.mrb[0].mxu0
  %v3898 = vadd.f32 0.0, %v3897
  %v3899 = vpop.f32.mrb[0].mxu0
  %3900 = vmatprep.mubr.bf16.mxu0 0
  %3901 = vmatmul.mubr.bf16.gmra.mrb[0].mxu0 %v2048
  %v3902 = vpop.f32.mrb[0].mxu0
  %v3903 = vadd.f32 0.0, %v3902
  %v3904 = vpop.f32.mrb[0].mxu0
  %v3905 = vpop.f32.mrb[0].mxu0
  %v3906 = vadd.f32 0.0, %v3905
  %v3907 = vpop.f32.mrb[0].mxu0
  %3908 = vmatprep.mubr.bf16.mxu0 0
  %3909 = vmatmul.mubr.bf16.gmra.mrb[0].mxu0 %v2051
  %v3910 = vpop.f32.mrb[0].mxu0
  %v3911 = vadd.f32 0.0, %v3910
  %v3912 = vpop.f32.mrb[0].mxu0
  %v3913 = vpop.f32.mrb[0].mxu0
  %v3914 = vadd.f32 0.0, %v3913
  %v3915 = vpop.f32.mrb[0].mxu0
  %3916 = vmatprep.mubr.bf16.mxu0 0
  %3917 = vmatmul.mubr.bf16.gmra.mrb[0].mxu0 %v2054
  %v3918 = vpop.f32.mrb[0].mxu0
  %v3919 = vadd.f32 0.0, %v3918
  %v3920 = vpop.f32.mrb[0].mxu0
  %v3921 = vpop.f32.mrb[0].mxu0
  %v3922 = vpop.f32.mrb[0].mxu0
  %3923 = vdwg.mxu0
  %3925 = vrot.lane.b32.xlu0 %v883, 127
  %v3926 = vpop.permute.xlu0 %3925
  %v3928 = vsel %vm920, %v3926, 0
  %3930 = vmatprep.subr.bf16.mxu0 0
  %3931 = vmatpush1.bf16.msra.mxu0 %v3928
  %3932 = vmatprep.subr.bf16.mxu0 0
  %3933 = vmatpush1.bf16.msra.mxu0 0
  %3934 = vmatprep.subr.bf16.mxu0 0
  %3935 = vmatpush1.bf16.msra.mxu0 0
  %3936 = vmatprep.subr.bf16.mxu0 0
  %3937 = vmatpush1.bf16.msra.mxu0 0
  %3938 = vmatprep.subr.bf16.mxu0 0
  %3939 = vmatpush1.bf16.msra.mxu0 0
  %3940 = vmatprep.subr.bf16.mxu0 0
  %3941 = vmatpush1.bf16.msra.mxu0 0
  %3942 = vmatprep.subr.bf16.mxu0 0
  %3943 = vmatpush1.bf16.msra.mxu0 0
  %3944 = vmatprep.subr.bf16.mxu0 0
  %3945 = vmatpush1.bf16.msra.mxu0 0
  %3946 = vmatprep.subr.bf16.mxu0 0
  %3947 = vmatpush1.bf16.msra.mxu0 0
  %3948 = vmatprep.subr.bf16.mxu0 0
  %3949 = vmatpush1.bf16.msra.mxu0 0
  %3950 = vmatprep.subr.bf16.mxu0 0
  %3951 = vmatpush1.bf16.msra.mxu0 0
  %3952 = vmatprep.subr.bf16.mxu0 0
  %3953 = vmatpush1.bf16.msra.mxu0 0
  %3954 = vmatprep.subr.bf16.mxu0 0
  %3955 = vmatpush1.bf16.msra.mxu0 0
  %3956 = vmatprep.subr.bf16.mxu0 0
  %3957 = vmatpush1.bf16.msra.mxu0 0
  %3958 = vmatprep.subr.bf16.mxu0 0
  %3959 = vmatpush1.bf16.msra.mxu0 0
  %3960 = vmatprep.subr.bf16.mxu0 0
  %3961 = vmatpush1.bf16.msra.mxu0 0
  %3962 = vmatprep.mubr.bf16.mxu0 0
  %3963 = vmatmul.mubr.bf16.gmra.mrb[0].mxu0 %v2045
  %v3964 = vpop.f32.mrb[0].mxu0
  %v3965 = vadd.f32 0.0, %v3964
  %v3966 = vpop.f32.mrb[0].mxu0
  %v3967 = vpop.f32.mrb[0].mxu0
  %v3968 = vadd.f32 0.0, %v3967
  %v3969 = vpop.f32.mrb[0].mxu0
  %3970 = vmatprep.mubr.bf16.mxu0 0
  %3971 = vmatmul.mubr.bf16.gmra.mrb[0].mxu0 %v2048
  %v3972 = vpop.f32.mrb[0].mxu0
  %v3973 = vadd.f32 0.0, %v3972
  %v3974 = vpop.f32.mrb[0].mxu0
  %v3975 = vpop.f32.mrb[0].mxu0
  %v3976 = vadd.f32 0.0, %v3975
  %v3977 = vpop.f32.mrb[0].mxu0
  %3978 = vmatprep.mubr.bf16.mxu0 0
  %3979 = vmatmul.mubr.bf16.gmra.mrb[0].mxu0 %v2051
  %v3980 = vpop.f32.mrb[0].mxu0
  %v3981 = vadd.f32 0.0, %v3980
  %v3982 = vpop.f32.mrb[0].mxu0
  %v3983 = vpop.f32.mrb[0].mxu0
  %v3984 = vadd.f32 0.0, %v3983
  %v3985 = vpop.f32.mrb[0].mxu0
  %3986 = vmatprep.mubr.bf16.mxu0 0
  %3987 = vmatmul.mubr.bf16.gmra.mrb[0].mxu0 %v2054
  %v3988 = vpop.f32.mrb[0].mxu0
  %v3989 = vadd.f32 0.0, %v3988
  %v3990 = vpop.f32.mrb[0].mxu0
  %v3991 = vpop.f32.mrb[0].mxu0
  %v3992 = vpop.f32.mrb[0].mxu0
  %3993 = vdwg.mxu0
  %3995 = vrot.lane.b32.xlu0 %v884, 127
  %v3996 = vpop.permute.xlu0 %3995
  %v3998 = vsel %vm920, %v3996, 0
  %4000 = vmatprep.subr.bf16.mxu0 0
  %4001 = vmatpush1.bf16.msra.mxu0 %v3998
  %4002 = vmatprep.subr.bf16.mxu0 0
  %4003 = vmatpush1.bf16.msra.mxu0 0
  %4004 = vmatprep.subr.bf16.mxu0 0
  %4005 = vmatpush1.bf16.msra.mxu0 0
  %4006 = vmatprep.subr.bf16.mxu0 0
  %4007 = vmatpush1.bf16.msra.mxu0 0
  %4008 = vmatprep.subr.bf16.mxu0 0
  %4009 = vmatpush1.bf16.msra.mxu0 0
  %4010 = vmatprep.subr.bf16.mxu0 0
  %4011 = vmatpush1.bf16.msra.mxu0 0
  %4012 = vmatprep.subr.bf16.mxu0 0
  %4013 = vmatpush1.bf16.msra.mxu0 0
  %4014 = vmatprep.subr.bf16.mxu0 0
  %4015 = vmatpush1.bf16.msra.mxu0 0
  %4016 = vmatprep.subr.bf16.mxu0 0
  %4017 = vmatpush1.bf16.msra.mxu0 0
  %4018 = vmatprep.subr.bf16.mxu0 0
  %4019 = vmatpush1.bf16.msra.mxu0 0
  %4020 = vmatprep.subr.bf16.mxu0 0
  %4021 = vmatpush1.bf16.msra.mxu0 0
  %4022 = vmatprep.subr.bf16.mxu0 0
  %4023 = vmatpush1.bf16.msra.mxu0 0
  %4024 = vmatprep.subr.bf16.mxu0 0
  %4025 = vmatpush1.bf16.msra.mxu0 0
  %4026 = vmatprep.subr.bf16.mxu0 0
  %4027 = vmatpush1.bf16.msra.mxu0 0
  %4028 = vmatprep.subr.bf16.mxu0 0
  %4029 = vmatpush1.bf16.msra.mxu0 0
  %4030 = vmatprep.subr.bf16.mxu0 0
  %4031 = vmatpush1.bf16.msra.mxu0 0
  %4032 = vmatprep.mubr.bf16.mxu0 0
  %4033 = vmatmul.mubr.bf16.gmra.mrb[0].mxu0 %v2045
  %v4034 = vpop.f32.mrb[0].mxu0
  %v4035 = vadd.f32 0.0, %v4034
  %v4036 = vpop.f32.mrb[0].mxu0
  %v4037 = vpop.f32.mrb[0].mxu0
  %v4038 = vadd.f32 0.0, %v4037
  %v4039 = vpop.f32.mrb[0].mxu0
  %4040 = vmatprep.mubr.bf16.mxu0 0
  %4041 = vmatmul.mubr.bf16.gmra.mrb[0].mxu0 %v2048
  %v4042 = vpop.f32.mrb[0].mxu0
  %v4043 = vadd.f32 0.0, %v4042
  %v4044 = vpop.f32.mrb[0].mxu0
  %v4045 = vpop.f32.mrb[0].mxu0
  %v4046 = vadd.f32 0.0, %v4045
  %v4047 = vpop.f32.mrb[0].mxu0
  %4048 = vmatprep.mubr.bf16.mxu0 0
  %4049 = vmatmul.mubr.bf16.gmra.mrb[0].mxu0 %v2051
  %v4050 = vpop.f32.mrb[0].mxu0
  %v4051 = vadd.f32 0.0, %v4050
  %v4052 = vpop.f32.mrb[0].mxu0
  %v4053 = vpop.f32.mrb[0].mxu0
  %v4054 = vadd.f32 0.0, %v4053
  %v4055 = vpop.f32.mrb[0].mxu0
  %4056 = vmatprep.mubr.bf16.mxu0 0
  %4057 = vmatmul.mubr.bf16.gmra.mrb[0].mxu0 %v2054
  %v4058 = vpop.f32.mrb[0].mxu0
  %v4059 = vadd.f32 0.0, %v4058
  %v4060 = vpop.f32.mrb[0].mxu0
  %v4061 = vpop.f32.mrb[0].mxu0
  %v4062 = vpop.f32.mrb[0].mxu0
  %4063 = vdwg.mxu0
  %4065 = vrot.lane.b32.xlu0 %v885, 127
  %v4066 = vpop.permute.xlu0 %4065
  %v4068 = vsel %vm920, %v4066, 0
  %4070 = vmatprep.subr.bf16.mxu0 0
  %4071 = vmatpush1.bf16.msra.mxu0 %v4068
  %4072 = vmatprep.subr.bf16.mxu0 0
  %4073 = vmatpush1.bf16.msra.mxu0 0
  %4074 = vmatprep.subr.bf16.mxu0 0
  %4075 = vmatpush1.bf16.msra.mxu0 0
  %4076 = vmatprep.subr.bf16.mxu0 0
  %4077 = vmatpush1.bf16.msra.mxu0 0
  %4078 = vmatprep.subr.bf16.mxu0 0
  %4079 = vmatpush1.bf16.msra.mxu0 0
  %4080 = vmatprep.subr.bf16.mxu0 0
  %4081 = vmatpush1.bf16.msra.mxu0 0
  %4082 = vmatprep.subr.bf16.mxu0 0
  %4083 = vmatpush1.bf16.msra.mxu0 0
  %4084 = vmatprep.subr.bf16.mxu0 0
  %4085 = vmatpush1.bf16.msra.mxu0 0
  %4086 = vmatprep.subr.bf16.mxu0 0
  %4087 = vmatpush1.bf16.msra.mxu0 0
  %4088 = vmatprep.subr.bf16.mxu0 0
  %4089 = vmatpush1.bf16.msra.mxu0 0
  %4090 = vmatprep.subr.bf16.mxu0 0
  %4091 = vmatpush1.bf16.msra.mxu0 0
  %4092 = vmatprep.subr.bf16.mxu0 0
  %4093 = vmatpush1.bf16.msra.mxu0 0
  %4094 = vmatprep.subr.bf16.mxu0 0
  %4095 = vmatpush1.bf16.msra.mxu0 0
  %4096 = vmatprep.subr.bf16.mxu0 0
  %4097 = vmatpush1.bf16.msra.mxu0 0
  %4098 = vmatprep.subr.bf16.mxu0 0
  %4099 = vmatpush1.bf16.msra.mxu0 0
  %4100 = vmatprep.subr.bf16.mxu0 0
  %4101 = vmatpush1.bf16.msra.mxu0 0
  %4102 = vmatprep.mubr.bf16.mxu0 0
  %4103 = vmatmul.mubr.bf16.gmra.mrb[0].mxu0 %v2045
  %v4104 = vpop.f32.mrb[0].mxu0
  %v4105 = vadd.f32 0.0, %v4104
  %v4106 = vpop.f32.mrb[0].mxu0
  %v4107 = vpop.f32.mrb[0].mxu0
  %v4108 = vadd.f32 0.0, %v4107
  %v4109 = vpop.f32.mrb[0].mxu0
  %4110 = vmatprep.mubr.bf16.mxu0 0
  %4111 = vmatmul.mubr.bf16.gmra.mrb[0].mxu0 %v2048
  %v4112 = vpop.f32.mrb[0].mxu0
  %v4113 = vadd.f32 0.0, %v4112
  %v4114 = vpop.f32.mrb[0].mxu0
  %v4115 = vpop.f32.mrb[0].mxu0
  %v4116 = vadd.f32 0.0, %v4115
  %v4117 = vpop.f32.mrb[0].mxu0
  %4118 = vmatprep.mubr.bf16.mxu0 0
  %4119 = vmatmul.mubr.bf16.gmra.mrb[0].mxu0 %v2051
  %v4120 = vpop.f32.mrb[0].mxu0
  %v4121 = vadd.f32 0.0, %v4120
  %v4122 = vpop.f32.mrb[0].mxu0
  %v4123 = vpop.f32.mrb[0].mxu0
  %v4124 = vadd.f32 0.0, %v4123
  %v4125 = vpop.f32.mrb[0].mxu0
  %4126 = vmatprep.mubr.bf16.mxu0 0
  %4127 = vmatmul.mubr.bf16.gmra.mrb[0].mxu0 %v2054
  %v4128 = vpop.f32.mrb[0].mxu0
  %v4129 = vadd.f32 0.0, %v4128
  %v4130 = vpop.f32.mrb[0].mxu0
  %v4131 = vpop.f32.mrb[0].mxu0
  %v4132 = vpop.f32.mrb[0].mxu0
  %4133 = vdwg.mxu0
  %4135 = vrot.lane.b32.xlu0 %v886, 127
  %v4136 = vpop.permute.xlu0 %4135
  %v4138 = vsel %vm920, %v4136, 0
  %4140 = vmatprep.subr.bf16.mxu0 0
  %4141 = vmatpush1.bf16.msra.mxu0 %v4138
  %4142 = vmatprep.subr.bf16.mxu0 0
  %4143 = vmatpush1.bf16.msra.mxu0 0
  %4144 = vmatprep.subr.bf16.mxu0 0
  %4145 = vmatpush1.bf16.msra.mxu0 0
  %4146 = vmatprep.subr.bf16.mxu0 0
  %4147 = vmatpush1.bf16.msra.mxu0 0
  %4148 = vmatprep.subr.bf16.mxu0 0
  %4149 = vmatpush1.bf16.msra.mxu0 0
  %4150 = vmatprep.subr.bf16.mxu0 0
  %4151 = vmatpush1.bf16.msra.mxu0 0
  %4152 = vmatprep.subr.bf16.mxu0 0
  %4153 = vmatpush1.bf16.msra.mxu0 0
  %4154 = vmatprep.subr.bf16.mxu0 0
  %4155 = vmatpush1.bf16.msra.mxu0 0
  %4156 = vmatprep.subr.bf16.mxu0 0
  %4157 = vmatpush1.bf16.msra.mxu0 0
  %4158 = vmatprep.subr.bf16.mxu0 0
  %4159 = vmatpush1.bf16.msra.mxu0 0
  %4160 = vmatprep.subr.bf16.mxu0 0
  %4161 = vmatpush1.bf16.msra.mxu0 0
  %4162 = vmatprep.subr.bf16.mxu0 0
  %4163 = vmatpush1.bf16.msra.mxu0 0
  %4164 = vmatprep.subr.bf16.mxu0 0
  %4165 = vmatpush1.bf16.msra.mxu0 0
  %4166 = vmatprep.subr.bf16.mxu0 0
  %4167 = vmatpush1.bf16.msra.mxu0 0
  %4168 = vmatprep.subr.bf16.mxu0 0
  %4169 = vmatpush1.bf16.msra.mxu0 0
  %4170 = vmatprep.subr.bf16.mxu0 0
  %4171 = vmatpush1.bf16.msra.mxu0 0
  %4172 = vmatprep.mubr.bf16.mxu0 0
  %4173 = vmatmul.mubr.bf16.gmra.mrb[0].mxu0 %v2045
  %v4174 = vpop.f32.mrb[0].mxu0
  %v4175 = vadd.f32 0.0, %v4174
  %v4176 = vpop.f32.mrb[0].mxu0
  %v4177 = vpop.f32.mrb[0].mxu0
  %v4178 = vadd.f32 0.0, %v4177
  %v4179 = vpop.f32.mrb[0].mxu0
  %4180 = vmatprep.mubr.bf16.mxu0 0
  %4181 = vmatmul.mubr.bf16.gmra.mrb[0].mxu0 %v2048
  %v4182 = vpop.f32.mrb[0].mxu0
  %v4183 = vadd.f32 0.0, %v4182
  %v4184 = vpop.f32.mrb[0].mxu0
  %v4185 = vpop.f32.mrb[0].mxu0
  %v4186 = vadd.f32 0.0, %v4185
  %v4187 = vpop.f32.mrb[0].mxu0
  %4188 = vmatprep.mubr.bf16.mxu0 0
  %4189 = vmatmul.mubr.bf16.gmra.mrb[0].mxu0 %v2051
  %v4190 = vpop.f32.mrb[0].mxu0
  %v4191 = vadd.f32 0.0, %v4190
  %v4192 = vpop.f32.mrb[0].mxu0
  %v4193 = vpop.f32.mrb[0].mxu0
  %v4194 = vadd.f32 0.0, %v4193
  %v4195 = vpop.f32.mrb[0].mxu0
  %4196 = vmatprep.mubr.bf16.mxu0 0
  %4197 = vmatmul.mubr.bf16.gmra.mrb[0].mxu0 %v2054
  %v4198 = vpop.f32.mrb[0].mxu0
  %v4199 = vadd.f32 0.0, %v4198
  %v4200 = vpop.f32.mrb[0].mxu0
  %v4201 = vpop.f32.mrb[0].mxu0
  %v4202 = vpop.f32.mrb[0].mxu0
  %4203 = vdwg.mxu0
  %4205 = vrot.lane.b32.xlu0 %v887, 127
  %v4206 = vpop.permute.xlu0 %4205
  %v4208 = vsel %vm920, %v4206, 0
  %4210 = vmatprep.subr.bf16.mxu0 0
  %4211 = vmatpush1.bf16.msra.mxu0 %v4208
  %4212 = vmatprep.subr.bf16.mxu0 0
  %4213 = vmatpush1.bf16.msra.mxu0 0
  %4214 = vmatprep.subr.bf16.mxu0 0
  %4215 = vmatpush1.bf16.msra.mxu0 0
  %4216 = vmatprep.subr.bf16.mxu0 0
  %4217 = vmatpush1.bf16.msra.mxu0 0
  %4218 = vmatprep.subr.bf16.mxu0 0
  %4219 = vmatpush1.bf16.msra.mxu0 0
  %4220 = vmatprep.subr.bf16.mxu0 0
  %4221 = vmatpush1.bf16.msra.mxu0 0
  %4222 = vmatprep.subr.bf16.mxu0 0
  %4223 = vmatpush1.bf16.msra.mxu0 0
  %4224 = vmatprep.subr.bf16.mxu0 0
  %4225 = vmatpush1.bf16.msra.mxu0 0
  %4226 = vmatprep.subr.bf16.mxu0 0
  %4227 = vmatpush1.bf16.msra.mxu0 0
  %4228 = vmatprep.subr.bf16.mxu0 0
  %4229 = vmatpush1.bf16.msra.mxu0 0
  %4230 = vmatprep.subr.bf16.mxu0 0
  %4231 = vmatpush1.bf16.msra.mxu0 0
  %4232 = vmatprep.subr.bf16.mxu0 0
  %4233 = vmatpush1.bf16.msra.mxu0 0
  %4234 = vmatprep.subr.bf16.mxu0 0
  %4235 = vmatpush1.bf16.msra.mxu0 0
  %4236 = vmatprep.subr.bf16.mxu0 0
  %4237 = vmatpush1.bf16.msra.mxu0 0
  %4238 = vmatprep.subr.bf16.mxu0 0
  %4239 = vmatpush1.bf16.msra.mxu0 0
  %4240 = vmatprep.subr.bf16.mxu0 0
  %4241 = vmatpush1.bf16.msra.mxu0 0
  %4242 = vmatprep.mubr.bf16.mxu0 0
  %4243 = vmatmul.mubr.bf16.gmra.mrb[0].mxu0 %v2045
  %v4244 = vpop.f32.mrb[0].mxu0
  %v4245 = vadd.f32 0.0, %v4244
  %v4246 = vpop.f32.mrb[0].mxu0
  %v4247 = vpop.f32.mrb[0].mxu0
  %v4248 = vadd.f32 0.0, %v4247
  %v4249 = vpop.f32.mrb[0].mxu0
  %4250 = vmatprep.mubr.bf16.mxu0 0
  %4251 = vmatmul.mubr.bf16.gmra.mrb[0].mxu0 %v2048
  %v4252 = vpop.f32.mrb[0].mxu0
  %v4253 = vadd.f32 0.0, %v4252
  %v4254 = vpop.f32.mrb[0].mxu0
  %v4255 = vpop.f32.mrb[0].mxu0
  %v4256 = vadd.f32 0.0, %v4255
  %v4257 = vpop.f32.mrb[0].mxu0
  %4258 = vmatprep.mubr.bf16.mxu0 0
  %4259 = vmatmul.mubr.bf16.gmra.mrb[0].mxu0 %v2051
  %v4260 = vpop.f32.mrb[0].mxu0
  %v4261 = vadd.f32 0.0, %v4260
  %v4262 = vpop.f32.mrb[0].mxu0
  %v4263 = vpop.f32.mrb[0].mxu0
  %v4264 = vadd.f32 0.0, %v4263
  %v4265 = vpop.f32.mrb[0].mxu0
  %4266 = vmatprep.mubr.bf16.mxu0 0
  %4267 = vmatmul.mubr.bf16.gmra.mrb[0].mxu0 %v2054
  %v4268 = vpop.f32.mrb[0].mxu0
  %v4269 = vadd.f32 0.0, %v4268
  %v4270 = vpop.f32.mrb[0].mxu0
  %v4271 = vpop.f32.mrb[0].mxu0
  %v4272 = vpop.f32.mrb[0].mxu0
  %4273 = vdwg.mxu0
  %4275 = vrot.lane.b32.xlu0 %v888, 127
  %v4276 = vpop.permute.xlu0 %4275
  %v4278 = vsel %vm920, %v4276, 0
  %4280 = vmatprep.subr.bf16.mxu0 0
  %4281 = vmatpush1.bf16.msra.mxu0 %v4278
  %4282 = vmatprep.subr.bf16.mxu0 0
  %4283 = vmatpush1.bf16.msra.mxu0 0
  %4284 = vmatprep.subr.bf16.mxu0 0
  %4285 = vmatpush1.bf16.msra.mxu0 0
  %4286 = vmatprep.subr.bf16.mxu0 0
  %4287 = vmatpush1.bf16.msra.mxu0 0
  %4288 = vmatprep.subr.bf16.mxu0 0
  %4289 = vmatpush1.bf16.msra.mxu0 0
  %4290 = vmatprep.subr.bf16.mxu0 0
  %4291 = vmatpush1.bf16.msra.mxu0 0
  %4292 = vmatprep.subr.bf16.mxu0 0
  %4293 = vmatpush1.bf16.msra.mxu0 0
  %4294 = vmatprep.subr.bf16.mxu0 0
  %4295 = vmatpush1.bf16.msra.mxu0 0
  %4296 = vmatprep.subr.bf16.mxu0 0
  %4297 = vmatpush1.bf16.msra.mxu0 0
  %4298 = vmatprep.subr.bf16.mxu0 0
  %4299 = vmatpush1.bf16.msra.mxu0 0
  %4300 = vmatprep.subr.bf16.mxu0 0
  %4301 = vmatpush1.bf16.msra.mxu0 0
  %4302 = vmatprep.subr.bf16.mxu0 0
  %4303 = vmatpush1.bf16.msra.mxu0 0
  %4304 = vmatprep.subr.bf16.mxu0 0
  %4305 = vmatpush1.bf16.msra.mxu0 0
  %4306 = vmatprep.subr.bf16.mxu0 0
  %4307 = vmatpush1.bf16.msra.mxu0 0
  %4308 = vmatprep.subr.bf16.mxu0 0
  %4309 = vmatpush1.bf16.msra.mxu0 0
  %4310 = vmatprep.subr.bf16.mxu0 0
  %4311 = vmatpush1.bf16.msra.mxu0 0
  %4312 = vmatprep.mubr.bf16.mxu0 0
  %4313 = vmatmul.mubr.bf16.gmra.mrb[0].mxu0 %v2045
  %v4314 = vpop.f32.mrb[0].mxu0
  %v4315 = vadd.f32 0.0, %v4314
  %v4316 = vpop.f32.mrb[0].mxu0
  %v4317 = vpop.f32.mrb[0].mxu0
  %v4318 = vadd.f32 0.0, %v4317
  %v4319 = vpop.f32.mrb[0].mxu0
  %4320 = vmatprep.mubr.bf16.mxu0 0
  %4321 = vmatmul.mubr.bf16.gmra.mrb[0].mxu0 %v2048
  %v4322 = vpop.f32.mrb[0].mxu0
  %v4323 = vadd.f32 0.0, %v4322
  %v4324 = vpop.f32.mrb[0].mxu0
  %v4325 = vpop.f32.mrb[0].mxu0
  %v4326 = vadd.f32 0.0, %v4325
  %v4327 = vpop.f32.mrb[0].mxu0
  %4328 = vmatprep.mubr.bf16.mxu0 0
  %4329 = vmatmul.mubr.bf16.gmra.mrb[0].mxu0 %v2051
  %v4330 = vpop.f32.mrb[0].mxu0
  %v4331 = vadd.f32 0.0, %v4330
  %v4332 = vpop.f32.mrb[0].mxu0
  %v4333 = vpop.f32.mrb[0].mxu0
  %v4334 = vadd.f32 0.0, %v4333
  %v4335 = vpop.f32.mrb[0].mxu0
  %4336 = vmatprep.mubr.bf16.mxu0 0
  %4337 = vmatmul.mubr.bf16.gmra.mrb[0].mxu0 %v2054
  %v4338 = vpop.f32.mrb[0].mxu0
  %v4339 = vadd.f32 0.0, %v4338
  %v4340 = vpop.f32.mrb[0].mxu0
  %v4341 = vpop.f32.mrb[0].mxu0
  %v4342 = vpop.f32.mrb[0].mxu0
  %4343 = vdwg.mxu0
  %v4344 = vadd.f32 %v3307, %v3825
  %v4345 = vadd.f32 %v3310, %v3828
  %v4346 = vadd.f32 %v3315, %v3833
  %v4347 = vadd.f32 %v3318, %v3836
  %v4348 = vadd.f32 %v3323, %v3841
  %v4349 = vadd.f32 %v3326, %v3844
  %v4350 = vadd.f32 %v3331, %v3849
  %v4351 = vadd.f32 %v3371, %v3895
  %v4352 = vadd.f32 %v3374, %v3898
  %v4353 = vadd.f32 %v3379, %v3903
  %v4354 = vadd.f32 %v3382, %v3906
  %v4355 = vadd.f32 %v3387, %v3911
  %v4356 = vadd.f32 %v3390, %v3914
  %v4357 = vadd.f32 %v3395, %v3919
  %v4358 = vadd.f32 %v3435, %v3965
  %v4359 = vadd.f32 %v3438, %v3968
  %v4360 = vadd.f32 %v3443, %v3973
  %v4361 = vadd.f32 %v3446, %v3976
  %v4362 = vadd.f32 %v3451, %v3981
  %v4363 = vadd.f32 %v3454, %v3984
  %v4364 = vadd.f32 %v3459, %v3989
  %v4365 = vadd.f32 %v3499, %v4035
  %v4366 = vadd.f32 %v3502, %v4038
  %v4367 = vadd.f32 %v3507, %v4043
  %v4368 = vadd.f32 %v3510, %v4046
  %v4369 = vadd.f32 %v3515, %v4051
  %v4370 = vadd.f32 %v3518, %v4054
  %v4371 = vadd.f32 %v3523, %v4059
  %v4372 = vadd.f32 %v3563, %v4105
  %v4373 = vadd.f32 %v3566, %v4108
  %v4374 = vadd.f32 %v3571, %v4113
  %v4375 = vadd.f32 %v3574, %v4116
  %v4376 = vadd.f32 %v3579, %v4121
  %v4377 = vadd.f32 %v3582, %v4124
  %v4378 = vadd.f32 %v3587, %v4129
  %v4379 = vadd.f32 %v3627, %v4175
  %v4380 = vadd.f32 %v3630, %v4178
  %v4381 = vadd.f32 %v3635, %v4183
  %v4382 = vadd.f32 %v3638, %v4186
  %v4383 = vadd.f32 %v3643, %v4191
  %v4384 = vadd.f32 %v3646, %v4194
  %v4385 = vadd.f32 %v3651, %v4199
  %v4386 = vadd.f32 %v3691, %v4245
  %v4387 = vadd.f32 %v3694, %v4248
  %v4388 = vadd.f32 %v3699, %v4253
  %v4389 = vadd.f32 %v3702, %v4256
  %v4390 = vadd.f32 %v3707, %v4261
  %v4391 = vadd.f32 %v3710, %v4264
  %v4392 = vadd.f32 %v3715, %v4269
  %v4393 = vadd.f32 %v3755, %v4315
  %v4394 = vadd.f32 %v3758, %v4318
  %v4395 = vadd.f32 %v3763, %v4323
  %v4396 = vadd.f32 %v3766, %v4326
  %v4397 = vadd.f32 %v3771, %v4331
  %v4398 = vadd.f32 %v3774, %v4334
  %v4399 = vadd.f32 %v3779, %v4339
  %v4400 = vadd.f32 %v4344, %v2672
  %v4401 = vadd.f32 %v4345, %v2677
  %v4402 = vadd.f32 %v4346, %v2682
  %v4403 = vadd.f32 %v4347, %v2687
  %v4404 = vadd.f32 %v4348, %v2692
  %v4405 = vadd.f32 %v4349, %v2697
  %v4406 = vadd.f32 %v4350, %v2702
  %v4407 = vadd.f32 %v4351, %v2672
  %v4408 = vadd.f32 %v4352, %v2677
  %v4409 = vadd.f32 %v4353, %v2682
  %v4410 = vadd.f32 %v4354, %v2687
  %v4411 = vadd.f32 %v4355, %v2692
  %v4412 = vadd.f32 %v4356, %v2697
  %v4413 = vadd.f32 %v4357, %v2702
  %v4414 = vadd.f32 %v4358, %v2672
  %v4415 = vadd.f32 %v4359, %v2677
  %v4416 = vadd.f32 %v4360, %v2682
  %v4417 = vadd.f32 %v4361, %v2687
  %v4418 = vadd.f32 %v4362, %v2692
  %v4419 = vadd.f32 %v4363, %v2697
  %v4420 = vadd.f32 %v4364, %v2702
  %v4421 = vadd.f32 %v4365, %v2672
  %v4422 = vadd.f32 %v4366, %v2677
  %v4423 = vadd.f32 %v4367, %v2682
  %v4424 = vadd.f32 %v4368, %v2687
  %v4425 = vadd.f32 %v4369, %v2692
  %v4426 = vadd.f32 %v4370, %v2697
  %v4427 = vadd.f32 %v4371, %v2702
  %v4428 = vadd.f32 %v4372, %v2672
  %v4429 = vadd.f32 %v4373, %v2677
  %v4430 = vadd.f32 %v4374, %v2682
  %v4431 = vadd.f32 %v4375, %v2687
  %v4432 = vadd.f32 %v4376, %v2692
  %v4433 = vadd.f32 %v4377, %v2697
  %v4434 = vadd.f32 %v4378, %v2702
  %v4435 = vadd.f32 %v4379, %v2672
  %v4436 = vadd.f32 %v4380, %v2677
  %v4437 = vadd.f32 %v4381, %v2682
  %v4438 = vadd.f32 %v4382, %v2687
  %v4439 = vadd.f32 %v4383, %v2692
  %v4440 = vadd.f32 %v4384, %v2697
  %v4441 = vadd.f32 %v4385, %v2702
  %v4442 = vadd.f32 %v4386, %v2672
  %v4443 = vadd.f32 %v4387, %v2677
  %v4444 = vadd.f32 %v4388, %v2682
  %v4445 = vadd.f32 %v4389, %v2687
  %v4446 = vadd.f32 %v4390, %v2692
  %v4447 = vadd.f32 %v4391, %v2697
  %v4448 = vadd.f32 %v4392, %v2702
  %v4449 = vadd.f32 %v4393, %v2672
  %v4450 = vadd.f32 %v4394, %v2677
  %v4451 = vadd.f32 %v4395, %v2682
  %v4452 = vadd.f32 %v4396, %v2687
  %v4453 = vadd.f32 %v4397, %v2692
  %v4454 = vadd.f32 %v4398, %v2697
  %v4455 = vadd.f32 %v4399, %v2702
  %v4456 = vmax.f32 %v2704, %v4400
  %v4457 = vmax.f32 %v2705, %v4401
  %v4458 = vmax.f32 %v2706, %v4402
  %v4459 = vmax.f32 %v2707, %v4403
  %v4460 = vmax.f32 %v2708, %v4404
  %v4461 = vmax.f32 %v2709, %v4405
  %v4462 = vmax.f32 %v2710, %v4406
  %v4463 = vmax.f32 %v2711, %v4407
  %v4464 = vmax.f32 %v2712, %v4408
  %v4465 = vmax.f32 %v2713, %v4409
  %v4466 = vmax.f32 %v2714, %v4410
  %v4467 = vmax.f32 %v2715, %v4411
  %v4468 = vmax.f32 %v2716, %v4412
  %v4469 = vmax.f32 %v2717, %v4413
  %v4470 = vmax.f32 %v2718, %v4414
  %v4471 = vmax.f32 %v2719, %v4415
  %v4472 = vmax.f32 %v2720, %v4416
  %v4473 = vmax.f32 %v2721, %v4417
  %v4474 = vmax.f32 %v2722, %v4418
  %v4475 = vmax.f32 %v2723, %v4419
  %v4476 = vmax.f32 %v2724, %v4420
  %v4477 = vmax.f32 %v2725, %v4421
  %v4478 = vmax.f32 %v2726, %v4422
  %v4479 = vmax.f32 %v2727, %v4423
  %v4480 = vmax.f32 %v2728, %v4424
  %v4481 = vmax.f32 %v2729, %v4425
  %v4482 = vmax.f32 %v2730, %v4426
  %v4483 = vmax.f32 %v2731, %v4427
  %v4484 = vmax.f32 %v2732, %v4428
  %v4485 = vmax.f32 %v2733, %v4429
  %v4486 = vmax.f32 %v2734, %v4430
  %v4487 = vmax.f32 %v2735, %v4431
  %v4488 = vmax.f32 %v2736, %v4432
  %v4489 = vmax.f32 %v2737, %v4433
  %v4490 = vmax.f32 %v2738, %v4434
  %v4491 = vmax.f32 %v2739, %v4435
  %v4492 = vmax.f32 %v2740, %v4436
  %v4493 = vmax.f32 %v2741, %v4437
  %v4494 = vmax.f32 %v2742, %v4438
  %v4495 = vmax.f32 %v2743, %v4439
  %v4496 = vmax.f32 %v2744, %v4440
  %v4497 = vmax.f32 %v2745, %v4441
  %v4498 = vmax.f32 %v2746, %v4442
  %v4499 = vmax.f32 %v2747, %v4443
  %v4500 = vmax.f32 %v2748, %v4444
  %v4501 = vmax.f32 %v2749, %v4445
  %v4502 = vmax.f32 %v2750, %v4446
  %v4503 = vmax.f32 %v2751, %v4447
  %v4504 = vmax.f32 %v2752, %v4448
  %v4505 = vmax.f32 %v2753, %v4449
  %v4506 = vmax.f32 %v2754, %v4450
  %v4507 = vmax.f32 %v2755, %v4451
  %v4508 = vmax.f32 %v2756, %v4452
  %v4509 = vmax.f32 %v2757, %v4453
  %v4510 = vmax.f32 %v2758, %v4454
  %v4511 = vmax.f32 %v2759, %v4455
  %v4512 = vmax.f32 %v4456, 0.0
  %v4513 = vmax.f32 %v4457, 0.0
  %v4514 = vmax.f32 %v4458, 0.0
  %v4515 = vmax.f32 %v4459, 0.0
  %v4516 = vmax.f32 %v4460, 0.0
  %v4517 = vmax.f32 %v4461, 0.0
  %v4518 = vmax.f32 %v4462, 0.0
  %v4519 = vmax.f32 %v4463, 0.0
  %v4520 = vmax.f32 %v4464, 0.0
  %v4521 = vmax.f32 %v4465, 0.0
  %v4522 = vmax.f32 %v4466, 0.0
  %v4523 = vmax.f32 %v4467, 0.0
  %v4524 = vmax.f32 %v4468, 0.0
  %v4525 = vmax.f32 %v4469, 0.0
  %v4526 = vmax.f32 %v4470, 0.0
  %v4527 = vmax.f32 %v4471, 0.0
  %v4528 = vmax.f32 %v4472, 0.0
  %v4529 = vmax.f32 %v4473, 0.0
  %v4530 = vmax.f32 %v4474, 0.0
  %v4531 = vmax.f32 %v4475, 0.0
  %v4532 = vmax.f32 %v4476, 0.0
  %v4533 = vmax.f32 %v4477, 0.0
  %v4534 = vmax.f32 %v4478, 0.0
  %v4535 = vmax.f32 %v4479, 0.0
  %v4536 = vmax.f32 %v4480, 0.0
  %v4537 = vmax.f32 %v4481, 0.0
  %v4538 = vmax.f32 %v4482, 0.0
  %v4539 = vmax.f32 %v4483, 0.0
  %v4540 = vmax.f32 %v4484, 0.0
  %v4541 = vmax.f32 %v4485, 0.0
  %v4542 = vmax.f32 %v4486, 0.0
  %v4543 = vmax.f32 %v4487, 0.0
  %v4544 = vmax.f32 %v4488, 0.0
  %v4545 = vmax.f32 %v4489, 0.0
  %v4546 = vmax.f32 %v4490, 0.0
  %v4547 = vmax.f32 %v4491, 0.0
  %v4548 = vmax.f32 %v4492, 0.0
  %v4549 = vmax.f32 %v4493, 0.0
  %v4550 = vmax.f32 %v4494, 0.0
  %v4551 = vmax.f32 %v4495, 0.0
  %v4552 = vmax.f32 %v4496, 0.0
  %v4553 = vmax.f32 %v4497, 0.0
  %v4554 = vmax.f32 %v4498, 0.0
  %v4555 = vmax.f32 %v4499, 0.0
  %v4556 = vmax.f32 %v4500, 0.0
  %v4557 = vmax.f32 %v4501, 0.0
  %v4558 = vmax.f32 %v4502, 0.0
  %v4559 = vmax.f32 %v4503, 0.0
  %v4560 = vmax.f32 %v4504, 0.0
  %v4561 = vmax.f32 %v4505, 0.0
  %v4562 = vmax.f32 %v4506, 0.0
  %v4563 = vmax.f32 %v4507, 0.0
  %v4564 = vmax.f32 %v4508, 0.0
  %v4565 = vmax.f32 %v4509, 0.0
  %v4566 = vmax.f32 %v4510, 0.0
  %v4567 = vmax.f32 %v4511, 0.0
  %v4568 = vpack.c.bf16 %v4513, %v4512
  %v4569 = vpack.c.bf16 %v4515, %v4514
  %v4570 = vpack.c.bf16 %v4517, %v4516
  %v4571 = vpack.c.bf16 %v4518, %v4518
  %v4572 = vpack.c.bf16 %v4520, %v4519
  %v4573 = vpack.c.bf16 %v4522, %v4521
  %v4574 = vpack.c.bf16 %v4524, %v4523
  %v4575 = vpack.c.bf16 %v4525, %v4525
  %v4576 = vpack.c.bf16 %v4527, %v4526
  %v4577 = vpack.c.bf16 %v4529, %v4528
  %v4578 = vpack.c.bf16 %v4531, %v4530
  %v4579 = vpack.c.bf16 %v4532, %v4532
  %v4580 = vpack.c.bf16 %v4534, %v4533
  %v4581 = vpack.c.bf16 %v4536, %v4535
  %v4582 = vpack.c.bf16 %v4538, %v4537
  %v4583 = vpack.c.bf16 %v4539, %v4539
  %v4584 = vpack.c.bf16 %v4541, %v4540
  %v4585 = vpack.c.bf16 %v4543, %v4542
  %v4586 = vpack.c.bf16 %v4545, %v4544
  %v4587 = vpack.c.bf16 %v4546, %v4546
  %v4588 = vpack.c.bf16 %v4548, %v4547
  %v4589 = vpack.c.bf16 %v4550, %v4549
  %v4590 = vpack.c.bf16 %v4552, %v4551
  %v4591 = vpack.c.bf16 %v4553, %v4553
  %v4592 = vpack.c.bf16 %v4555, %v4554
  %v4593 = vpack.c.bf16 %v4557, %v4556
  %v4594 = vpack.c.bf16 %v4559, %v4558
  %v4595 = vpack.c.bf16 %v4560, %v4560
  %v4596 = vpack.c.bf16 %v4562, %v4561
  %v4597 = vpack.c.bf16 %v4564, %v4563
  %v4598 = vpack.c.bf16 %v4566, %v4565
  %v4599 = vpack.c.bf16 %v4567, %v4567
  %v4632 = vunpack.c.l.b16 %v4568
  %v4633 = vunpack.c.h.b16 %v4568
  %v4634 = vunpack.c.l.b16 %v4569
  %v4635 = vunpack.c.h.b16 %v4569
  %v4636 = vunpack.c.l.b16 %v4570
  %v4637 = vunpack.c.h.b16 %v4570
  %v4638 = vunpack.c.l.b16 %v4571
  %v4639 = vunpack.c.l.b16 %v4572
  %v4640 = vunpack.c.h.b16 %v4572
  %v4641 = vunpack.c.l.b16 %v4573
  %v4642 = vunpack.c.h.b16 %v4573
  %v4643 = vunpack.c.l.b16 %v4574
  %v4644 = vunpack.c.h.b16 %v4574
  %v4645 = vunpack.c.l.b16 %v4575
  %v4646 = vunpack.c.l.b16 %v4576
  %v4647 = vunpack.c.h.b16 %v4576
  %v4648 = vunpack.c.l.b16 %v4577
  %v4649 = vunpack.c.h.b16 %v4577
  %v4650 = vunpack.c.l.b16 %v4578
  %v4651 = vunpack.c.h.b16 %v4578
  %v4652 = vunpack.c.l.b16 %v4579
  %v4653 = vunpack.c.l.b16 %v4580
  %v4654 = vunpack.c.h.b16 %v4580
  %v4655 = vunpack.c.l.b16 %v4581
  %v4656 = vunpack.c.h.b16 %v4581
  %v4657 = vunpack.c.l.b16 %v4582
  %v4658 = vunpack.c.h.b16 %v4582
  %v4659 = vunpack.c.l.b16 %v4583
  %v4660 = vunpack.c.l.b16 %v4584
  %v4661 = vunpack.c.h.b16 %v4584
  %v4662 = vunpack.c.l.b16 %v4585
  %v4663 = vunpack.c.h.b16 %v4585
  %v4664 = vunpack.c.l.b16 %v4586
  %v4665 = vunpack.c.h.b16 %v4586
  %v4666 = vunpack.c.l.b16 %v4587
  %v4667 = vunpack.c.l.b16 %v4588
  %v4668 = vunpack.c.h.b16 %v4588
  %v4669 = vunpack.c.l.b16 %v4589
  %v4670 = vunpack.c.h.b16 %v4589
  %v4671 = vunpack.c.l.b16 %v4590
  %v4672 = vunpack.c.h.b16 %v4590
  %v4673 = vunpack.c.l.b16 %v4591
  %v4674 = vunpack.c.l.b16 %v4592
  %v4675 = vunpack.c.h.b16 %v4592
  %v4676 = vunpack.c.l.b16 %v4593
  %v4677 = vunpack.c.h.b16 %v4593
  %v4678 = vunpack.c.l.b16 %v4594
  %v4679 = vunpack.c.h.b16 %v4594
  %v4680 = vunpack.c.l.b16 %v4595
  %v4681 = vunpack.c.l.b16 %v4596
  %v4682 = vunpack.c.h.b16 %v4596
  %v4683 = vunpack.c.l.b16 %v4597
  %v4684 = vunpack.c.h.b16 %v4597
  %v4685 = vunpack.c.l.b16 %v4598
  %v4686 = vunpack.c.h.b16 %v4598
  %v4687 = vunpack.c.l.b16 %v4599
  %v4688 = vpack.c.b16 %v4632, %v4632
  %v4689 = vpack.c.b16 %v4633, %v4633
  %v4690 = vpack.c.b16 %v4634, %v4634
  %v4691 = vpack.c.b16 %v4635, %v4635
  %v4692 = vpack.c.b16 %v4636, %v4636
  %v4693 = vpack.c.b16 %v4637, %v4637
  %v4694 = vpack.c.b16 %v4638, %v4638
  %v4695 = vpack.c.b16 %v4639, %v4639
  %v4696 = vpack.c.b16 %v4640, %v4640
  %v4697 = vpack.c.b16 %v4641, %v4641
  %v4698 = vpack.c.b16 %v4642, %v4642
  %v4699 = vpack.c.b16 %v4643, %v4643
  %v4700 = vpack.c.b16 %v4644, %v4644
  %v4701 = vpack.c.b16 %v4645, %v4645
  %v4702 = vpack.c.b16 %v4646, %v4646
  %v4703 = vpack.c.b16 %v4647, %v4647
  %v4704 = vpack.c.b16 %v4648, %v4648
  %v4705 = vpack.c.b16 %v4649, %v4649
  %v4706 = vpack.c.b16 %v4650, %v4650
  %v4707 = vpack.c.b16 %v4651, %v4651
  %v4708 = vpack.c.b16 %v4652, %v4652
  %v4709 = vpack.c.b16 %v4653, %v4653
  %v4710 = vpack.c.b16 %v4654, %v4654
  %v4711 = vpack.c.b16 %v4655, %v4655
  %v4712 = vpack.c.b16 %v4656, %v4656
  %v4713 = vpack.c.b16 %v4657, %v4657
  %v4714 = vpack.c.b16 %v4658, %v4658
  %v4715 = vpack.c.b16 %v4659, %v4659
  %v4716 = vpack.c.b16 %v4660, %v4660
  %v4717 = vpack.c.b16 %v4661, %v4661
  %v4718 = vpack.c.b16 %v4662, %v4662
  %v4719 = vpack.c.b16 %v4663, %v4663
  %v4720 = vpack.c.b16 %v4664, %v4664
  %v4721 = vpack.c.b16 %v4665, %v4665
  %v4722 = vpack.c.b16 %v4666, %v4666
  %v4723 = vpack.c.b16 %v4667, %v4667
  %v4724 = vpack.c.b16 %v4668, %v4668
  %v4725 = vpack.c.b16 %v4669, %v4669
  %v4726 = vpack.c.b16 %v4670, %v4670
  %v4727 = vpack.c.b16 %v4671, %v4671
  %v4728 = vpack.c.b16 %v4672, %v4672
  %v4729 = vpack.c.b16 %v4673, %v4673
  %v4730 = vpack.c.b16 %v4674, %v4674
  %v4731 = vpack.c.b16 %v4675, %v4675
  %v4732 = vpack.c.b16 %v4676, %v4676
  %v4733 = vpack.c.b16 %v4677, %v4677
  %v4734 = vpack.c.b16 %v4678, %v4678
  %v4735 = vpack.c.b16 %v4679, %v4679
  %v4736 = vpack.c.b16 %v4680, %v4680
  %v4737 = vpack.c.b16 %v4681, %v4681
  %v4738 = vpack.c.b16 %v4682, %v4682
  %v4739 = vpack.c.b16 %v4683, %v4683
  %v4740 = vpack.c.b16 %v4684, %v4684
  %v4741 = vpack.c.b16 %v4685, %v4685
  %v4742 = vpack.c.b16 %v4686, %v4686
  %v4743 = vpack.c.b16 %v4687, %v4687
  %vm4800 = vcmask 60416
  %4801 = vst.msk [vmem:[%s5] sm:$0xf] %vm4800, %v4688
  %4802 = vst.msk [vmem:[%s5 + $0x4] sm:$0xf] %vm4800, %v4689
  %4803 = vst.msk [vmem:[%s5 + $0x8] sm:$0xf] %vm4800, %v4690
  %4804 = vst.msk [vmem:[%s5 + $0xc] sm:$0xf] %vm4800, %v4691
  %4805 = vst.msk [vmem:[%s5 + $0x10] sm:$0xf] %vm4800, %v4692
  %4806 = vst.msk [vmem:[%s5 + $0x14] sm:$0xf] %vm4800, %v4693
  %vm4807 = vcmask 57344
  %4808 = vst.msk [vmem:[%s5 + $0x18] sm:$0x1] %vm4807, %v4694
  %4809 = vst.msk [vmem:[%s5 + $0x1c] sm:$0xf] %vm4800, %v4695
  %4810 = vst.msk [vmem:[%s5 + $0x20] sm:$0xf] %vm4800, %v4696
  %4811 = vst.msk [vmem:[%s5 + $0x24] sm:$0xf] %vm4800, %v4697
  %4812 = vst.msk [vmem:[%s5 + $0x28] sm:$0xf] %vm4800, %v4698
  %4813 = vst.msk [vmem:[%s5 + $0x2c] sm:$0xf] %vm4800, %v4699
  %4814 = vst.msk [vmem:[%s5 + $0x30] sm:$0xf] %vm4800, %v4700
  %4815 = vst.msk [vmem:[%s5 + $0x34] sm:$0x1] %vm4807, %v4701
  %4816 = vst.msk [vmem:[%s5 + $0x38] sm:$0xf] %vm4800, %v4702
  %4817 = vst.msk [vmem:[%s5 + $0x3c] sm:$0xf] %vm4800, %v4703
  %4818 = vst.msk [vmem:[%s5 + $0x40] sm:$0xf] %vm4800, %v4704
  %4819 = vst.msk [vmem:[%s5 + $0x44] sm:$0xf] %vm4800, %v4705
  %4820 = vst.msk [vmem:[%s5 + $0x48] sm:$0xf] %vm4800, %v4706
  %4821 = vst.msk [vmem:[%s5 + $0x4c] sm:$0xf] %vm4800, %v4707
  %4822 = vst.msk [vmem:[%s5 + $0x50] sm:$0x1] %vm4807, %v4708
  %4823 = vst.msk [vmem:[%s5 + $0x54] sm:$0xf] %vm4800, %v4709
  %4824 = vst.msk [vmem:[%s5 + $0x58] sm:$0xf] %vm4800, %v4710
  %4825 = vst.msk [vmem:[%s5 + $0x5c] sm:$0xf] %vm4800, %v4711
  %4826 = vst.msk [vmem:[%s5 + $0x60] sm:$0xf] %vm4800, %v4712
  %4827 = vst.msk [vmem:[%s5 + $0x64] sm:$0xf] %vm4800, %v4713
  %4828 = vst.msk [vmem:[%s5 + $0x68] sm:$0xf] %vm4800, %v4714
  %4829 = vst.msk [vmem:[%s5 + $0x6c] sm:$0x1] %vm4807, %v4715
  %4830 = vst.msk [vmem:[%s5 + $0x70] sm:$0xf] %vm4800, %v4716
  %4831 = vst.msk [vmem:[%s5 + $0x74] sm:$0xf] %vm4800, %v4717
  %4832 = vst.msk [vmem:[%s5 + $0x78] sm:$0xf] %vm4800, %v4718
  %4833 = vst.msk [vmem:[%s5 + $0x7c] sm:$0xf] %vm4800, %v4719
  %4834 = vst.msk [vmem:[%s5 + $0x80] sm:$0xf] %vm4800, %v4720
  %4835 = vst.msk [vmem:[%s5 + $0x84] sm:$0xf] %vm4800, %v4721
  %4836 = vst.msk [vmem:[%s5 + $0x88] sm:$0x1] %vm4807, %v4722
  %4837 = vst.msk [vmem:[%s5 + $0x8c] sm:$0xf] %vm4800, %v4723
  %4838 = vst.msk [vmem:[%s5 + $0x90] sm:$0xf] %vm4800, %v4724
  %4839 = vst.msk [vmem:[%s5 + $0x94] sm:$0xf] %vm4800, %v4725
  %4840 = vst.msk [vmem:[%s5 + $0x98] sm:$0xf] %vm4800, %v4726
  %4841 = vst.msk [vmem:[%s5 + $0x9c] sm:$0xf] %vm4800, %v4727
  %4842 = vst.msk [vmem:[%s5 + $0xa0] sm:$0xf] %vm4800, %v4728
  %4843 = vst.msk [vmem:[%s5 + $0xa4] sm:$0x1] %vm4807, %v4729
  %4844 = vst.msk [vmem:[%s5 + $0xa8] sm:$0xf] %vm4800, %v4730
  %4845 = vst.msk [vmem:[%s5 + $0xac] sm:$0xf] %vm4800, %v4731
  %4846 = vst.msk [vmem:[%s5 + $0xb0] sm:$0xf] %vm4800, %v4732
  %4847 = vst.msk [vmem:[%s5 + $0xb4] sm:$0xf] %vm4800, %v4733
  %4848 = vst.msk [vmem:[%s5 + $0xb8] sm:$0xf] %vm4800, %v4734
  %4849 = vst.msk [vmem:[%s5 + $0xbc] sm:$0xf] %vm4800, %v4735
  %4850 = vst.msk [vmem:[%s5 + $0xc0] sm:$0x1] %vm4807, %v4736
  %4851 = vst.msk [vmem:[%s5 + $0xc4] sm:$0xf] %vm4800, %v4737
  %4852 = vst.msk [vmem:[%s5 + $0xc8] sm:$0xf] %vm4800, %v4738
  %4853 = vst.msk [vmem:[%s5 + $0xcc] sm:$0xf] %vm4800, %v4739
  %4854 = vst.msk [vmem:[%s5 + $0xd0] sm:$0xf] %vm4800, %v4740
  %4855 = vst.msk [vmem:[%s5 + $0xd4] sm:$0xf] %vm4800, %v4741
  %4856 = vst.msk [vmem:[%s5 + $0xd8] sm:$0xf] %vm4800, %v4742
  %4857 = vst.msk [vmem:[%s5 + $0xdc] sm:$0x1] %vm4807, %v4743
  // Predicated region
  $region22: #{ram_conv1d_mx_forward.3} parent=0 // pred_check
    _
  $region23: #{ram_conv1d_mx_forward.3} parent=0 // pred_check_branch
    %4859 = sbr.rel (0) target = $region25
  $region24: #{ram_conv1d_mx_forward.3} parent=0 // pred_region
    _
  $region25: #{ram_conv1d_mx_forward.3} parent=0 // pred_fallthru
    _
  // Predicated region
  $region26: #{ram_conv1d_mx_forward.3} parent=0 // pred_check
    _
  $region27: #{ram_conv1d_mx_forward.3} parent=0 // pred_check_branch
    %4861 = sbr.rel (0) target = $region29
  $region28: #{ram_conv1d_mx_forward.3} parent=0 // pred_region
    _
  $region29: #{ram_conv1d_mx_forward.3} parent=0 // pred_fallthru
    _

</llo_original>
